<compile_context>
chip_gen: v5e
topology: v5e:2x2
jax: 0.10.0
libtpu: 0.0.40
codegen_flags: <defaults>
</compile_context>

<pallas_src>
import functools
import math

import jax
import jax.numpy as jnp
import numpy as np
from jax.experimental import pallas as pl
from jax.experimental.pallas import tpu as pltpu

NUM_HEADS = 8        # MultiheadDiffAttention(hidden_dim, 8)
_LN_EPS = 1e-5       # torch nn.LayerNorm default


# ----------------------------------------------------------------------------
# in-kernel math helpers (operate on loaded values)
# ----------------------------------------------------------------------------

def _layernorm(x, g, b, eps=_LN_EPS):
    mu = jnp.mean(x, axis=-1, keepdims=True)
    xc = x - mu
    var = jnp.mean(xc * xc, axis=-1, keepdims=True)
    return xc * jax.lax.rsqrt(var + eps) * g + b


def _softmax_last(s):
    m = jnp.max(s, axis=-1, keepdims=True)
    e = jnp.exp(s - m)
    return e / jnp.sum(e, axis=-1, keepdims=True)   # exact divide (bit-parity)


def _encoder(x3, calls, lam, perm, refs, *, scale):
    """TransformerEncoder (eval) applied jointly to G = calls*B groups.

    x3: (G, S, E).  `perm` is the per-original-call (B*S, B*S) row permutation
    reproducing PyTorch's attn_output.transpose(0,1).contiguous().view(B,S,E)
    batch scramble (bug-for-bug).  Returns (G*S, E).
    """
    (wq1_ref, bq1_ref, wq2_ref, bq2_ref, wk_ref, bk_ref, wv_ref, bv_ref,
     wo_ref, bo_ref, g1_ref, bln1_ref, w1_ref, b1_ref, w2_ref, b2_ref,
     g2_ref, bln2_ref) = refs
    G, S, E = x3.shape
    x2 = x3.reshape(G * S, E)

    # q1/q2 use full-width weights whose complementary half was zeroed on the
    # host, so q1.k1 / q2.k2 are full-E contractions -> no sub-128-lane slices.
    q1 = (jnp.dot(x2, wq1_ref[...], preferred_element_type=jnp.float32)
          + bq1_ref[...]).reshape(G, S, E)
    q2 = (jnp.dot(x2, wq2_ref[...], preferred_element_type=jnp.float32)
          + bq2_ref[...]).reshape(G, S, E)
    k = (jnp.dot(x2, wk_ref[...], preferred_element_type=jnp.float32)
         + bk_ref[...]).reshape(G, S, E)
    v = (jnp.dot(x2, wv_ref[...], preferred_element_type=jnp.float32)
         + bv_ref[...]).reshape(G, S, E)

    s1 = jnp.einsum('gqd,gkd->gqk', q1, k, preferred_element_type=jnp.float32)
    s2 = jnp.einsum('gqd,gkd->gqk', q2, k, preferred_element_type=jnp.float32)
    p = _softmax_last(jnp.concatenate([s1, s2], axis=0) * scale)  # one pass
    dw = p[:G] - lam * p[G:]                                      # (G, S, S)
    ao = jnp.einsum('gqk,gkd->gqd', dw, v, preferred_element_type=jnp.float32)

    # PyTorch batch scramble, applied per original attention call (one block of
    # B*S rows) via a tiny one-hot batched matmul -- replaces the previous
    # O((calls*B*S)^2) block-diagonal permutation matrix.
    blk = (G // calls) * S
    ao = ao.reshape(calls, blk, E)
    perm_b = jnp.broadcast_to(perm, (calls, blk, blk))
    ao = jnp.einsum('frc,fce->fre', perm_b, ao,
                    preferred_element_type=jnp.float32).reshape(G * S, E)

    y = jnp.dot(ao, wo_ref[...], preferred_element_type=jnp.float32) + bo_ref[...]
    x1 = _layernorm(x2 + y, g1_ref[...], bln1_ref[...])
    hid = jnp.maximum(
        jnp.dot(x1, w1_ref[...], preferred_element_type=jnp.float32) + b1_ref[...],
        0.0)
    y2 = jnp.dot(hid, w2_ref[...], preferred_element_type=jnp.float32) + b2_ref[...]
    return _layernorm(x1 + y2, g2_ref[...], bln2_ref[...])


# ----------------------------------------------------------------------------
# the single fused kernel
# ----------------------------------------------------------------------------

def vivitae_kernel(patches_ref, perm_s_ref, perm_t_ref, pw_ref, pb_ref,
                   pos_ref, temb_ref, *rest, frames, batch, n_tok, scale):
    sp_refs = rest[0:18]          # spatial encoder weights
    tp_refs = rest[18:36]         # temporal encoder weights
    wout_ref, bout_ref, lam_ref = rest[36], rest[37], rest[38]
    out_ref = rest[39]            # (batch*maxlen, Opad)  lane-dense output slab
    tin_ref = rest[40]            # VMEM scratch (batch, maxlen, E)

    E = pw_ref.shape[1]

    # ---- spatial stage: Conv2d-as-GEMM patch embed + pos, all frames at once
    emb = (jnp.dot(patches_ref[...], pw_ref[...],
                   preferred_element_type=jnp.float32) + pb_ref[...])
    x3 = emb.reshape(frames * batch, n_tok, E) + pos_ref[...][None, :, :]
    enc_s = _encoder(x3, frames, lam_ref[0, 0], perm_s_ref[...], sp_refs,
                     scale=scale)
    # encoded.mean(dim=1) per (frame, batch) group
    tokens = jnp.mean(enc_s.reshape(frames * batch, n_tok, E), axis=1)

    # ---- inter-stage glue, fully in-kernel: (frame,batch)->(batch,frame)
    #      reorder + temporal_embed add + zero padding up to maxlen
    tin_ref[...] = jnp.zeros_like(tin_ref)
    temb = temb_ref[...]                                   # (maxlen, E)
    for f in range(frames):                                # static, tiny
        row = tokens[f * batch:(f + 1) * batch, :] + temb[f:f + 1, :]
        tin_ref[:, f:f + 1, :] = row.reshape(batch, 1, E)

    # ---- temporal stage + final output projection (lane-padded to 128)
    enc_t = _encoder(tin_ref[...], 1, lam_ref[0, 1], perm_t_ref[...], tp_refs,
                     scale=scale)
    out_ref[...] = (jnp.dot(enc_t, wout_ref[...],
                            preferred_element_type=jnp.float32) + bout_ref[...])


# ----------------------------------------------------------------------------
# pallas_call wrapper and glue
# ----------------------------------------------------------------------------

def _full_spec(shape):
    zeros = (0,) * len(shape)
    return pl.BlockSpec(shape, lambda i, _z=zeros: _z)


_SMEM_SPEC = pl.BlockSpec(memory_space=pltpu.MemorySpace.SMEM)

_ENC_KEYS = ("wq1_t", "bq1", "wq2_t", "bq2", "wk_t", "bk", "wv_t", "bv",
             "wo_t", "bo", "g1", "bln1", "w1_t", "b1", "w2_t", "b2",
             "g2", "bln2")


def _enc_args(enc):
    return tuple(enc[k] for k in _ENC_KEYS)


def _scramble_perm(batch, seq):
    """(B*S, B*S) one-hot for transpose(0,1).contiguous().view(B, S, E)."""
    size = batch * seq
    P = np.zeros((size, size), dtype=np.float32)
    r = np.arange(size)
    src = (r % batch) * seq + (r // batch)
    P[r, src] = 1.0
    return jnp.asarray(P)


def vivitae_forward(x, kp, *, patchnum, maxlen, output_size):
    B, T, C, H, W = x.shape
    t = min(T, maxlen)
    p = patchnum
    E = kp["pw_t"].shape[1]
    hp, wp = H // p, W // p
    N = hp * wp
    head_dim = E // NUM_HEADS
    scale = 1.0 / math.sqrt(head_dim)
    o_pad = kp["wout_pad"].shape[1]

    # Non-overlapping patch extraction, frame-major so each original spatial
    # transformer call occupies a contiguous block of B*N rows.
    # TODO(synk): fold this rearrangement into the kernel (per-frame BlockSpec)
    # to drop one host-side HBM pass at large resolutions.
    xf = x[:, :t]                                           # (B, t, C, H, W)
    patches = xf.reshape(B, t, C, hp, p, wp, p)
    patches = jnp.transpose(patches, (1, 0, 3, 5, 2, 4, 6))  # (t,B,hp,wp,C,p,p)
    patches2d = patches.reshape(t * B * N, C * p * p)

    perm_s = _scramble_perm(B, N)        # (B*N, B*N)    -- spatial calls
    perm_t = _scramble_perm(B, maxlen)   # (B*maxlen,)^2 -- temporal call

    vmem_args = ((patches2d, perm_s, perm_t, kp["pw_t"], kp["pb"],
                  kp["pos"][:N], kp["temb"])
                 + _enc_args(kp["spatial"]) + _enc_args(kp["temporal"])
                 + (kp["wout_pad"], kp["bout_pad"]))
    args = vmem_args + (kp["lam2"],)
    in_specs = [_full_spec(a.shape) for a in vmem_args] + [_SMEM_SPEC]

    out2d = pl.pallas_call(
        functools.partial(vivitae_kernel, frames=t, batch=B, n_tok=N,
                          scale=scale),
        out_shape=jax.ShapeDtypeStruct((B * maxlen, o_pad), jnp.float32),
        grid=(1,),
        in_specs=in_specs,
        out_specs=_full_spec((B * maxlen, o_pad)),
        scratch_shapes=[pltpu.VMEM((B, maxlen, E), jnp.float32)],
        compiler_params=pltpu.CompilerParams(
            dimension_semantics=("arbitrary",)),
    )(*args)

    # lane-dense (…,128) slab -> (B, maxlen, output_size)
    return out2d[:, :output_size].reshape(B, maxlen, output_size)


# ----------------------------------------------------------------------------
# deterministic synthetic parameters (torch layout) + host-side kernel prep
# ----------------------------------------------------------------------------

def init_params(key, input_size, output_size, patchnum, maxlen, hidden_dim):
    E = hidden_dim
    p = patchnum
    n_tot = (input_size // p) ** 2
    keys = jax.random.split(key, 8)

    def rnd(k, shape, s=0.05):
        return (s * jax.random.normal(k, shape)).astype(jnp.float32)

    def enc_params(k):
        ks = jax.random.split(k, 8)
        return dict(
            in_proj_weight=rnd(ks[0], (3 * E, E)),
            in_proj_bias=rnd(ks[1], (3 * E,)),
            lambda_param=jnp.float32(0.8),
            out_proj_weight=rnd(ks[2], (E, E)),
            out_proj_bias=rnd(ks[3], (E,)),
            norm1_weight=jnp.ones((E,), jnp.float32),
            norm1_bias=jnp.zeros((E,), jnp.float32),
            ffn0_weight=rnd(ks[4], (E, E)),
            ffn0_bias=rnd(ks[5], (E,)),
            ffn2_weight=rnd(ks[6], (E, E)),
            ffn2_bias=rnd(ks[7], (E,)),
            norm2_weight=jnp.ones((E,), jnp.float32),
            norm2_bias=jnp.zeros((E,), jnp.float32),
        )

    return dict(
        conv_weight=rnd(keys[0], (E, 3, p, p)),   # nn.Conv2d(3, E, p, stride=p)
        conv_bias=rnd(keys[1], (E,)),
        pos_embed=rnd(keys[2], (1, n_tot, E)),    # zeros in torch init; random here
        temporal_embed=rnd(keys[3], (1, maxlen, E)),
        spatial=enc_params(keys[4]),
        temporal=enc_params(keys[5]),
        out_weight=rnd(keys[6], (output_size, E)),  # nn.Linear(E, output_size)
        out_bias=rnd(keys[7], (output_size,)),
    )


def prepare_params(params):
    """One-time host-side conversion of torch-layout params to kernel layout."""
    E = params["conv_weight"].shape[0]
    h = E // 2
    col_lo = (jnp.arange(E) < h).astype(jnp.float32)
    col_hi = 1.0 - col_lo

    def prep_enc(e):
        W = e["in_proj_weight"]
        bqkv = e["in_proj_bias"]
        wq_t = W[0:E].T
        wk_t = W[E:2 * E].T
        wv_t = W[2 * E:3 * E].T
        bq = bqkv[0:E]
        bk = bqkv[E:2 * E]
        bv = bqkv[2 * E:3 * E]
        return dict(
            # q1/q2 as full-width slabs with the complementary half zeroed so
            # the in-kernel score contractions need no sub-128-lane slices.
            wq1_t=wq_t * col_lo[None, :], bq1=(bq * col_lo).reshape(1, E),
            wq2_t=wq_t * col_hi[None, :], bq2=(bq * col_hi).reshape(1, E),
            wk_t=wk_t, bk=bk.reshape(1, E),
            wv_t=wv_t, bv=bv.reshape(1, E),
            wo_t=e["out_proj_weight"].T, bo=e["out_proj_bias"].reshape(1, E),
            g1=e["norm1_weight"].reshape(1, E),
            bln1=e["norm1_bias"].reshape(1, E),
            w1_t=e["ffn0_weight"].T, b1=e["ffn0_bias"].reshape(1, E),
            w2_t=e["ffn2_weight"].T, b2=e["ffn2_bias"].reshape(1, E),
            g2=e["norm2_weight"].reshape(1, E),
            bln2=e["norm2_bias"].reshape(1, E),
        )

    O = params["out_weight"].shape[0]
    o_pad = max(128, -(-O // 128) * 128)           # lane-dense output width
    wout_t = params["out_weight"].T                # (E, O)
    wout_pad = jnp.zeros((E, o_pad), jnp.float32).at[:, :O].set(wout_t)
    bout_pad = jnp.zeros((1, o_pad), jnp.float32).at[0, :O].set(params["out_bias"])
    lam2 = jnp.stack([params["spatial"]["lambda_param"],
                      params["temporal"]["lambda_param"]]
                     ).reshape(1, 2).astype(jnp.float32)

    return dict(
        pw_t=params["conv_weight"].reshape(E, -1).T,   # Conv2d as (C*p*p, E) GEMM
        pb=params["conv_bias"].reshape(1, E),
        pos=params["pos_embed"][0],                     # (N_tot, E)
        temb=params["temporal_embed"][0],               # (maxlen, E)
        spatial=prep_enc(params["spatial"]),
        temporal=prep_enc(params["temporal"]),
        wout_pad=wout_pad,
        bout_pad=bout_pad,
        lam2=lam2,
    )


if __name__ == "__main__":
    input_size = 16     # spatial H = W
    output_size = 8
    patchnum = 4        # -> 16 patches per frame
    maxlen = 8
    hidden_dim = 32     # 8 heads -> head_dim 4
    B, T, C = 2, 6, 3   # T < maxlen exercises the zero-padding path

    key = jax.random.PRNGKey(0)
    kx, kparam = jax.random.split(key)
    x = jax.random.normal(kx, (B, T, C, input_size, input_size), jnp.float32)
    params = init_params(kparam, input_size, output_size, patchnum, maxlen,
                         hidden_dim)
    kparams = prepare_params(params)

    fwd = jax.jit(functools.partial(vivitae_forward, patchnum=patchnum,
                                    maxlen=maxlen, output_size=output_size))
    out = jax.block_until_ready(fwd(x, kparams))
    assert out.shape == (B, maxlen, output_size), out.shape
    assert bool(jnp.all(jnp.isfinite(out)))
    print("KERNEL_OK")
</pallas_src>

<mosaic_0001>
module attributes {stable_mosaic.version = 11 : i64} {
  func.func @vivitae_kernel(%arg0: i32, %arg1: memref<192x48xf32, #tpu.memory_space<vmem>>, %arg2: memref<32x32xf32, #tpu.memory_space<vmem>>, %arg3: memref<16x16xf32, #tpu.memory_space<vmem>>, %arg4: memref<48x32xf32, #tpu.memory_space<vmem>>, %arg5: memref<1x32xf32, #tpu.memory_space<vmem>>, %arg6: memref<16x32xf32, #tpu.memory_space<vmem>>, %arg7: memref<8x32xf32, #tpu.memory_space<vmem>>, %arg8: memref<32x32xf32, #tpu.memory_space<vmem>>, %arg9: memref<1x32xf32, #tpu.memory_space<vmem>>, %arg10: memref<32x32xf32, #tpu.memory_space<vmem>>, %arg11: memref<1x32xf32, #tpu.memory_space<vmem>>, %arg12: memref<32x32xf32, #tpu.memory_space<vmem>>, %arg13: memref<1x32xf32, #tpu.memory_space<vmem>>, %arg14: memref<32x32xf32, #tpu.memory_space<vmem>>, %arg15: memref<1x32xf32, #tpu.memory_space<vmem>>, %arg16: memref<32x32xf32, #tpu.memory_space<vmem>>, %arg17: memref<1x32xf32, #tpu.memory_space<vmem>>, %arg18: memref<1x32xf32, #tpu.memory_space<vmem>>, %arg19: memref<1x32xf32, #tpu.memory_space<vmem>>, %arg20: memref<32x32xf32, #tpu.memory_space<vmem>>, %arg21: memref<1x32xf32, #tpu.memory_space<vmem>>, %arg22: memref<32x32xf32, #tpu.memory_space<vmem>>, %arg23: memref<1x32xf32, #tpu.memory_space<vmem>>, %arg24: memref<1x32xf32, #tpu.memory_space<vmem>>, %arg25: memref<1x32xf32, #tpu.memory_space<vmem>>, %arg26: memref<32x32xf32, #tpu.memory_space<vmem>>, %arg27: memref<1x32xf32, #tpu.memory_space<vmem>>, %arg28: memref<32x32xf32, #tpu.memory_space<vmem>>, %arg29: memref<1x32xf32, #tpu.memory_space<vmem>>, %arg30: memref<32x32xf32, #tpu.memory_space<vmem>>, %arg31: memref<1x32xf32, #tpu.memory_space<vmem>>, %arg32: memref<32x32xf32, #tpu.memory_space<vmem>>, %arg33: memref<1x32xf32, #tpu.memory_space<vmem>>, %arg34: memref<32x32xf32, #tpu.memory_space<vmem>>, %arg35: memref<1x32xf32, #tpu.memory_space<vmem>>, %arg36: memref<1x32xf32, #tpu.memory_space<vmem>>, %arg37: memref<1x32xf32, #tpu.memory_space<vmem>>, %arg38: memref<32x32xf32, #tpu.memory_space<vmem>>, %arg39: memref<1x32xf32, #tpu.memory_space<vmem>>, %arg40: memref<32x32xf32, #tpu.memory_space<vmem>>, %arg41: memref<1x32xf32, #tpu.memory_space<vmem>>, %arg42: memref<1x32xf32, #tpu.memory_space<vmem>>, %arg43: memref<1x32xf32, #tpu.memory_space<vmem>>, %arg44: memref<32x128xf32, #tpu.memory_space<vmem>>, %arg45: memref<1x128xf32, #tpu.memory_space<vmem>>, %arg46: memref<1x2xf32, #tpu.memory_space<smem>>, %arg47: memref<16x128xf32, #tpu.memory_space<vmem>>, %arg48: memref<2x8x32xf32, #tpu.memory_space<vmem>>) attributes {dimension_semantics = [#tpu.dimension_semantics<arbitrary>], iteration_bounds = array<i64: 1>, scalar_prefetch = 0 : i64, scratch_operands = 1 : i64, tpu.core_type = #tpu.core_type<tc>, window_params = [{pipeline_mode = #tpu.pipeline_mode<synchronous>, transform_indices = @transform_0, window_bounds = array<i64: 192, 48>}, {pipeline_mode = #tpu.pipeline_mode<synchronous>, transform_indices = @transform_1, window_bounds = array<i64: 32, 32>}, {pipeline_mode = #tpu.pipeline_mode<synchronous>, transform_indices = @transform_2, window_bounds = array<i64: 16, 16>}, {pipeline_mode = #tpu.pipeline_mode<synchronous>, transform_indices = @transform_3, window_bounds = array<i64: 48, 32>}, {pipeline_mode = #tpu.pipeline_mode<synchronous>, transform_indices = @transform_4, window_bounds = array<i64: 1, 32>}, {pipeline_mode = #tpu.pipeline_mode<synchronous>, transform_indices = @transform_5, window_bounds = array<i64: 16, 32>}, {pipeline_mode = #tpu.pipeline_mode<synchronous>, transform_indices = @transform_6, window_bounds = array<i64: 8, 32>}, {pipeline_mode = #tpu.pipeline_mode<synchronous>, transform_indices = @transform_7, window_bounds = array<i64: 32, 32>}, {pipeline_mode = #tpu.pipeline_mode<synchronous>, transform_indices = @transform_8, window_bounds = array<i64: 1, 32>}, {pipeline_mode = #tpu.pipeline_mode<synchronous>, transform_indices = @transform_9, window_bounds = array<i64: 32, 32>}, {pipeline_mode = #tpu.pipeline_mode<synchronous>, transform_indices = @transform_10, window_bounds = array<i64: 1, 32>}, {pipeline_mode = #tpu.pipeline_mode<synchronous>, transform_indices = @transform_11, window_bounds = array<i64: 32, 32>}, {pipeline_mode = #tpu.pipeline_mode<synchronous>, transform_indices = @transform_12, window_bounds = array<i64: 1, 32>}, {pipeline_mode = #tpu.pipeline_mode<synchronous>, transform_indices = @transform_13, window_bounds = array<i64: 32, 32>}, {pipeline_mode = #tpu.pipeline_mode<synchronous>, transform_indices = @transform_14, window_bounds = array<i64: 1, 32>}, {pipeline_mode = #tpu.pipeline_mode<synchronous>, transform_indices = @transform_15, window_bounds = array<i64: 32, 32>}, {pipeline_mode = #tpu.pipeline_mode<synchronous>, transform_indices = @transform_16, window_bounds = array<i64: 1, 32>}, {pipeline_mode = #tpu.pipeline_mode<synchronous>, transform_indices = @transform_17, window_bounds = array<i64: 1, 32>}, {pipeline_mode = #tpu.pipeline_mode<synchronous>, transform_indices = @transform_18, window_bounds = array<i64: 1, 32>}, {pipeline_mode = #tpu.pipeline_mode<synchronous>, transform_indices = @transform_19, window_bounds = array<i64: 32, 32>}, {pipeline_mode = #tpu.pipeline_mode<synchronous>, transform_indices = @transform_20, window_bounds = array<i64: 1, 32>}, {pipeline_mode = #tpu.pipeline_mode<synchronous>, transform_indices = @transform_21, window_bounds = array<i64: 32, 32>}, {pipeline_mode = #tpu.pipeline_mode<synchronous>, transform_indices = @transform_22, window_bounds = array<i64: 1, 32>}, {pipeline_mode = #tpu.pipeline_mode<synchronous>, transform_indices = @transform_23, window_bounds = array<i64: 1, 32>}, {pipeline_mode = #tpu.pipeline_mode<synchronous>, transform_indices = @transform_24, window_bounds = array<i64: 1, 32>}, {pipeline_mode = #tpu.pipeline_mode<synchronous>, transform_indices = @transform_25, window_bounds = array<i64: 32, 32>}, {pipeline_mode = #tpu.pipeline_mode<synchronous>, transform_indices = @transform_26, window_bounds = array<i64: 1, 32>}, {pipeline_mode = #tpu.pipeline_mode<synchronous>, transform_indices = @transform_27, window_bounds = array<i64: 32, 32>}, {pipeline_mode = #tpu.pipeline_mode<synchronous>, transform_indices = @transform_28, window_bounds = array<i64: 1, 32>}, {pipeline_mode = #tpu.pipeline_mode<synchronous>, transform_indices = @transform_29, window_bounds = array<i64: 32, 32>}, {pipeline_mode = #tpu.pipeline_mode<synchronous>, transform_indices = @transform_30, window_bounds = array<i64: 1, 32>}, {pipeline_mode = #tpu.pipeline_mode<synchronous>, transform_indices = @transform_31, window_bounds = array<i64: 32, 32>}, {pipeline_mode = #tpu.pipeline_mode<synchronous>, transform_indices = @transform_32, window_bounds = array<i64: 1, 32>}, {pipeline_mode = #tpu.pipeline_mode<synchronous>, transform_indices = @transform_33, window_bounds = array<i64: 32, 32>}, {pipeline_mode = #tpu.pipeline_mode<synchronous>, transform_indices = @transform_34, window_bounds = array<i64: 1, 32>}, {pipeline_mode = #tpu.pipeline_mode<synchronous>, transform_indices = @transform_35, window_bounds = array<i64: 1, 32>}, {pipeline_mode = #tpu.pipeline_mode<synchronous>, transform_indices = @transform_36, window_bounds = array<i64: 1, 32>}, {pipeline_mode = #tpu.pipeline_mode<synchronous>, transform_indices = @transform_37, window_bounds = array<i64: 32, 32>}, {pipeline_mode = #tpu.pipeline_mode<synchronous>, transform_indices = @transform_38, window_bounds = array<i64: 1, 32>}, {pipeline_mode = #tpu.pipeline_mode<synchronous>, transform_indices = @transform_39, window_bounds = array<i64: 32, 32>}, {pipeline_mode = #tpu.pipeline_mode<synchronous>, transform_indices = @transform_40, window_bounds = array<i64: 1, 32>}, {pipeline_mode = #tpu.pipeline_mode<synchronous>, transform_indices = @transform_41, window_bounds = array<i64: 1, 32>}, {pipeline_mode = #tpu.pipeline_mode<synchronous>, transform_indices = @transform_42, window_bounds = array<i64: 1, 32>}, {pipeline_mode = #tpu.pipeline_mode<synchronous>, transform_indices = @transform_43, window_bounds = array<i64: 32, 128>}, {pipeline_mode = #tpu.pipeline_mode<synchronous>, transform_indices = @transform_44, window_bounds = array<i64: 1, 128>}, {transform_indices = @transform_45, window_bounds = array<i64: 1, 2>}, {pipeline_mode = #tpu.pipeline_mode<synchronous>, transform_indices = @transform_46, window_bounds = array<i64: 16, 128>}]} {
    %c0 = arith.constant 0 : index
    %c0_0 = arith.constant 0 : index
    %0 = vector.load %arg1[%c0, %c0_0] : memref<192x48xf32, #tpu.memory_space<vmem>>, vector<192x48xf32>
    %c0_1 = arith.constant 0 : index
    %c0_2 = arith.constant 0 : index
    %1 = vector.load %arg4[%c0_1, %c0_2] : memref<48x32xf32, #tpu.memory_space<vmem>>, vector<48x32xf32>
    %cst = arith.constant dense<0.000000e+00> : vector<192x32xf32>
    %2 = tpu.matmul %0, %1, %cst {dimension_numbers = #tpu.dot_dimension_numbers<[1], [0], [0], [1], [0, 0, 1, 1], [], []>} : vector<192x48xf32>, vector<48x32xf32>, vector<192x32xf32> -> vector<192x32xf32>
    %c0_3 = arith.constant 0 : index
    %c0_4 = arith.constant 0 : index
    %3 = vector.load %arg5[%c0_3, %c0_4] : memref<1x32xf32, #tpu.memory_space<vmem>>, vector<1x32xf32>
    %4 = vector.broadcast %3 : vector<1x32xf32> to vector<192x32xf32>
    %5 = arith.addf %2, %4 : vector<192x32xf32>
    %6 = vector.shape_cast %5 : vector<192x32xf32> to vector<12x16x32xf32>
    %c0_5 = arith.constant 0 : index
    %c0_6 = arith.constant 0 : index
    %7 = vector.load %arg6[%c0_5, %c0_6] : memref<16x32xf32, #tpu.memory_space<vmem>>, vector<16x32xf32>
    %8 = vector.shape_cast %7 : vector<16x32xf32> to vector<1x16x32xf32>
    %9 = vector.broadcast %8 : vector<1x16x32xf32> to vector<12x16x32xf32>
    %10 = arith.addf %6, %9 : vector<12x16x32xf32>
    %c0_7 = arith.constant 0 : index
    %c0_8 = arith.constant 0 : index
    %11 = memref.load %arg46[%c0_7, %c0_8] : memref<1x2xf32, #tpu.memory_space<smem>>
    %c0_9 = arith.constant 0 : index
    %c0_10 = arith.constant 0 : index
    %12 = vector.load %arg2[%c0_9, %c0_10] : memref<32x32xf32, #tpu.memory_space<vmem>>, vector<32x32xf32>
    %13 = vector.shape_cast %10 : vector<12x16x32xf32> to vector<192x32xf32>
    %c0_11 = arith.constant 0 : index
    %c0_12 = arith.constant 0 : index
    %14 = vector.load %arg8[%c0_11, %c0_12] : memref<32x32xf32, #tpu.memory_space<vmem>>, vector<32x32xf32>
    %cst_13 = arith.constant dense<0.000000e+00> : vector<192x32xf32>
    %15 = tpu.matmul %13, %14, %cst_13 {dimension_numbers = #tpu.dot_dimension_numbers<[1], [0], [0], [1], [0, 0, 1, 1], [], []>} : vector<192x32xf32>, vector<32x32xf32>, vector<192x32xf32> -> vector<192x32xf32>
    %c0_14 = arith.constant 0 : index
    %c0_15 = arith.constant 0 : index
    %16 = vector.load %arg9[%c0_14, %c0_15] : memref<1x32xf32, #tpu.memory_space<vmem>>, vector<1x32xf32>
    %17 = vector.broadcast %16 : vector<1x32xf32> to vector<192x32xf32>
    %18 = arith.addf %15, %17 : vector<192x32xf32>
    %19 = vector.shape_cast %18 : vector<192x32xf32> to vector<12x16x32xf32>
    %c0_16 = arith.constant 0 : index
    %c0_17 = arith.constant 0 : index
    %20 = vector.load %arg10[%c0_16, %c0_17] : memref<32x32xf32, #tpu.memory_space<vmem>>, vector<32x32xf32>
    %cst_18 = arith.constant dense<0.000000e+00> : vector<192x32xf32>
    %21 = tpu.matmul %13, %20, %cst_18 {dimension_numbers = #tpu.dot_dimension_numbers<[1], [0], [0], [1], [0, 0, 1, 1], [], []>} : vector<192x32xf32>, vector<32x32xf32>, vector<192x32xf32> -> vector<192x32xf32>
    %c0_19 = arith.constant 0 : index
    %c0_20 = arith.constant 0 : index
    %22 = vector.load %arg11[%c0_19, %c0_20] : memref<1x32xf32, #tpu.memory_space<vmem>>, vector<1x32xf32>
    %23 = vector.broadcast %22 : vector<1x32xf32> to vector<192x32xf32>
    %24 = arith.addf %21, %23 : vector<192x32xf32>
    %25 = vector.shape_cast %24 : vector<192x32xf32> to vector<12x16x32xf32>
    %c0_21 = arith.constant 0 : index
    %c0_22 = arith.constant 0 : index
    %26 = vector.load %arg12[%c0_21, %c0_22] : memref<32x32xf32, #tpu.memory_space<vmem>>, vector<32x32xf32>
    %cst_23 = arith.constant dense<0.000000e+00> : vector<192x32xf32>
    %27 = tpu.matmul %13, %26, %cst_23 {dimension_numbers = #tpu.dot_dimension_numbers<[1], [0], [0], [1], [0, 0, 1, 1], [], []>} : vector<192x32xf32>, vector<32x32xf32>, vector<192x32xf32> -> vector<192x32xf32>
    %c0_24 = arith.constant 0 : index
    %c0_25 = arith.constant 0 : index
    %28 = vector.load %arg13[%c0_24, %c0_25] : memref<1x32xf32, #tpu.memory_space<vmem>>, vector<1x32xf32>
    %29 = vector.broadcast %28 : vector<1x32xf32> to vector<192x32xf32>
    %30 = arith.addf %27, %29 : vector<192x32xf32>
    %31 = vector.shape_cast %30 : vector<192x32xf32> to vector<12x16x32xf32>
    %c0_26 = arith.constant 0 : index
    %c0_27 = arith.constant 0 : index
    %32 = vector.load %arg14[%c0_26, %c0_27] : memref<32x32xf32, #tpu.memory_space<vmem>>, vector<32x32xf32>
    %cst_28 = arith.constant dense<0.000000e+00> : vector<192x32xf32>
    %33 = tpu.matmul %13, %32, %cst_28 {dimension_numbers = #tpu.dot_dimension_numbers<[1], [0], [0], [1], [0, 0, 1, 1], [], []>} : vector<192x32xf32>, vector<32x32xf32>, vector<192x32xf32> -> vector<192x32xf32>
    %c0_29 = arith.constant 0 : index
    %c0_30 = arith.constant 0 : index
    %34 = vector.load %arg15[%c0_29, %c0_30] : memref<1x32xf32, #tpu.memory_space<vmem>>, vector<1x32xf32>
    %35 = vector.broadcast %34 : vector<1x32xf32> to vector<192x32xf32>
    %36 = arith.addf %33, %35 : vector<192x32xf32>
    %37 = vector.shape_cast %36 : vector<192x32xf32> to vector<12x16x32xf32>
    "tpu.trace_start"() <{level = 10 : i32, message = "gqd,gkd->gqk"}> : () -> ()
    %cst_31 = arith.constant dense<0.000000e+00> : vector<12x16x16xf32>
    %38 = tpu.matmul %19, %31, %cst_31 {dimension_numbers = #tpu.dot_dimension_numbers<[2], [2], [1], [1], [0, 0, 0, 1, 1, 1], [0], [0]>} : vector<12x16x32xf32>, vector<12x16x32xf32>, vector<12x16x16xf32> -> vector<12x16x16xf32>
    %cst_32 = arith.constant dense<0.000000e+00> : vector<12x16x16xf32>
    %39 = tpu.matmul %25, %31, %cst_32 {dimension_numbers = #tpu.dot_dimension_numbers<[2], [2], [1], [1], [0, 0, 0, 1, 1, 1], [0], [0]>} : vector<12x16x32xf32>, vector<12x16x32xf32>, vector<12x16x16xf32> -> vector<12x16x16xf32>
    "tpu.trace_stop"() : () -> ()
    %40 = tpu.concatenate %38, %39 in 0 : vector<12x16x16xf32>, vector<12x16x16xf32> -> vector<24x16x16xf32>
    %cst_33 = arith.constant 5.000000e-01 : f32
    %41 = vector.broadcast %cst_33 : f32 to vector<24x16x16xf32>
    %42 = arith.mulf %40, %41 : vector<24x16x16xf32>
    %cst_34 = arith.constant dense<0xFF800000> : vector<24x16xf32>
    %43 = vector.multi_reduction <maximumf>, %42, %cst_34 [2] : vector<24x16x16xf32> to vector<24x16xf32>
    %44 = vector.shape_cast %43 : vector<24x16xf32> to vector<24x16x1xf32>
    %45 = vector.broadcast %44 : vector<24x16x1xf32> to vector<24x16x16xf32>
    %46 = arith.subf %42, %45 : vector<24x16x16xf32>
    %47 = math.exp %46 : vector<24x16x16xf32>
    %cst_35 = arith.constant dense<0.000000e+00> : vector<24x16xf32>
    %48 = vector.multi_reduction <add>, %47, %cst_35 [2] : vector<24x16x16xf32> to vector<24x16xf32>
    %49 = vector.shape_cast %48 : vector<24x16xf32> to vector<24x16x1xf32>
    %50 = vector.broadcast %49 : vector<24x16x1xf32> to vector<24x16x16xf32>
    %51 = arith.divf %47, %50 : vector<24x16x16xf32>
    %52 = vector.extract_strided_slice %51 {offsets = [0, 0, 0], sizes = [12, 16, 16], strides = [1, 1, 1]} : vector<24x16x16xf32> to vector<12x16x16xf32>
    %53 = vector.extract_strided_slice %51 {offsets = [12, 0, 0], sizes = [12, 16, 16], strides = [1, 1, 1]} : vector<24x16x16xf32> to vector<12x16x16xf32>
    %54 = vector.broadcast %11 : f32 to vector<12x16x16xf32>
    %55 = arith.mulf %54, %53 : vector<12x16x16xf32>
    %56 = arith.subf %52, %55 : vector<12x16x16xf32>
    "tpu.trace_start"() <{level = 10 : i32, message = "gqk,gkd->gqd"}> : () -> ()
    %cst_36 = arith.constant dense<0.000000e+00> : vector<12x16x32xf32>
    %57 = tpu.matmul %56, %37, %cst_36 {dimension_numbers = #tpu.dot_dimension_numbers<[2], [1], [1], [2], [0, 0, 0, 1, 1, 2], [0], [0]>} : vector<12x16x16xf32>, vector<12x16x32xf32>, vector<12x16x32xf32> -> vector<12x16x32xf32>
    "tpu.trace_stop"() : () -> ()
    %58 = vector.shape_cast %57 : vector<12x16x32xf32> to vector<6x32x32xf32>
    %59 = vector.shape_cast %12 : vector<32x32xf32> to vector<1x32x32xf32>
    %60 = vector.broadcast %59 : vector<1x32x32xf32> to vector<6x32x32xf32>
    "tpu.trace_start"() <{level = 10 : i32, message = "frc,fce->fre"}> : () -> ()
    %cst_37 = arith.constant dense<0.000000e+00> : vector<6x32x32xf32>
    %61 = tpu.matmul %60, %58, %cst_37 {dimension_numbers = #tpu.dot_dimension_numbers<[2], [1], [1], [2], [0, 0, 0, 1, 1, 2], [0], [0]>} : vector<6x32x32xf32>, vector<6x32x32xf32>, vector<6x32x32xf32> -> vector<6x32x32xf32>
    "tpu.trace_stop"() : () -> ()
    %62 = vector.shape_cast %61 : vector<6x32x32xf32> to vector<192x32xf32>
    %c0_38 = arith.constant 0 : index
    %c0_39 = arith.constant 0 : index
    %63 = vector.load %arg16[%c0_38, %c0_39] : memref<32x32xf32, #tpu.memory_space<vmem>>, vector<32x32xf32>
    %cst_40 = arith.constant dense<0.000000e+00> : vector<192x32xf32>
    %64 = tpu.matmul %62, %63, %cst_40 {dimension_numbers = #tpu.dot_dimension_numbers<[1], [0], [0], [1], [0, 0, 1, 1], [], []>} : vector<192x32xf32>, vector<32x32xf32>, vector<192x32xf32> -> vector<192x32xf32>
    %c0_41 = arith.constant 0 : index
    %c0_42 = arith.constant 0 : index
    %65 = vector.load %arg17[%c0_41, %c0_42] : memref<1x32xf32, #tpu.memory_space<vmem>>, vector<1x32xf32>
    %66 = vector.broadcast %65 : vector<1x32xf32> to vector<192x32xf32>
    %67 = arith.addf %64, %66 : vector<192x32xf32>
    %68 = arith.addf %13, %67 : vector<192x32xf32>
    %c0_43 = arith.constant 0 : index
    %c0_44 = arith.constant 0 : index
    %69 = vector.load %arg18[%c0_43, %c0_44] : memref<1x32xf32, #tpu.memory_space<vmem>>, vector<1x32xf32>
    %c0_45 = arith.constant 0 : index
    %c0_46 = arith.constant 0 : index
    %70 = vector.load %arg19[%c0_45, %c0_46] : memref<1x32xf32, #tpu.memory_space<vmem>>, vector<1x32xf32>
    %cst_47 = arith.constant dense<0.000000e+00> : vector<192xf32>
    %71 = vector.multi_reduction <add>, %68, %cst_47 [1] : vector<192x32xf32> to vector<192xf32>
    %72 = vector.shape_cast %71 : vector<192xf32> to vector<192x1xf32>
    %cst_48 = arith.constant 3.200000e+01 : f32
    %73 = vector.broadcast %cst_48 : f32 to vector<192x1xf32>
    %74 = arith.divf %72, %73 : vector<192x1xf32>
    %75 = vector.broadcast %74 : vector<192x1xf32> to vector<192x32xf32>
    %76 = arith.subf %68, %75 : vector<192x32xf32>
    %77 = arith.mulf %76, %76 : vector<192x32xf32>
    %cst_49 = arith.constant dense<0.000000e+00> : vector<192xf32>
    %78 = vector.multi_reduction <add>, %77, %cst_49 [1] : vector<192x32xf32> to vector<192xf32>
    %79 = vector.shape_cast %78 : vector<192xf32> to vector<192x1xf32>
    %cst_50 = arith.constant 3.200000e+01 : f32
    %80 = vector.broadcast %cst_50 : f32 to vector<192x1xf32>
    %81 = arith.divf %79, %80 : vector<192x1xf32>
    %cst_51 = arith.constant 9.99999974E-6 : f32
    %82 = vector.broadcast %cst_51 : f32 to vector<192x1xf32>
    %83 = arith.addf %81, %82 : vector<192x1xf32>
    %84 = math.rsqrt %83 : vector<192x1xf32>
    %85 = vector.broadcast %84 : vector<192x1xf32> to vector<192x32xf32>
    %86 = arith.mulf %76, %85 : vector<192x32xf32>
    %87 = vector.broadcast %69 : vector<1x32xf32> to vector<192x32xf32>
    %88 = arith.mulf %86, %87 : vector<192x32xf32>
    %89 = vector.broadcast %70 : vector<1x32xf32> to vector<192x32xf32>
    %90 = arith.addf %88, %89 : vector<192x32xf32>
    %c0_52 = arith.constant 0 : index
    %c0_53 = arith.constant 0 : index
    %91 = vector.load %arg20[%c0_52, %c0_53] : memref<32x32xf32, #tpu.memory_space<vmem>>, vector<32x32xf32>
    %cst_54 = arith.constant dense<0.000000e+00> : vector<192x32xf32>
    %92 = tpu.matmul %90, %91, %cst_54 {dimension_numbers = #tpu.dot_dimension_numbers<[1], [0], [0], [1], [0, 0, 1, 1], [], []>} : vector<192x32xf32>, vector<32x32xf32>, vector<192x32xf32> -> vector<192x32xf32>
    %c0_55 = arith.constant 0 : index
    %c0_56 = arith.constant 0 : index
    %93 = vector.load %arg21[%c0_55, %c0_56] : memref<1x32xf32, #tpu.memory_space<vmem>>, vector<1x32xf32>
    %94 = vector.broadcast %93 : vector<1x32xf32> to vector<192x32xf32>
    %95 = arith.addf %92, %94 : vector<192x32xf32>
    %cst_57 = arith.constant 0.000000e+00 : f32
    %96 = vector.broadcast %cst_57 : f32 to vector<192x32xf32>
    %97 = arith.maximumf %95, %96 : vector<192x32xf32>
    %c0_58 = arith.constant 0 : index
    %c0_59 = arith.constant 0 : index
    %98 = vector.load %arg22[%c0_58, %c0_59] : memref<32x32xf32, #tpu.memory_space<vmem>>, vector<32x32xf32>
    %cst_60 = arith.constant dense<0.000000e+00> : vector<192x32xf32>
    %99 = tpu.matmul %97, %98, %cst_60 {dimension_numbers = #tpu.dot_dimension_numbers<[1], [0], [0], [1], [0, 0, 1, 1], [], []>} : vector<192x32xf32>, vector<32x32xf32>, vector<192x32xf32> -> vector<192x32xf32>
    %c0_61 = arith.constant 0 : index
    %c0_62 = arith.constant 0 : index
    %100 = vector.load %arg23[%c0_61, %c0_62] : memref<1x32xf32, #tpu.memory_space<vmem>>, vector<1x32xf32>
    %101 = vector.broadcast %100 : vector<1x32xf32> to vector<192x32xf32>
    %102 = arith.addf %99, %101 : vector<192x32xf32>
    %103 = arith.addf %90, %102 : vector<192x32xf32>
    %c0_63 = arith.constant 0 : index
    %c0_64 = arith.constant 0 : index
    %104 = vector.load %arg24[%c0_63, %c0_64] : memref<1x32xf32, #tpu.memory_space<vmem>>, vector<1x32xf32>
    %c0_65 = arith.constant 0 : index
    %c0_66 = arith.constant 0 : index
    %105 = vector.load %arg25[%c0_65, %c0_66] : memref<1x32xf32, #tpu.memory_space<vmem>>, vector<1x32xf32>
    %cst_67 = arith.constant dense<0.000000e+00> : vector<192xf32>
    %106 = vector.multi_reduction <add>, %103, %cst_67 [1] : vector<192x32xf32> to vector<192xf32>
    %107 = vector.shape_cast %106 : vector<192xf32> to vector<192x1xf32>
    %cst_68 = arith.constant 3.200000e+01 : f32
    %108 = vector.broadcast %cst_68 : f32 to vector<192x1xf32>
    %109 = arith.divf %107, %108 : vector<192x1xf32>
    %110 = vector.broadcast %109 : vector<192x1xf32> to vector<192x32xf32>
    %111 = arith.subf %103, %110 : vector<192x32xf32>
    %112 = arith.mulf %111, %111 : vector<192x32xf32>
    %cst_69 = arith.constant dense<0.000000e+00> : vector<192xf32>
    %113 = vector.multi_reduction <add>, %112, %cst_69 [1] : vector<192x32xf32> to vector<192xf32>
    %114 = vector.shape_cast %113 : vector<192xf32> to vector<192x1xf32>
    %cst_70 = arith.constant 3.200000e+01 : f32
    %115 = vector.broadcast %cst_70 : f32 to vector<192x1xf32>
    %116 = arith.divf %114, %115 : vector<192x1xf32>
    %cst_71 = arith.constant 9.99999974E-6 : f32
    %117 = vector.broadcast %cst_71 : f32 to vector<192x1xf32>
    %118 = arith.addf %116, %117 : vector<192x1xf32>
    %119 = math.rsqrt %118 : vector<192x1xf32>
    %120 = vector.broadcast %119 : vector<192x1xf32> to vector<192x32xf32>
    %121 = arith.mulf %111, %120 : vector<192x32xf32>
    %122 = vector.broadcast %104 : vector<1x32xf32> to vector<192x32xf32>
    %123 = arith.mulf %121, %122 : vector<192x32xf32>
    %124 = vector.broadcast %105 : vector<1x32xf32> to vector<192x32xf32>
    %125 = arith.addf %123, %124 : vector<192x32xf32>
    %126 = vector.shape_cast %125 : vector<192x32xf32> to vector<12x16x32xf32>
    %cst_72 = arith.constant dense<0.000000e+00> : vector<12x32xf32>
    %127 = vector.multi_reduction <add>, %126, %cst_72 [1] : vector<12x16x32xf32> to vector<12x32xf32>
    %cst_73 = arith.constant 1.600000e+01 : f32
    %128 = vector.broadcast %cst_73 : f32 to vector<12x32xf32>
    %129 = arith.divf %127, %128 : vector<12x32xf32>
    %cst_74 = arith.constant 0.000000e+00 : f32
    %130 = vector.broadcast %cst_74 : f32 to vector<2x8x32xf32>
    %c0_75 = arith.constant 0 : index
    %c0_76 = arith.constant 0 : index
    %c0_77 = arith.constant 0 : index
    %131 = vector.load %arg48[%c0_75, %c0_76, %c0_77] : memref<2x8x32xf32, #tpu.memory_space<vmem>>, vector<2x8x32xf32>
    tpu.vector_store %arg48[%c0_75, %c0_76, %c0_77], %130 {strides = array<i32>} : memref<2x8x32xf32, #tpu.memory_space<vmem>>, vector<2x8x32xf32>,
    %c0_78 = arith.constant 0 : index
    %c0_79 = arith.constant 0 : index
    %132 = vector.load %arg7[%c0_78, %c0_79] : memref<8x32xf32, #tpu.memory_space<vmem>>, vector<8x32xf32>
    %133 = vector.extract_strided_slice %129 {offsets = [0, 0], sizes = [2, 32], strides = [1, 1]} : vector<12x32xf32> to vector<2x32xf32>
    %134 = vector.extract_strided_slice %132 {offsets = [0, 0], sizes = [1, 32], strides = [1, 1]} : vector<8x32xf32> to vector<1x32xf32>
    %135 = vector.broadcast %134 : vector<1x32xf32> to vector<2x32xf32>
    %136 = arith.addf %133, %135 : vector<2x32xf32>
    %137 = vector.shape_cast %136 : vector<2x32xf32> to vector<2x1x32xf32>
    %c0_80 = arith.constant 0 : index
    %c0_81 = arith.constant 0 : index
    %c0_82 = arith.constant 0 : index
    %138 = vector.load %arg48[%c0_80, %c0_81, %c0_82] : memref<2x8x32xf32, #tpu.memory_space<vmem>>, vector<2x1x32xf32>
    tpu.vector_store %arg48[%c0_80, %c0_81, %c0_82], %137 {strides = array<i32>} : memref<2x8x32xf32, #tpu.memory_space<vmem>>, vector<2x1x32xf32>,
    %139 = vector.extract_strided_slice %129 {offsets = [2, 0], sizes = [2, 32], strides = [1, 1]} : vector<12x32xf32> to vector<2x32xf32>
    %140 = vector.extract_strided_slice %132 {offsets = [1, 0], sizes = [1, 32], strides = [1, 1]} : vector<8x32xf32> to vector<1x32xf32>
    %141 = vector.broadcast %140 : vector<1x32xf32> to vector<2x32xf32>
    %142 = arith.addf %139, %141 : vector<2x32xf32>
    %143 = vector.shape_cast %142 : vector<2x32xf32> to vector<2x1x32xf32>
    %c0_83 = arith.constant 0 : index
    %c1 = arith.constant 1 : index
    %c0_84 = arith.constant 0 : index
    %144 = vector.load %arg48[%c0_83, %c1, %c0_84] : memref<2x8x32xf32, #tpu.memory_space<vmem>>, vector<2x1x32xf32>
    tpu.vector_store %arg48[%c0_83, %c1, %c0_84], %143 {strides = array<i32>} : memref<2x8x32xf32, #tpu.memory_space<vmem>>, vector<2x1x32xf32>,
    %145 = vector.extract_strided_slice %129 {offsets = [4, 0], sizes = [2, 32], strides = [1, 1]} : vector<12x32xf32> to vector<2x32xf32>
    %146 = vector.extract_strided_slice %132 {offsets = [2, 0], sizes = [1, 32], strides = [1, 1]} : vector<8x32xf32> to vector<1x32xf32>
    %147 = vector.broadcast %146 : vector<1x32xf32> to vector<2x32xf32>
    %148 = arith.addf %145, %147 : vector<2x32xf32>
    %149 = vector.shape_cast %148 : vector<2x32xf32> to vector<2x1x32xf32>
    %c0_85 = arith.constant 0 : index
    %c2 = arith.constant 2 : index
    %c0_86 = arith.constant 0 : index
    %150 = vector.load %arg48[%c0_85, %c2, %c0_86] : memref<2x8x32xf32, #tpu.memory_space<vmem>>, vector<2x1x32xf32>
    tpu.vector_store %arg48[%c0_85, %c2, %c0_86], %149 {strides = array<i32>} : memref<2x8x32xf32, #tpu.memory_space<vmem>>, vector<2x1x32xf32>,
    %151 = vector.extract_strided_slice %129 {offsets = [6, 0], sizes = [2, 32], strides = [1, 1]} : vector<12x32xf32> to vector<2x32xf32>
    %152 = vector.extract_strided_slice %132 {offsets = [3, 0], sizes = [1, 32], strides = [1, 1]} : vector<8x32xf32> to vector<1x32xf32>
    %153 = vector.broadcast %152 : vector<1x32xf32> to vector<2x32xf32>
    %154 = arith.addf %151, %153 : vector<2x32xf32>
    %155 = vector.shape_cast %154 : vector<2x32xf32> to vector<2x1x32xf32>
    %c0_87 = arith.constant 0 : index
    %c3 = arith.constant 3 : index
    %c0_88 = arith.constant 0 : index
    %156 = vector.load %arg48[%c0_87, %c3, %c0_88] : memref<2x8x32xf32, #tpu.memory_space<vmem>>, vector<2x1x32xf32>
    tpu.vector_store %arg48[%c0_87, %c3, %c0_88], %155 {strides = array<i32>} : memref<2x8x32xf32, #tpu.memory_space<vmem>>, vector<2x1x32xf32>,
    %157 = vector.extract_strided_slice %129 {offsets = [8, 0], sizes = [2, 32], strides = [1, 1]} : vector<12x32xf32> to vector<2x32xf32>
    %158 = vector.extract_strided_slice %132 {offsets = [4, 0], sizes = [1, 32], strides = [1, 1]} : vector<8x32xf32> to vector<1x32xf32>
    %159 = vector.broadcast %158 : vector<1x32xf32> to vector<2x32xf32>
    %160 = arith.addf %157, %159 : vector<2x32xf32>
    %161 = vector.shape_cast %160 : vector<2x32xf32> to vector<2x1x32xf32>
    %c0_89 = arith.constant 0 : index
    %c4 = arith.constant 4 : index
    %c0_90 = arith.constant 0 : index
    %162 = vector.load %arg48[%c0_89, %c4, %c0_90] : memref<2x8x32xf32, #tpu.memory_space<vmem>>, vector<2x1x32xf32>
    tpu.vector_store %arg48[%c0_89, %c4, %c0_90], %161 {strides = array<i32>} : memref<2x8x32xf32, #tpu.memory_space<vmem>>, vector<2x1x32xf32>,
    %163 = vector.extract_strided_slice %129 {offsets = [10, 0], sizes = [2, 32], strides = [1, 1]} : vector<12x32xf32> to vector<2x32xf32>
    %164 = vector.extract_strided_slice %132 {offsets = [5, 0], sizes = [1, 32], strides = [1, 1]} : vector<8x32xf32> to vector<1x32xf32>
    %165 = vector.broadcast %164 : vector<1x32xf32> to vector<2x32xf32>
    %166 = arith.addf %163, %165 : vector<2x32xf32>
    %167 = vector.shape_cast %166 : vector<2x32xf32> to vector<2x1x32xf32>
    %c0_91 = arith.constant 0 : index
    %c5 = arith.constant 5 : index
    %c0_92 = arith.constant 0 : index
    %168 = vector.load %arg48[%c0_91, %c5, %c0_92] : memref<2x8x32xf32, #tpu.memory_space<vmem>>, vector<2x1x32xf32>
    tpu.vector_store %arg48[%c0_91, %c5, %c0_92], %167 {strides = array<i32>} : memref<2x8x32xf32, #tpu.memory_space<vmem>>, vector<2x1x32xf32>,
    %c0_93 = arith.constant 0 : index
    %c0_94 = arith.constant 0 : index
    %c0_95 = arith.constant 0 : index
    %169 = vector.load %arg48[%c0_93, %c0_94, %c0_95] : memref<2x8x32xf32, #tpu.memory_space<vmem>>, vector<2x8x32xf32>
    %c0_96 = arith.constant 0 : index
    %c1_97 = arith.constant 1 : index
    %170 = memref.load %arg46[%c0_96, %c1_97] : memref<1x2xf32, #tpu.memory_space<smem>>
    %c0_98 = arith.constant 0 : index
    %c0_99 = arith.constant 0 : index
    %171 = vector.load %arg3[%c0_98, %c0_99] : memref<16x16xf32, #tpu.memory_space<vmem>>, vector<16x16xf32>
    %172 = vector.shape_cast %169 : vector<2x8x32xf32> to vector<16x32xf32>
    %c0_100 = arith.constant 0 : index
    %c0_101 = arith.constant 0 : index
    %173 = vector.load %arg26[%c0_100, %c0_101] : memref<32x32xf32, #tpu.memory_space<vmem>>, vector<32x32xf32>
    %cst_102 = arith.constant dense<0.000000e+00> : vector<16x32xf32>
    %174 = tpu.matmul %172, %173, %cst_102 {dimension_numbers = #tpu.dot_dimension_numbers<[1], [0], [0], [1], [0, 0, 1, 1], [], []>} : vector<16x32xf32>, vector<32x32xf32>, vector<16x32xf32> -> vector<16x32xf32>
    %c0_103 = arith.constant 0 : index
    %c0_104 = arith.constant 0 : index
    %175 = vector.load %arg27[%c0_103, %c0_104] : memref<1x32xf32, #tpu.memory_space<vmem>>, vector<1x32xf32>
    %176 = vector.broadcast %175 : vector<1x32xf32> to vector<16x32xf32>
    %177 = arith.addf %174, %176 : vector<16x32xf32>
    %178 = vector.shape_cast %177 : vector<16x32xf32> to vector<2x8x32xf32>
    %c0_105 = arith.constant 0 : index
    %c0_106 = arith.constant 0 : index
    %179 = vector.load %arg28[%c0_105, %c0_106] : memref<32x32xf32, #tpu.memory_space<vmem>>, vector<32x32xf32>
    %cst_107 = arith.constant dense<0.000000e+00> : vector<16x32xf32>
    %180 = tpu.matmul %172, %179, %cst_107 {dimension_numbers = #tpu.dot_dimension_numbers<[1], [0], [0], [1], [0, 0, 1, 1], [], []>} : vector<16x32xf32>, vector<32x32xf32>, vector<16x32xf32> -> vector<16x32xf32>
    %c0_108 = arith.constant 0 : index
    %c0_109 = arith.constant 0 : index
    %181 = vector.load %arg29[%c0_108, %c0_109] : memref<1x32xf32, #tpu.memory_space<vmem>>, vector<1x32xf32>
    %182 = vector.broadcast %181 : vector<1x32xf32> to vector<16x32xf32>
    %183 = arith.addf %180, %182 : vector<16x32xf32>
    %184 = vector.shape_cast %183 : vector<16x32xf32> to vector<2x8x32xf32>
    %c0_110 = arith.constant 0 : index
    %c0_111 = arith.constant 0 : index
    %185 = vector.load %arg30[%c0_110, %c0_111] : memref<32x32xf32, #tpu.memory_space<vmem>>, vector<32x32xf32>
    %cst_112 = arith.constant dense<0.000000e+00> : vector<16x32xf32>
    %186 = tpu.matmul %172, %185, %cst_112 {dimension_numbers = #tpu.dot_dimension_numbers<[1], [0], [0], [1], [0, 0, 1, 1], [], []>} : vector<16x32xf32>, vector<32x32xf32>, vector<16x32xf32> -> vector<16x32xf32>
    %c0_113 = arith.constant 0 : index
    %c0_114 = arith.constant 0 : index
    %187 = vector.load %arg31[%c0_113, %c0_114] : memref<1x32xf32, #tpu.memory_space<vmem>>, vector<1x32xf32>
    %188 = vector.broadcast %187 : vector<1x32xf32> to vector<16x32xf32>
    %189 = arith.addf %186, %188 : vector<16x32xf32>
    %190 = vector.shape_cast %189 : vector<16x32xf32> to vector<2x8x32xf32>
    %c0_115 = arith.constant 0 : index
    %c0_116 = arith.constant 0 : index
    %191 = vector.load %arg32[%c0_115, %c0_116] : memref<32x32xf32, #tpu.memory_space<vmem>>, vector<32x32xf32>
    %cst_117 = arith.constant dense<0.000000e+00> : vector<16x32xf32>
    %192 = tpu.matmul %172, %191, %cst_117 {dimension_numbers = #tpu.dot_dimension_numbers<[1], [0], [0], [1], [0, 0, 1, 1], [], []>} : vector<16x32xf32>, vector<32x32xf32>, vector<16x32xf32> -> vector<16x32xf32>
    %c0_118 = arith.constant 0 : index
    %c0_119 = arith.constant 0 : index
    %193 = vector.load %arg33[%c0_118, %c0_119] : memref<1x32xf32, #tpu.memory_space<vmem>>, vector<1x32xf32>
    %194 = vector.broadcast %193 : vector<1x32xf32> to vector<16x32xf32>
    %195 = arith.addf %192, %194 : vector<16x32xf32>
    %196 = vector.shape_cast %195 : vector<16x32xf32> to vector<2x8x32xf32>
    "tpu.trace_start"() <{level = 10 : i32, message = "gqd,gkd->gqk"}> : () -> ()
    %cst_120 = arith.constant dense<0.000000e+00> : vector<2x8x8xf32>
    %197 = tpu.matmul %178, %190, %cst_120 {dimension_numbers = #tpu.dot_dimension_numbers<[2], [2], [1], [1], [0, 0, 0, 1, 1, 1], [0], [0]>} : vector<2x8x32xf32>, vector<2x8x32xf32>, vector<2x8x8xf32> -> vector<2x8x8xf32>
    %cst_121 = arith.constant dense<0.000000e+00> : vector<2x8x8xf32>
    %198 = tpu.matmul %184, %190, %cst_121 {dimension_numbers = #tpu.dot_dimension_numbers<[2], [2], [1], [1], [0, 0, 0, 1, 1, 1], [0], [0]>} : vector<2x8x32xf32>, vector<2x8x32xf32>, vector<2x8x8xf32> -> vector<2x8x8xf32>
    "tpu.trace_stop"() : () -> ()
    %199 = tpu.concatenate %197, %198 in 0 : vector<2x8x8xf32>, vector<2x8x8xf32> -> vector<4x8x8xf32>
    %cst_122 = arith.constant 5.000000e-01 : f32
    %200 = vector.broadcast %cst_122 : f32 to vector<4x8x8xf32>
    %201 = arith.mulf %199, %200 : vector<4x8x8xf32>
    %cst_123 = arith.constant dense<0xFF800000> : vector<4x8xf32>
    %202 = vector.multi_reduction <maximumf>, %201, %cst_123 [2] : vector<4x8x8xf32> to vector<4x8xf32>
    %203 = vector.shape_cast %202 : vector<4x8xf32> to vector<4x8x1xf32>
    %204 = vector.broadcast %203 : vector<4x8x1xf32> to vector<4x8x8xf32>
    %205 = arith.subf %201, %204 : vector<4x8x8xf32>
    %206 = math.exp %205 : vector<4x8x8xf32>
    %cst_124 = arith.constant dense<0.000000e+00> : vector<4x8xf32>
    %207 = vector.multi_reduction <add>, %206, %cst_124 [2] : vector<4x8x8xf32> to vector<4x8xf32>
    %208 = vector.shape_cast %207 : vector<4x8xf32> to vector<4x8x1xf32>
    %209 = vector.broadcast %208 : vector<4x8x1xf32> to vector<4x8x8xf32>
    %210 = arith.divf %206, %209 : vector<4x8x8xf32>
    %211 = vector.extract_strided_slice %210 {offsets = [0, 0, 0], sizes = [2, 8, 8], strides = [1, 1, 1]} : vector<4x8x8xf32> to vector<2x8x8xf32>
    %212 = vector.extract_strided_slice %210 {offsets = [2, 0, 0], sizes = [2, 8, 8], strides = [1, 1, 1]} : vector<4x8x8xf32> to vector<2x8x8xf32>
    %213 = vector.broadcast %170 : f32 to vector<2x8x8xf32>
    %214 = arith.mulf %213, %212 : vector<2x8x8xf32>
    %215 = arith.subf %211, %214 : vector<2x8x8xf32>
    "tpu.trace_start"() <{level = 10 : i32, message = "gqk,gkd->gqd"}> : () -> ()
    %cst_125 = arith.constant dense<0.000000e+00> : vector<2x8x32xf32>
    %216 = tpu.matmul %215, %196, %cst_125 {dimension_numbers = #tpu.dot_dimension_numbers<[2], [1], [1], [2], [0, 0, 0, 1, 1, 2], [0], [0]>} : vector<2x8x8xf32>, vector<2x8x32xf32>, vector<2x8x32xf32> -> vector<2x8x32xf32>
    "tpu.trace_stop"() : () -> ()
    %217 = vector.shape_cast %216 : vector<2x8x32xf32> to vector<1x16x32xf32>
    %218 = vector.shape_cast %171 : vector<16x16xf32> to vector<1x16x16xf32>
    "tpu.trace_start"() <{level = 10 : i32, message = "frc,fce->fre"}> : () -> ()
    %cst_126 = arith.constant dense<0.000000e+00> : vector<1x16x32xf32>
    %219 = tpu.matmul %218, %217, %cst_126 {dimension_numbers = #tpu.dot_dimension_numbers<[2], [1], [1], [2], [0, 0, 0, 1, 1, 2], [0], [0]>} : vector<1x16x16xf32>, vector<1x16x32xf32>, vector<1x16x32xf32> -> vector<1x16x32xf32>
    "tpu.trace_stop"() : () -> ()
    %220 = vector.shape_cast %219 : vector<1x16x32xf32> to vector<16x32xf32>
    %c0_127 = arith.constant 0 : index
    %c0_128 = arith.constant 0 : index
    %221 = vector.load %arg34[%c0_127, %c0_128] : memref<32x32xf32, #tpu.memory_space<vmem>>, vector<32x32xf32>
    %cst_129 = arith.constant dense<0.000000e+00> : vector<16x32xf32>
    %222 = tpu.matmul %220, %221, %cst_129 {dimension_numbers = #tpu.dot_dimension_numbers<[1], [0], [0], [1], [0, 0, 1, 1], [], []>} : vector<16x32xf32>, vector<32x32xf32>, vector<16x32xf32> -> vector<16x32xf32>
    %c0_130 = arith.constant 0 : index
    %c0_131 = arith.constant 0 : index
    %223 = vector.load %arg35[%c0_130, %c0_131] : memref<1x32xf32, #tpu.memory_space<vmem>>, vector<1x32xf32>
    %224 = vector.broadcast %223 : vector<1x32xf32> to vector<16x32xf32>
    %225 = arith.addf %222, %224 : vector<16x32xf32>
    %226 = arith.addf %172, %225 : vector<16x32xf32>
    %c0_132 = arith.constant 0 : index
    %c0_133 = arith.constant 0 : index
    %227 = vector.load %arg36[%c0_132, %c0_133] : memref<1x32xf32, #tpu.memory_space<vmem>>, vector<1x32xf32>
    %c0_134 = arith.constant 0 : index
    %c0_135 = arith.constant 0 : index
    %228 = vector.load %arg37[%c0_134, %c0_135] : memref<1x32xf32, #tpu.memory_space<vmem>>, vector<1x32xf32>
    %cst_136 = arith.constant dense<0.000000e+00> : vector<16xf32>
    %229 = vector.multi_reduction <add>, %226, %cst_136 [1] : vector<16x32xf32> to vector<16xf32>
    %230 = vector.shape_cast %229 : vector<16xf32> to vector<16x1xf32>
    %cst_137 = arith.constant 3.200000e+01 : f32
    %231 = vector.broadcast %cst_137 : f32 to vector<16x1xf32>
    %232 = arith.divf %230, %231 : vector<16x1xf32>
    %233 = vector.broadcast %232 : vector<16x1xf32> to vector<16x32xf32>
    %234 = arith.subf %226, %233 : vector<16x32xf32>
    %235 = arith.mulf %234, %234 : vector<16x32xf32>
    %cst_138 = arith.constant dense<0.000000e+00> : vector<16xf32>
    %236 = vector.multi_reduction <add>, %235, %cst_138 [1] : vector<16x32xf32> to vector<16xf32>
    %237 = vector.shape_cast %236 : vector<16xf32> to vector<16x1xf32>
    %cst_139 = arith.constant 3.200000e+01 : f32
    %238 = vector.broadcast %cst_139 : f32 to vector<16x1xf32>
    %239 = arith.divf %237, %238 : vector<16x1xf32>
    %cst_140 = arith.constant 9.99999974E-6 : f32
    %240 = vector.broadcast %cst_140 : f32 to vector<16x1xf32>
    %241 = arith.addf %239, %240 : vector<16x1xf32>
    %242 = math.rsqrt %241 : vector<16x1xf32>
    %243 = vector.broadcast %242 : vector<16x1xf32> to vector<16x32xf32>
    %244 = arith.mulf %234, %243 : vector<16x32xf32>
    %245 = vector.broadcast %227 : vector<1x32xf32> to vector<16x32xf32>
    %246 = arith.mulf %244, %245 : vector<16x32xf32>
    %247 = vector.broadcast %228 : vector<1x32xf32> to vector<16x32xf32>
    %248 = arith.addf %246, %247 : vector<16x32xf32>
    %c0_141 = arith.constant 0 : index
    %c0_142 = arith.constant 0 : index
    %249 = vector.load %arg38[%c0_141, %c0_142] : memref<32x32xf32, #tpu.memory_space<vmem>>, vector<32x32xf32>
    %cst_143 = arith.constant dense<0.000000e+00> : vector<16x32xf32>
    %250 = tpu.matmul %248, %249, %cst_143 {dimension_numbers = #tpu.dot_dimension_numbers<[1], [0], [0], [1], [0, 0, 1, 1], [], []>} : vector<16x32xf32>, vector<32x32xf32>, vector<16x32xf32> -> vector<16x32xf32>
    %c0_144 = arith.constant 0 : index
    %c0_145 = arith.constant 0 : index
    %251 = vector.load %arg39[%c0_144, %c0_145] : memref<1x32xf32, #tpu.memory_space<vmem>>, vector<1x32xf32>
    %252 = vector.broadcast %251 : vector<1x32xf32> to vector<16x32xf32>
    %253 = arith.addf %250, %252 : vector<16x32xf32>
    %cst_146 = arith.constant 0.000000e+00 : f32
    %254 = vector.broadcast %cst_146 : f32 to vector<16x32xf32>
    %255 = arith.maximumf %253, %254 : vector<16x32xf32>
    %c0_147 = arith.constant 0 : index
    %c0_148 = arith.constant 0 : index
    %256 = vector.load %arg40[%c0_147, %c0_148] : memref<32x32xf32, #tpu.memory_space<vmem>>, vector<32x32xf32>
    %cst_149 = arith.constant dense<0.000000e+00> : vector<16x32xf32>
    %257 = tpu.matmul %255, %256, %cst_149 {dimension_numbers = #tpu.dot_dimension_numbers<[1], [0], [0], [1], [0, 0, 1, 1], [], []>} : vector<16x32xf32>, vector<32x32xf32>, vector<16x32xf32> -> vector<16x32xf32>
    %c0_150 = arith.constant 0 : index
    %c0_151 = arith.constant 0 : index
    %258 = vector.load %arg41[%c0_150, %c0_151] : memref<1x32xf32, #tpu.memory_space<vmem>>, vector<1x32xf32>
    %259 = vector.broadcast %258 : vector<1x32xf32> to vector<16x32xf32>
    %260 = arith.addf %257, %259 : vector<16x32xf32>
    %261 = arith.addf %248, %260 : vector<16x32xf32>
    %c0_152 = arith.constant 0 : index
    %c0_153 = arith.constant 0 : index
    %262 = vector.load %arg42[%c0_152, %c0_153] : memref<1x32xf32, #tpu.memory_space<vmem>>, vector<1x32xf32>
    %c0_154 = arith.constant 0 : index
    %c0_155 = arith.constant 0 : index
    %263 = vector.load %arg43[%c0_154, %c0_155] : memref<1x32xf32, #tpu.memory_space<vmem>>, vector<1x32xf32>
    %cst_156 = arith.constant dense<0.000000e+00> : vector<16xf32>
    %264 = vector.multi_reduction <add>, %261, %cst_156 [1] : vector<16x32xf32> to vector<16xf32>
    %265 = vector.shape_cast %264 : vector<16xf32> to vector<16x1xf32>
    %cst_157 = arith.constant 3.200000e+01 : f32
    %266 = vector.broadcast %cst_157 : f32 to vector<16x1xf32>
    %267 = arith.divf %265, %266 : vector<16x1xf32>
    %268 = vector.broadcast %267 : vector<16x1xf32> to vector<16x32xf32>
    %269 = arith.subf %261, %268 : vector<16x32xf32>
    %270 = arith.mulf %269, %269 : vector<16x32xf32>
    %cst_158 = arith.constant dense<0.000000e+00> : vector<16xf32>
    %271 = vector.multi_reduction <add>, %270, %cst_158 [1] : vector<16x32xf32> to vector<16xf32>
    %272 = vector.shape_cast %271 : vector<16xf32> to vector<16x1xf32>
    %cst_159 = arith.constant 3.200000e+01 : f32
    %273 = vector.broadcast %cst_159 : f32 to vector<16x1xf32>
    %274 = arith.divf %272, %273 : vector<16x1xf32>
    %cst_160 = arith.constant 9.99999974E-6 : f32
    %275 = vector.broadcast %cst_160 : f32 to vector<16x1xf32>
    %276 = arith.addf %274, %275 : vector<16x1xf32>
    %277 = math.rsqrt %276 : vector<16x1xf32>
    %278 = vector.broadcast %277 : vector<16x1xf32> to vector<16x32xf32>
    %279 = arith.mulf %269, %278 : vector<16x32xf32>
    %280 = vector.broadcast %262 : vector<1x32xf32> to vector<16x32xf32>
    %281 = arith.mulf %279, %280 : vector<16x32xf32>
    %282 = vector.broadcast %263 : vector<1x32xf32> to vector<16x32xf32>
    %283 = arith.addf %281, %282 : vector<16x32xf32>
    %c0_161 = arith.constant 0 : index
    %c0_162 = arith.constant 0 : index
    %284 = vector.load %arg44[%c0_161, %c0_162] : memref<32x128xf32, #tpu.memory_space<vmem>>, vector<32x128xf32>
    %cst_163 = arith.constant dense<0.000000e+00> : vector<16x128xf32>
    %285 = tpu.matmul %283, %284, %cst_163 {dimension_numbers = #tpu.dot_dimension_numbers<[1], [0], [0], [1], [0, 0, 1, 1], [], []>} : vector<16x32xf32>, vector<32x128xf32>, vector<16x128xf32> -> vector<16x128xf32>
    %c0_164 = arith.constant 0 : index
    %c0_165 = arith.constant 0 : index
    %286 = vector.load %arg45[%c0_164, %c0_165] : memref<1x128xf32, #tpu.memory_space<vmem>>, vector<1x128xf32>
    %287 = vector.broadcast %286 : vector<1x128xf32> to vector<16x128xf32>
    %288 = arith.addf %285, %287 : vector<16x128xf32>
    %c0_166 = arith.constant 0 : index
    %c0_167 = arith.constant 0 : index
    %289 = vector.load %arg47[%c0_166, %c0_167] : memref<16x128xf32, #tpu.memory_space<vmem>>, vector<16x128xf32>
    tpu.vector_store %arg47[%c0_166, %c0_167], %288 {strides = array<i32>} : memref<16x128xf32, #tpu.memory_space<vmem>>, vector<16x128xf32>,
    return
  }
  func.func @transform_0(%arg0: i32) -> (i32, i32) {
    %c0_i32 = arith.constant 0 : i32
    %c0_i32_0 = arith.constant 0 : i32
    %c0_i32_1 = arith.constant 0 : i32
    return %c0_i32, %c0_i32_0 : i32, i32
  }
  func.func @transform_1(%arg0: i32) -> (i32, i32) {
    %c0_i32 = arith.constant 0 : i32
    %c0_i32_0 = arith.constant 0 : i32
    %c0_i32_1 = arith.constant 0 : i32
    return %c0_i32, %c0_i32_0 : i32, i32
  }
  func.func @transform_2(%arg0: i32) -> (i32, i32) {
    %c0_i32 = arith.constant 0 : i32
    %c0_i32_0 = arith.constant 0 : i32
    %c0_i32_1 = arith.constant 0 : i32
    return %c0_i32, %c0_i32_0 : i32, i32
  }
  func.func @transform_3(%arg0: i32) -> (i32, i32) {
    %c0_i32 = arith.constant 0 : i32
    %c0_i32_0 = arith.constant 0 : i32
    %c0_i32_1 = arith.constant 0 : i32
    return %c0_i32, %c0_i32_0 : i32, i32
  }
  func.func @transform_4(%arg0: i32) -> (i32, i32) {
    %c0_i32 = arith.constant 0 : i32
    %c0_i32_0 = arith.constant 0 : i32
    %c0_i32_1 = arith.constant 0 : i32
    return %c0_i32, %c0_i32_0 : i32, i32
  }
  func.func @transform_5(%arg0: i32) -> (i32, i32) {
    %c0_i32 = arith.constant 0 : i32
    %c0_i32_0 = arith.constant 0 : i32
    %c0_i32_1 = arith.constant 0 : i32
    return %c0_i32, %c0_i32_0 : i32, i32
  }
  func.func @transform_6(%arg0: i32) -> (i32, i32) {
    %c0_i32 = arith.constant 0 : i32
    %c0_i32_0 = arith.constant 0 : i32
    %c0_i32_1 = arith.constant 0 : i32
    return %c0_i32, %c0_i32_0 : i32, i32
  }
  func.func @transform_7(%arg0: i32) -> (i32, i32) {
    %c0_i32 = arith.constant 0 : i32
    %c0_i32_0 = arith.constant 0 : i32
    %c0_i32_1 = arith.constant 0 : i32
    return %c0_i32, %c0_i32_0 : i32, i32
  }
  func.func @transform_8(%arg0: i32) -> (i32, i32) {
    %c0_i32 = arith.constant 0 : i32
    %c0_i32_0 = arith.constant 0 : i32
    %c0_i32_1 = arith.constant 0 : i32
    return %c0_i32, %c0_i32_0 : i32, i32
  }
  func.func @transform_9(%arg0: i32) -> (i32, i32) {
    %c0_i32 = arith.constant 0 : i32
    %c0_i32_0 = arith.constant 0 : i32
    %c0_i32_1 = arith.constant 0 : i32
    return %c0_i32, %c0_i32_0 : i32, i32
  }
  func.func @transform_10(%arg0: i32) -> (i32, i32) {
    %c0_i32 = arith.constant 0 : i32
    %c0_i32_0 = arith.constant 0 : i32
    %c0_i32_1 = arith.constant 0 : i32
    return %c0_i32, %c0_i32_0 : i32, i32
  }
  func.func @transform_11(%arg0: i32) -> (i32, i32) {
    %c0_i32 = arith.constant 0 : i32
    %c0_i32_0 = arith.constant 0 : i32
    %c0_i32_1 = arith.constant 0 : i32
    return %c0_i32, %c0_i32_0 : i32, i32
  }
  func.func @transform_12(%arg0: i32) -> (i32, i32) {
    %c0_i32 = arith.constant 0 : i32
    %c0_i32_0 = arith.constant 0 : i32
    %c0_i32_1 = arith.constant 0 : i32
    return %c0_i32, %c0_i32_0 : i32, i32
  }
  func.func @transform_13(%arg0: i32) -> (i32, i32) {
    %c0_i32 = arith.constant 0 : i32
    %c0_i32_0 = arith.constant 0 : i32
    %c0_i32_1 = arith.constant 0 : i32
    return %c0_i32, %c0_i32_0 : i32, i32
  }
  func.func @transform_14(%arg0: i32) -> (i32, i32) {
    %c0_i32 = arith.constant 0 : i32
    %c0_i32_0 = arith.constant 0 : i32
    %c0_i32_1 = arith.constant 0 : i32
    return %c0_i32, %c0_i32_0 : i32, i32
  }
  func.func @transform_15(%arg0: i32) -> (i32, i32) {
    %c0_i32 = arith.constant 0 : i32
    %c0_i32_0 = arith.constant 0 : i32
    %c0_i32_1 = arith.constant 0 : i32
    return %c0_i32, %c0_i32_0 : i32, i32
  }
  func.func @transform_16(%arg0: i32) -> (i32, i32) {
    %c0_i32 = arith.constant 0 : i32
    %c0_i32_0 = arith.constant 0 : i32
    %c0_i32_1 = arith.constant 0 : i32
    return %c0_i32, %c0_i32_0 : i32, i32
  }
  func.func @transform_17(%arg0: i32) -> (i32, i32) {
    %c0_i32 = arith.constant 0 : i32
    %c0_i32_0 = arith.constant 0 : i32
    %c0_i32_1 = arith.constant 0 : i32
    return %c0_i32, %c0_i32_0 : i32, i32
  }
  func.func @transform_18(%arg0: i32) -> (i32, i32) {
    %c0_i32 = arith.constant 0 : i32
    %c0_i32_0 = arith.constant 0 : i32
    %c0_i32_1 = arith.constant 0 : i32
    return %c0_i32, %c0_i32_0 : i32, i32
  }
  func.func @transform_19(%arg0: i32) -> (i32, i32) {
    %c0_i32 = arith.constant 0 : i32
    %c0_i32_0 = arith.constant 0 : i32
    %c0_i32_1 = arith.constant 0 : i32
    return %c0_i32, %c0_i32_0 : i32, i32
  }
  func.func @transform_20(%arg0: i32) -> (i32, i32) {
    %c0_i32 = arith.constant 0 : i32
    %c0_i32_0 = arith.constant 0 : i32
    %c0_i32_1 = arith.constant 0 : i32
    return %c0_i32, %c0_i32_0 : i32, i32
  }
  func.func @transform_21(%arg0: i32) -> (i32, i32) {
    %c0_i32 = arith.constant 0 : i32
    %c0_i32_0 = arith.constant 0 : i32
    %c0_i32_1 = arith.constant 0 : i32
    return %c0_i32, %c0_i32_0 : i32, i32
  }
  func.func @transform_22(%arg0: i32) -> (i32, i32) {
    %c0_i32 = arith.constant 0 : i32
    %c0_i32_0 = arith.constant 0 : i32
    %c0_i32_1 = arith.constant 0 : i32
    return %c0_i32, %c0_i32_0 : i32, i32
  }
  func.func @transform_23(%arg0: i32) -> (i32, i32) {
    %c0_i32 = arith.constant 0 : i32
    %c0_i32_0 = arith.constant 0 : i32
    %c0_i32_1 = arith.constant 0 : i32
    return %c0_i32, %c0_i32_0 : i32, i32
  }
  func.func @transform_24(%arg0: i32) -> (i32, i32) {
    %c0_i32 = arith.constant 0 : i32
    %c0_i32_0 = arith.constant 0 : i32
    %c0_i32_1 = arith.constant 0 : i32
    return %c0_i32, %c0_i32_0 : i32, i32
  }
  func.func @transform_25(%arg0: i32) -> (i32, i32) {
    %c0_i32 = arith.constant 0 : i32
    %c0_i32_0 = arith.constant 0 : i32
    %c0_i32_1 = arith.constant 0 : i32
    return %c0_i32, %c0_i32_0 : i32, i32
  }
  func.func @transform_26(%arg0: i32) -> (i32, i32) {
    %c0_i32 = arith.constant 0 : i32
    %c0_i32_0 = arith.constant 0 : i32
    %c0_i32_1 = arith.constant 0 : i32
    return %c0_i32, %c0_i32_0 : i32, i32
  }
  func.func @transform_27(%arg0: i32) -> (i32, i32) {
    %c0_i32 = arith.constant 0 : i32
    %c0_i32_0 = arith.constant 0 : i32
    %c0_i32_1 = arith.constant 0 : i32
    return %c0_i32, %c0_i32_0 : i32, i32
  }
  func.func @transform_28(%arg0: i32) -> (i32, i32) {
    %c0_i32 = arith.constant 0 : i32
    %c0_i32_0 = arith.constant 0 : i32
    %c0_i32_1 = arith.constant 0 : i32
    return %c0_i32, %c0_i32_0 : i32, i32
  }
  func.func @transform_29(%arg0: i32) -> (i32, i32) {
    %c0_i32 = arith.constant 0 : i32
    %c0_i32_0 = arith.constant 0 : i32
    %c0_i32_1 = arith.constant 0 : i32
    return %c0_i32, %c0_i32_0 : i32, i32
  }
  func.func @transform_30(%arg0: i32) -> (i32, i32) {
    %c0_i32 = arith.constant 0 : i32
    %c0_i32_0 = arith.constant 0 : i32
    %c0_i32_1 = arith.constant 0 : i32
    return %c0_i32, %c0_i32_0 : i32, i32
  }
  func.func @transform_31(%arg0: i32) -> (i32, i32) {
    %c0_i32 = arith.constant 0 : i32
    %c0_i32_0 = arith.constant 0 : i32
    %c0_i32_1 = arith.constant 0 : i32
    return %c0_i32, %c0_i32_0 : i32, i32
  }
  func.func @transform_32(%arg0: i32) -> (i32, i32) {
    %c0_i32 = arith.constant 0 : i32
    %c0_i32_0 = arith.constant 0 : i32
    %c0_i32_1 = arith.constant 0 : i32
    return %c0_i32, %c0_i32_0 : i32, i32
  }
  func.func @transform_33(%arg0: i32) -> (i32, i32) {
    %c0_i32 = arith.constant 0 : i32
    %c0_i32_0 = arith.constant 0 : i32
    %c0_i32_1 = arith.constant 0 : i32
    return %c0_i32, %c0_i32_0 : i32, i32
  }
  func.func @transform_34(%arg0: i32) -> (i32, i32) {
    %c0_i32 = arith.constant 0 : i32
    %c0_i32_0 = arith.constant 0 : i32
    %c0_i32_1 = arith.constant 0 : i32
    return %c0_i32, %c0_i32_0 : i32, i32
  }
  func.func @transform_35(%arg0: i32) -> (i32, i32) {
    %c0_i32 = arith.constant 0 : i32
    %c0_i32_0 = arith.constant 0 : i32
    %c0_i32_1 = arith.constant 0 : i32
    return %c0_i32, %c0_i32_0 : i32, i32
  }
  func.func @transform_36(%arg0: i32) -> (i32, i32) {
    %c0_i32 = arith.constant 0 : i32
    %c0_i32_0 = arith.constant 0 : i32
    %c0_i32_1 = arith.constant 0 : i32
    return %c0_i32, %c0_i32_0 : i32, i32
  }
  func.func @transform_37(%arg0: i32) -> (i32, i32) {
    %c0_i32 = arith.constant 0 : i32
    %c0_i32_0 = arith.constant 0 : i32
    %c0_i32_1 = arith.constant 0 : i32
    return %c0_i32, %c0_i32_0 : i32, i32
  }
  func.func @transform_38(%arg0: i32) -> (i32, i32) {
    %c0_i32 = arith.constant 0 : i32
    %c0_i32_0 = arith.constant 0 : i32
    %c0_i32_1 = arith.constant 0 : i32
    return %c0_i32, %c0_i32_0 : i32, i32
  }
  func.func @transform_39(%arg0: i32) -> (i32, i32) {
    %c0_i32 = arith.constant 0 : i32
    %c0_i32_0 = arith.constant 0 : i32
    %c0_i32_1 = arith.constant 0 : i32
    return %c0_i32, %c0_i32_0 : i32, i32
  }
  func.func @transform_40(%arg0: i32) -> (i32, i32) {
    %c0_i32 = arith.constant 0 : i32
    %c0_i32_0 = arith.constant 0 : i32
    %c0_i32_1 = arith.constant 0 : i32
    return %c0_i32, %c0_i32_0 : i32, i32
  }
  func.func @transform_41(%arg0: i32) -> (i32, i32) {
    %c0_i32 = arith.constant 0 : i32
    %c0_i32_0 = arith.constant 0 : i32
    %c0_i32_1 = arith.constant 0 : i32
    return %c0_i32, %c0_i32_0 : i32, i32
  }
  func.func @transform_42(%arg0: i32) -> (i32, i32) {
    %c0_i32 = arith.constant 0 : i32
    %c0_i32_0 = arith.constant 0 : i32
    %c0_i32_1 = arith.constant 0 : i32
    return %c0_i32, %c0_i32_0 : i32, i32
  }
  func.func @transform_43(%arg0: i32) -> (i32, i32) {
    %c0_i32 = arith.constant 0 : i32
    %c0_i32_0 = arith.constant 0 : i32
    %c0_i32_1 = arith.constant 0 : i32
    return %c0_i32, %c0_i32_0 : i32, i32
  }
  func.func @transform_44(%arg0: i32) -> (i32, i32) {
    %c0_i32 = arith.constant 0 : i32
    %c0_i32_0 = arith.constant 0 : i32
    %c0_i32_1 = arith.constant 0 : i32
    return %c0_i32, %c0_i32_0 : i32, i32
  }
  func.func @transform_45(%arg0: i32) -> (i32, i32) {
    %c0_i32 = arith.constant 0 : i32
    %c0_i32_0 = arith.constant 0 : i32
    %c0_i32_1 = arith.constant 0 : i32
    return %c0_i32, %c0_i32_0 : i32, i32
  }
  func.func @transform_46(%arg0: i32) -> (i32, i32) {
    %c0_i32 = arith.constant 0 : i32
    %c0_i32_0 = arith.constant 0 : i32
    %c0_i32_1 = arith.constant 0 : i32
    return %c0_i32, %c0_i32_0 : i32, i32
  }
}

</mosaic_0001>

<llo_original>
// kernel: vivitae_forward.1
$region0: #{vivitae_forward.1}
  #allocation0 [shape = 'u32[]', space=smem, size = 0x4, offset = 0x4, fixed_abs, tag = 'smem constant byte address 0x4 - core index']
  #allocation1 [shape = 'u32[72,128]{1,0:T(1,128)}', space=vmem, size = 0x9000, scoped, tag = 'internal scratch']
  #allocation2 [shape = 'f32[2,8,32]{2,1,0:T(8,128)}', space=vmem, size = 0x2000, scoped, tag = 'scratch operand']
  %s0 = inlined_call_operand.smem [shape: u32[47], index: -1, kind: input, shape index: {}]
  %s1 = sld [smem:[%s0]]
  %s2 = scalar_lea.smem %s0, 1
  %s3 = sld [smem:[%s2]]
  %s4 = scalar_lea.smem %s0, 2
  %s5 = sld [smem:[%s4]]
  %s6 = scalar_lea.smem %s0, 3
  %s7 = sld [smem:[%s6]]
  %s8 = scalar_lea.smem %s0, 4
  %s9 = sld [smem:[%s8]]
  %s10 = scalar_lea.smem %s0, 5
  %s11 = sld [smem:[%s10]]
  %s12 = scalar_lea.smem %s0, 6
  %s13 = sld [smem:[%s12]]
  %s14 = scalar_lea.smem %s0, 7
  %s15 = sld [smem:[%s14]]
  %s16 = scalar_lea.smem %s0, 8
  %s17 = sld [smem:[%s16]]
  %s18 = scalar_lea.smem %s0, 9
  %s19 = sld [smem:[%s18]]
  %s20 = scalar_lea.smem %s0, 10
  %s21 = sld [smem:[%s20]]
  %s22 = scalar_lea.smem %s0, 11
  %s23 = sld [smem:[%s22]]
  %s24 = scalar_lea.smem %s0, 12
  %s25 = sld [smem:[%s24]]
  %s26 = scalar_lea.smem %s0, 13
  %s27 = sld [smem:[%s26]]
  %s28 = scalar_lea.smem %s0, 14
  %s29 = sld [smem:[%s28]]
  %s30 = scalar_lea.smem %s0, 15
  %s31 = sld [smem:[%s30]]
  %s32 = scalar_lea.smem %s0, 16
  %s33 = sld [smem:[%s32]]
  %s34 = scalar_lea.smem %s0, 17
  %s35 = sld [smem:[%s34]]
  %s36 = scalar_lea.smem %s0, 18
  %s37 = sld [smem:[%s36]]
  %s38 = scalar_lea.smem %s0, 19
  %s39 = sld [smem:[%s38]]
  %s40 = scalar_lea.smem %s0, 20
  %s41 = sld [smem:[%s40]]
  %s42 = scalar_lea.smem %s0, 21
  %s43 = sld [smem:[%s42]]
  %s44 = scalar_lea.smem %s0, 22
  %s45 = sld [smem:[%s44]]
  %s46 = scalar_lea.smem %s0, 23
  %s47 = sld [smem:[%s46]]
  %s48 = scalar_lea.smem %s0, 24
  %s49 = sld [smem:[%s48]]
  %s50 = scalar_lea.smem %s0, 25
  %s51 = sld [smem:[%s50]]
  %s52 = scalar_lea.smem %s0, 26
  %s53 = sld [smem:[%s52]]
  %s54 = scalar_lea.smem %s0, 27
  %s55 = sld [smem:[%s54]]
  %s56 = scalar_lea.smem %s0, 28
  %s57 = sld [smem:[%s56]]
  %s58 = scalar_lea.smem %s0, 29
  %s59 = sld [smem:[%s58]]
  %s60 = scalar_lea.smem %s0, 30
  %s61 = sld [smem:[%s60]]
  %s62 = scalar_lea.smem %s0, 31
  %s63 = sld [smem:[%s62]]
  %s64 = scalar_lea.smem %s0, 32
  %s65 = sld [smem:[%s64]]
  %s66 = scalar_lea.smem %s0, 33
  %s67 = sld [smem:[%s66]]
  %s68 = scalar_lea.smem %s0, 34
  %s69 = sld [smem:[%s68]]
  %s70 = scalar_lea.smem %s0, 35
  %s71 = sld [smem:[%s70]]
  %s72 = scalar_lea.smem %s0, 36
  %s73 = sld [smem:[%s72]]
  %s74 = scalar_lea.smem %s0, 37
  %s75 = sld [smem:[%s74]]
  %s76 = scalar_lea.smem %s0, 38
  %s77 = sld [smem:[%s76]]
  %s78 = scalar_lea.smem %s0, 39
  %s79 = sld [smem:[%s78]]
  %s80 = scalar_lea.smem %s0, 40
  %s81 = sld [smem:[%s80]]
  %s82 = scalar_lea.smem %s0, 41
  %s83 = sld [smem:[%s82]]
  %s84 = scalar_lea.smem %s0, 42
  %s85 = sld [smem:[%s84]]
  %s86 = scalar_lea.smem %s0, 43
  %s87 = sld [smem:[%s86]]
  %s88 = scalar_lea.smem %s0, 44
  %s89 = sld [smem:[%s88]]
  %s90 = scalar_lea.smem %s0, 45
  %s91 = sld [smem:[%s90]]
  %s92 = scalar_lea.smem %s0, 46
  %s93 = sld [smem:[%s92]]
  %s94 = sld [smem:[#allocation0]]
  $region214: #{vivitae_forward.1} parent=0
    _
  %s96 = ssub.s32 1, %s94
  %s97 = scalar_select 0, %s96, %s94
  $region1: #{vivitae_forward.1} parent=0
    #allocation3 [shape = 'u8[512]{0}', space=vmem, size = 0x400, scoped, tag = 'input window, operand 40, single buffered']
    #allocation4 [shape = 's32[1]{0}', space=sflag, size = 0x4, scoped, tag = 'scoped memory for vivitae_forward.1']
    #allocation5 [shape = 's32[1]{0}', space=sflag, size = 0x4, scoped, tag = 'scoped memory for vivitae_forward.1']
    #allocation6 [shape = 'u8[512]{0}', space=vmem, size = 0x400, scoped, tag = 'input window, operand 41, single buffered']
    #allocation7 [shape = 's32[1]{0}', space=sflag, size = 0x4, scoped, tag = 'scoped memory for vivitae_forward.1']
    #allocation8 [shape = 'u8[512]{0}', space=vmem, size = 0x400, scoped, tag = 'input window, operand 42, single buffered']
    #allocation9 [shape = 'u8[512]{0}', space=vmem, size = 0x400, scoped, tag = 'input window, operand 44, single buffered']
    #allocation10 [shape = 's32[1]{0}', space=sflag, size = 0x4, scoped, tag = 'scoped memory for vivitae_forward.1']
    #allocation11 [shape = 'u8[512]{0}', space=smem, size = 0x200, scoped, tag = 'input window, operand 45, single buffered']
    %98 = vsyncpa [#allocation4], 0
    %99 = vsyncpa [#allocation7], 0
    %100 = vsyncpa [#allocation10], 0
    %101 = vsyncpa [#allocation5], 0
    // Predicated region
    $region2: #{vivitae_forward.1} parent=1 // pred_check
      _
    $region3: #{vivitae_forward.1} parent=1 // pred_check_branch
      %103 = sbr.rel (0) target = $region5
    $region4: #{vivitae_forward.1} parent=1 // pred_region
      _
    $region5: #{vivitae_forward.1} parent=1 // pred_fallthru
      _
    // Predicated region
    $region6: #{vivitae_forward.1} parent=1 // pred_check
      _
    $region7: #{vivitae_forward.1} parent=1 // pred_check_branch
      %105 = sbr.rel (0) target = $region9
    $region8: #{vivitae_forward.1} parent=1 // pred_region
      _
    $region9: #{vivitae_forward.1} parent=1 // pred_fallthru
      _
    // Predicated region
    $region10: #{vivitae_forward.1} parent=1 // pred_check
      _
    $region11: #{vivitae_forward.1} parent=1 // pred_check_branch
      %107 = sbr.rel (0) target = $region13
    $region12: #{vivitae_forward.1} parent=1 // pred_region
      _
    $region13: #{vivitae_forward.1} parent=1 // pred_fallthru
      _
    // Predicated region
    $region14: #{vivitae_forward.1} parent=1 // pred_check
      _
    $region15: #{vivitae_forward.1} parent=1 // pred_check_branch
      %109 = sbr.rel (0) target = $region17
    $region16: #{vivitae_forward.1} parent=1 // pred_region
      _
    $region17: #{vivitae_forward.1} parent=1 // pred_fallthru
      _
    // Predicated region
    $region18: #{vivitae_forward.1} parent=1 // pred_check
      _
    $region19: #{vivitae_forward.1} parent=1 // pred_check_branch
      %111 = sbr.rel (0) target = $region21
    $region20: #{vivitae_forward.1} parent=1 // pred_region
      _
    $region21: #{vivitae_forward.1} parent=1 // pred_fallthru
      _
    // Predicated region
    $region22: #{vivitae_forward.1} parent=1 // pred_check
      _
    $region23: #{vivitae_forward.1} parent=1 // pred_check_branch
      %113 = sbr.rel (0) target = $region25
    $region24: #{vivitae_forward.1} parent=1 // pred_region
      _
    $region25: #{vivitae_forward.1} parent=1 // pred_fallthru
      _
    // Predicated region
    $region26: #{vivitae_forward.1} parent=1 // pred_check
      _
    $region27: #{vivitae_forward.1} parent=1 // pred_check_branch
      %115 = sbr.rel (0) target = $region29
    $region28: #{vivitae_forward.1} parent=1 // pred_region
      _
    $region29: #{vivitae_forward.1} parent=1 // pred_fallthru
      _
    // Predicated region
    $region30: #{vivitae_forward.1} parent=1 // pred_check
      _
    $region31: #{vivitae_forward.1} parent=1 // pred_check_branch
      %117 = sbr.rel (0) target = $region33
    $region32: #{vivitae_forward.1} parent=1 // pred_region
      _
    $region33: #{vivitae_forward.1} parent=1 // pred_fallthru
      _
    // Predicated region
    $region34: #{vivitae_forward.1} parent=1 // pred_check
      _
    $region35: #{vivitae_forward.1} parent=1 // pred_check_branch
      %119 = sbr.rel (0) target = $region37
    $region36: #{vivitae_forward.1} parent=1 // pred_region
      _
    $region37: #{vivitae_forward.1} parent=1 // pred_fallthru
      _
    // Predicated region
    $region38: #{vivitae_forward.1} parent=1 // pred_check
      _
    $region39: #{vivitae_forward.1} parent=1 // pred_check_branch
      %121 = sbr.rel (0) target = $region41
    $region40: #{vivitae_forward.1} parent=1 // pred_region
      _
    $region41: #{vivitae_forward.1} parent=1 // pred_fallthru
      _
    // Predicated region
    $region42: #{vivitae_forward.1} parent=1 // pred_check
      _
    $region43: #{vivitae_forward.1} parent=1 // pred_check_branch
      %123 = sbr.rel (0) target = $region45
    $region44: #{vivitae_forward.1} parent=1 // pred_region
      _
    $region45: #{vivitae_forward.1} parent=1 // pred_fallthru
      _
    // Predicated region
    $region46: #{vivitae_forward.1} parent=1 // pred_check
      _
    $region47: #{vivitae_forward.1} parent=1 // pred_check_branch
      %125 = sbr.rel (0) target = $region49
    $region48: #{vivitae_forward.1} parent=1 // pred_region
      _
    $region49: #{vivitae_forward.1} parent=1 // pred_fallthru
      _
    // Predicated region
    $region50: #{vivitae_forward.1} parent=1 // pred_check
      _
    $region51: #{vivitae_forward.1} parent=1 // pred_check_branch
      %127 = sbr.rel (0) target = $region53
    $region52: #{vivitae_forward.1} parent=1 // pred_region
      _
    $region53: #{vivitae_forward.1} parent=1 // pred_fallthru
      _
    // Predicated region
    $region54: #{vivitae_forward.1} parent=1 // pred_check
      _
    $region55: #{vivitae_forward.1} parent=1 // pred_check_branch
      %129 = sbr.rel (0) target = $region57
    $region56: #{vivitae_forward.1} parent=1 // pred_region
      _
    $region57: #{vivitae_forward.1} parent=1 // pred_fallthru
      _
    // Predicated region
    $region58: #{vivitae_forward.1} parent=1 // pred_check
      _
    $region59: #{vivitae_forward.1} parent=1 // pred_check_branch
      %131 = sbr.rel (0) target = $region61
    $region60: #{vivitae_forward.1} parent=1 // pred_region
      _
    $region61: #{vivitae_forward.1} parent=1 // pred_fallthru
      _
    // Predicated region
    $region62: #{vivitae_forward.1} parent=1 // pred_check
      _
    $region63: #{vivitae_forward.1} parent=1 // pred_check_branch
      %133 = sbr.rel (0) target = $region65
    $region64: #{vivitae_forward.1} parent=1 // pred_region
      _
    $region65: #{vivitae_forward.1} parent=1 // pred_fallthru
      _
    // Predicated region
    $region66: #{vivitae_forward.1} parent=1 // pred_check
      _
    $region67: #{vivitae_forward.1} parent=1 // pred_check_branch
      %135 = sbr.rel (0) target = $region69
    $region68: #{vivitae_forward.1} parent=1 // pred_region
      _
    $region69: #{vivitae_forward.1} parent=1 // pred_fallthru
      _
    // Predicated region
    $region70: #{vivitae_forward.1} parent=1 // pred_check
      _
    $region71: #{vivitae_forward.1} parent=1 // pred_check_branch
      %137 = sbr.rel (0) target = $region73
    $region72: #{vivitae_forward.1} parent=1 // pred_region
      _
    $region73: #{vivitae_forward.1} parent=1 // pred_fallthru
      _
    // Predicated region
    $region74: #{vivitae_forward.1} parent=1 // pred_check
      _
    $region75: #{vivitae_forward.1} parent=1 // pred_check_branch
      %139 = sbr.rel (0) target = $region77
    $region76: #{vivitae_forward.1} parent=1 // pred_region
      _
    $region77: #{vivitae_forward.1} parent=1 // pred_fallthru
      _
    // Predicated region
    $region78: #{vivitae_forward.1} parent=1 // pred_check
      _
    $region79: #{vivitae_forward.1} parent=1 // pred_check_branch
      %141 = sbr.rel (0) target = $region81
    $region80: #{vivitae_forward.1} parent=1 // pred_region
      _
    $region81: #{vivitae_forward.1} parent=1 // pred_fallthru
      _
    // Predicated region
    $region82: #{vivitae_forward.1} parent=1 // pred_check
      _
    $region83: #{vivitae_forward.1} parent=1 // pred_check_branch
      %143 = sbr.rel (0) target = $region85
    $region84: #{vivitae_forward.1} parent=1 // pred_region
      _
    $region85: #{vivitae_forward.1} parent=1 // pred_fallthru
      _
    // Predicated region
    $region86: #{vivitae_forward.1} parent=1 // pred_check
      _
    $region87: #{vivitae_forward.1} parent=1 // pred_check_branch
      %145 = sbr.rel (0) target = $region89
    $region88: #{vivitae_forward.1} parent=1 // pred_region
      _
    $region89: #{vivitae_forward.1} parent=1 // pred_fallthru
      _
    // Predicated region
    $region90: #{vivitae_forward.1} parent=1 // pred_check
      _
    $region91: #{vivitae_forward.1} parent=1 // pred_check_branch
      %147 = sbr.rel (0) target = $region93
    $region92: #{vivitae_forward.1} parent=1 // pred_region
      _
    $region93: #{vivitae_forward.1} parent=1 // pred_fallthru
      _
    // Predicated region
    $region94: #{vivitae_forward.1} parent=1 // pred_check
      _
    $region95: #{vivitae_forward.1} parent=1 // pred_check_branch
      %149 = sbr.rel (0) target = $region97
    $region96: #{vivitae_forward.1} parent=1 // pred_region
      _
    $region97: #{vivitae_forward.1} parent=1 // pred_fallthru
      _
    // Predicated region
    $region98: #{vivitae_forward.1} parent=1 // pred_check
      _
    $region99: #{vivitae_forward.1} parent=1 // pred_check_branch
      %151 = sbr.rel (0) target = $region101
    $region100: #{vivitae_forward.1} parent=1 // pred_region
      _
    $region101: #{vivitae_forward.1} parent=1 // pred_fallthru
      _
    // Predicated region
    $region102: #{vivitae_forward.1} parent=1 // pred_check
      _
    $region103: #{vivitae_forward.1} parent=1 // pred_check_branch
      %153 = sbr.rel (0) target = $region105
    $region104: #{vivitae_forward.1} parent=1 // pred_region
      _
    $region105: #{vivitae_forward.1} parent=1 // pred_fallthru
      _
    // Predicated region
    $region106: #{vivitae_forward.1} parent=1 // pred_check
      _
    $region107: #{vivitae_forward.1} parent=1 // pred_check_branch
      %155 = sbr.rel (0) target = $region109
    $region108: #{vivitae_forward.1} parent=1 // pred_region
      _
    $region109: #{vivitae_forward.1} parent=1 // pred_fallthru
      _
    // Predicated region
    $region110: #{vivitae_forward.1} parent=1 // pred_check
      _
    $region111: #{vivitae_forward.1} parent=1 // pred_check_branch
      %157 = sbr.rel (0) target = $region113
    $region112: #{vivitae_forward.1} parent=1 // pred_region
      _
    $region113: #{vivitae_forward.1} parent=1 // pred_fallthru
      _
    // Predicated region
    $region114: #{vivitae_forward.1} parent=1 // pred_check
      _
    $region115: #{vivitae_forward.1} parent=1 // pred_check_branch
      %159 = sbr.rel (0) target = $region117
    $region116: #{vivitae_forward.1} parent=1 // pred_region
      _
    $region117: #{vivitae_forward.1} parent=1 // pred_fallthru
      _
    // Predicated region
    $region118: #{vivitae_forward.1} parent=1 // pred_check
      _
    $region119: #{vivitae_forward.1} parent=1 // pred_check_branch
      %161 = sbr.rel (0) target = $region121
    $region120: #{vivitae_forward.1} parent=1 // pred_region
      _
    $region121: #{vivitae_forward.1} parent=1 // pred_fallthru
      _
    // Predicated region
    $region122: #{vivitae_forward.1} parent=1 // pred_check
      _
    $region123: #{vivitae_forward.1} parent=1 // pred_check_branch
      %163 = sbr.rel (0) target = $region125
    $region124: #{vivitae_forward.1} parent=1 // pred_region
      _
    $region125: #{vivitae_forward.1} parent=1 // pred_fallthru
      _
    // Predicated region
    $region126: #{vivitae_forward.1} parent=1 // pred_check
      _
    $region127: #{vivitae_forward.1} parent=1 // pred_check_branch
      %165 = sbr.rel (0) target = $region129
    $region128: #{vivitae_forward.1} parent=1 // pred_region
      _
    $region129: #{vivitae_forward.1} parent=1 // pred_fallthru
      _
    // Predicated region
    $region130: #{vivitae_forward.1} parent=1 // pred_check
      _
    $region131: #{vivitae_forward.1} parent=1 // pred_check_branch
      %167 = sbr.rel (0) target = $region133
    $region132: #{vivitae_forward.1} parent=1 // pred_region
      _
    $region133: #{vivitae_forward.1} parent=1 // pred_fallthru
      _
    // Predicated region
    $region134: #{vivitae_forward.1} parent=1 // pred_check
      _
    $region135: #{vivitae_forward.1} parent=1 // pred_check_branch
      %169 = sbr.rel (0) target = $region137
    $region136: #{vivitae_forward.1} parent=1 // pred_region
      _
    $region137: #{vivitae_forward.1} parent=1 // pred_fallthru
      _
    // Predicated region
    $region138: #{vivitae_forward.1} parent=1 // pred_check
      _
    $region139: #{vivitae_forward.1} parent=1 // pred_check_branch
      %171 = sbr.rel (0) target = $region141
    $region140: #{vivitae_forward.1} parent=1 // pred_region
      _
    $region141: #{vivitae_forward.1} parent=1 // pred_fallthru
      _
    // Predicated region
    $region142: #{vivitae_forward.1} parent=1 // pred_check
      _
    $region143: #{vivitae_forward.1} parent=1 // pred_check_branch
      %173 = sbr.rel (0) target = $region145
    $region144: #{vivitae_forward.1} parent=1 // pred_region
      _
    $region145: #{vivitae_forward.1} parent=1 // pred_fallthru
      _
    // Predicated region
    $region146: #{vivitae_forward.1} parent=1 // pred_check
      _
    $region147: #{vivitae_forward.1} parent=1 // pred_check_branch
      %175 = sbr.rel (0) target = $region149
    $region148: #{vivitae_forward.1} parent=1 // pred_region
      _
    $region149: #{vivitae_forward.1} parent=1 // pred_fallthru
      _
    // Predicated region
    $region150: #{vivitae_forward.1} parent=1 // pred_check
      _
    $region151: #{vivitae_forward.1} parent=1 // pred_check_branch
      %177 = sbr.rel (0) target = $region153
    $region152: #{vivitae_forward.1} parent=1 // pred_region
      _
    $region153: #{vivitae_forward.1} parent=1 // pred_fallthru
      _
    // Predicated region
    $region154: #{vivitae_forward.1} parent=1 // pred_check
      _
    $region155: #{vivitae_forward.1} parent=1 // pred_check_branch
      %179 = sbr.rel (0) target = $region157
    $region156: #{vivitae_forward.1} parent=1 // pred_region
      _
    $region157: #{vivitae_forward.1} parent=1 // pred_fallthru
      _
    // Predicated region
    $region158: #{vivitae_forward.1} parent=1 // pred_check
      _
    $region159: #{vivitae_forward.1} parent=1 // pred_check_branch
      %181 = sbr.rel (0) target = $region161
    $region160: #{vivitae_forward.1} parent=1 // pred_region
      _
    $region161: #{vivitae_forward.1} parent=1 // pred_fallthru
      _
    // Predicated region
    $region162: #{vivitae_forward.1} parent=1 // pred_check
      _
    $region163: #{vivitae_forward.1} parent=1 // pred_check_branch
      %183 = sbr.rel (0) target = $region165
    $region164: #{vivitae_forward.1} parent=1 // pred_region
      %185 = vsyncadd [#allocation4], 0
      %s187 = sshll.u32 %s81, 4
      %s188 = int_to_ptr.hbm [resolvable:$true] %s187
      %s189 = sshll.u32 [#allocation3], 4
      %s190 = int_to_ptr.vmem [resolvable:$true] %s189
      %192 = dma.hbm_to_vmem [thread:$0]  %s188, 16, %s190, [#allocation4]
    $region165: #{vivitae_forward.1} parent=1 // pred_fallthru
      _
    // Predicated region
    $region166: #{vivitae_forward.1} parent=1 // pred_check
      _
    $region167: #{vivitae_forward.1} parent=1 // pred_check_branch
      %194 = sbr.rel (0) target = $region169
    $region168: #{vivitae_forward.1} parent=1 // pred_region
      %196 = vsyncadd [#allocation7], 0
      %s198 = sshll.u32 %s83, 4
      %s199 = int_to_ptr.hbm [resolvable:$true] %s198
      %s200 = sshll.u32 [#allocation6], 4
      %s201 = int_to_ptr.vmem [resolvable:$true] %s200
      %203 = dma.hbm_to_vmem [thread:$0]  %s199, 16, %s201, [#allocation7]
    $region169: #{vivitae_forward.1} parent=1 // pred_fallthru
      _
    // Predicated region
    $region170: #{vivitae_forward.1} parent=1 // pred_check
      _
    $region171: #{vivitae_forward.1} parent=1 // pred_check_branch
      %205 = sbr.rel (0) target = $region173
    $region172: #{vivitae_forward.1} parent=1 // pred_region
      %207 = vsyncadd [#allocation7], 0
      %s209 = sshll.u32 %s85, 4
      %s210 = int_to_ptr.hbm [resolvable:$true] %s209
      %s211 = sshll.u32 [#allocation8], 4
      %s212 = int_to_ptr.vmem [resolvable:$true] %s211
      %214 = dma.hbm_to_vmem [thread:$0]  %s210, 16, %s212, [#allocation7]
    $region173: #{vivitae_forward.1} parent=1 // pred_fallthru
      _
    // Predicated region
    $region174: #{vivitae_forward.1} parent=1 // pred_check
      _
    $region175: #{vivitae_forward.1} parent=1 // pred_check_branch
      %216 = sbr.rel (0) target = $region177
    $region176: #{vivitae_forward.1} parent=1 // pred_region
      _
    $region177: #{vivitae_forward.1} parent=1 // pred_fallthru
      _
    // Predicated region
    $region178: #{vivitae_forward.1} parent=1 // pred_check
      _
    $region179: #{vivitae_forward.1} parent=1 // pred_check_branch
      %218 = sbr.rel (0) target = $region181
    $region180: #{vivitae_forward.1} parent=1 // pred_region
      %220 = vsyncadd [#allocation10], 0
      %s222 = sshll.u32 %s89, 4
      %s223 = int_to_ptr.hbm [resolvable:$true] %s222
      %s224 = sshll.u32 [#allocation9], 4
      %s225 = int_to_ptr.vmem [resolvable:$true] %s224
      %227 = dma.hbm_to_vmem [thread:$0]  %s223, 16, %s225, [#allocation10]
    $region181: #{vivitae_forward.1} parent=1 // pred_fallthru
      _
    // Predicated region
    $region182: #{vivitae_forward.1} parent=1 // pred_check
      _
    $region183: #{vivitae_forward.1} parent=1 // pred_check_branch
      %229 = sbr.rel (0) target = $region185
    $region184: #{vivitae_forward.1} parent=1 // pred_region
      %231 = vsyncadd [#allocation5], 0
      %s233 = sshll.u32 %s91, 4
      %s234 = int_to_ptr.hbm [resolvable:$true] %s233
      %236 = dma.hbm_to_smem %s234, 16, [#allocation11], [#allocation5]
    $region185: #{vivitae_forward.1} parent=1 // pred_fallthru
      _
    // Predicated region
    $region186: #{vivitae_forward.1} parent=1 // pred_check
      _
    $region187: #{vivitae_forward.1} parent=1 // pred_check_branch
      %238 = sbr.rel (0) target = $region189
    $region188: #{vivitae_forward.1} parent=1 // pred_region
      %240 = dma.done [#allocation4], 16
    $region189: #{vivitae_forward.1} parent=1 // pred_fallthru
      _
    // Predicated region
    $region190: #{vivitae_forward.1} parent=1 // pred_check
      _
    $region191: #{vivitae_forward.1} parent=1 // pred_check_branch
      %242 = sbr.rel (0) target = $region193
    $region192: #{vivitae_forward.1} parent=1 // pred_region
      %244 = dma.done [#allocation7], 16
    $region193: #{vivitae_forward.1} parent=1 // pred_fallthru
      _
    // Predicated region
    $region194: #{vivitae_forward.1} parent=1 // pred_check
      _
    $region195: #{vivitae_forward.1} parent=1 // pred_check_branch
      %246 = sbr.rel (0) target = $region197
    $region196: #{vivitae_forward.1} parent=1 // pred_region
      %248 = dma.done [#allocation7], 16
    $region197: #{vivitae_forward.1} parent=1 // pred_fallthru
      _
    // Predicated region
    $region198: #{vivitae_forward.1} parent=1 // pred_check
      _
    $region199: #{vivitae_forward.1} parent=1 // pred_check_branch
      %250 = sbr.rel (0) target = $region201
    $region200: #{vivitae_forward.1} parent=1 // pred_region
      %252 = dma.done [#allocation10], 16
    $region201: #{vivitae_forward.1} parent=1 // pred_fallthru
      _
    // Predicated region
    $region202: #{vivitae_forward.1} parent=1 // pred_check
      _
    $region203: #{vivitae_forward.1} parent=1 // pred_check_branch
      %254 = sbr.rel (0) target = $region205
    $region204: #{vivitae_forward.1} parent=1 // pred_region
      %256 = dma.done [#allocation5], 16
    $region205: #{vivitae_forward.1} parent=1 // pred_fallthru
      _
    %257 = sfence
    %v258 = vld [vmem:[%s1] sm:$0xff]
    %v259 = vld [vmem:[%s1 + $0x8] sm:$0xff]
    %v260 = vld [vmem:[%s1 + $0x10] sm:$0xff]
    %v261 = vld [vmem:[%s1 + $0x18] sm:$0xff]
    %v262 = vld [vmem:[%s1 + $0x20] sm:$0xff]
    %v263 = vld [vmem:[%s1 + $0x28] sm:$0xff]
    %v264 = vld [vmem:[%s1 + $0x30] sm:$0xff]
    %v265 = vld [vmem:[%s1 + $0x38] sm:$0xff]
    %v266 = vld [vmem:[%s1 + $0x40] sm:$0xff]
    %v267 = vld [vmem:[%s1 + $0x48] sm:$0xff]
    %v268 = vld [vmem:[%s1 + $0x50] sm:$0xff]
    %v269 = vld [vmem:[%s1 + $0x58] sm:$0xff]
    %v270 = vld [vmem:[%s1 + $0x60] sm:$0xff]
    %v271 = vld [vmem:[%s1 + $0x68] sm:$0xff]
    %v272 = vld [vmem:[%s1 + $0x70] sm:$0xff]
    %v273 = vld [vmem:[%s1 + $0x78] sm:$0xff]
    %v274 = vld [vmem:[%s1 + $0x80] sm:$0xff]
    %v275 = vld [vmem:[%s1 + $0x88] sm:$0xff]
    %v276 = vld [vmem:[%s1 + $0x90] sm:$0xff]
    %v277 = vld [vmem:[%s1 + $0x98] sm:$0xff]
    %v278 = vld [vmem:[%s1 + $0xa0] sm:$0xff]
    %v279 = vld [vmem:[%s1 + $0xa8] sm:$0xff]
    %v280 = vld [vmem:[%s1 + $0xb0] sm:$0xff]
    %v281 = vld [vmem:[%s1 + $0xb8] sm:$0xff]
    %v282 = vld [vmem:[%s7] sm:$0xff]
    %v283 = vld [vmem:[%s7 + $0x8] sm:$0xff]
    %v284 = vld [vmem:[%s7 + $0x10] sm:$0xff]
    %v285 = vld [vmem:[%s7 + $0x18] sm:$0xff]
    %v286 = vld [vmem:[%s7 + $0x20] sm:$0xff]
    %v287 = vld [vmem:[%s7 + $0x28] sm:$0xff]
    %v288 = vld [vmem:[%s9] sm:$0x1]
    %v290 = vperm.slane %v288, 0
    %vm292 = vcmask 392192
    %v294 = vsel %vm292, %v258, 0
    %v297 = vsel %vm292, %v259, 0
    %v300 = vsel %vm292, %v260, 0
    %v303 = vsel %vm292, %v261, 0
    %v306 = vsel %vm292, %v262, 0
    %v309 = vsel %vm292, %v263, 0
    %v312 = vsel %vm292, %v264, 0
    %v315 = vsel %vm292, %v265, 0
    %v318 = vsel %vm292, %v266, 0
    %v321 = vsel %vm292, %v267, 0
    %v324 = vsel %vm292, %v268, 0
    %v327 = vsel %vm292, %v269, 0
    %v330 = vsel %vm292, %v270, 0
    %v333 = vsel %vm292, %v271, 0
    %v336 = vsel %vm292, %v272, 0
    %v339 = vsel %vm292, %v273, 0
    %v342 = vsel %vm292, %v274, 0
    %v345 = vsel %vm292, %v275, 0
    %v348 = vsel %vm292, %v276, 0
    %v351 = vsel %vm292, %v277, 0
    %v354 = vsel %vm292, %v278, 0
    %v357 = vsel %vm292, %v279, 0
    %v360 = vsel %vm292, %v280, 0
    %v363 = vsel %vm292, %v281, 0
    %365 = vmatpush.msra.mxu0 0.0
    %366 = vmatpush.msra.mxu0 0.0
    %367 = vmatpush.msra.mxu0 0.0
    %368 = vmatpush.msra.mxu0 0.0
    %369 = vmatpush.msra.mxu0 0.0
    %370 = vmatpush.msra.mxu0 0.0
    %371 = vmatpush.msra.mxu0 0.0
    %372 = vmatpush.msra.mxu0 0.0
    %373 = vmatpush.msra.mxu0 0.0
    %374 = vmatpush.msra.mxu0 0.0
    %375 = vmatpush.msra.mxu0 %v287
    %376 = vmatpush.msra.mxu0 %v286
    %377 = vmatpush.msra.mxu0 %v285
    %378 = vmatpush.msra.mxu0 %v284
    %379 = vmatpush.msra.mxu0 %v283
    %380 = vmatpush.msra.mxu0 %v282
    %381 = vmatmul.f32.gmra.mxu0 %v294
    %v382 = vpop.f32.mrf.mxu0
    %v383 = vadd.f32 %v290, %v382
    %384 = vmatmul.f32.gmra.mxu0 %v297
    %v385 = vpop.f32.mrf.mxu0
    %v386 = vadd.f32 %v290, %v385
    %387 = vmatmul.f32.gmra.mxu0 %v300
    %v388 = vpop.f32.mrf.mxu0
    %v389 = vadd.f32 %v290, %v388
    %390 = vmatmul.f32.gmra.mxu0 %v303
    %v391 = vpop.f32.mrf.mxu0
    %v392 = vadd.f32 %v290, %v391
    %393 = vmatmul.f32.gmra.mxu0 %v306
    %v394 = vpop.f32.mrf.mxu0
    %v395 = vadd.f32 %v290, %v394
    %396 = vmatmul.f32.gmra.mxu0 %v309
    %v397 = vpop.f32.mrf.mxu0
    %v398 = vadd.f32 %v290, %v397
    %399 = vmatmul.f32.gmra.mxu0 %v312
    %v400 = vpop.f32.mrf.mxu0
    %v401 = vadd.f32 %v290, %v400
    %402 = vmatmul.f32.gmra.mxu0 %v315
    %v403 = vpop.f32.mrf.mxu0
    %v404 = vadd.f32 %v290, %v403
    %405 = vmatmul.f32.gmra.mxu0 %v318
    %v406 = vpop.f32.mrf.mxu0
    %v407 = vadd.f32 %v290, %v406
    %408 = vmatmul.f32.gmra.mxu0 %v321
    %v409 = vpop.f32.mrf.mxu0
    %v410 = vadd.f32 %v290, %v409
    %411 = vmatmul.f32.gmra.mxu0 %v324
    %v412 = vpop.f32.mrf.mxu0
    %v413 = vadd.f32 %v290, %v412
    %414 = vmatmul.f32.gmra.mxu0 %v327
    %v415 = vpop.f32.mrf.mxu0
    %v416 = vadd.f32 %v290, %v415
    %417 = vmatmul.f32.gmra.mxu0 %v330
    %v418 = vpop.f32.mrf.mxu0
    %v419 = vadd.f32 %v290, %v418
    %420 = vmatmul.f32.gmra.mxu0 %v333
    %v421 = vpop.f32.mrf.mxu0
    %v422 = vadd.f32 %v290, %v421
    %423 = vmatmul.f32.gmra.mxu0 %v336
    %v424 = vpop.f32.mrf.mxu0
    %v425 = vadd.f32 %v290, %v424
    %426 = vmatmul.f32.gmra.mxu0 %v339
    %v427 = vpop.f32.mrf.mxu0
    %v428 = vadd.f32 %v290, %v427
    %429 = vmatmul.f32.gmra.mxu0 %v342
    %v430 = vpop.f32.mrf.mxu0
    %v431 = vadd.f32 %v290, %v430
    %432 = vmatmul.f32.gmra.mxu0 %v345
    %v433 = vpop.f32.mrf.mxu0
    %v434 = vadd.f32 %v290, %v433
    %435 = vmatmul.f32.gmra.mxu0 %v348
    %v436 = vpop.f32.mrf.mxu0
    %v437 = vadd.f32 %v290, %v436
    %438 = vmatmul.f32.gmra.mxu0 %v351
    %v439 = vpop.f32.mrf.mxu0
    %v440 = vadd.f32 %v290, %v439
    %441 = vmatmul.f32.gmra.mxu0 %v354
    %v442 = vpop.f32.mrf.mxu0
    %v443 = vadd.f32 %v290, %v442
    %444 = vmatmul.f32.gmra.mxu0 %v357
    %v445 = vpop.f32.mrf.mxu0
    %v446 = vadd.f32 %v290, %v445
    %447 = vmatmul.f32.gmra.mxu0 %v360
    %v448 = vpop.f32.mrf.mxu0
    %v449 = vadd.f32 %v290, %v448
    %450 = vmatmul.f32.gmra.mxu0 %v363
    %v451 = vpop.f32.mrf.mxu0
    %v452 = vadd.f32 %v290, %v451
    %453 = vdwg.mxu0
    %v454 = vld [vmem:[%s11] sm:$0xff]
    %v455 = vld [vmem:[%s11 + $0x8] sm:$0xff]
    %v456 = vadd.f32 %v383, %v454
    %v457 = vadd.f32 %v386, %v455
    %v458 = vadd.f32 %v389, %v454
    %v459 = vadd.f32 %v392, %v455
    %v460 = vadd.f32 %v395, %v454
    %v461 = vadd.f32 %v398, %v455
    %v462 = vadd.f32 %v401, %v454
    %v463 = vadd.f32 %v404, %v455
    %v464 = vadd.f32 %v407, %v454
    %v465 = vadd.f32 %v410, %v455
    %v466 = vadd.f32 %v413, %v454
    %v467 = vadd.f32 %v416, %v455
    %v468 = vadd.f32 %v419, %v454
    %v469 = vadd.f32 %v422, %v455
    %v470 = vadd.f32 %v425, %v454
    %v471 = vadd.f32 %v428, %v455
    %v472 = vadd.f32 %v431, %v454
    %v473 = vadd.f32 %v434, %v455
    %v474 = vadd.f32 %v437, %v454
    %v475 = vadd.f32 %v440, %v455
    %v476 = vadd.f32 %v443, %v454
    %v477 = vadd.f32 %v446, %v455
    %v478 = vadd.f32 %v449, %v454
    %v479 = vadd.f32 %v452, %v455
    %s480 = sld [smem:[#allocation11]]
    %v481 = vld [vmem:[%s3] sm:$0xff]
    %v482 = vld [vmem:[%s3 + $0x8] sm:$0xff]
    %v483 = vld [vmem:[%s3 + $0x10] sm:$0xff]
    %v484 = vld [vmem:[%s3 + $0x18] sm:$0xff]
    %v485 = vld [vmem:[%s15] sm:$0xff]
    %v486 = vld [vmem:[%s15 + $0x8] sm:$0xff]
    %v487 = vld [vmem:[%s15 + $0x10] sm:$0xff]
    %v488 = vld [vmem:[%s15 + $0x18] sm:$0xff]
    %v489 = vld [vmem:[%s17] sm:$0x1]
    %v491 = vperm.slane %v489, 0
    %vm493 = vcmask 261120
    %v495 = vsel %vm493, %v456, 0
    %v498 = vsel %vm493, %v457, 0
    %v501 = vsel %vm493, %v458, 0
    %v504 = vsel %vm493, %v459, 0
    %v507 = vsel %vm493, %v460, 0
    %v510 = vsel %vm493, %v461, 0
    %v513 = vsel %vm493, %v462, 0
    %v516 = vsel %vm493, %v463, 0
    %v519 = vsel %vm493, %v464, 0
    %v522 = vsel %vm493, %v465, 0
    %v525 = vsel %vm493, %v466, 0
    %v528 = vsel %vm493, %v467, 0
    %v531 = vsel %vm493, %v468, 0
    %v534 = vsel %vm493, %v469, 0
    %v537 = vsel %vm493, %v470, 0
    %v540 = vsel %vm493, %v471, 0
    %v543 = vsel %vm493, %v472, 0
    %v546 = vsel %vm493, %v473, 0
    %v549 = vsel %vm493, %v474, 0
    %v552 = vsel %vm493, %v475, 0
    %v555 = vsel %vm493, %v476, 0
    %v558 = vsel %vm493, %v477, 0
    %v561 = vsel %vm493, %v478, 0
    %v564 = vsel %vm493, %v479, 0
    %566 = vmatpush.msra.mxu0 0.0
    %567 = vmatpush.msra.mxu0 0.0
    %568 = vmatpush.msra.mxu0 0.0
    %569 = vmatpush.msra.mxu0 0.0
    %570 = vmatpush.msra.mxu0 0.0
    %571 = vmatpush.msra.mxu0 0.0
    %572 = vmatpush.msra.mxu0 0.0
    %573 = vmatpush.msra.mxu0 0.0
    %574 = vmatpush.msra.mxu0 0.0
    %575 = vmatpush.msra.mxu0 0.0
    %576 = vmatpush.msra.mxu0 0.0
    %577 = vmatpush.msra.mxu0 0.0
    %578 = vmatpush.msra.mxu0 %v488
    %579 = vmatpush.msra.mxu0 %v487
    %580 = vmatpush.msra.mxu0 %v486
    %581 = vmatpush.msra.mxu0 %v485
    %582 = vmatmul.f32.gmra.mxu0 %v495
    %v583 = vpop.f32.mrf.mxu0
    %v584 = vadd.f32 %v491, %v583
    %585 = vmatmul.f32.gmra.mxu0 %v498
    %v586 = vpop.f32.mrf.mxu0
    %v587 = vadd.f32 %v491, %v586
    %588 = vmatmul.f32.gmra.mxu0 %v501
    %v589 = vpop.f32.mrf.mxu0
    %v590 = vadd.f32 %v491, %v589
    %591 = vmatmul.f32.gmra.mxu0 %v504
    %v592 = vpop.f32.mrf.mxu0
    %v593 = vadd.f32 %v491, %v592
    %594 = vmatmul.f32.gmra.mxu0 %v507
    %v595 = vpop.f32.mrf.mxu0
    %v596 = vadd.f32 %v491, %v595
    %597 = vmatmul.f32.gmra.mxu0 %v510
    %v598 = vpop.f32.mrf.mxu0
    %v599 = vadd.f32 %v491, %v598
    %600 = vmatmul.f32.gmra.mxu0 %v513
    %v601 = vpop.f32.mrf.mxu0
    %v602 = vadd.f32 %v491, %v601
    %603 = vmatmul.f32.gmra.mxu0 %v516
    %v604 = vpop.f32.mrf.mxu0
    %v605 = vadd.f32 %v491, %v604
    %606 = vmatmul.f32.gmra.mxu0 %v519
    %v607 = vpop.f32.mrf.mxu0
    %v608 = vadd.f32 %v491, %v607
    %609 = vmatmul.f32.gmra.mxu0 %v522
    %v610 = vpop.f32.mrf.mxu0
    %v611 = vadd.f32 %v491, %v610
    %612 = vmatmul.f32.gmra.mxu0 %v525
    %v613 = vpop.f32.mrf.mxu0
    %v614 = vadd.f32 %v491, %v613
    %615 = vmatmul.f32.gmra.mxu0 %v528
    %v616 = vpop.f32.mrf.mxu0
    %v617 = vadd.f32 %v491, %v616
    %618 = vmatmul.f32.gmra.mxu0 %v531
    %v619 = vpop.f32.mrf.mxu0
    %v620 = vadd.f32 %v491, %v619
    %621 = vmatmul.f32.gmra.mxu0 %v534
    %v622 = vpop.f32.mrf.mxu0
    %v623 = vadd.f32 %v491, %v622
    %624 = vmatmul.f32.gmra.mxu0 %v537
    %v625 = vpop.f32.mrf.mxu0
    %v626 = vadd.f32 %v491, %v625
    %627 = vmatmul.f32.gmra.mxu0 %v540
    %v628 = vpop.f32.mrf.mxu0
    %v629 = vadd.f32 %v491, %v628
    %630 = vmatmul.f32.gmra.mxu0 %v543
    %v631 = vpop.f32.mrf.mxu0
    %v632 = vadd.f32 %v491, %v631
    %633 = vmatmul.f32.gmra.mxu0 %v546
    %v634 = vpop.f32.mrf.mxu0
    %v635 = vadd.f32 %v491, %v634
    %636 = vmatmul.f32.gmra.mxu0 %v549
    %v637 = vpop.f32.mrf.mxu0
    %v638 = vadd.f32 %v491, %v637
    %639 = vmatmul.f32.gmra.mxu0 %v552
    %v640 = vpop.f32.mrf.mxu0
    %v641 = vadd.f32 %v491, %v640
    %642 = vmatmul.f32.gmra.mxu0 %v555
    %v643 = vpop.f32.mrf.mxu0
    %v644 = vadd.f32 %v491, %v643
    %645 = vmatmul.f32.gmra.mxu0 %v558
    %v646 = vpop.f32.mrf.mxu0
    %v647 = vadd.f32 %v491, %v646
    %648 = vmatmul.f32.gmra.mxu0 %v561
    %v649 = vpop.f32.mrf.mxu0
    %v650 = vadd.f32 %v491, %v649
    %651 = vmatmul.f32.gmra.mxu0 %v564
    %v652 = vpop.f32.mrf.mxu0
    %v653 = vadd.f32 %v491, %v652
    %654 = vdwg.mxu0
    %v655 = vld [vmem:[%s19] sm:$0xff]
    %v656 = vld [vmem:[%s19 + $0x8] sm:$0xff]
    %v657 = vld [vmem:[%s19 + $0x10] sm:$0xff]
    %v658 = vld [vmem:[%s19 + $0x18] sm:$0xff]
    %v659 = vld [vmem:[%s21] sm:$0x1]
    %v661 = vperm.slane %v659, 0
    %663 = vmatpush.msra.mxu0 0.0
    %664 = vmatpush.msra.mxu0 0.0
    %665 = vmatpush.msra.mxu0 0.0
    %666 = vmatpush.msra.mxu0 0.0
    %667 = vmatpush.msra.mxu0 0.0
    %668 = vmatpush.msra.mxu0 0.0
    %669 = vmatpush.msra.mxu0 0.0
    %670 = vmatpush.msra.mxu0 0.0
    %671 = vmatpush.msra.mxu0 0.0
    %672 = vmatpush.msra.mxu0 0.0
    %673 = vmatpush.msra.mxu0 0.0
    %674 = vmatpush.msra.mxu0 0.0
    %675 = vmatpush.msra.mxu0 %v658
    %676 = vmatpush.msra.mxu0 %v657
    %677 = vmatpush.msra.mxu0 %v656
    %678 = vmatpush.msra.mxu0 %v655
    %679 = vmatmul.f32.gmra.mxu0 %v495
    %v680 = vpop.f32.mrf.mxu0
    %v681 = vadd.f32 %v661, %v680
    %682 = vmatmul.f32.gmra.mxu0 %v498
    %v683 = vpop.f32.mrf.mxu0
    %v684 = vadd.f32 %v661, %v683
    %685 = vmatmul.f32.gmra.mxu0 %v501
    %v686 = vpop.f32.mrf.mxu0
    %v687 = vadd.f32 %v661, %v686
    %688 = vmatmul.f32.gmra.mxu0 %v504
    %v689 = vpop.f32.mrf.mxu0
    %v690 = vadd.f32 %v661, %v689
    %691 = vmatmul.f32.gmra.mxu0 %v507
    %v692 = vpop.f32.mrf.mxu0
    %v693 = vadd.f32 %v661, %v692
    %694 = vmatmul.f32.gmra.mxu0 %v510
    %v695 = vpop.f32.mrf.mxu0
    %v696 = vadd.f32 %v661, %v695
    %697 = vmatmul.f32.gmra.mxu0 %v513
    %v698 = vpop.f32.mrf.mxu0
    %v699 = vadd.f32 %v661, %v698
    %700 = vmatmul.f32.gmra.mxu0 %v516
    %v701 = vpop.f32.mrf.mxu0
    %v702 = vadd.f32 %v661, %v701
    %703 = vmatmul.f32.gmra.mxu0 %v519
    %v704 = vpop.f32.mrf.mxu0
    %v705 = vadd.f32 %v661, %v704
    %706 = vmatmul.f32.gmra.mxu0 %v522
    %v707 = vpop.f32.mrf.mxu0
    %v708 = vadd.f32 %v661, %v707
    %709 = vmatmul.f32.gmra.mxu0 %v525
    %v710 = vpop.f32.mrf.mxu0
    %v711 = vadd.f32 %v661, %v710
    %712 = vmatmul.f32.gmra.mxu0 %v528
    %v713 = vpop.f32.mrf.mxu0
    %v714 = vadd.f32 %v661, %v713
    %715 = vmatmul.f32.gmra.mxu0 %v531
    %v716 = vpop.f32.mrf.mxu0
    %v717 = vadd.f32 %v661, %v716
    %718 = vmatmul.f32.gmra.mxu0 %v534
    %v719 = vpop.f32.mrf.mxu0
    %v720 = vadd.f32 %v661, %v719
    %721 = vmatmul.f32.gmra.mxu0 %v537
    %v722 = vpop.f32.mrf.mxu0
    %v723 = vadd.f32 %v661, %v722
    %724 = vmatmul.f32.gmra.mxu0 %v540
    %v725 = vpop.f32.mrf.mxu0
    %v726 = vadd.f32 %v661, %v725
    %727 = vmatmul.f32.gmra.mxu0 %v543
    %v728 = vpop.f32.mrf.mxu0
    %v729 = vadd.f32 %v661, %v728
    %730 = vmatmul.f32.gmra.mxu0 %v546
    %v731 = vpop.f32.mrf.mxu0
    %v732 = vadd.f32 %v661, %v731
    %733 = vmatmul.f32.gmra.mxu0 %v549
    %v734 = vpop.f32.mrf.mxu0
    %v735 = vadd.f32 %v661, %v734
    %736 = vmatmul.f32.gmra.mxu0 %v552
    %v737 = vpop.f32.mrf.mxu0
    %v738 = vadd.f32 %v661, %v737
    %739 = vmatmul.f32.gmra.mxu0 %v555
    %v740 = vpop.f32.mrf.mxu0
    %v741 = vadd.f32 %v661, %v740
    %742 = vmatmul.f32.gmra.mxu0 %v558
    %v743 = vpop.f32.mrf.mxu0
    %v744 = vadd.f32 %v661, %v743
    %745 = vmatmul.f32.gmra.mxu0 %v561
    %v746 = vpop.f32.mrf.mxu0
    %v747 = vadd.f32 %v661, %v746
    %748 = vmatmul.f32.gmra.mxu0 %v564
    %v749 = vpop.f32.mrf.mxu0
    %v750 = vadd.f32 %v661, %v749
    %751 = vdwg.mxu0
    %v752 = vld [vmem:[%s23] sm:$0xff]
    %v753 = vld [vmem:[%s23 + $0x8] sm:$0xff]
    %v754 = vld [vmem:[%s23 + $0x10] sm:$0xff]
    %v755 = vld [vmem:[%s23 + $0x18] sm:$0xff]
    %v756 = vld [vmem:[%s25] sm:$0x1]
    %v758 = vperm.slane %v756, 0
    %760 = vmatpush.msra.mxu0 0.0
    %761 = vmatpush.msra.mxu0 0.0
    %762 = vmatpush.msra.mxu0 0.0
    %763 = vmatpush.msra.mxu0 0.0
    %764 = vmatpush.msra.mxu0 0.0
    %765 = vmatpush.msra.mxu0 0.0
    %766 = vmatpush.msra.mxu0 0.0
    %767 = vmatpush.msra.mxu0 0.0
    %768 = vmatpush.msra.mxu0 0.0
    %769 = vmatpush.msra.mxu0 0.0
    %770 = vmatpush.msra.mxu0 0.0
    %771 = vmatpush.msra.mxu0 0.0
    %772 = vmatpush.msra.mxu0 %v755
    %773 = vmatpush.msra.mxu0 %v754
    %774 = vmatpush.msra.mxu0 %v753
    %775 = vmatpush.msra.mxu0 %v752
    %776 = vmatmul.f32.gmra.mxu0 %v495
    %v777 = vpop.f32.mrf.mxu0
    %v778 = vadd.f32 %v758, %v777
    %779 = vmatmul.f32.gmra.mxu0 %v498
    %v780 = vpop.f32.mrf.mxu0
    %v781 = vadd.f32 %v758, %v780
    %782 = vmatmul.f32.gmra.mxu0 %v501
    %v783 = vpop.f32.mrf.mxu0
    %v784 = vadd.f32 %v758, %v783
    %785 = vmatmul.f32.gmra.mxu0 %v504
    %v786 = vpop.f32.mrf.mxu0
    %v787 = vadd.f32 %v758, %v786
    %788 = vmatmul.f32.gmra.mxu0 %v507
    %v789 = vpop.f32.mrf.mxu0
    %v790 = vadd.f32 %v758, %v789
    %791 = vmatmul.f32.gmra.mxu0 %v510
    %v792 = vpop.f32.mrf.mxu0
    %v793 = vadd.f32 %v758, %v792
    %794 = vmatmul.f32.gmra.mxu0 %v513
    %v795 = vpop.f32.mrf.mxu0
    %v796 = vadd.f32 %v758, %v795
    %797 = vmatmul.f32.gmra.mxu0 %v516
    %v798 = vpop.f32.mrf.mxu0
    %v799 = vadd.f32 %v758, %v798
    %800 = vmatmul.f32.gmra.mxu0 %v519
    %v801 = vpop.f32.mrf.mxu0
    %v802 = vadd.f32 %v758, %v801
    %803 = vmatmul.f32.gmra.mxu0 %v522
    %v804 = vpop.f32.mrf.mxu0
    %v805 = vadd.f32 %v758, %v804
    %806 = vmatmul.f32.gmra.mxu0 %v525
    %v807 = vpop.f32.mrf.mxu0
    %v808 = vadd.f32 %v758, %v807
    %809 = vmatmul.f32.gmra.mxu0 %v528
    %v810 = vpop.f32.mrf.mxu0
    %v811 = vadd.f32 %v758, %v810
    %812 = vmatmul.f32.gmra.mxu0 %v531
    %v813 = vpop.f32.mrf.mxu0
    %v814 = vadd.f32 %v758, %v813
    %815 = vmatmul.f32.gmra.mxu0 %v534
    %v816 = vpop.f32.mrf.mxu0
    %v817 = vadd.f32 %v758, %v816
    %818 = vmatmul.f32.gmra.mxu0 %v537
    %v819 = vpop.f32.mrf.mxu0
    %v820 = vadd.f32 %v758, %v819
    %821 = vmatmul.f32.gmra.mxu0 %v540
    %v822 = vpop.f32.mrf.mxu0
    %v823 = vadd.f32 %v758, %v822
    %824 = vmatmul.f32.gmra.mxu0 %v543
    %v825 = vpop.f32.mrf.mxu0
    %v826 = vadd.f32 %v758, %v825
    %827 = vmatmul.f32.gmra.mxu0 %v546
    %v828 = vpop.f32.mrf.mxu0
    %v829 = vadd.f32 %v758, %v828
    %830 = vmatmul.f32.gmra.mxu0 %v549
    %v831 = vpop.f32.mrf.mxu0
    %v832 = vadd.f32 %v758, %v831
    %833 = vmatmul.f32.gmra.mxu0 %v552
    %v834 = vpop.f32.mrf.mxu0
    %v835 = vadd.f32 %v758, %v834
    %836 = vmatmul.f32.gmra.mxu0 %v555
    %v837 = vpop.f32.mrf.mxu0
    %v838 = vadd.f32 %v758, %v837
    %839 = vmatmul.f32.gmra.mxu0 %v558
    %v840 = vpop.f32.mrf.mxu0
    %v841 = vadd.f32 %v758, %v840
    %842 = vmatmul.f32.gmra.mxu0 %v561
    %v843 = vpop.f32.mrf.mxu0
    %v844 = vadd.f32 %v758, %v843
    %845 = vmatmul.f32.gmra.mxu0 %v564
    %v846 = vpop.f32.mrf.mxu0
    %v847 = vadd.f32 %v758, %v846
    %848 = vdwg.mxu0
    %v849 = vld [vmem:[%s27] sm:$0xff]
    %v850 = vld [vmem:[%s27 + $0x8] sm:$0xff]
    %v851 = vld [vmem:[%s27 + $0x10] sm:$0xff]
    %v852 = vld [vmem:[%s27 + $0x18] sm:$0xff]
    %v853 = vld [vmem:[%s29] sm:$0x1]
    %v855 = vperm.slane %v853, 0
    %857 = vmatpush.msra.mxu0 0.0
    %858 = vmatpush.msra.mxu0 0.0
    %859 = vmatpush.msra.mxu0 0.0
    %860 = vmatpush.msra.mxu0 0.0
    %861 = vmatpush.msra.mxu0 0.0
    %862 = vmatpush.msra.mxu0 0.0
    %863 = vmatpush.msra.mxu0 0.0
    %864 = vmatpush.msra.mxu0 0.0
    %865 = vmatpush.msra.mxu0 0.0
    %866 = vmatpush.msra.mxu0 0.0
    %867 = vmatpush.msra.mxu0 0.0
    %868 = vmatpush.msra.mxu0 0.0
    %869 = vmatpush.msra.mxu0 %v852
    %870 = vmatpush.msra.mxu0 %v851
    %871 = vmatpush.msra.mxu0 %v850
    %872 = vmatpush.msra.mxu0 %v849
    %873 = vmatmul.f32.gmra.mxu0 %v495
    %v874 = vpop.f32.mrf.mxu0
    %v875 = vadd.f32 %v855, %v874
    %876 = vmatmul.f32.gmra.mxu0 %v498
    %v877 = vpop.f32.mrf.mxu0
    %v878 = vadd.f32 %v855, %v877
    %879 = vmatmul.f32.gmra.mxu0 %v501
    %v880 = vpop.f32.mrf.mxu0
    %v881 = vadd.f32 %v855, %v880
    %882 = vmatmul.f32.gmra.mxu0 %v504
    %v883 = vpop.f32.mrf.mxu0
    %v884 = vadd.f32 %v855, %v883
    %885 = vmatmul.f32.gmra.mxu0 %v507
    %v886 = vpop.f32.mrf.mxu0
    %v887 = vadd.f32 %v855, %v886
    %888 = vmatmul.f32.gmra.mxu0 %v510
    %v889 = vpop.f32.mrf.mxu0
    %v890 = vadd.f32 %v855, %v889
    %891 = vmatmul.f32.gmra.mxu0 %v513
    %v892 = vpop.f32.mrf.mxu0
    %v893 = vadd.f32 %v855, %v892
    %894 = vmatmul.f32.gmra.mxu0 %v516
    %v895 = vpop.f32.mrf.mxu0
    %v896 = vadd.f32 %v855, %v895
    %897 = vmatmul.f32.gmra.mxu0 %v519
    %v898 = vpop.f32.mrf.mxu0
    %v899 = vadd.f32 %v855, %v898
    %900 = vmatmul.f32.gmra.mxu0 %v522
    %v901 = vpop.f32.mrf.mxu0
    %v902 = vadd.f32 %v855, %v901
    %903 = vmatmul.f32.gmra.mxu0 %v525
    %v904 = vpop.f32.mrf.mxu0
    %v905 = vadd.f32 %v855, %v904
    %906 = vmatmul.f32.gmra.mxu0 %v528
    %v907 = vpop.f32.mrf.mxu0
    %v908 = vadd.f32 %v855, %v907
    %909 = vmatmul.f32.gmra.mxu0 %v531
    %v910 = vpop.f32.mrf.mxu0
    %v911 = vadd.f32 %v855, %v910
    %912 = vmatmul.f32.gmra.mxu0 %v534
    %v913 = vpop.f32.mrf.mxu0
    %v914 = vadd.f32 %v855, %v913
    %915 = vmatmul.f32.gmra.mxu0 %v537
    %v916 = vpop.f32.mrf.mxu0
    %v917 = vadd.f32 %v855, %v916
    %918 = vmatmul.f32.gmra.mxu0 %v540
    %v919 = vpop.f32.mrf.mxu0
    %v920 = vadd.f32 %v855, %v919
    %921 = vmatmul.f32.gmra.mxu0 %v543
    %v922 = vpop.f32.mrf.mxu0
    %v923 = vadd.f32 %v855, %v922
    %924 = vmatmul.f32.gmra.mxu0 %v546
    %v925 = vpop.f32.mrf.mxu0
    %v926 = vadd.f32 %v855, %v925
    %927 = vmatmul.f32.gmra.mxu0 %v549
    %v928 = vpop.f32.mrf.mxu0
    %v929 = vadd.f32 %v855, %v928
    %930 = vmatmul.f32.gmra.mxu0 %v552
    %v931 = vpop.f32.mrf.mxu0
    %v932 = vadd.f32 %v855, %v931
    %933 = vmatmul.f32.gmra.mxu0 %v555
    %v934 = vpop.f32.mrf.mxu0
    %v935 = vadd.f32 %v855, %v934
    %936 = vmatmul.f32.gmra.mxu0 %v558
    %v937 = vpop.f32.mrf.mxu0
    %v938 = vadd.f32 %v855, %v937
    %939 = vmatmul.f32.gmra.mxu0 %v561
    %v940 = vpop.f32.mrf.mxu0
    %v941 = vadd.f32 %v855, %v940
    %942 = vmatmul.f32.gmra.mxu0 %v564
    %v943 = vpop.f32.mrf.mxu0
    %v944 = vadd.f32 %v855, %v943
    %945 = vdwg.mxu0
    %v947 = vsel %vm493, %v584, 0
    %v950 = vsel %vm493, %v587, 0
    %v953 = vsel %vm493, %v778, 0
    %v956 = vsel %vm493, %v781, 0
    %958 = vmatpush.xpose.msra.mxu0 0.0
    %959 = vmatpush.xpose.msra.mxu0 0.0
    %960 = vmatpush.xpose.msra.mxu0 0.0
    %961 = vmatpush.xpose.msra.mxu0 0.0
    %962 = vmatpush.xpose.msra.mxu0 0.0
    %963 = vmatpush.xpose.msra.mxu0 0.0
    %964 = vmatpush.xpose.msra.mxu0 0.0
    %965 = vmatpush.xpose.msra.mxu0 0.0
    %966 = vmatpush.xpose.msra.mxu0 0.0
    %967 = vmatpush.xpose.msra.mxu0 0.0
    %968 = vmatpush.xpose.msra.mxu0 0.0
    %969 = vmatpush.xpose.msra.mxu0 0.0
    %970 = vmatpush.xpose.msra.mxu0 0.0
    %971 = vmatpush.xpose.msra.mxu0 0.0
    %972 = vmatpush.xpose.msra.mxu0 %v956
    %973 = vmatpush.xpose.msra.mxu0 %v953
    %974 = vmatmul.f32.gmra.mxu0 %v947
    %v975 = vpop.f32.mrf.mxu0
    %v976 = vadd.f32 0.0, %v975
    %977 = vmatmul.f32.gmra.mxu0 %v950
    %v978 = vpop.f32.mrf.mxu0
    %v979 = vadd.f32 0.0, %v978
    %980 = vdwg.mxu0
    %v982 = vsel %vm493, %v590, 0
    %v985 = vsel %vm493, %v593, 0
    %v988 = vsel %vm493, %v784, 0
    %v991 = vsel %vm493, %v787, 0
    %993 = vmatpush.xpose.msra.mxu0 0.0
    %994 = vmatpush.xpose.msra.mxu0 0.0
    %995 = vmatpush.xpose.msra.mxu0 0.0
    %996 = vmatpush.xpose.msra.mxu0 0.0
    %997 = vmatpush.xpose.msra.mxu0 0.0
    %998 = vmatpush.xpose.msra.mxu0 0.0
    %999 = vmatpush.xpose.msra.mxu0 0.0
    %1000 = vmatpush.xpose.msra.mxu0 0.0
    %1001 = vmatpush.xpose.msra.mxu0 0.0
    %1002 = vmatpush.xpose.msra.mxu0 0.0
    %1003 = vmatpush.xpose.msra.mxu0 0.0
    %1004 = vmatpush.xpose.msra.mxu0 0.0
    %1005 = vmatpush.xpose.msra.mxu0 0.0
    %1006 = vmatpush.xpose.msra.mxu0 0.0
    %1007 = vmatpush.xpose.msra.mxu0 %v991
    %1008 = vmatpush.xpose.msra.mxu0 %v988
    %1009 = vmatmul.f32.gmra.mxu0 %v982
    %v1010 = vpop.f32.mrf.mxu0
    %v1011 = vadd.f32 0.0, %v1010
    %1012 = vmatmul.f32.gmra.mxu0 %v985
    %v1013 = vpop.f32.mrf.mxu0
    %v1014 = vadd.f32 0.0, %v1013
    %1015 = vdwg.mxu0
    %v1017 = vsel %vm493, %v596, 0
    %v1020 = vsel %vm493, %v599, 0
    %v1023 = vsel %vm493, %v790, 0
    %v1026 = vsel %vm493, %v793, 0
    %1028 = vmatpush.xpose.msra.mxu0 0.0
    %1029 = vmatpush.xpose.msra.mxu0 0.0
    %1030 = vmatpush.xpose.msra.mxu0 0.0
    %1031 = vmatpush.xpose.msra.mxu0 0.0
    %1032 = vmatpush.xpose.msra.mxu0 0.0
    %1033 = vmatpush.xpose.msra.mxu0 0.0
    %1034 = vmatpush.xpose.msra.mxu0 0.0
    %1035 = vmatpush.xpose.msra.mxu0 0.0
    %1036 = vmatpush.xpose.msra.mxu0 0.0
    %1037 = vmatpush.xpose.msra.mxu0 0.0
    %1038 = vmatpush.xpose.msra.mxu0 0.0
    %1039 = vmatpush.xpose.msra.mxu0 0.0
    %1040 = vmatpush.xpose.msra.mxu0 0.0
    %1041 = vmatpush.xpose.msra.mxu0 0.0
    %1042 = vmatpush.xpose.msra.mxu0 %v1026
    %1043 = vmatpush.xpose.msra.mxu0 %v1023
    %1044 = vmatmul.f32.gmra.mxu0 %v1017
    %v1045 = vpop.f32.mrf.mxu0
    %v1046 = vadd.f32 0.0, %v1045
    %1047 = vmatmul.f32.gmra.mxu0 %v1020
    %v1048 = vpop.f32.mrf.mxu0
    %v1049 = vadd.f32 0.0, %v1048
    %1050 = vdwg.mxu0
    %v1052 = vsel %vm493, %v602, 0
    %v1055 = vsel %vm493, %v605, 0
    %v1058 = vsel %vm493, %v796, 0
    %v1061 = vsel %vm493, %v799, 0
    %1063 = vmatpush.xpose.msra.mxu0 0.0
    %1064 = vmatpush.xpose.msra.mxu0 0.0
    %1065 = vmatpush.xpose.msra.mxu0 0.0
    %1066 = vmatpush.xpose.msra.mxu0 0.0
    %1067 = vmatpush.xpose.msra.mxu0 0.0
    %1068 = vmatpush.xpose.msra.mxu0 0.0
    %1069 = vmatpush.xpose.msra.mxu0 0.0
    %1070 = vmatpush.xpose.msra.mxu0 0.0
    %1071 = vmatpush.xpose.msra.mxu0 0.0
    %1072 = vmatpush.xpose.msra.mxu0 0.0
    %1073 = vmatpush.xpose.msra.mxu0 0.0
    %1074 = vmatpush.xpose.msra.mxu0 0.0
    %1075 = vmatpush.xpose.msra.mxu0 0.0
    %1076 = vmatpush.xpose.msra.mxu0 0.0
    %1077 = vmatpush.xpose.msra.mxu0 %v1061
    %1078 = vmatpush.xpose.msra.mxu0 %v1058
    %1079 = vmatmul.f32.gmra.mxu0 %v1052
    %v1080 = vpop.f32.mrf.mxu0
    %v1081 = vadd.f32 0.0, %v1080
    %1082 = vmatmul.f32.gmra.mxu0 %v1055
    %v1083 = vpop.f32.mrf.mxu0
    %v1084 = vadd.f32 0.0, %v1083
    %1085 = vdwg.mxu0
    %v1087 = vsel %vm493, %v608, 0
    %v1090 = vsel %vm493, %v611, 0
    %v1093 = vsel %vm493, %v802, 0
    %v1096 = vsel %vm493, %v805, 0
    %1098 = vmatpush.xpose.msra.mxu0 0.0
    %1099 = vmatpush.xpose.msra.mxu0 0.0
    %1100 = vmatpush.xpose.msra.mxu0 0.0
    %1101 = vmatpush.xpose.msra.mxu0 0.0
    %1102 = vmatpush.xpose.msra.mxu0 0.0
    %1103 = vmatpush.xpose.msra.mxu0 0.0
    %1104 = vmatpush.xpose.msra.mxu0 0.0
    %1105 = vmatpush.xpose.msra.mxu0 0.0
    %1106 = vmatpush.xpose.msra.mxu0 0.0
    %1107 = vmatpush.xpose.msra.mxu0 0.0
    %1108 = vmatpush.xpose.msra.mxu0 0.0
    %1109 = vmatpush.xpose.msra.mxu0 0.0
    %1110 = vmatpush.xpose.msra.mxu0 0.0
    %1111 = vmatpush.xpose.msra.mxu0 0.0
    %1112 = vmatpush.xpose.msra.mxu0 %v1096
    %1113 = vmatpush.xpose.msra.mxu0 %v1093
    %1114 = vmatmul.f32.gmra.mxu0 %v1087
    %v1115 = vpop.f32.mrf.mxu0
    %v1116 = vadd.f32 0.0, %v1115
    %1117 = vmatmul.f32.gmra.mxu0 %v1090
    %v1118 = vpop.f32.mrf.mxu0
    %v1119 = vadd.f32 0.0, %v1118
    %1120 = vdwg.mxu0
    %v1122 = vsel %vm493, %v614, 0
    %v1125 = vsel %vm493, %v617, 0
    %v1128 = vsel %vm493, %v808, 0
    %v1131 = vsel %vm493, %v811, 0
    %1133 = vmatpush.xpose.msra.mxu0 0.0
    %1134 = vmatpush.xpose.msra.mxu0 0.0
    %1135 = vmatpush.xpose.msra.mxu0 0.0
    %1136 = vmatpush.xpose.msra.mxu0 0.0
    %1137 = vmatpush.xpose.msra.mxu0 0.0
    %1138 = vmatpush.xpose.msra.mxu0 0.0
    %1139 = vmatpush.xpose.msra.mxu0 0.0
    %1140 = vmatpush.xpose.msra.mxu0 0.0
    %1141 = vmatpush.xpose.msra.mxu0 0.0
    %1142 = vmatpush.xpose.msra.mxu0 0.0
    %1143 = vmatpush.xpose.msra.mxu0 0.0
    %1144 = vmatpush.xpose.msra.mxu0 0.0
    %1145 = vmatpush.xpose.msra.mxu0 0.0
    %1146 = vmatpush.xpose.msra.mxu0 0.0
    %1147 = vmatpush.xpose.msra.mxu0 %v1131
    %1148 = vmatpush.xpose.msra.mxu0 %v1128
    %1149 = vmatmul.f32.gmra.mxu0 %v1122
    %v1150 = vpop.f32.mrf.mxu0
    %v1151 = vadd.f32 0.0, %v1150
    %1152 = vmatmul.f32.gmra.mxu0 %v1125
    %v1153 = vpop.f32.mrf.mxu0
    %v1154 = vadd.f32 0.0, %v1153
    %1155 = vdwg.mxu0
    %v1157 = vsel %vm493, %v620, 0
    %v1160 = vsel %vm493, %v623, 0
    %v1163 = vsel %vm493, %v814, 0
    %v1166 = vsel %vm493, %v817, 0
    %1168 = vmatpush.xpose.msra.mxu0 0.0
    %1169 = vmatpush.xpose.msra.mxu0 0.0
    %1170 = vmatpush.xpose.msra.mxu0 0.0
    %1171 = vmatpush.xpose.msra.mxu0 0.0
    %1172 = vmatpush.xpose.msra.mxu0 0.0
    %1173 = vmatpush.xpose.msra.mxu0 0.0
    %1174 = vmatpush.xpose.msra.mxu0 0.0
    %1175 = vmatpush.xpose.msra.mxu0 0.0
    %1176 = vmatpush.xpose.msra.mxu0 0.0
    %1177 = vmatpush.xpose.msra.mxu0 0.0
    %1178 = vmatpush.xpose.msra.mxu0 0.0
    %1179 = vmatpush.xpose.msra.mxu0 0.0
    %1180 = vmatpush.xpose.msra.mxu0 0.0
    %1181 = vmatpush.xpose.msra.mxu0 0.0
    %1182 = vmatpush.xpose.msra.mxu0 %v1166
    %1183 = vmatpush.xpose.msra.mxu0 %v1163
    %1184 = vmatmul.f32.gmra.mxu0 %v1157
    %v1185 = vpop.f32.mrf.mxu0
    %v1186 = vadd.f32 0.0, %v1185
    %1187 = vmatmul.f32.gmra.mxu0 %v1160
    %v1188 = vpop.f32.mrf.mxu0
    %v1189 = vadd.f32 0.0, %v1188
    %1190 = vdwg.mxu0
    %v1192 = vsel %vm493, %v626, 0
    %v1195 = vsel %vm493, %v629, 0
    %v1198 = vsel %vm493, %v820, 0
    %v1201 = vsel %vm493, %v823, 0
    %1203 = vmatpush.xpose.msra.mxu0 0.0
    %1204 = vmatpush.xpose.msra.mxu0 0.0
    %1205 = vmatpush.xpose.msra.mxu0 0.0
    %1206 = vmatpush.xpose.msra.mxu0 0.0
    %1207 = vmatpush.xpose.msra.mxu0 0.0
    %1208 = vmatpush.xpose.msra.mxu0 0.0
    %1209 = vmatpush.xpose.msra.mxu0 0.0
    %1210 = vmatpush.xpose.msra.mxu0 0.0
    %1211 = vmatpush.xpose.msra.mxu0 0.0
    %1212 = vmatpush.xpose.msra.mxu0 0.0
    %1213 = vmatpush.xpose.msra.mxu0 0.0
    %1214 = vmatpush.xpose.msra.mxu0 0.0
    %1215 = vmatpush.xpose.msra.mxu0 0.0
    %1216 = vmatpush.xpose.msra.mxu0 0.0
    %1217 = vmatpush.xpose.msra.mxu0 %v1201
    %1218 = vmatpush.xpose.msra.mxu0 %v1198
    %1219 = vmatmul.f32.gmra.mxu0 %v1192
    %v1220 = vpop.f32.mrf.mxu0
    %v1221 = vadd.f32 0.0, %v1220
    %1222 = vmatmul.f32.gmra.mxu0 %v1195
    %v1223 = vpop.f32.mrf.mxu0
    %v1224 = vadd.f32 0.0, %v1223
    %1225 = vdwg.mxu0
    %v1227 = vsel %vm493, %v632, 0
    %v1230 = vsel %vm493, %v635, 0
    %v1233 = vsel %vm493, %v826, 0
    %v1236 = vsel %vm493, %v829, 0
    %1238 = vmatpush.xpose.msra.mxu0 0.0
    %1239 = vmatpush.xpose.msra.mxu0 0.0
    %1240 = vmatpush.xpose.msra.mxu0 0.0
    %1241 = vmatpush.xpose.msra.mxu0 0.0
    %1242 = vmatpush.xpose.msra.mxu0 0.0
    %1243 = vmatpush.xpose.msra.mxu0 0.0
    %1244 = vmatpush.xpose.msra.mxu0 0.0
    %1245 = vmatpush.xpose.msra.mxu0 0.0
    %1246 = vmatpush.xpose.msra.mxu0 0.0
    %1247 = vmatpush.xpose.msra.mxu0 0.0
    %1248 = vmatpush.xpose.msra.mxu0 0.0
    %1249 = vmatpush.xpose.msra.mxu0 0.0
    %1250 = vmatpush.xpose.msra.mxu0 0.0
    %1251 = vmatpush.xpose.msra.mxu0 0.0
    %1252 = vmatpush.xpose.msra.mxu0 %v1236
    %1253 = vmatpush.xpose.msra.mxu0 %v1233
    %1254 = vmatmul.f32.gmra.mxu0 %v1227
    %v1255 = vpop.f32.mrf.mxu0
    %v1256 = vadd.f32 0.0, %v1255
    %1257 = vmatmul.f32.gmra.mxu0 %v1230
    %v1258 = vpop.f32.mrf.mxu0
    %v1259 = vadd.f32 0.0, %v1258
    %1260 = vdwg.mxu0
    %v1262 = vsel %vm493, %v638, 0
    %v1265 = vsel %vm493, %v641, 0
    %v1268 = vsel %vm493, %v832, 0
    %v1271 = vsel %vm493, %v835, 0
    %1273 = vmatpush.xpose.msra.mxu0 0.0
    %1274 = vmatpush.xpose.msra.mxu0 0.0
    %1275 = vmatpush.xpose.msra.mxu0 0.0
    %1276 = vmatpush.xpose.msra.mxu0 0.0
    %1277 = vmatpush.xpose.msra.mxu0 0.0
    %1278 = vmatpush.xpose.msra.mxu0 0.0
    %1279 = vmatpush.xpose.msra.mxu0 0.0
    %1280 = vmatpush.xpose.msra.mxu0 0.0
    %1281 = vmatpush.xpose.msra.mxu0 0.0
    %1282 = vmatpush.xpose.msra.mxu0 0.0
    %1283 = vmatpush.xpose.msra.mxu0 0.0
    %1284 = vmatpush.xpose.msra.mxu0 0.0
    %1285 = vmatpush.xpose.msra.mxu0 0.0
    %1286 = vmatpush.xpose.msra.mxu0 0.0
    %1287 = vmatpush.xpose.msra.mxu0 %v1271
    %1288 = vmatpush.xpose.msra.mxu0 %v1268
    %1289 = vmatmul.f32.gmra.mxu0 %v1262
    %v1290 = vpop.f32.mrf.mxu0
    %v1291 = vadd.f32 0.0, %v1290
    %1292 = vmatmul.f32.gmra.mxu0 %v1265
    %v1293 = vpop.f32.mrf.mxu0
    %v1294 = vadd.f32 0.0, %v1293
    %1295 = vdwg.mxu0
    %v1297 = vsel %vm493, %v644, 0
    %v1300 = vsel %vm493, %v647, 0
    %v1303 = vsel %vm493, %v838, 0
    %v1306 = vsel %vm493, %v841, 0
    %1308 = vmatpush.xpose.msra.mxu0 0.0
    %1309 = vmatpush.xpose.msra.mxu0 0.0
    %1310 = vmatpush.xpose.msra.mxu0 0.0
    %1311 = vmatpush.xpose.msra.mxu0 0.0
    %1312 = vmatpush.xpose.msra.mxu0 0.0
    %1313 = vmatpush.xpose.msra.mxu0 0.0
    %1314 = vmatpush.xpose.msra.mxu0 0.0
    %1315 = vmatpush.xpose.msra.mxu0 0.0
    %1316 = vmatpush.xpose.msra.mxu0 0.0
    %1317 = vmatpush.xpose.msra.mxu0 0.0
    %1318 = vmatpush.xpose.msra.mxu0 0.0
    %1319 = vmatpush.xpose.msra.mxu0 0.0
    %1320 = vmatpush.xpose.msra.mxu0 0.0
    %1321 = vmatpush.xpose.msra.mxu0 0.0
    %1322 = vmatpush.xpose.msra.mxu0 %v1306
    %1323 = vmatpush.xpose.msra.mxu0 %v1303
    %1324 = vmatmul.f32.gmra.mxu0 %v1297
    %v1325 = vpop.f32.mrf.mxu0
    %v1326 = vadd.f32 0.0, %v1325
    %1327 = vmatmul.f32.gmra.mxu0 %v1300
    %v1328 = vpop.f32.mrf.mxu0
    %v1329 = vadd.f32 0.0, %v1328
    %1330 = vdwg.mxu0
    %v1332 = vsel %vm493, %v650, 0
    %v1335 = vsel %vm493, %v653, 0
    %v1338 = vsel %vm493, %v844, 0
    %v1341 = vsel %vm493, %v847, 0
    %1343 = vmatpush.xpose.msra.mxu0 0.0
    %1344 = vmatpush.xpose.msra.mxu0 0.0
    %1345 = vmatpush.xpose.msra.mxu0 0.0
    %1346 = vmatpush.xpose.msra.mxu0 0.0
    %1347 = vmatpush.xpose.msra.mxu0 0.0
    %1348 = vmatpush.xpose.msra.mxu0 0.0
    %1349 = vmatpush.xpose.msra.mxu0 0.0
    %1350 = vmatpush.xpose.msra.mxu0 0.0
    %1351 = vmatpush.xpose.msra.mxu0 0.0
    %1352 = vmatpush.xpose.msra.mxu0 0.0
    %1353 = vmatpush.xpose.msra.mxu0 0.0
    %1354 = vmatpush.xpose.msra.mxu0 0.0
    %1355 = vmatpush.xpose.msra.mxu0 0.0
    %1356 = vmatpush.xpose.msra.mxu0 0.0
    %1357 = vmatpush.xpose.msra.mxu0 %v1341
    %1358 = vmatpush.xpose.msra.mxu0 %v1338
    %1359 = vmatmul.f32.gmra.mxu0 %v1332
    %v1360 = vpop.f32.mrf.mxu0
    %v1361 = vadd.f32 0.0, %v1360
    %1362 = vmatmul.f32.gmra.mxu0 %v1335
    %v1363 = vpop.f32.mrf.mxu0
    %v1364 = vadd.f32 0.0, %v1363
    %1365 = vdwg.mxu0
    %v1367 = vsel %vm493, %v681, 0
    %v1370 = vsel %vm493, %v684, 0
    %1372 = vmatpush.xpose.msra.mxu0 0.0
    %1373 = vmatpush.xpose.msra.mxu0 0.0
    %1374 = vmatpush.xpose.msra.mxu0 0.0
    %1375 = vmatpush.xpose.msra.mxu0 0.0
    %1376 = vmatpush.xpose.msra.mxu0 0.0
    %1377 = vmatpush.xpose.msra.mxu0 0.0
    %1378 = vmatpush.xpose.msra.mxu0 0.0
    %1379 = vmatpush.xpose.msra.mxu0 0.0
    %1380 = vmatpush.xpose.msra.mxu0 0.0
    %1381 = vmatpush.xpose.msra.mxu0 0.0
    %1382 = vmatpush.xpose.msra.mxu0 0.0
    %1383 = vmatpush.xpose.msra.mxu0 0.0
    %1384 = vmatpush.xpose.msra.mxu0 0.0
    %1385 = vmatpush.xpose.msra.mxu0 0.0
    %1386 = vmatpush.xpose.msra.mxu0 %v956
    %1387 = vmatpush.xpose.msra.mxu0 %v953
    %1388 = vmatmul.f32.gmra.mxu0 %v1367
    %v1389 = vpop.f32.mrf.mxu0
    %v1390 = vadd.f32 0.0, %v1389
    %1391 = vmatmul.f32.gmra.mxu0 %v1370
    %v1392 = vpop.f32.mrf.mxu0
    %v1393 = vadd.f32 0.0, %v1392
    %1394 = vdwg.mxu0
    %v1396 = vsel %vm493, %v687, 0
    %v1399 = vsel %vm493, %v690, 0
    %1401 = vmatpush.xpose.msra.mxu0 0.0
    %1402 = vmatpush.xpose.msra.mxu0 0.0
    %1403 = vmatpush.xpose.msra.mxu0 0.0
    %1404 = vmatpush.xpose.msra.mxu0 0.0
    %1405 = vmatpush.xpose.msra.mxu0 0.0
    %1406 = vmatpush.xpose.msra.mxu0 0.0
    %1407 = vmatpush.xpose.msra.mxu0 0.0
    %1408 = vmatpush.xpose.msra.mxu0 0.0
    %1409 = vmatpush.xpose.msra.mxu0 0.0
    %1410 = vmatpush.xpose.msra.mxu0 0.0
    %1411 = vmatpush.xpose.msra.mxu0 0.0
    %1412 = vmatpush.xpose.msra.mxu0 0.0
    %1413 = vmatpush.xpose.msra.mxu0 0.0
    %1414 = vmatpush.xpose.msra.mxu0 0.0
    %1415 = vmatpush.xpose.msra.mxu0 %v991
    %1416 = vmatpush.xpose.msra.mxu0 %v988
    %1417 = vmatmul.f32.gmra.mxu0 %v1396
    %v1418 = vpop.f32.mrf.mxu0
    %v1419 = vadd.f32 0.0, %v1418
    %1420 = vmatmul.f32.gmra.mxu0 %v1399
    %v1421 = vpop.f32.mrf.mxu0
    %v1422 = vadd.f32 0.0, %v1421
    %1423 = vdwg.mxu0
    %v1425 = vsel %vm493, %v693, 0
    %v1428 = vsel %vm493, %v696, 0
    %1430 = vmatpush.xpose.msra.mxu0 0.0
    %1431 = vmatpush.xpose.msra.mxu0 0.0
    %1432 = vmatpush.xpose.msra.mxu0 0.0
    %1433 = vmatpush.xpose.msra.mxu0 0.0
    %1434 = vmatpush.xpose.msra.mxu0 0.0
    %1435 = vmatpush.xpose.msra.mxu0 0.0
    %1436 = vmatpush.xpose.msra.mxu0 0.0
    %1437 = vmatpush.xpose.msra.mxu0 0.0
    %1438 = vmatpush.xpose.msra.mxu0 0.0
    %1439 = vmatpush.xpose.msra.mxu0 0.0
    %1440 = vmatpush.xpose.msra.mxu0 0.0
    %1441 = vmatpush.xpose.msra.mxu0 0.0
    %1442 = vmatpush.xpose.msra.mxu0 0.0
    %1443 = vmatpush.xpose.msra.mxu0 0.0
    %1444 = vmatpush.xpose.msra.mxu0 %v1026
    %1445 = vmatpush.xpose.msra.mxu0 %v1023
    %1446 = vmatmul.f32.gmra.mxu0 %v1425
    %v1447 = vpop.f32.mrf.mxu0
    %v1448 = vadd.f32 0.0, %v1447
    %1449 = vmatmul.f32.gmra.mxu0 %v1428
    %v1450 = vpop.f32.mrf.mxu0
    %v1451 = vadd.f32 0.0, %v1450
    %1452 = vdwg.mxu0
    %v1454 = vsel %vm493, %v699, 0
    %v1457 = vsel %vm493, %v702, 0
    %1459 = vmatpush.xpose.msra.mxu0 0.0
    %1460 = vmatpush.xpose.msra.mxu0 0.0
    %1461 = vmatpush.xpose.msra.mxu0 0.0
    %1462 = vmatpush.xpose.msra.mxu0 0.0
    %1463 = vmatpush.xpose.msra.mxu0 0.0
    %1464 = vmatpush.xpose.msra.mxu0 0.0
    %1465 = vmatpush.xpose.msra.mxu0 0.0
    %1466 = vmatpush.xpose.msra.mxu0 0.0
    %1467 = vmatpush.xpose.msra.mxu0 0.0
    %1468 = vmatpush.xpose.msra.mxu0 0.0
    %1469 = vmatpush.xpose.msra.mxu0 0.0
    %1470 = vmatpush.xpose.msra.mxu0 0.0
    %1471 = vmatpush.xpose.msra.mxu0 0.0
    %1472 = vmatpush.xpose.msra.mxu0 0.0
    %1473 = vmatpush.xpose.msra.mxu0 %v1061
    %1474 = vmatpush.xpose.msra.mxu0 %v1058
    %1475 = vmatmul.f32.gmra.mxu0 %v1454
    %v1476 = vpop.f32.mrf.mxu0
    %v1477 = vadd.f32 0.0, %v1476
    %1478 = vmatmul.f32.gmra.mxu0 %v1457
    %v1479 = vpop.f32.mrf.mxu0
    %v1480 = vadd.f32 0.0, %v1479
    %1481 = vdwg.mxu0
    %v1483 = vsel %vm493, %v705, 0
    %v1486 = vsel %vm493, %v708, 0
    %1488 = vmatpush.xpose.msra.mxu0 0.0
    %1489 = vmatpush.xpose.msra.mxu0 0.0
    %1490 = vmatpush.xpose.msra.mxu0 0.0
    %1491 = vmatpush.xpose.msra.mxu0 0.0
    %1492 = vmatpush.xpose.msra.mxu0 0.0
    %1493 = vmatpush.xpose.msra.mxu0 0.0
    %1494 = vmatpush.xpose.msra.mxu0 0.0
    %1495 = vmatpush.xpose.msra.mxu0 0.0
    %1496 = vmatpush.xpose.msra.mxu0 0.0
    %1497 = vmatpush.xpose.msra.mxu0 0.0
    %1498 = vmatpush.xpose.msra.mxu0 0.0
    %1499 = vmatpush.xpose.msra.mxu0 0.0
    %1500 = vmatpush.xpose.msra.mxu0 0.0
    %1501 = vmatpush.xpose.msra.mxu0 0.0
    %1502 = vmatpush.xpose.msra.mxu0 %v1096
    %1503 = vmatpush.xpose.msra.mxu0 %v1093
    %1504 = vmatmul.f32.gmra.mxu0 %v1483
    %v1505 = vpop.f32.mrf.mxu0
    %v1506 = vadd.f32 0.0, %v1505
    %1507 = vmatmul.f32.gmra.mxu0 %v1486
    %v1508 = vpop.f32.mrf.mxu0
    %v1509 = vadd.f32 0.0, %v1508
    %1510 = vdwg.mxu0
    %v1512 = vsel %vm493, %v711, 0
    %v1515 = vsel %vm493, %v714, 0
    %1517 = vmatpush.xpose.msra.mxu0 0.0
    %1518 = vmatpush.xpose.msra.mxu0 0.0
    %1519 = vmatpush.xpose.msra.mxu0 0.0
    %1520 = vmatpush.xpose.msra.mxu0 0.0
    %1521 = vmatpush.xpose.msra.mxu0 0.0
    %1522 = vmatpush.xpose.msra.mxu0 0.0
    %1523 = vmatpush.xpose.msra.mxu0 0.0
    %1524 = vmatpush.xpose.msra.mxu0 0.0
    %1525 = vmatpush.xpose.msra.mxu0 0.0
    %1526 = vmatpush.xpose.msra.mxu0 0.0
    %1527 = vmatpush.xpose.msra.mxu0 0.0
    %1528 = vmatpush.xpose.msra.mxu0 0.0
    %1529 = vmatpush.xpose.msra.mxu0 0.0
    %1530 = vmatpush.xpose.msra.mxu0 0.0
    %1531 = vmatpush.xpose.msra.mxu0 %v1131
    %1532 = vmatpush.xpose.msra.mxu0 %v1128
    %1533 = vmatmul.f32.gmra.mxu0 %v1512
    %v1534 = vpop.f32.mrf.mxu0
    %v1535 = vadd.f32 0.0, %v1534
    %1536 = vmatmul.f32.gmra.mxu0 %v1515
    %v1537 = vpop.f32.mrf.mxu0
    %v1538 = vadd.f32 0.0, %v1537
    %1539 = vdwg.mxu0
    %v1541 = vsel %vm493, %v717, 0
    %v1544 = vsel %vm493, %v720, 0
    %1546 = vmatpush.xpose.msra.mxu0 0.0
    %1547 = vmatpush.xpose.msra.mxu0 0.0
    %1548 = vmatpush.xpose.msra.mxu0 0.0
    %1549 = vmatpush.xpose.msra.mxu0 0.0
    %1550 = vmatpush.xpose.msra.mxu0 0.0
    %1551 = vmatpush.xpose.msra.mxu0 0.0
    %1552 = vmatpush.xpose.msra.mxu0 0.0
    %1553 = vmatpush.xpose.msra.mxu0 0.0
    %1554 = vmatpush.xpose.msra.mxu0 0.0
    %1555 = vmatpush.xpose.msra.mxu0 0.0
    %1556 = vmatpush.xpose.msra.mxu0 0.0
    %1557 = vmatpush.xpose.msra.mxu0 0.0
    %1558 = vmatpush.xpose.msra.mxu0 0.0
    %1559 = vmatpush.xpose.msra.mxu0 0.0
    %1560 = vmatpush.xpose.msra.mxu0 %v1166
    %1561 = vmatpush.xpose.msra.mxu0 %v1163
    %1562 = vmatmul.f32.gmra.mxu0 %v1541
    %v1563 = vpop.f32.mrf.mxu0
    %v1564 = vadd.f32 0.0, %v1563
    %1565 = vmatmul.f32.gmra.mxu0 %v1544
    %v1566 = vpop.f32.mrf.mxu0
    %v1567 = vadd.f32 0.0, %v1566
    %1568 = vdwg.mxu0
    %v1570 = vsel %vm493, %v723, 0
    %v1573 = vsel %vm493, %v726, 0
    %1575 = vmatpush.xpose.msra.mxu0 0.0
    %1576 = vmatpush.xpose.msra.mxu0 0.0
    %1577 = vmatpush.xpose.msra.mxu0 0.0
    %1578 = vmatpush.xpose.msra.mxu0 0.0
    %1579 = vmatpush.xpose.msra.mxu0 0.0
    %1580 = vmatpush.xpose.msra.mxu0 0.0
    %1581 = vmatpush.xpose.msra.mxu0 0.0
    %1582 = vmatpush.xpose.msra.mxu0 0.0
    %1583 = vmatpush.xpose.msra.mxu0 0.0
    %1584 = vmatpush.xpose.msra.mxu0 0.0
    %1585 = vmatpush.xpose.msra.mxu0 0.0
    %1586 = vmatpush.xpose.msra.mxu0 0.0
    %1587 = vmatpush.xpose.msra.mxu0 0.0
    %1588 = vmatpush.xpose.msra.mxu0 0.0
    %1589 = vmatpush.xpose.msra.mxu0 %v1201
    %1590 = vmatpush.xpose.msra.mxu0 %v1198
    %1591 = vmatmul.f32.gmra.mxu0 %v1570
    %v1592 = vpop.f32.mrf.mxu0
    %v1593 = vadd.f32 0.0, %v1592
    %1594 = vmatmul.f32.gmra.mxu0 %v1573
    %v1595 = vpop.f32.mrf.mxu0
    %v1596 = vadd.f32 0.0, %v1595
    %1597 = vdwg.mxu0
    %v1599 = vsel %vm493, %v729, 0
    %v1602 = vsel %vm493, %v732, 0
    %1604 = vmatpush.xpose.msra.mxu0 0.0
    %1605 = vmatpush.xpose.msra.mxu0 0.0
    %1606 = vmatpush.xpose.msra.mxu0 0.0
    %1607 = vmatpush.xpose.msra.mxu0 0.0
    %1608 = vmatpush.xpose.msra.mxu0 0.0
    %1609 = vmatpush.xpose.msra.mxu0 0.0
    %1610 = vmatpush.xpose.msra.mxu0 0.0
    %1611 = vmatpush.xpose.msra.mxu0 0.0
    %1612 = vmatpush.xpose.msra.mxu0 0.0
    %1613 = vmatpush.xpose.msra.mxu0 0.0
    %1614 = vmatpush.xpose.msra.mxu0 0.0
    %1615 = vmatpush.xpose.msra.mxu0 0.0
    %1616 = vmatpush.xpose.msra.mxu0 0.0
    %1617 = vmatpush.xpose.msra.mxu0 0.0
    %1618 = vmatpush.xpose.msra.mxu0 %v1236
    %1619 = vmatpush.xpose.msra.mxu0 %v1233
    %1620 = vmatmul.f32.gmra.mxu0 %v1599
    %v1621 = vpop.f32.mrf.mxu0
    %v1622 = vadd.f32 0.0, %v1621
    %1623 = vmatmul.f32.gmra.mxu0 %v1602
    %v1624 = vpop.f32.mrf.mxu0
    %v1625 = vadd.f32 0.0, %v1624
    %1626 = vdwg.mxu0
    %v1628 = vsel %vm493, %v735, 0
    %v1631 = vsel %vm493, %v738, 0
    %1633 = vmatpush.xpose.msra.mxu0 0.0
    %1634 = vmatpush.xpose.msra.mxu0 0.0
    %1635 = vmatpush.xpose.msra.mxu0 0.0
    %1636 = vmatpush.xpose.msra.mxu0 0.0
    %1637 = vmatpush.xpose.msra.mxu0 0.0
    %1638 = vmatpush.xpose.msra.mxu0 0.0
    %1639 = vmatpush.xpose.msra.mxu0 0.0
    %1640 = vmatpush.xpose.msra.mxu0 0.0
    %1641 = vmatpush.xpose.msra.mxu0 0.0
    %1642 = vmatpush.xpose.msra.mxu0 0.0
    %1643 = vmatpush.xpose.msra.mxu0 0.0
    %1644 = vmatpush.xpose.msra.mxu0 0.0
    %1645 = vmatpush.xpose.msra.mxu0 0.0
    %1646 = vmatpush.xpose.msra.mxu0 0.0
    %1647 = vmatpush.xpose.msra.mxu0 %v1271
    %1648 = vmatpush.xpose.msra.mxu0 %v1268
    %1649 = vmatmul.f32.gmra.mxu0 %v1628
    %v1650 = vpop.f32.mrf.mxu0
    %v1651 = vadd.f32 0.0, %v1650
    %1652 = vmatmul.f32.gmra.mxu0 %v1631
    %v1653 = vpop.f32.mrf.mxu0
    %v1654 = vadd.f32 0.0, %v1653
    %1655 = vdwg.mxu0
    %v1657 = vsel %vm493, %v741, 0
    %v1660 = vsel %vm493, %v744, 0
    %1662 = vmatpush.xpose.msra.mxu0 0.0
    %1663 = vmatpush.xpose.msra.mxu0 0.0
    %1664 = vmatpush.xpose.msra.mxu0 0.0
    %1665 = vmatpush.xpose.msra.mxu0 0.0
    %1666 = vmatpush.xpose.msra.mxu0 0.0
    %1667 = vmatpush.xpose.msra.mxu0 0.0
    %1668 = vmatpush.xpose.msra.mxu0 0.0
    %1669 = vmatpush.xpose.msra.mxu0 0.0
    %1670 = vmatpush.xpose.msra.mxu0 0.0
    %1671 = vmatpush.xpose.msra.mxu0 0.0
    %1672 = vmatpush.xpose.msra.mxu0 0.0
    %1673 = vmatpush.xpose.msra.mxu0 0.0
    %1674 = vmatpush.xpose.msra.mxu0 0.0
    %1675 = vmatpush.xpose.msra.mxu0 0.0
    %1676 = vmatpush.xpose.msra.mxu0 %v1306
    %1677 = vmatpush.xpose.msra.mxu0 %v1303
    %1678 = vmatmul.f32.gmra.mxu0 %v1657
    %v1679 = vpop.f32.mrf.mxu0
    %v1680 = vadd.f32 0.0, %v1679
    %1681 = vmatmul.f32.gmra.mxu0 %v1660
    %v1682 = vpop.f32.mrf.mxu0
    %v1683 = vadd.f32 0.0, %v1682
    %1684 = vdwg.mxu0
    %v1686 = vsel %vm493, %v747, 0
    %v1689 = vsel %vm493, %v750, 0
    %1691 = vmatpush.xpose.msra.mxu0 0.0
    %1692 = vmatpush.xpose.msra.mxu0 0.0
    %1693 = vmatpush.xpose.msra.mxu0 0.0
    %1694 = vmatpush.xpose.msra.mxu0 0.0
    %1695 = vmatpush.xpose.msra.mxu0 0.0
    %1696 = vmatpush.xpose.msra.mxu0 0.0
    %1697 = vmatpush.xpose.msra.mxu0 0.0
    %1698 = vmatpush.xpose.msra.mxu0 0.0
    %1699 = vmatpush.xpose.msra.mxu0 0.0
    %1700 = vmatpush.xpose.msra.mxu0 0.0
    %1701 = vmatpush.xpose.msra.mxu0 0.0
    %1702 = vmatpush.xpose.msra.mxu0 0.0
    %1703 = vmatpush.xpose.msra.mxu0 0.0
    %1704 = vmatpush.xpose.msra.mxu0 0.0
    %1705 = vmatpush.xpose.msra.mxu0 %v1341
    %1706 = vmatpush.xpose.msra.mxu0 %v1338
    %1707 = vmatmul.f32.gmra.mxu0 %v1686
    %v1708 = vpop.f32.mrf.mxu0
    %v1709 = vadd.f32 0.0, %v1708
    %1710 = vmatmul.f32.gmra.mxu0 %v1689
    %v1711 = vpop.f32.mrf.mxu0
    %v1712 = vadd.f32 0.0, %v1711
    %1713 = vdwg.mxu0
    %v1714 = vmul.f32 %v976, 0.5
    %v1715 = vmul.f32 %v979, 0.5
    %v1716 = vmul.f32 %v1011, 0.5
    %v1717 = vmul.f32 %v1014, 0.5
    %v1718 = vmul.f32 %v1046, 0.5
    %v1719 = vmul.f32 %v1049, 0.5
    %v1720 = vmul.f32 %v1081, 0.5
    %v1721 = vmul.f32 %v1084, 0.5
    %v1722 = vmul.f32 %v1116, 0.5
    %v1723 = vmul.f32 %v1119, 0.5
    %v1724 = vmul.f32 %v1151, 0.5
    %v1725 = vmul.f32 %v1154, 0.5
    %v1726 = vmul.f32 %v1186, 0.5
    %v1727 = vmul.f32 %v1189, 0.5
    %v1728 = vmul.f32 %v1221, 0.5
    %v1729 = vmul.f32 %v1224, 0.5
    %v1730 = vmul.f32 %v1256, 0.5
    %v1731 = vmul.f32 %v1259, 0.5
    %v1732 = vmul.f32 %v1291, 0.5
    %v1733 = vmul.f32 %v1294, 0.5
    %v1734 = vmul.f32 %v1326, 0.5
    %v1735 = vmul.f32 %v1329, 0.5
    %v1736 = vmul.f32 %v1361, 0.5
    %v1737 = vmul.f32 %v1364, 0.5
    %v1738 = vmul.f32 %v1390, 0.5
    %v1739 = vmul.f32 %v1393, 0.5
    %v1740 = vmul.f32 %v1419, 0.5
    %v1741 = vmul.f32 %v1422, 0.5
    %v1742 = vmul.f32 %v1448, 0.5
    %v1743 = vmul.f32 %v1451, 0.5
    %v1744 = vmul.f32 %v1477, 0.5
    %v1745 = vmul.f32 %v1480, 0.5
    %v1746 = vmul.f32 %v1506, 0.5
    %v1747 = vmul.f32 %v1509, 0.5
    %v1748 = vmul.f32 %v1535, 0.5
    %v1749 = vmul.f32 %v1538, 0.5
    %v1750 = vmul.f32 %v1564, 0.5
    %v1751 = vmul.f32 %v1567, 0.5
    %v1752 = vmul.f32 %v1593, 0.5
    %v1753 = vmul.f32 %v1596, 0.5
    %v1754 = vmul.f32 %v1622, 0.5
    %v1755 = vmul.f32 %v1625, 0.5
    %v1756 = vmul.f32 %v1651, 0.5
    %v1757 = vmul.f32 %v1654, 0.5
    %v1758 = vmul.f32 %v1680, 0.5
    %v1759 = vmul.f32 %v1683, 0.5
    %v1760 = vmul.f32 %v1709, 0.5
    %v1761 = vmul.f32 %v1712, 0.5
    %vm1762 = vcmask 130048
    %v1763 = vsel %vm1762, %v1714, -inf
    %1764 = vmax.xlane.f32.xlu0 %v1763
    %v1765 = vpop.xlane.xlu0 %1764
    %v1766 = vsel %vm1762, %v1715, -inf
    %1767 = vmax.xlane.f32.xlu0 %v1766
    %v1768 = vpop.xlane.xlu0 %1767
    %v1769 = vsel %vm1762, %v1716, -inf
    %1770 = vmax.xlane.f32.xlu0 %v1769
    %v1771 = vpop.xlane.xlu0 %1770
    %v1772 = vsel %vm1762, %v1717, -inf
    %1773 = vmax.xlane.f32.xlu0 %v1772
    %v1774 = vpop.xlane.xlu0 %1773
    %v1775 = vsel %vm1762, %v1718, -inf
    %1776 = vmax.xlane.f32.xlu0 %v1775
    %v1777 = vpop.xlane.xlu0 %1776
    %v1778 = vsel %vm1762, %v1719, -inf
    %1779 = vmax.xlane.f32.xlu0 %v1778
    %v1780 = vpop.xlane.xlu0 %1779
    %v1781 = vsel %vm1762, %v1720, -inf
    %1782 = vmax.xlane.f32.xlu0 %v1781
    %v1783 = vpop.xlane.xlu0 %1782
    %v1784 = vsel %vm1762, %v1721, -inf
    %1785 = vmax.xlane.f32.xlu0 %v1784
    %v1786 = vpop.xlane.xlu0 %1785
    %v1787 = vsel %vm1762, %v1722, -inf
    %1788 = vmax.xlane.f32.xlu0 %v1787
    %v1789 = vpop.xlane.xlu0 %1788
    %v1790 = vsel %vm1762, %v1723, -inf
    %1791 = vmax.xlane.f32.xlu0 %v1790
    %v1792 = vpop.xlane.xlu0 %1791
    %v1793 = vsel %vm1762, %v1724, -inf
    %1794 = vmax.xlane.f32.xlu0 %v1793
    %v1795 = vpop.xlane.xlu0 %1794
    %v1796 = vsel %vm1762, %v1725, -inf
    %1797 = vmax.xlane.f32.xlu0 %v1796
    %v1798 = vpop.xlane.xlu0 %1797
    %v1799 = vsel %vm1762, %v1726, -inf
    %1800 = vmax.xlane.f32.xlu0 %v1799
    %v1801 = vpop.xlane.xlu0 %1800
    %v1802 = vsel %vm1762, %v1727, -inf
    %1803 = vmax.xlane.f32.xlu0 %v1802
    %v1804 = vpop.xlane.xlu0 %1803
    %v1805 = vsel %vm1762, %v1728, -inf
    %1806 = vmax.xlane.f32.xlu0 %v1805
    %v1807 = vpop.xlane.xlu0 %1806
    %v1808 = vsel %vm1762, %v1729, -inf
    %1809 = vmax.xlane.f32.xlu0 %v1808
    %v1810 = vpop.xlane.xlu0 %1809
    %v1811 = vsel %vm1762, %v1730, -inf
    %1812 = vmax.xlane.f32.xlu0 %v1811
    %v1813 = vpop.xlane.xlu0 %1812
    %v1814 = vsel %vm1762, %v1731, -inf
    %1815 = vmax.xlane.f32.xlu0 %v1814
    %v1816 = vpop.xlane.xlu0 %1815
    %v1817 = vsel %vm1762, %v1732, -inf
    %1818 = vmax.xlane.f32.xlu0 %v1817
    %v1819 = vpop.xlane.xlu0 %1818
    %v1820 = vsel %vm1762, %v1733, -inf
    %1821 = vmax.xlane.f32.xlu0 %v1820
    %v1822 = vpop.xlane.xlu0 %1821
    %v1823 = vsel %vm1762, %v1734, -inf
    %1824 = vmax.xlane.f32.xlu0 %v1823
    %v1825 = vpop.xlane.xlu0 %1824
    %v1826 = vsel %vm1762, %v1735, -inf
    %1827 = vmax.xlane.f32.xlu0 %v1826
    %v1828 = vpop.xlane.xlu0 %1827
    %v1829 = vsel %vm1762, %v1736, -inf
    %1830 = vmax.xlane.f32.xlu0 %v1829
    %v1831 = vpop.xlane.xlu0 %1830
    %v1832 = vsel %vm1762, %v1737, -inf
    %1833 = vmax.xlane.f32.xlu0 %v1832
    %v1834 = vpop.xlane.xlu0 %1833
    %v1835 = vsel %vm1762, %v1738, -inf
    %1836 = vmax.xlane.f32.xlu0 %v1835
    %v1837 = vpop.xlane.xlu0 %1836
    %v1838 = vsel %vm1762, %v1739, -inf
    %1839 = vmax.xlane.f32.xlu0 %v1838
    %v1840 = vpop.xlane.xlu0 %1839
    %v1841 = vsel %vm1762, %v1740, -inf
    %1842 = vmax.xlane.f32.xlu0 %v1841
    %v1843 = vpop.xlane.xlu0 %1842
    %v1844 = vsel %vm1762, %v1741, -inf
    %1845 = vmax.xlane.f32.xlu0 %v1844
    %v1846 = vpop.xlane.xlu0 %1845
    %v1847 = vsel %vm1762, %v1742, -inf
    %1848 = vmax.xlane.f32.xlu0 %v1847
    %v1849 = vpop.xlane.xlu0 %1848
    %v1850 = vsel %vm1762, %v1743, -inf
    %1851 = vmax.xlane.f32.xlu0 %v1850
    %v1852 = vpop.xlane.xlu0 %1851
    %v1853 = vsel %vm1762, %v1744, -inf
    %1854 = vmax.xlane.f32.xlu0 %v1853
    %v1855 = vpop.xlane.xlu0 %1854
    %v1856 = vsel %vm1762, %v1745, -inf
    %1857 = vmax.xlane.f32.xlu0 %v1856
    %v1858 = vpop.xlane.xlu0 %1857
    %v1859 = vsel %vm1762, %v1746, -inf
    %1860 = vmax.xlane.f32.xlu0 %v1859
    %v1861 = vpop.xlane.xlu0 %1860
    %v1862 = vsel %vm1762, %v1747, -inf
    %1863 = vmax.xlane.f32.xlu0 %v1862
    %v1864 = vpop.xlane.xlu0 %1863
    %v1865 = vsel %vm1762, %v1748, -inf
    %1866 = vmax.xlane.f32.xlu0 %v1865
    %v1867 = vpop.xlane.xlu0 %1866
    %v1868 = vsel %vm1762, %v1749, -inf
    %1869 = vmax.xlane.f32.xlu0 %v1868
    %v1870 = vpop.xlane.xlu0 %1869
    %v1871 = vsel %vm1762, %v1750, -inf
    %1872 = vmax.xlane.f32.xlu0 %v1871
    %v1873 = vpop.xlane.xlu0 %1872
    %v1874 = vsel %vm1762, %v1751, -inf
    %1875 = vmax.xlane.f32.xlu0 %v1874
    %v1876 = vpop.xlane.xlu0 %1875
    %v1877 = vsel %vm1762, %v1752, -inf
    %1878 = vmax.xlane.f32.xlu0 %v1877
    %v1879 = vpop.xlane.xlu0 %1878
    %v1880 = vsel %vm1762, %v1753, -inf
    %1881 = vmax.xlane.f32.xlu0 %v1880
    %v1882 = vpop.xlane.xlu0 %1881
    %v1883 = vsel %vm1762, %v1754, -inf
    %1884 = vmax.xlane.f32.xlu0 %v1883
    %v1885 = vpop.xlane.xlu0 %1884
    %v1886 = vsel %vm1762, %v1755, -inf
    %1887 = vmax.xlane.f32.xlu0 %v1886
    %v1888 = vpop.xlane.xlu0 %1887
    %v1889 = vsel %vm1762, %v1756, -inf
    %1890 = vmax.xlane.f32.xlu0 %v1889
    %v1891 = vpop.xlane.xlu0 %1890
    %v1892 = vsel %vm1762, %v1757, -inf
    %1893 = vmax.xlane.f32.xlu0 %v1892
    %v1894 = vpop.xlane.xlu0 %1893
    %v1895 = vsel %vm1762, %v1758, -inf
    %1896 = vmax.xlane.f32.xlu0 %v1895
    %v1897 = vpop.xlane.xlu0 %1896
    %v1898 = vsel %vm1762, %v1759, -inf
    %1899 = vmax.xlane.f32.xlu0 %v1898
    %v1900 = vpop.xlane.xlu0 %1899
    %v1901 = vsel %vm1762, %v1760, -inf
    %1902 = vmax.xlane.f32.xlu0 %v1901
    %v1903 = vpop.xlane.xlu0 %1902
    %v1904 = vsel %vm1762, %v1761, -inf
    %1905 = vmax.xlane.f32.xlu0 %v1904
    %v1906 = vpop.xlane.xlu0 %1905
    %v1907 = vsub.f32 %v1714, %v1765
    %v1908 = vsub.f32 %v1715, %v1768
    %v1909 = vsub.f32 %v1716, %v1771
    %v1910 = vsub.f32 %v1717, %v1774
    %v1911 = vsub.f32 %v1718, %v1777
    %v1912 = vsub.f32 %v1719, %v1780
    %v1913 = vsub.f32 %v1720, %v1783
    %v1914 = vsub.f32 %v1721, %v1786
    %v1915 = vsub.f32 %v1722, %v1789
    %v1916 = vsub.f32 %v1723, %v1792
    %v1917 = vsub.f32 %v1724, %v1795
    %v1918 = vsub.f32 %v1725, %v1798
    %v1919 = vsub.f32 %v1726, %v1801
    %v1920 = vsub.f32 %v1727, %v1804
    %v1921 = vsub.f32 %v1728, %v1807
    %v1922 = vsub.f32 %v1729, %v1810
    %v1923 = vsub.f32 %v1730, %v1813
    %v1924 = vsub.f32 %v1731, %v1816
    %v1925 = vsub.f32 %v1732, %v1819
    %v1926 = vsub.f32 %v1733, %v1822
    %v1927 = vsub.f32 %v1734, %v1825
    %v1928 = vsub.f32 %v1735, %v1828
    %v1929 = vsub.f32 %v1736, %v1831
    %v1930 = vsub.f32 %v1737, %v1834
    %v1931 = vsub.f32 %v1738, %v1837
    %v1932 = vsub.f32 %v1739, %v1840
    %v1933 = vsub.f32 %v1740, %v1843
    %v1934 = vsub.f32 %v1741, %v1846
    %v1935 = vsub.f32 %v1742, %v1849
    %v1936 = vsub.f32 %v1743, %v1852
    %v1937 = vsub.f32 %v1744, %v1855
    %v1938 = vsub.f32 %v1745, %v1858
    %v1939 = vsub.f32 %v1746, %v1861
    %v1940 = vsub.f32 %v1747, %v1864
    %v1941 = vsub.f32 %v1748, %v1867
    %v1942 = vsub.f32 %v1749, %v1870
    %v1943 = vsub.f32 %v1750, %v1873
    %v1944 = vsub.f32 %v1751, %v1876
    %v1945 = vsub.f32 %v1752, %v1879
    %v1946 = vsub.f32 %v1753, %v1882
    %v1947 = vsub.f32 %v1754, %v1885
    %v1948 = vsub.f32 %v1755, %v1888
    %v1949 = vsub.f32 %v1756, %v1891
    %v1950 = vsub.f32 %v1757, %v1894
    %v1951 = vsub.f32 %v1758, %v1897
    %v1952 = vsub.f32 %v1759, %v1900
    %v1953 = vsub.f32 %v1760, %v1903
    %v1954 = vsub.f32 %v1761, %v1906
    %v1955 = vmul.f32 %v1907, 1.442695
    %v1956 = vpow.pop %v1955
    %v1957 = vmul.f32 %v1908, 1.442695
    %v1958 = vpow.pop %v1957
    %v1959 = vmul.f32 %v1909, 1.442695
    %v1960 = vpow.pop %v1959
    %v1961 = vmul.f32 %v1910, 1.442695
    %v1962 = vpow.pop %v1961
    %v1963 = vmul.f32 %v1911, 1.442695
    %v1964 = vpow.pop %v1963
    %v1965 = vmul.f32 %v1912, 1.442695
    %v1966 = vpow.pop %v1965
    %v1967 = vmul.f32 %v1913, 1.442695
    %v1968 = vpow.pop %v1967
    %v1969 = vmul.f32 %v1914, 1.442695
    %v1970 = vpow.pop %v1969
    %v1971 = vmul.f32 %v1915, 1.442695
    %v1972 = vpow.pop %v1971
    %v1973 = vmul.f32 %v1916, 1.442695
    %v1974 = vpow.pop %v1973
    %v1975 = vmul.f32 %v1917, 1.442695
    %v1976 = vpow.pop %v1975
    %v1977 = vmul.f32 %v1918, 1.442695
    %v1978 = vpow.pop %v1977
    %v1979 = vmul.f32 %v1919, 1.442695
    %v1980 = vpow.pop %v1979
    %v1981 = vmul.f32 %v1920, 1.442695
    %v1982 = vpow.pop %v1981
    %v1983 = vmul.f32 %v1921, 1.442695
    %v1984 = vpow.pop %v1983
    %v1985 = vmul.f32 %v1922, 1.442695
    %v1986 = vpow.pop %v1985
    %v1987 = vmul.f32 %v1923, 1.442695
    %v1988 = vpow.pop %v1987
    %v1989 = vmul.f32 %v1924, 1.442695
    %v1990 = vpow.pop %v1989
    %v1991 = vmul.f32 %v1925, 1.442695
    %v1992 = vpow.pop %v1991
    %v1993 = vmul.f32 %v1926, 1.442695
    %v1994 = vpow.pop %v1993
    %v1995 = vmul.f32 %v1927, 1.442695
    %v1996 = vpow.pop %v1995
    %v1997 = vmul.f32 %v1928, 1.442695
    %v1998 = vpow.pop %v1997
    %v1999 = vmul.f32 %v1929, 1.442695
    %v2000 = vpow.pop %v1999
    %v2001 = vmul.f32 %v1930, 1.442695
    %v2002 = vpow.pop %v2001
    %v2003 = vmul.f32 %v1931, 1.442695
    %v2004 = vpow.pop %v2003
    %v2005 = vmul.f32 %v1932, 1.442695
    %v2006 = vpow.pop %v2005
    %v2007 = vmul.f32 %v1933, 1.442695
    %v2008 = vpow.pop %v2007
    %v2009 = vmul.f32 %v1934, 1.442695
    %v2010 = vpow.pop %v2009
    %v2011 = vmul.f32 %v1935, 1.442695
    %v2012 = vpow.pop %v2011
    %v2013 = vmul.f32 %v1936, 1.442695
    %v2014 = vpow.pop %v2013
    %v2015 = vmul.f32 %v1937, 1.442695
    %v2016 = vpow.pop %v2015
    %v2017 = vmul.f32 %v1938, 1.442695
    %v2018 = vpow.pop %v2017
    %v2019 = vmul.f32 %v1939, 1.442695
    %v2020 = vpow.pop %v2019
    %v2021 = vmul.f32 %v1940, 1.442695
    %v2022 = vpow.pop %v2021
    %v2023 = vmul.f32 %v1941, 1.442695
    %v2024 = vpow.pop %v2023
    %v2025 = vmul.f32 %v1942, 1.442695
    %v2026 = vpow.pop %v2025
    %v2027 = vmul.f32 %v1943, 1.442695
    %v2028 = vpow.pop %v2027
    %v2029 = vmul.f32 %v1944, 1.442695
    %v2030 = vpow.pop %v2029
    %v2031 = vmul.f32 %v1945, 1.442695
    %v2032 = vpow.pop %v2031
    %v2033 = vmul.f32 %v1946, 1.442695
    %v2034 = vpow.pop %v2033
    %v2035 = vmul.f32 %v1947, 1.442695
    %v2036 = vpow.pop %v2035
    %v2037 = vmul.f32 %v1948, 1.442695
    %v2038 = vpow.pop %v2037
    %v2039 = vmul.f32 %v1949, 1.442695
    %v2040 = vpow.pop %v2039
    %v2041 = vmul.f32 %v1950, 1.442695
    %v2042 = vpow.pop %v2041
    %v2043 = vmul.f32 %v1951, 1.442695
    %v2044 = vpow.pop %v2043
    %v2045 = vmul.f32 %v1952, 1.442695
    %v2046 = vpow.pop %v2045
    %v2047 = vmul.f32 %v1953, 1.442695
    %v2048 = vpow.pop %v2047
    %v2049 = vmul.f32 %v1954, 1.442695
    %v2050 = vpow.pop %v2049
    %v2051 = vsel %vm1762, %v1956, 0.0
    %2052 = vadd.xlane.f32.xlu0 %v2051
    %v2053 = vpop.xlane.xlu0 %2052
    %v2054 = vsel %vm1762, %v1958, 0.0
    %2055 = vadd.xlane.f32.xlu0 %v2054
    %v2056 = vpop.xlane.xlu0 %2055
    %v2057 = vsel %vm1762, %v1960, 0.0
    %2058 = vadd.xlane.f32.xlu0 %v2057
    %v2059 = vpop.xlane.xlu0 %2058
    %v2060 = vsel %vm1762, %v1962, 0.0
    %2061 = vadd.xlane.f32.xlu0 %v2060
    %v2062 = vpop.xlane.xlu0 %2061
    %v2063 = vsel %vm1762, %v1964, 0.0
    %2064 = vadd.xlane.f32.xlu0 %v2063
    %v2065 = vpop.xlane.xlu0 %2064
    %v2066 = vsel %vm1762, %v1966, 0.0
    %2067 = vadd.xlane.f32.xlu0 %v2066
    %v2068 = vpop.xlane.xlu0 %2067
    %v2069 = vsel %vm1762, %v1968, 0.0
    %2070 = vadd.xlane.f32.xlu0 %v2069
    %v2071 = vpop.xlane.xlu0 %2070
    %v2072 = vsel %vm1762, %v1970, 0.0
    %2073 = vadd.xlane.f32.xlu0 %v2072
    %v2074 = vpop.xlane.xlu0 %2073
    %v2075 = vsel %vm1762, %v1972, 0.0
    %2076 = vadd.xlane.f32.xlu0 %v2075
    %v2077 = vpop.xlane.xlu0 %2076
    %v2078 = vsel %vm1762, %v1974, 0.0
    %2079 = vadd.xlane.f32.xlu0 %v2078
    %v2080 = vpop.xlane.xlu0 %2079
    %v2081 = vsel %vm1762, %v1976, 0.0
    %2082 = vadd.xlane.f32.xlu0 %v2081
    %v2083 = vpop.xlane.xlu0 %2082
    %v2084 = vsel %vm1762, %v1978, 0.0
    %2085 = vadd.xlane.f32.xlu0 %v2084
    %v2086 = vpop.xlane.xlu0 %2085
    %v2087 = vsel %vm1762, %v1980, 0.0
    %2088 = vadd.xlane.f32.xlu0 %v2087
    %v2089 = vpop.xlane.xlu0 %2088
    %v2090 = vsel %vm1762, %v1982, 0.0
    %2091 = vadd.xlane.f32.xlu0 %v2090
    %v2092 = vpop.xlane.xlu0 %2091
    %v2093 = vsel %vm1762, %v1984, 0.0
    %2094 = vadd.xlane.f32.xlu0 %v2093
    %v2095 = vpop.xlane.xlu0 %2094
    %v2096 = vsel %vm1762, %v1986, 0.0
    %2097 = vadd.xlane.f32.xlu0 %v2096
    %v2098 = vpop.xlane.xlu0 %2097
    %v2099 = vsel %vm1762, %v1988, 0.0
    %2100 = vadd.xlane.f32.xlu0 %v2099
    %v2101 = vpop.xlane.xlu0 %2100
    %v2102 = vsel %vm1762, %v1990, 0.0
    %2103 = vadd.xlane.f32.xlu0 %v2102
    %v2104 = vpop.xlane.xlu0 %2103
    %v2105 = vsel %vm1762, %v1992, 0.0
    %2106 = vadd.xlane.f32.xlu0 %v2105
    %v2107 = vpop.xlane.xlu0 %2106
    %v2108 = vsel %vm1762, %v1994, 0.0
    %2109 = vadd.xlane.f32.xlu0 %v2108
    %v2110 = vpop.xlane.xlu0 %2109
    %v2111 = vsel %vm1762, %v1996, 0.0
    %2112 = vadd.xlane.f32.xlu0 %v2111
    %v2113 = vpop.xlane.xlu0 %2112
    %v2114 = vsel %vm1762, %v1998, 0.0
    %2115 = vadd.xlane.f32.xlu0 %v2114
    %v2116 = vpop.xlane.xlu0 %2115
    %v2117 = vsel %vm1762, %v2000, 0.0
    %2118 = vadd.xlane.f32.xlu0 %v2117
    %v2119 = vpop.xlane.xlu0 %2118
    %v2120 = vsel %vm1762, %v2002, 0.0
    %2121 = vadd.xlane.f32.xlu0 %v2120
    %v2122 = vpop.xlane.xlu0 %2121
    %v2123 = vsel %vm1762, %v2004, 0.0
    %2124 = vadd.xlane.f32.xlu0 %v2123
    %v2125 = vpop.xlane.xlu0 %2124
    %v2126 = vsel %vm1762, %v2006, 0.0
    %2127 = vadd.xlane.f32.xlu0 %v2126
    %v2128 = vpop.xlane.xlu0 %2127
    %v2129 = vsel %vm1762, %v2008, 0.0
    %2130 = vadd.xlane.f32.xlu0 %v2129
    %v2131 = vpop.xlane.xlu0 %2130
    %v2132 = vsel %vm1762, %v2010, 0.0
    %2133 = vadd.xlane.f32.xlu0 %v2132
    %v2134 = vpop.xlane.xlu0 %2133
    %v2135 = vsel %vm1762, %v2012, 0.0
    %2136 = vadd.xlane.f32.xlu0 %v2135
    %v2137 = vpop.xlane.xlu0 %2136
    %v2138 = vsel %vm1762, %v2014, 0.0
    %2139 = vadd.xlane.f32.xlu0 %v2138
    %v2140 = vpop.xlane.xlu0 %2139
    %v2141 = vsel %vm1762, %v2016, 0.0
    %2142 = vadd.xlane.f32.xlu0 %v2141
    %v2143 = vpop.xlane.xlu0 %2142
    %v2144 = vsel %vm1762, %v2018, 0.0
    %2145 = vadd.xlane.f32.xlu0 %v2144
    %v2146 = vpop.xlane.xlu0 %2145
    %v2147 = vsel %vm1762, %v2020, 0.0
    %2148 = vadd.xlane.f32.xlu0 %v2147
    %v2149 = vpop.xlane.xlu0 %2148
    %v2150 = vsel %vm1762, %v2022, 0.0
    %2151 = vadd.xlane.f32.xlu0 %v2150
    %v2152 = vpop.xlane.xlu0 %2151
    %v2153 = vsel %vm1762, %v2024, 0.0
    %2154 = vadd.xlane.f32.xlu0 %v2153
    %v2155 = vpop.xlane.xlu0 %2154
    %v2156 = vsel %vm1762, %v2026, 0.0
    %2157 = vadd.xlane.f32.xlu0 %v2156
    %v2158 = vpop.xlane.xlu0 %2157
    %v2159 = vsel %vm1762, %v2028, 0.0
    %2160 = vadd.xlane.f32.xlu0 %v2159
    %v2161 = vpop.xlane.xlu0 %2160
    %v2162 = vsel %vm1762, %v2030, 0.0
    %2163 = vadd.xlane.f32.xlu0 %v2162
    %v2164 = vpop.xlane.xlu0 %2163
    %v2165 = vsel %vm1762, %v2032, 0.0
    %2166 = vadd.xlane.f32.xlu0 %v2165
    %v2167 = vpop.xlane.xlu0 %2166
    %v2168 = vsel %vm1762, %v2034, 0.0
    %2169 = vadd.xlane.f32.xlu0 %v2168
    %v2170 = vpop.xlane.xlu0 %2169
    %v2171 = vsel %vm1762, %v2036, 0.0
    %2172 = vadd.xlane.f32.xlu0 %v2171
    %v2173 = vpop.xlane.xlu0 %2172
    %v2174 = vsel %vm1762, %v2038, 0.0
    %2175 = vadd.xlane.f32.xlu0 %v2174
    %v2176 = vpop.xlane.xlu0 %2175
    %v2177 = vsel %vm1762, %v2040, 0.0
    %2178 = vadd.xlane.f32.xlu0 %v2177
    %v2179 = vpop.xlane.xlu0 %2178
    %v2180 = vsel %vm1762, %v2042, 0.0
    %2181 = vadd.xlane.f32.xlu0 %v2180
    %v2182 = vpop.xlane.xlu0 %2181
    %v2183 = vsel %vm1762, %v2044, 0.0
    %2184 = vadd.xlane.f32.xlu0 %v2183
    %v2185 = vpop.xlane.xlu0 %2184
    %v2186 = vsel %vm1762, %v2046, 0.0
    %2187 = vadd.xlane.f32.xlu0 %v2186
    %v2188 = vpop.xlane.xlu0 %2187
    %v2189 = vsel %vm1762, %v2048, 0.0
    %2190 = vadd.xlane.f32.xlu0 %v2189
    %v2191 = vpop.xlane.xlu0 %2190
    %v2192 = vsel %vm1762, %v2050, 0.0
    %2193 = vadd.xlane.f32.xlu0 %v2192
    %v2194 = vpop.xlane.xlu0 %2193
    %v2195 = vrcp.pop %v2053
    %v2196 = vmul.f32 %v2053, %v2195
    %v2197 = vsub.f32 1.0, %v2196
    %v2198 = vmul.f32 %v2195, %v2197
    %v2199 = vadd.f32 %v2195, %v2198
    %vm2200 = vweird.f32 %v2053
    %vm2201 = vweird.f32 %v2195
    %vm2202 = vmor %vm2200, %vm2201
    %v2203 = vsel %vm2202, %v2195, %v2199
    %v2204 = vand.u32 2147483647, %v2053
    %vm2205 = vcmp.eq.f32.partialorder %v2204, 8.507059e+37
    %v2206 = vand.u32 %v2053, 2147483648
    %v2207 = vor.u32 1.1754944e-38, %v2206
    %v2208 = vsel %vm2205, %v2207, %v2203
    %v2209 = vmul.f32 %v1956, %v2208
    %v2210 = vrcp.pop %v2056
    %v2211 = vmul.f32 %v2056, %v2210
    %v2212 = vsub.f32 1.0, %v2211
    %v2213 = vmul.f32 %v2210, %v2212
    %v2214 = vadd.f32 %v2210, %v2213
    %vm2215 = vweird.f32 %v2056
    %vm2216 = vweird.f32 %v2210
    %vm2217 = vmor %vm2215, %vm2216
    %v2218 = vsel %vm2217, %v2210, %v2214
    %v2219 = vand.u32 2147483647, %v2056
    %vm2220 = vcmp.eq.f32.partialorder %v2219, 8.507059e+37
    %v2221 = vand.u32 %v2056, 2147483648
    %v2222 = vor.u32 1.1754944e-38, %v2221
    %v2223 = vsel %vm2220, %v2222, %v2218
    %v2224 = vmul.f32 %v1958, %v2223
    %v2225 = vrcp.pop %v2059
    %v2226 = vmul.f32 %v2059, %v2225
    %v2227 = vsub.f32 1.0, %v2226
    %v2228 = vmul.f32 %v2225, %v2227
    %v2229 = vadd.f32 %v2225, %v2228
    %vm2230 = vweird.f32 %v2059
    %vm2231 = vweird.f32 %v2225
    %vm2232 = vmor %vm2230, %vm2231
    %v2233 = vsel %vm2232, %v2225, %v2229
    %v2234 = vand.u32 2147483647, %v2059
    %vm2235 = vcmp.eq.f32.partialorder %v2234, 8.507059e+37
    %v2236 = vand.u32 %v2059, 2147483648
    %v2237 = vor.u32 1.1754944e-38, %v2236
    %v2238 = vsel %vm2235, %v2237, %v2233
    %v2239 = vmul.f32 %v1960, %v2238
    %v2240 = vrcp.pop %v2062
    %v2241 = vmul.f32 %v2062, %v2240
    %v2242 = vsub.f32 1.0, %v2241
    %v2243 = vmul.f32 %v2240, %v2242
    %v2244 = vadd.f32 %v2240, %v2243
    %vm2245 = vweird.f32 %v2062
    %vm2246 = vweird.f32 %v2240
    %vm2247 = vmor %vm2245, %vm2246
    %v2248 = vsel %vm2247, %v2240, %v2244
    %v2249 = vand.u32 2147483647, %v2062
    %vm2250 = vcmp.eq.f32.partialorder %v2249, 8.507059e+37
    %v2251 = vand.u32 %v2062, 2147483648
    %v2252 = vor.u32 1.1754944e-38, %v2251
    %v2253 = vsel %vm2250, %v2252, %v2248
    %v2254 = vmul.f32 %v1962, %v2253
    %v2255 = vrcp.pop %v2065
    %v2256 = vmul.f32 %v2065, %v2255
    %v2257 = vsub.f32 1.0, %v2256
    %v2258 = vmul.f32 %v2255, %v2257
    %v2259 = vadd.f32 %v2255, %v2258
    %vm2260 = vweird.f32 %v2065
    %vm2261 = vweird.f32 %v2255
    %vm2262 = vmor %vm2260, %vm2261
    %v2263 = vsel %vm2262, %v2255, %v2259
    %v2264 = vand.u32 2147483647, %v2065
    %vm2265 = vcmp.eq.f32.partialorder %v2264, 8.507059e+37
    %v2266 = vand.u32 %v2065, 2147483648
    %v2267 = vor.u32 1.1754944e-38, %v2266
    %v2268 = vsel %vm2265, %v2267, %v2263
    %v2269 = vmul.f32 %v1964, %v2268
    %v2270 = vrcp.pop %v2068
    %v2271 = vmul.f32 %v2068, %v2270
    %v2272 = vsub.f32 1.0, %v2271
    %v2273 = vmul.f32 %v2270, %v2272
    %v2274 = vadd.f32 %v2270, %v2273
    %vm2275 = vweird.f32 %v2068
    %vm2276 = vweird.f32 %v2270
    %vm2277 = vmor %vm2275, %vm2276
    %v2278 = vsel %vm2277, %v2270, %v2274
    %v2279 = vand.u32 2147483647, %v2068
    %vm2280 = vcmp.eq.f32.partialorder %v2279, 8.507059e+37
    %v2281 = vand.u32 %v2068, 2147483648
    %v2282 = vor.u32 1.1754944e-38, %v2281
    %v2283 = vsel %vm2280, %v2282, %v2278
    %v2284 = vmul.f32 %v1966, %v2283
    %v2285 = vrcp.pop %v2071
    %v2286 = vmul.f32 %v2071, %v2285
    %v2287 = vsub.f32 1.0, %v2286
    %v2288 = vmul.f32 %v2285, %v2287
    %v2289 = vadd.f32 %v2285, %v2288
    %vm2290 = vweird.f32 %v2071
    %vm2291 = vweird.f32 %v2285
    %vm2292 = vmor %vm2290, %vm2291
    %v2293 = vsel %vm2292, %v2285, %v2289
    %v2294 = vand.u32 2147483647, %v2071
    %vm2295 = vcmp.eq.f32.partialorder %v2294, 8.507059e+37
    %v2296 = vand.u32 %v2071, 2147483648
    %v2297 = vor.u32 1.1754944e-38, %v2296
    %v2298 = vsel %vm2295, %v2297, %v2293
    %v2299 = vmul.f32 %v1968, %v2298
    %v2300 = vrcp.pop %v2074
    %v2301 = vmul.f32 %v2074, %v2300
    %v2302 = vsub.f32 1.0, %v2301
    %v2303 = vmul.f32 %v2300, %v2302
    %v2304 = vadd.f32 %v2300, %v2303
    %vm2305 = vweird.f32 %v2074
    %vm2306 = vweird.f32 %v2300
    %vm2307 = vmor %vm2305, %vm2306
    %v2308 = vsel %vm2307, %v2300, %v2304
    %v2309 = vand.u32 2147483647, %v2074
    %vm2310 = vcmp.eq.f32.partialorder %v2309, 8.507059e+37
    %v2311 = vand.u32 %v2074, 2147483648
    %v2312 = vor.u32 1.1754944e-38, %v2311
    %v2313 = vsel %vm2310, %v2312, %v2308
    %v2314 = vmul.f32 %v1970, %v2313
    %v2315 = vrcp.pop %v2077
    %v2316 = vmul.f32 %v2077, %v2315
    %v2317 = vsub.f32 1.0, %v2316
    %v2318 = vmul.f32 %v2315, %v2317
    %v2319 = vadd.f32 %v2315, %v2318
    %vm2320 = vweird.f32 %v2077
    %vm2321 = vweird.f32 %v2315
    %vm2322 = vmor %vm2320, %vm2321
    %v2323 = vsel %vm2322, %v2315, %v2319
    %v2324 = vand.u32 2147483647, %v2077
    %vm2325 = vcmp.eq.f32.partialorder %v2324, 8.507059e+37
    %v2326 = vand.u32 %v2077, 2147483648
    %v2327 = vor.u32 1.1754944e-38, %v2326
    %v2328 = vsel %vm2325, %v2327, %v2323
    %v2329 = vmul.f32 %v1972, %v2328
    %v2330 = vrcp.pop %v2080
    %v2331 = vmul.f32 %v2080, %v2330
    %v2332 = vsub.f32 1.0, %v2331
    %v2333 = vmul.f32 %v2330, %v2332
    %v2334 = vadd.f32 %v2330, %v2333
    %vm2335 = vweird.f32 %v2080
    %vm2336 = vweird.f32 %v2330
    %vm2337 = vmor %vm2335, %vm2336
    %v2338 = vsel %vm2337, %v2330, %v2334
    %v2339 = vand.u32 2147483647, %v2080
    %vm2340 = vcmp.eq.f32.partialorder %v2339, 8.507059e+37
    %v2341 = vand.u32 %v2080, 2147483648
    %v2342 = vor.u32 1.1754944e-38, %v2341
    %v2343 = vsel %vm2340, %v2342, %v2338
    %v2344 = vmul.f32 %v1974, %v2343
    %v2345 = vrcp.pop %v2083
    %v2346 = vmul.f32 %v2083, %v2345
    %v2347 = vsub.f32 1.0, %v2346
    %v2348 = vmul.f32 %v2345, %v2347
    %v2349 = vadd.f32 %v2345, %v2348
    %vm2350 = vweird.f32 %v2083
    %vm2351 = vweird.f32 %v2345
    %vm2352 = vmor %vm2350, %vm2351
    %v2353 = vsel %vm2352, %v2345, %v2349
    %v2354 = vand.u32 2147483647, %v2083
    %vm2355 = vcmp.eq.f32.partialorder %v2354, 8.507059e+37
    %v2356 = vand.u32 %v2083, 2147483648
    %v2357 = vor.u32 1.1754944e-38, %v2356
    %v2358 = vsel %vm2355, %v2357, %v2353
    %v2359 = vmul.f32 %v1976, %v2358
    %v2360 = vrcp.pop %v2086
    %v2361 = vmul.f32 %v2086, %v2360
    %v2362 = vsub.f32 1.0, %v2361
    %v2363 = vmul.f32 %v2360, %v2362
    %v2364 = vadd.f32 %v2360, %v2363
    %vm2365 = vweird.f32 %v2086
    %vm2366 = vweird.f32 %v2360
    %vm2367 = vmor %vm2365, %vm2366
    %v2368 = vsel %vm2367, %v2360, %v2364
    %v2369 = vand.u32 2147483647, %v2086
    %vm2370 = vcmp.eq.f32.partialorder %v2369, 8.507059e+37
    %v2371 = vand.u32 %v2086, 2147483648
    %v2372 = vor.u32 1.1754944e-38, %v2371
    %v2373 = vsel %vm2370, %v2372, %v2368
    %v2374 = vmul.f32 %v1978, %v2373
    %v2375 = vrcp.pop %v2089
    %v2376 = vmul.f32 %v2089, %v2375
    %v2377 = vsub.f32 1.0, %v2376
    %v2378 = vmul.f32 %v2375, %v2377
    %v2379 = vadd.f32 %v2375, %v2378
    %vm2380 = vweird.f32 %v2089
    %vm2381 = vweird.f32 %v2375
    %vm2382 = vmor %vm2380, %vm2381
    %v2383 = vsel %vm2382, %v2375, %v2379
    %v2384 = vand.u32 2147483647, %v2089
    %vm2385 = vcmp.eq.f32.partialorder %v2384, 8.507059e+37
    %v2386 = vand.u32 %v2089, 2147483648
    %v2387 = vor.u32 1.1754944e-38, %v2386
    %v2388 = vsel %vm2385, %v2387, %v2383
    %v2389 = vmul.f32 %v1980, %v2388
    %v2390 = vrcp.pop %v2092
    %v2391 = vmul.f32 %v2092, %v2390
    %v2392 = vsub.f32 1.0, %v2391
    %v2393 = vmul.f32 %v2390, %v2392
    %v2394 = vadd.f32 %v2390, %v2393
    %vm2395 = vweird.f32 %v2092
    %vm2396 = vweird.f32 %v2390
    %vm2397 = vmor %vm2395, %vm2396
    %v2398 = vsel %vm2397, %v2390, %v2394
    %v2399 = vand.u32 2147483647, %v2092
    %vm2400 = vcmp.eq.f32.partialorder %v2399, 8.507059e+37
    %v2401 = vand.u32 %v2092, 2147483648
    %v2402 = vor.u32 1.1754944e-38, %v2401
    %v2403 = vsel %vm2400, %v2402, %v2398
    %v2404 = vmul.f32 %v1982, %v2403
    %v2405 = vrcp.pop %v2095
    %v2406 = vmul.f32 %v2095, %v2405
    %v2407 = vsub.f32 1.0, %v2406
    %v2408 = vmul.f32 %v2405, %v2407
    %v2409 = vadd.f32 %v2405, %v2408
    %vm2410 = vweird.f32 %v2095
    %vm2411 = vweird.f32 %v2405
    %vm2412 = vmor %vm2410, %vm2411
    %v2413 = vsel %vm2412, %v2405, %v2409
    %v2414 = vand.u32 2147483647, %v2095
    %vm2415 = vcmp.eq.f32.partialorder %v2414, 8.507059e+37
    %v2416 = vand.u32 %v2095, 2147483648
    %v2417 = vor.u32 1.1754944e-38, %v2416
    %v2418 = vsel %vm2415, %v2417, %v2413
    %v2419 = vmul.f32 %v1984, %v2418
    %v2420 = vrcp.pop %v2098
    %v2421 = vmul.f32 %v2098, %v2420
    %v2422 = vsub.f32 1.0, %v2421
    %v2423 = vmul.f32 %v2420, %v2422
    %v2424 = vadd.f32 %v2420, %v2423
    %vm2425 = vweird.f32 %v2098
    %vm2426 = vweird.f32 %v2420
    %vm2427 = vmor %vm2425, %vm2426
    %v2428 = vsel %vm2427, %v2420, %v2424
    %v2429 = vand.u32 2147483647, %v2098
    %vm2430 = vcmp.eq.f32.partialorder %v2429, 8.507059e+37
    %v2431 = vand.u32 %v2098, 2147483648
    %v2432 = vor.u32 1.1754944e-38, %v2431
    %v2433 = vsel %vm2430, %v2432, %v2428
    %v2434 = vmul.f32 %v1986, %v2433
    %v2435 = vrcp.pop %v2101
    %v2436 = vmul.f32 %v2101, %v2435
    %v2437 = vsub.f32 1.0, %v2436
    %v2438 = vmul.f32 %v2435, %v2437
    %v2439 = vadd.f32 %v2435, %v2438
    %vm2440 = vweird.f32 %v2101
    %vm2441 = vweird.f32 %v2435
    %vm2442 = vmor %vm2440, %vm2441
    %v2443 = vsel %vm2442, %v2435, %v2439
    %v2444 = vand.u32 2147483647, %v2101
    %vm2445 = vcmp.eq.f32.partialorder %v2444, 8.507059e+37
    %v2446 = vand.u32 %v2101, 2147483648
    %v2447 = vor.u32 1.1754944e-38, %v2446
    %v2448 = vsel %vm2445, %v2447, %v2443
    %v2449 = vmul.f32 %v1988, %v2448
    %v2450 = vrcp.pop %v2104
    %v2451 = vmul.f32 %v2104, %v2450
    %v2452 = vsub.f32 1.0, %v2451
    %v2453 = vmul.f32 %v2450, %v2452
    %v2454 = vadd.f32 %v2450, %v2453
    %vm2455 = vweird.f32 %v2104
    %vm2456 = vweird.f32 %v2450
    %vm2457 = vmor %vm2455, %vm2456
    %v2458 = vsel %vm2457, %v2450, %v2454
    %v2459 = vand.u32 2147483647, %v2104
    %vm2460 = vcmp.eq.f32.partialorder %v2459, 8.507059e+37
    %v2461 = vand.u32 %v2104, 2147483648
    %v2462 = vor.u32 1.1754944e-38, %v2461
    %v2463 = vsel %vm2460, %v2462, %v2458
    %v2464 = vmul.f32 %v1990, %v2463
    %v2465 = vrcp.pop %v2107
    %v2466 = vmul.f32 %v2107, %v2465
    %v2467 = vsub.f32 1.0, %v2466
    %v2468 = vmul.f32 %v2465, %v2467
    %v2469 = vadd.f32 %v2465, %v2468
    %vm2470 = vweird.f32 %v2107
    %vm2471 = vweird.f32 %v2465
    %vm2472 = vmor %vm2470, %vm2471
    %v2473 = vsel %vm2472, %v2465, %v2469
    %v2474 = vand.u32 2147483647, %v2107
    %vm2475 = vcmp.eq.f32.partialorder %v2474, 8.507059e+37
    %v2476 = vand.u32 %v2107, 2147483648
    %v2477 = vor.u32 1.1754944e-38, %v2476
    %v2478 = vsel %vm2475, %v2477, %v2473
    %v2479 = vmul.f32 %v1992, %v2478
    %v2480 = vrcp.pop %v2110
    %v2481 = vmul.f32 %v2110, %v2480
    %v2482 = vsub.f32 1.0, %v2481
    %v2483 = vmul.f32 %v2480, %v2482
    %v2484 = vadd.f32 %v2480, %v2483
    %vm2485 = vweird.f32 %v2110
    %vm2486 = vweird.f32 %v2480
    %vm2487 = vmor %vm2485, %vm2486
    %v2488 = vsel %vm2487, %v2480, %v2484
    %v2489 = vand.u32 2147483647, %v2110
    %vm2490 = vcmp.eq.f32.partialorder %v2489, 8.507059e+37
    %v2491 = vand.u32 %v2110, 2147483648
    %v2492 = vor.u32 1.1754944e-38, %v2491
    %v2493 = vsel %vm2490, %v2492, %v2488
    %v2494 = vmul.f32 %v1994, %v2493
    %v2495 = vrcp.pop %v2113
    %v2496 = vmul.f32 %v2113, %v2495
    %v2497 = vsub.f32 1.0, %v2496
    %v2498 = vmul.f32 %v2495, %v2497
    %v2499 = vadd.f32 %v2495, %v2498
    %vm2500 = vweird.f32 %v2113
    %vm2501 = vweird.f32 %v2495
    %vm2502 = vmor %vm2500, %vm2501
    %v2503 = vsel %vm2502, %v2495, %v2499
    %v2504 = vand.u32 2147483647, %v2113
    %vm2505 = vcmp.eq.f32.partialorder %v2504, 8.507059e+37
    %v2506 = vand.u32 %v2113, 2147483648
    %v2507 = vor.u32 1.1754944e-38, %v2506
    %v2508 = vsel %vm2505, %v2507, %v2503
    %v2509 = vmul.f32 %v1996, %v2508
    %v2510 = vrcp.pop %v2116
    %v2511 = vmul.f32 %v2116, %v2510
    %v2512 = vsub.f32 1.0, %v2511
    %v2513 = vmul.f32 %v2510, %v2512
    %v2514 = vadd.f32 %v2510, %v2513
    %vm2515 = vweird.f32 %v2116
    %vm2516 = vweird.f32 %v2510
    %vm2517 = vmor %vm2515, %vm2516
    %v2518 = vsel %vm2517, %v2510, %v2514
    %v2519 = vand.u32 2147483647, %v2116
    %vm2520 = vcmp.eq.f32.partialorder %v2519, 8.507059e+37
    %v2521 = vand.u32 %v2116, 2147483648
    %v2522 = vor.u32 1.1754944e-38, %v2521
    %v2523 = vsel %vm2520, %v2522, %v2518
    %v2524 = vmul.f32 %v1998, %v2523
    %v2525 = vrcp.pop %v2119
    %v2526 = vmul.f32 %v2119, %v2525
    %v2527 = vsub.f32 1.0, %v2526
    %v2528 = vmul.f32 %v2525, %v2527
    %v2529 = vadd.f32 %v2525, %v2528
    %vm2530 = vweird.f32 %v2119
    %vm2531 = vweird.f32 %v2525
    %vm2532 = vmor %vm2530, %vm2531
    %v2533 = vsel %vm2532, %v2525, %v2529
    %v2534 = vand.u32 2147483647, %v2119
    %vm2535 = vcmp.eq.f32.partialorder %v2534, 8.507059e+37
    %v2536 = vand.u32 %v2119, 2147483648
    %v2537 = vor.u32 1.1754944e-38, %v2536
    %v2538 = vsel %vm2535, %v2537, %v2533
    %v2539 = vmul.f32 %v2000, %v2538
    %v2540 = vrcp.pop %v2122
    %v2541 = vmul.f32 %v2122, %v2540
    %v2542 = vsub.f32 1.0, %v2541
    %v2543 = vmul.f32 %v2540, %v2542
    %v2544 = vadd.f32 %v2540, %v2543
    %vm2545 = vweird.f32 %v2122
    %vm2546 = vweird.f32 %v2540
    %vm2547 = vmor %vm2545, %vm2546
    %v2548 = vsel %vm2547, %v2540, %v2544
    %v2549 = vand.u32 2147483647, %v2122
    %vm2550 = vcmp.eq.f32.partialorder %v2549, 8.507059e+37
    %v2551 = vand.u32 %v2122, 2147483648
    %v2552 = vor.u32 1.1754944e-38, %v2551
    %v2553 = vsel %vm2550, %v2552, %v2548
    %v2554 = vmul.f32 %v2002, %v2553
    %v2555 = vrcp.pop %v2125
    %v2556 = vmul.f32 %v2125, %v2555
    %v2557 = vsub.f32 1.0, %v2556
    %v2558 = vmul.f32 %v2555, %v2557
    %v2559 = vadd.f32 %v2555, %v2558
    %vm2560 = vweird.f32 %v2125
    %vm2561 = vweird.f32 %v2555
    %vm2562 = vmor %vm2560, %vm2561
    %v2563 = vsel %vm2562, %v2555, %v2559
    %v2564 = vand.u32 2147483647, %v2125
    %vm2565 = vcmp.eq.f32.partialorder %v2564, 8.507059e+37
    %v2566 = vand.u32 %v2125, 2147483648
    %v2567 = vor.u32 1.1754944e-38, %v2566
    %v2568 = vsel %vm2565, %v2567, %v2563
    %v2569 = vmul.f32 %v2004, %v2568
    %v2570 = vrcp.pop %v2128
    %v2571 = vmul.f32 %v2128, %v2570
    %v2572 = vsub.f32 1.0, %v2571
    %v2573 = vmul.f32 %v2570, %v2572
    %v2574 = vadd.f32 %v2570, %v2573
    %vm2575 = vweird.f32 %v2128
    %vm2576 = vweird.f32 %v2570
    %vm2577 = vmor %vm2575, %vm2576
    %v2578 = vsel %vm2577, %v2570, %v2574
    %v2579 = vand.u32 2147483647, %v2128
    %vm2580 = vcmp.eq.f32.partialorder %v2579, 8.507059e+37
    %v2581 = vand.u32 %v2128, 2147483648
    %v2582 = vor.u32 1.1754944e-38, %v2581
    %v2583 = vsel %vm2580, %v2582, %v2578
    %v2584 = vmul.f32 %v2006, %v2583
    %v2585 = vrcp.pop %v2131
    %v2586 = vmul.f32 %v2131, %v2585
    %v2587 = vsub.f32 1.0, %v2586
    %v2588 = vmul.f32 %v2585, %v2587
    %v2589 = vadd.f32 %v2585, %v2588
    %vm2590 = vweird.f32 %v2131
    %vm2591 = vweird.f32 %v2585
    %vm2592 = vmor %vm2590, %vm2591
    %v2593 = vsel %vm2592, %v2585, %v2589
    %v2594 = vand.u32 2147483647, %v2131
    %vm2595 = vcmp.eq.f32.partialorder %v2594, 8.507059e+37
    %v2596 = vand.u32 %v2131, 2147483648
    %v2597 = vor.u32 1.1754944e-38, %v2596
    %v2598 = vsel %vm2595, %v2597, %v2593
    %v2599 = vmul.f32 %v2008, %v2598
    %v2600 = vrcp.pop %v2134
    %v2601 = vmul.f32 %v2134, %v2600
    %v2602 = vsub.f32 1.0, %v2601
    %v2603 = vmul.f32 %v2600, %v2602
    %v2604 = vadd.f32 %v2600, %v2603
    %vm2605 = vweird.f32 %v2134
    %vm2606 = vweird.f32 %v2600
    %vm2607 = vmor %vm2605, %vm2606
    %v2608 = vsel %vm2607, %v2600, %v2604
    %v2609 = vand.u32 2147483647, %v2134
    %vm2610 = vcmp.eq.f32.partialorder %v2609, 8.507059e+37
    %v2611 = vand.u32 %v2134, 2147483648
    %v2612 = vor.u32 1.1754944e-38, %v2611
    %v2613 = vsel %vm2610, %v2612, %v2608
    %v2614 = vmul.f32 %v2010, %v2613
    %v2615 = vrcp.pop %v2137
    %v2616 = vmul.f32 %v2137, %v2615
    %v2617 = vsub.f32 1.0, %v2616
    %v2618 = vmul.f32 %v2615, %v2617
    %v2619 = vadd.f32 %v2615, %v2618
    %vm2620 = vweird.f32 %v2137
    %vm2621 = vweird.f32 %v2615
    %vm2622 = vmor %vm2620, %vm2621
    %v2623 = vsel %vm2622, %v2615, %v2619
    %v2624 = vand.u32 2147483647, %v2137
    %vm2625 = vcmp.eq.f32.partialorder %v2624, 8.507059e+37
    %v2626 = vand.u32 %v2137, 2147483648
    %v2627 = vor.u32 1.1754944e-38, %v2626
    %v2628 = vsel %vm2625, %v2627, %v2623
    %v2629 = vmul.f32 %v2012, %v2628
    %v2630 = vrcp.pop %v2140
    %v2631 = vmul.f32 %v2140, %v2630
    %v2632 = vsub.f32 1.0, %v2631
    %v2633 = vmul.f32 %v2630, %v2632
    %v2634 = vadd.f32 %v2630, %v2633
    %vm2635 = vweird.f32 %v2140
    %vm2636 = vweird.f32 %v2630
    %vm2637 = vmor %vm2635, %vm2636
    %v2638 = vsel %vm2637, %v2630, %v2634
    %v2639 = vand.u32 2147483647, %v2140
    %vm2640 = vcmp.eq.f32.partialorder %v2639, 8.507059e+37
    %v2641 = vand.u32 %v2140, 2147483648
    %v2642 = vor.u32 1.1754944e-38, %v2641
    %v2643 = vsel %vm2640, %v2642, %v2638
    %v2644 = vmul.f32 %v2014, %v2643
    %v2645 = vrcp.pop %v2143
    %v2646 = vmul.f32 %v2143, %v2645
    %v2647 = vsub.f32 1.0, %v2646
    %v2648 = vmul.f32 %v2645, %v2647
    %v2649 = vadd.f32 %v2645, %v2648
    %vm2650 = vweird.f32 %v2143
    %vm2651 = vweird.f32 %v2645
    %vm2652 = vmor %vm2650, %vm2651
    %v2653 = vsel %vm2652, %v2645, %v2649
    %v2654 = vand.u32 2147483647, %v2143
    %vm2655 = vcmp.eq.f32.partialorder %v2654, 8.507059e+37
    %v2656 = vand.u32 %v2143, 2147483648
    %v2657 = vor.u32 1.1754944e-38, %v2656
    %v2658 = vsel %vm2655, %v2657, %v2653
    %v2659 = vmul.f32 %v2016, %v2658
    %v2660 = vrcp.pop %v2146
    %v2661 = vmul.f32 %v2146, %v2660
    %v2662 = vsub.f32 1.0, %v2661
    %v2663 = vmul.f32 %v2660, %v2662
    %v2664 = vadd.f32 %v2660, %v2663
    %vm2665 = vweird.f32 %v2146
    %vm2666 = vweird.f32 %v2660
    %vm2667 = vmor %vm2665, %vm2666
    %v2668 = vsel %vm2667, %v2660, %v2664
    %v2669 = vand.u32 2147483647, %v2146
    %vm2670 = vcmp.eq.f32.partialorder %v2669, 8.507059e+37
    %v2671 = vand.u32 %v2146, 2147483648
    %v2672 = vor.u32 1.1754944e-38, %v2671
    %v2673 = vsel %vm2670, %v2672, %v2668
    %v2674 = vmul.f32 %v2018, %v2673
    %v2675 = vrcp.pop %v2149
    %v2676 = vmul.f32 %v2149, %v2675
    %v2677 = vsub.f32 1.0, %v2676
    %v2678 = vmul.f32 %v2675, %v2677
    %v2679 = vadd.f32 %v2675, %v2678
    %vm2680 = vweird.f32 %v2149
    %vm2681 = vweird.f32 %v2675
    %vm2682 = vmor %vm2680, %vm2681
    %v2683 = vsel %vm2682, %v2675, %v2679
    %v2684 = vand.u32 2147483647, %v2149
    %vm2685 = vcmp.eq.f32.partialorder %v2684, 8.507059e+37
    %v2686 = vand.u32 %v2149, 2147483648
    %v2687 = vor.u32 1.1754944e-38, %v2686
    %v2688 = vsel %vm2685, %v2687, %v2683
    %v2689 = vmul.f32 %v2020, %v2688
    %v2690 = vrcp.pop %v2152
    %v2691 = vmul.f32 %v2152, %v2690
    %v2692 = vsub.f32 1.0, %v2691
    %v2693 = vmul.f32 %v2690, %v2692
    %v2694 = vadd.f32 %v2690, %v2693
    %vm2695 = vweird.f32 %v2152
    %vm2696 = vweird.f32 %v2690
    %vm2697 = vmor %vm2695, %vm2696
    %v2698 = vsel %vm2697, %v2690, %v2694
    %v2699 = vand.u32 2147483647, %v2152
    %vm2700 = vcmp.eq.f32.partialorder %v2699, 8.507059e+37
    %v2701 = vand.u32 %v2152, 2147483648
    %v2702 = vor.u32 1.1754944e-38, %v2701
    %v2703 = vsel %vm2700, %v2702, %v2698
    %v2704 = vmul.f32 %v2022, %v2703
    %v2705 = vrcp.pop %v2155
    %v2706 = vmul.f32 %v2155, %v2705
    %v2707 = vsub.f32 1.0, %v2706
    %v2708 = vmul.f32 %v2705, %v2707
    %v2709 = vadd.f32 %v2705, %v2708
    %vm2710 = vweird.f32 %v2155
    %vm2711 = vweird.f32 %v2705
    %vm2712 = vmor %vm2710, %vm2711
    %v2713 = vsel %vm2712, %v2705, %v2709
    %v2714 = vand.u32 2147483647, %v2155
    %vm2715 = vcmp.eq.f32.partialorder %v2714, 8.507059e+37
    %v2716 = vand.u32 %v2155, 2147483648
    %v2717 = vor.u32 1.1754944e-38, %v2716
    %v2718 = vsel %vm2715, %v2717, %v2713
    %v2719 = vmul.f32 %v2024, %v2718
    %v2720 = vrcp.pop %v2158
    %v2721 = vmul.f32 %v2158, %v2720
    %v2722 = vsub.f32 1.0, %v2721
    %v2723 = vmul.f32 %v2720, %v2722
    %v2724 = vadd.f32 %v2720, %v2723
    %vm2725 = vweird.f32 %v2158
    %vm2726 = vweird.f32 %v2720
    %vm2727 = vmor %vm2725, %vm2726
    %v2728 = vsel %vm2727, %v2720, %v2724
    %v2729 = vand.u32 2147483647, %v2158
    %vm2730 = vcmp.eq.f32.partialorder %v2729, 8.507059e+37
    %v2731 = vand.u32 %v2158, 2147483648
    %v2732 = vor.u32 1.1754944e-38, %v2731
    %v2733 = vsel %vm2730, %v2732, %v2728
    %v2734 = vmul.f32 %v2026, %v2733
    %v2735 = vrcp.pop %v2161
    %v2736 = vmul.f32 %v2161, %v2735
    %v2737 = vsub.f32 1.0, %v2736
    %v2738 = vmul.f32 %v2735, %v2737
    %v2739 = vadd.f32 %v2735, %v2738
    %vm2740 = vweird.f32 %v2161
    %vm2741 = vweird.f32 %v2735
    %vm2742 = vmor %vm2740, %vm2741
    %v2743 = vsel %vm2742, %v2735, %v2739
    %v2744 = vand.u32 2147483647, %v2161
    %vm2745 = vcmp.eq.f32.partialorder %v2744, 8.507059e+37
    %v2746 = vand.u32 %v2161, 2147483648
    %v2747 = vor.u32 1.1754944e-38, %v2746
    %v2748 = vsel %vm2745, %v2747, %v2743
    %v2749 = vmul.f32 %v2028, %v2748
    %v2750 = vrcp.pop %v2164
    %v2751 = vmul.f32 %v2164, %v2750
    %v2752 = vsub.f32 1.0, %v2751
    %v2753 = vmul.f32 %v2750, %v2752
    %v2754 = vadd.f32 %v2750, %v2753
    %vm2755 = vweird.f32 %v2164
    %vm2756 = vweird.f32 %v2750
    %vm2757 = vmor %vm2755, %vm2756
    %v2758 = vsel %vm2757, %v2750, %v2754
    %v2759 = vand.u32 2147483647, %v2164
    %vm2760 = vcmp.eq.f32.partialorder %v2759, 8.507059e+37
    %v2761 = vand.u32 %v2164, 2147483648
    %v2762 = vor.u32 1.1754944e-38, %v2761
    %v2763 = vsel %vm2760, %v2762, %v2758
    %v2764 = vmul.f32 %v2030, %v2763
    %v2765 = vrcp.pop %v2167
    %v2766 = vmul.f32 %v2167, %v2765
    %v2767 = vsub.f32 1.0, %v2766
    %v2768 = vmul.f32 %v2765, %v2767
    %v2769 = vadd.f32 %v2765, %v2768
    %vm2770 = vweird.f32 %v2167
    %vm2771 = vweird.f32 %v2765
    %vm2772 = vmor %vm2770, %vm2771
    %v2773 = vsel %vm2772, %v2765, %v2769
    %v2774 = vand.u32 2147483647, %v2167
    %vm2775 = vcmp.eq.f32.partialorder %v2774, 8.507059e+37
    %v2776 = vand.u32 %v2167, 2147483648
    %v2777 = vor.u32 1.1754944e-38, %v2776
    %v2778 = vsel %vm2775, %v2777, %v2773
    %v2779 = vmul.f32 %v2032, %v2778
    %v2780 = vrcp.pop %v2170
    %v2781 = vmul.f32 %v2170, %v2780
    %v2782 = vsub.f32 1.0, %v2781
    %v2783 = vmul.f32 %v2780, %v2782
    %v2784 = vadd.f32 %v2780, %v2783
    %vm2785 = vweird.f32 %v2170
    %vm2786 = vweird.f32 %v2780
    %vm2787 = vmor %vm2785, %vm2786
    %v2788 = vsel %vm2787, %v2780, %v2784
    %v2789 = vand.u32 2147483647, %v2170
    %vm2790 = vcmp.eq.f32.partialorder %v2789, 8.507059e+37
    %v2791 = vand.u32 %v2170, 2147483648
    %v2792 = vor.u32 1.1754944e-38, %v2791
    %v2793 = vsel %vm2790, %v2792, %v2788
    %v2794 = vmul.f32 %v2034, %v2793
    %v2795 = vrcp.pop %v2173
    %v2796 = vmul.f32 %v2173, %v2795
    %v2797 = vsub.f32 1.0, %v2796
    %v2798 = vmul.f32 %v2795, %v2797
    %v2799 = vadd.f32 %v2795, %v2798
    %vm2800 = vweird.f32 %v2173
    %vm2801 = vweird.f32 %v2795
    %vm2802 = vmor %vm2800, %vm2801
    %v2803 = vsel %vm2802, %v2795, %v2799
    %v2804 = vand.u32 2147483647, %v2173
    %vm2805 = vcmp.eq.f32.partialorder %v2804, 8.507059e+37
    %v2806 = vand.u32 %v2173, 2147483648
    %v2807 = vor.u32 1.1754944e-38, %v2806
    %v2808 = vsel %vm2805, %v2807, %v2803
    %v2809 = vmul.f32 %v2036, %v2808
    %v2810 = vrcp.pop %v2176
    %v2811 = vmul.f32 %v2176, %v2810
    %v2812 = vsub.f32 1.0, %v2811
    %v2813 = vmul.f32 %v2810, %v2812
    %v2814 = vadd.f32 %v2810, %v2813
    %vm2815 = vweird.f32 %v2176
    %vm2816 = vweird.f32 %v2810
    %vm2817 = vmor %vm2815, %vm2816
    %v2818 = vsel %vm2817, %v2810, %v2814
    %v2819 = vand.u32 2147483647, %v2176
    %vm2820 = vcmp.eq.f32.partialorder %v2819, 8.507059e+37
    %v2821 = vand.u32 %v2176, 2147483648
    %v2822 = vor.u32 1.1754944e-38, %v2821
    %v2823 = vsel %vm2820, %v2822, %v2818
    %v2824 = vmul.f32 %v2038, %v2823
    %v2825 = vrcp.pop %v2179
    %v2826 = vmul.f32 %v2179, %v2825
    %v2827 = vsub.f32 1.0, %v2826
    %v2828 = vmul.f32 %v2825, %v2827
    %v2829 = vadd.f32 %v2825, %v2828
    %vm2830 = vweird.f32 %v2179
    %vm2831 = vweird.f32 %v2825
    %vm2832 = vmor %vm2830, %vm2831
    %v2833 = vsel %vm2832, %v2825, %v2829
    %v2834 = vand.u32 2147483647, %v2179
    %vm2835 = vcmp.eq.f32.partialorder %v2834, 8.507059e+37
    %v2836 = vand.u32 %v2179, 2147483648
    %v2837 = vor.u32 1.1754944e-38, %v2836
    %v2838 = vsel %vm2835, %v2837, %v2833
    %v2839 = vmul.f32 %v2040, %v2838
    %v2840 = vrcp.pop %v2182
    %v2841 = vmul.f32 %v2182, %v2840
    %v2842 = vsub.f32 1.0, %v2841
    %v2843 = vmul.f32 %v2840, %v2842
    %v2844 = vadd.f32 %v2840, %v2843
    %vm2845 = vweird.f32 %v2182
    %vm2846 = vweird.f32 %v2840
    %vm2847 = vmor %vm2845, %vm2846
    %v2848 = vsel %vm2847, %v2840, %v2844
    %v2849 = vand.u32 2147483647, %v2182
    %vm2850 = vcmp.eq.f32.partialorder %v2849, 8.507059e+37
    %v2851 = vand.u32 %v2182, 2147483648
    %v2852 = vor.u32 1.1754944e-38, %v2851
    %v2853 = vsel %vm2850, %v2852, %v2848
    %v2854 = vmul.f32 %v2042, %v2853
    %v2855 = vrcp.pop %v2185
    %v2856 = vmul.f32 %v2185, %v2855
    %v2857 = vsub.f32 1.0, %v2856
    %v2858 = vmul.f32 %v2855, %v2857
    %v2859 = vadd.f32 %v2855, %v2858
    %vm2860 = vweird.f32 %v2185
    %vm2861 = vweird.f32 %v2855
    %vm2862 = vmor %vm2860, %vm2861
    %v2863 = vsel %vm2862, %v2855, %v2859
    %v2864 = vand.u32 2147483647, %v2185
    %vm2865 = vcmp.eq.f32.partialorder %v2864, 8.507059e+37
    %v2866 = vand.u32 %v2185, 2147483648
    %v2867 = vor.u32 1.1754944e-38, %v2866
    %v2868 = vsel %vm2865, %v2867, %v2863
    %v2869 = vmul.f32 %v2044, %v2868
    %v2870 = vrcp.pop %v2188
    %v2871 = vmul.f32 %v2188, %v2870
    %v2872 = vsub.f32 1.0, %v2871
    %v2873 = vmul.f32 %v2870, %v2872
    %v2874 = vadd.f32 %v2870, %v2873
    %vm2875 = vweird.f32 %v2188
    %vm2876 = vweird.f32 %v2870
    %vm2877 = vmor %vm2875, %vm2876
    %v2878 = vsel %vm2877, %v2870, %v2874
    %v2879 = vand.u32 2147483647, %v2188
    %vm2880 = vcmp.eq.f32.partialorder %v2879, 8.507059e+37
    %v2881 = vand.u32 %v2188, 2147483648
    %v2882 = vor.u32 1.1754944e-38, %v2881
    %v2883 = vsel %vm2880, %v2882, %v2878
    %v2884 = vmul.f32 %v2046, %v2883
    %v2885 = vrcp.pop %v2191
    %v2886 = vmul.f32 %v2191, %v2885
    %v2887 = vsub.f32 1.0, %v2886
    %v2888 = vmul.f32 %v2885, %v2887
    %v2889 = vadd.f32 %v2885, %v2888
    %vm2890 = vweird.f32 %v2191
    %vm2891 = vweird.f32 %v2885
    %vm2892 = vmor %vm2890, %vm2891
    %v2893 = vsel %vm2892, %v2885, %v2889
    %v2894 = vand.u32 2147483647, %v2191
    %vm2895 = vcmp.eq.f32.partialorder %v2894, 8.507059e+37
    %v2896 = vand.u32 %v2191, 2147483648
    %v2897 = vor.u32 1.1754944e-38, %v2896
    %v2898 = vsel %vm2895, %v2897, %v2893
    %v2899 = vmul.f32 %v2048, %v2898
    %v2900 = vrcp.pop %v2194
    %v2901 = vmul.f32 %v2194, %v2900
    %v2902 = vsub.f32 1.0, %v2901
    %v2903 = vmul.f32 %v2900, %v2902
    %v2904 = vadd.f32 %v2900, %v2903
    %vm2905 = vweird.f32 %v2194
    %vm2906 = vweird.f32 %v2900
    %vm2907 = vmor %vm2905, %vm2906
    %v2908 = vsel %vm2907, %v2900, %v2904
    %v2909 = vand.u32 2147483647, %v2194
    %vm2910 = vcmp.eq.f32.partialorder %v2909, 8.507059e+37
    %v2911 = vand.u32 %v2194, 2147483648
    %v2912 = vor.u32 1.1754944e-38, %v2911
    %v2913 = vsel %vm2910, %v2912, %v2908
    %v2914 = vmul.f32 %v2050, %v2913
    %v2915 = vstv %s480
    %v2916 = vmul.f32 %v2915, %v2569
    %v2917 = vmul.f32 %v2915, %v2584
    %v2918 = vmul.f32 %v2915, %v2599
    %v2919 = vmul.f32 %v2915, %v2614
    %v2920 = vmul.f32 %v2915, %v2629
    %v2921 = vmul.f32 %v2915, %v2644
    %v2922 = vmul.f32 %v2915, %v2659
    %v2923 = vmul.f32 %v2915, %v2674
    %v2924 = vmul.f32 %v2915, %v2689
    %v2925 = vmul.f32 %v2915, %v2704
    %v2926 = vmul.f32 %v2915, %v2719
    %v2927 = vmul.f32 %v2915, %v2734
    %v2928 = vmul.f32 %v2915, %v2749
    %v2929 = vmul.f32 %v2915, %v2764
    %v2930 = vmul.f32 %v2915, %v2779
    %v2931 = vmul.f32 %v2915, %v2794
    %v2932 = vmul.f32 %v2915, %v2809
    %v2933 = vmul.f32 %v2915, %v2824
    %v2934 = vmul.f32 %v2915, %v2839
    %v2935 = vmul.f32 %v2915, %v2854
    %v2936 = vmul.f32 %v2915, %v2869
    %v2937 = vmul.f32 %v2915, %v2884
    %v2938 = vmul.f32 %v2915, %v2899
    %v2939 = vmul.f32 %v2915, %v2914
    %v2940 = vsub.f32 %v2209, %v2916
    %v2941 = vsub.f32 %v2224, %v2917
    %v2942 = vsub.f32 %v2239, %v2918
    %v2943 = vsub.f32 %v2254, %v2919
    %v2944 = vsub.f32 %v2269, %v2920
    %v2945 = vsub.f32 %v2284, %v2921
    %v2946 = vsub.f32 %v2299, %v2922
    %v2947 = vsub.f32 %v2314, %v2923
    %v2948 = vsub.f32 %v2329, %v2924
    %v2949 = vsub.f32 %v2344, %v2925
    %v2950 = vsub.f32 %v2359, %v2926
    %v2951 = vsub.f32 %v2374, %v2927
    %v2952 = vsub.f32 %v2389, %v2928
    %v2953 = vsub.f32 %v2404, %v2929
    %v2954 = vsub.f32 %v2419, %v2930
    %v2955 = vsub.f32 %v2434, %v2931
    %v2956 = vsub.f32 %v2449, %v2932
    %v2957 = vsub.f32 %v2464, %v2933
    %v2958 = vsub.f32 %v2479, %v2934
    %v2959 = vsub.f32 %v2494, %v2935
    %v2960 = vsub.f32 %v2509, %v2936
    %v2961 = vsub.f32 %v2524, %v2937
    %v2962 = vsub.f32 %v2539, %v2938
    %v2963 = vsub.f32 %v2554, %v2939
    %v2965 = vsel %vm1762, %v2940, 0
    %v2968 = vsel %vm1762, %v2941, 0
    %2970 = vmatpush.msra.mxu0 0.0
    %2971 = vmatpush.msra.mxu0 0.0
    %2972 = vmatpush.msra.mxu0 0.0
    %2973 = vmatpush.msra.mxu0 0.0
    %2974 = vmatpush.msra.mxu0 0.0
    %2975 = vmatpush.msra.mxu0 0.0
    %2976 = vmatpush.msra.mxu0 0.0
    %2977 = vmatpush.msra.mxu0 0.0
    %2978 = vmatpush.msra.mxu0 0.0
    %2979 = vmatpush.msra.mxu0 0.0
    %2980 = vmatpush.msra.mxu0 0.0
    %2981 = vmatpush.msra.mxu0 0.0
    %2982 = vmatpush.msra.mxu0 0.0
    %2983 = vmatpush.msra.mxu0 0.0
    %2984 = vmatpush.msra.mxu0 %v878
    %2985 = vmatpush.msra.mxu0 %v875
    %2986 = vmatmul.f32.gmra.mxu0 %v2965
    %v2987 = vpop.f32.mrf.mxu0
    %v2988 = vadd.f32 0.0, %v2987
    %2989 = vmatmul.f32.gmra.mxu0 %v2968
    %v2990 = vpop.f32.mrf.mxu0
    %v2991 = vadd.f32 0.0, %v2990
    %2992 = vdwg.mxu0
    %v2994 = vsel %vm1762, %v2942, 0
    %v2997 = vsel %vm1762, %v2943, 0
    %2999 = vmatpush.msra.mxu0 0.0
    %3000 = vmatpush.msra.mxu0 0.0
    %3001 = vmatpush.msra.mxu0 0.0
    %3002 = vmatpush.msra.mxu0 0.0
    %3003 = vmatpush.msra.mxu0 0.0
    %3004 = vmatpush.msra.mxu0 0.0
    %3005 = vmatpush.msra.mxu0 0.0
    %3006 = vmatpush.msra.mxu0 0.0
    %3007 = vmatpush.msra.mxu0 0.0
    %3008 = vmatpush.msra.mxu0 0.0
    %3009 = vmatpush.msra.mxu0 0.0
    %3010 = vmatpush.msra.mxu0 0.0
    %3011 = vmatpush.msra.mxu0 0.0
    %3012 = vmatpush.msra.mxu0 0.0
    %3013 = vmatpush.msra.mxu0 %v884
    %3014 = vmatpush.msra.mxu0 %v881
    %3015 = vmatmul.f32.gmra.mxu0 %v2994
    %v3016 = vpop.f32.mrf.mxu0
    %v3017 = vadd.f32 0.0, %v3016
    %3018 = vmatmul.f32.gmra.mxu0 %v2997
    %v3019 = vpop.f32.mrf.mxu0
    %v3020 = vadd.f32 0.0, %v3019
    %3021 = vdwg.mxu0
    %v3023 = vsel %vm1762, %v2944, 0
    %v3026 = vsel %vm1762, %v2945, 0
    %3028 = vmatpush.msra.mxu0 0.0
    %3029 = vmatpush.msra.mxu0 0.0
    %3030 = vmatpush.msra.mxu0 0.0
    %3031 = vmatpush.msra.mxu0 0.0
    %3032 = vmatpush.msra.mxu0 0.0
    %3033 = vmatpush.msra.mxu0 0.0
    %3034 = vmatpush.msra.mxu0 0.0
    %3035 = vmatpush.msra.mxu0 0.0
    %3036 = vmatpush.msra.mxu0 0.0
    %3037 = vmatpush.msra.mxu0 0.0
    %3038 = vmatpush.msra.mxu0 0.0
    %3039 = vmatpush.msra.mxu0 0.0
    %3040 = vmatpush.msra.mxu0 0.0
    %3041 = vmatpush.msra.mxu0 0.0
    %3042 = vmatpush.msra.mxu0 %v890
    %3043 = vmatpush.msra.mxu0 %v887
    %3044 = vmatmul.f32.gmra.mxu0 %v3023
    %v3045 = vpop.f32.mrf.mxu0
    %v3046 = vadd.f32 0.0, %v3045
    %3047 = vmatmul.f32.gmra.mxu0 %v3026
    %v3048 = vpop.f32.mrf.mxu0
    %v3049 = vadd.f32 0.0, %v3048
    %3050 = vdwg.mxu0
    %v3052 = vsel %vm1762, %v2946, 0
    %v3055 = vsel %vm1762, %v2947, 0
    %3057 = vmatpush.msra.mxu0 0.0
    %3058 = vmatpush.msra.mxu0 0.0
    %3059 = vmatpush.msra.mxu0 0.0
    %3060 = vmatpush.msra.mxu0 0.0
    %3061 = vmatpush.msra.mxu0 0.0
    %3062 = vmatpush.msra.mxu0 0.0
    %3063 = vmatpush.msra.mxu0 0.0
    %3064 = vmatpush.msra.mxu0 0.0
    %3065 = vmatpush.msra.mxu0 0.0
    %3066 = vmatpush.msra.mxu0 0.0
    %3067 = vmatpush.msra.mxu0 0.0
    %3068 = vmatpush.msra.mxu0 0.0
    %3069 = vmatpush.msra.mxu0 0.0
    %3070 = vmatpush.msra.mxu0 0.0
    %3071 = vmatpush.msra.mxu0 %v896
    %3072 = vmatpush.msra.mxu0 %v893
    %3073 = vmatmul.f32.gmra.mxu0 %v3052
    %v3074 = vpop.f32.mrf.mxu0
    %v3075 = vadd.f32 0.0, %v3074
    %3076 = vmatmul.f32.gmra.mxu0 %v3055
    %v3077 = vpop.f32.mrf.mxu0
    %v3078 = vadd.f32 0.0, %v3077
    %3079 = vdwg.mxu0
    %v3081 = vsel %vm1762, %v2948, 0
    %v3084 = vsel %vm1762, %v2949, 0
    %3086 = vmatpush.msra.mxu0 0.0
    %3087 = vmatpush.msra.mxu0 0.0
    %3088 = vmatpush.msra.mxu0 0.0
    %3089 = vmatpush.msra.mxu0 0.0
    %3090 = vmatpush.msra.mxu0 0.0
    %3091 = vmatpush.msra.mxu0 0.0
    %3092 = vmatpush.msra.mxu0 0.0
    %3093 = vmatpush.msra.mxu0 0.0
    %3094 = vmatpush.msra.mxu0 0.0
    %3095 = vmatpush.msra.mxu0 0.0
    %3096 = vmatpush.msra.mxu0 0.0
    %3097 = vmatpush.msra.mxu0 0.0
    %3098 = vmatpush.msra.mxu0 0.0
    %3099 = vmatpush.msra.mxu0 0.0
    %3100 = vmatpush.msra.mxu0 %v902
    %3101 = vmatpush.msra.mxu0 %v899
    %3102 = vmatmul.f32.gmra.mxu0 %v3081
    %v3103 = vpop.f32.mrf.mxu0
    %v3104 = vadd.f32 0.0, %v3103
    %3105 = vmatmul.f32.gmra.mxu0 %v3084
    %v3106 = vpop.f32.mrf.mxu0
    %v3107 = vadd.f32 0.0, %v3106
    %3108 = vdwg.mxu0
    %v3110 = vsel %vm1762, %v2950, 0
    %v3113 = vsel %vm1762, %v2951, 0
    %3115 = vmatpush.msra.mxu0 0.0
    %3116 = vmatpush.msra.mxu0 0.0
    %3117 = vmatpush.msra.mxu0 0.0
    %3118 = vmatpush.msra.mxu0 0.0
    %3119 = vmatpush.msra.mxu0 0.0
    %3120 = vmatpush.msra.mxu0 0.0
    %3121 = vmatpush.msra.mxu0 0.0
    %3122 = vmatpush.msra.mxu0 0.0
    %3123 = vmatpush.msra.mxu0 0.0
    %3124 = vmatpush.msra.mxu0 0.0
    %3125 = vmatpush.msra.mxu0 0.0
    %3126 = vmatpush.msra.mxu0 0.0
    %3127 = vmatpush.msra.mxu0 0.0
    %3128 = vmatpush.msra.mxu0 0.0
    %3129 = vmatpush.msra.mxu0 %v908
    %3130 = vmatpush.msra.mxu0 %v905
    %3131 = vmatmul.f32.gmra.mxu0 %v3110
    %v3132 = vpop.f32.mrf.mxu0
    %v3133 = vadd.f32 0.0, %v3132
    %3134 = vmatmul.f32.gmra.mxu0 %v3113
    %v3135 = vpop.f32.mrf.mxu0
    %v3136 = vadd.f32 0.0, %v3135
    %3137 = vdwg.mxu0
    %v3139 = vsel %vm1762, %v2952, 0
    %v3142 = vsel %vm1762, %v2953, 0
    %3144 = vmatpush.msra.mxu0 0.0
    %3145 = vmatpush.msra.mxu0 0.0
    %3146 = vmatpush.msra.mxu0 0.0
    %3147 = vmatpush.msra.mxu0 0.0
    %3148 = vmatpush.msra.mxu0 0.0
    %3149 = vmatpush.msra.mxu0 0.0
    %3150 = vmatpush.msra.mxu0 0.0
    %3151 = vmatpush.msra.mxu0 0.0
    %3152 = vmatpush.msra.mxu0 0.0
    %3153 = vmatpush.msra.mxu0 0.0
    %3154 = vmatpush.msra.mxu0 0.0
    %3155 = vmatpush.msra.mxu0 0.0
    %3156 = vmatpush.msra.mxu0 0.0
    %3157 = vmatpush.msra.mxu0 0.0
    %3158 = vmatpush.msra.mxu0 %v914
    %3159 = vmatpush.msra.mxu0 %v911
    %3160 = vmatmul.f32.gmra.mxu0 %v3139
    %v3161 = vpop.f32.mrf.mxu0
    %v3162 = vadd.f32 0.0, %v3161
    %3163 = vmatmul.f32.gmra.mxu0 %v3142
    %v3164 = vpop.f32.mrf.mxu0
    %v3165 = vadd.f32 0.0, %v3164
    %3166 = vdwg.mxu0
    %v3168 = vsel %vm1762, %v2954, 0
    %v3171 = vsel %vm1762, %v2955, 0
    %3173 = vmatpush.msra.mxu0 0.0
    %3174 = vmatpush.msra.mxu0 0.0
    %3175 = vmatpush.msra.mxu0 0.0
    %3176 = vmatpush.msra.mxu0 0.0
    %3177 = vmatpush.msra.mxu0 0.0
    %3178 = vmatpush.msra.mxu0 0.0
    %3179 = vmatpush.msra.mxu0 0.0
    %3180 = vmatpush.msra.mxu0 0.0
    %3181 = vmatpush.msra.mxu0 0.0
    %3182 = vmatpush.msra.mxu0 0.0
    %3183 = vmatpush.msra.mxu0 0.0
    %3184 = vmatpush.msra.mxu0 0.0
    %3185 = vmatpush.msra.mxu0 0.0
    %3186 = vmatpush.msra.mxu0 0.0
    %3187 = vmatpush.msra.mxu0 %v920
    %3188 = vmatpush.msra.mxu0 %v917
    %3189 = vmatmul.f32.gmra.mxu0 %v3168
    %v3190 = vpop.f32.mrf.mxu0
    %v3191 = vadd.f32 0.0, %v3190
    %3192 = vmatmul.f32.gmra.mxu0 %v3171
    %v3193 = vpop.f32.mrf.mxu0
    %v3194 = vadd.f32 0.0, %v3193
    %3195 = vdwg.mxu0
    %v3197 = vsel %vm1762, %v2956, 0
    %v3200 = vsel %vm1762, %v2957, 0
    %3202 = vmatpush.msra.mxu0 0.0
    %3203 = vmatpush.msra.mxu0 0.0
    %3204 = vmatpush.msra.mxu0 0.0
    %3205 = vmatpush.msra.mxu0 0.0
    %3206 = vmatpush.msra.mxu0 0.0
    %3207 = vmatpush.msra.mxu0 0.0
    %3208 = vmatpush.msra.mxu0 0.0
    %3209 = vmatpush.msra.mxu0 0.0
    %3210 = vmatpush.msra.mxu0 0.0
    %3211 = vmatpush.msra.mxu0 0.0
    %3212 = vmatpush.msra.mxu0 0.0
    %3213 = vmatpush.msra.mxu0 0.0
    %3214 = vmatpush.msra.mxu0 0.0
    %3215 = vmatpush.msra.mxu0 0.0
    %3216 = vmatpush.msra.mxu0 %v926
    %3217 = vmatpush.msra.mxu0 %v923
    %3218 = vmatmul.f32.gmra.mxu0 %v3197
    %v3219 = vpop.f32.mrf.mxu0
    %v3220 = vadd.f32 0.0, %v3219
    %3221 = vmatmul.f32.gmra.mxu0 %v3200
    %v3222 = vpop.f32.mrf.mxu0
    %v3223 = vadd.f32 0.0, %v3222
    %3224 = vdwg.mxu0
    %v3226 = vsel %vm1762, %v2958, 0
    %v3229 = vsel %vm1762, %v2959, 0
    %3231 = vmatpush.msra.mxu0 0.0
    %3232 = vmatpush.msra.mxu0 0.0
    %3233 = vmatpush.msra.mxu0 0.0
    %3234 = vmatpush.msra.mxu0 0.0
    %3235 = vmatpush.msra.mxu0 0.0
    %3236 = vmatpush.msra.mxu0 0.0
    %3237 = vmatpush.msra.mxu0 0.0
    %3238 = vmatpush.msra.mxu0 0.0
    %3239 = vmatpush.msra.mxu0 0.0
    %3240 = vmatpush.msra.mxu0 0.0
    %3241 = vmatpush.msra.mxu0 0.0
    %3242 = vmatpush.msra.mxu0 0.0
    %3243 = vmatpush.msra.mxu0 0.0
    %3244 = vmatpush.msra.mxu0 0.0
    %3245 = vmatpush.msra.mxu0 %v932
    %3246 = vmatpush.msra.mxu0 %v929
    %3247 = vmatmul.f32.gmra.mxu0 %v3226
    %v3248 = vpop.f32.mrf.mxu0
    %v3249 = vadd.f32 0.0, %v3248
    %3250 = vmatmul.f32.gmra.mxu0 %v3229
    %v3251 = vpop.f32.mrf.mxu0
    %v3252 = vadd.f32 0.0, %v3251
    %3253 = vdwg.mxu0
    %v3255 = vsel %vm1762, %v2960, 0
    %v3258 = vsel %vm1762, %v2961, 0
    %3260 = vmatpush.msra.mxu0 0.0
    %3261 = vmatpush.msra.mxu0 0.0
    %3262 = vmatpush.msra.mxu0 0.0
    %3263 = vmatpush.msra.mxu0 0.0
    %3264 = vmatpush.msra.mxu0 0.0
    %3265 = vmatpush.msra.mxu0 0.0
    %3266 = vmatpush.msra.mxu0 0.0
    %3267 = vmatpush.msra.mxu0 0.0
    %3268 = vmatpush.msra.mxu0 0.0
    %3269 = vmatpush.msra.mxu0 0.0
    %3270 = vmatpush.msra.mxu0 0.0
    %3271 = vmatpush.msra.mxu0 0.0
    %3272 = vmatpush.msra.mxu0 0.0
    %3273 = vmatpush.msra.mxu0 0.0
    %3274 = vmatpush.msra.mxu0 %v938
    %3275 = vmatpush.msra.mxu0 %v935
    %3276 = vmatmul.f32.gmra.mxu0 %v3255
    %v3277 = vpop.f32.mrf.mxu0
    %v3278 = vadd.f32 0.0, %v3277
    %3279 = vmatmul.f32.gmra.mxu0 %v3258
    %v3280 = vpop.f32.mrf.mxu0
    %v3281 = vadd.f32 0.0, %v3280
    %3282 = vdwg.mxu0
    %v3284 = vsel %vm1762, %v2962, 0
    %v3287 = vsel %vm1762, %v2963, 0
    %3289 = vmatpush.msra.mxu0 0.0
    %3290 = vmatpush.msra.mxu0 0.0
    %3291 = vmatpush.msra.mxu0 0.0
    %3292 = vmatpush.msra.mxu0 0.0
    %3293 = vmatpush.msra.mxu0 0.0
    %3294 = vmatpush.msra.mxu0 0.0
    %3295 = vmatpush.msra.mxu0 0.0
    %3296 = vmatpush.msra.mxu0 0.0
    %3297 = vmatpush.msra.mxu0 0.0
    %3298 = vmatpush.msra.mxu0 0.0
    %3299 = vmatpush.msra.mxu0 0.0
    %3300 = vmatpush.msra.mxu0 0.0
    %3301 = vmatpush.msra.mxu0 0.0
    %3302 = vmatpush.msra.mxu0 0.0
    %3303 = vmatpush.msra.mxu0 %v944
    %3304 = vmatpush.msra.mxu0 %v941
    %3305 = vmatmul.f32.gmra.mxu0 %v3284
    %v3306 = vpop.f32.mrf.mxu0
    %v3307 = vadd.f32 0.0, %v3306
    %3308 = vmatmul.f32.gmra.mxu0 %v3287
    %v3309 = vpop.f32.mrf.mxu0
    %v3310 = vadd.f32 0.0, %v3309
    %3311 = vdwg.mxu0
    %v3313 = vsel %vm493, %v481, 0
    %v3316 = vsel %vm493, %v482, 0
    %v3319 = vsel %vm493, %v483, 0
    %v3322 = vsel %vm493, %v484, 0
    %3324 = vmatpush.msra.mxu0 0.0
    %3325 = vmatpush.msra.mxu0 0.0
    %3326 = vmatpush.msra.mxu0 0.0
    %3327 = vmatpush.msra.mxu0 0.0
    %3328 = vmatpush.msra.mxu0 0.0
    %3329 = vmatpush.msra.mxu0 0.0
    %3330 = vmatpush.msra.mxu0 0.0
    %3331 = vmatpush.msra.mxu0 0.0
    %3332 = vmatpush.msra.mxu0 0.0
    %3333 = vmatpush.msra.mxu0 0.0
    %3334 = vmatpush.msra.mxu0 0.0
    %3335 = vmatpush.msra.mxu0 0.0
    %3336 = vmatpush.msra.mxu0 %v3020
    %3337 = vmatpush.msra.mxu0 %v3017
    %3338 = vmatpush.msra.mxu0 %v2991
    %3339 = vmatpush.msra.mxu0 %v2988
    %3340 = vmatmul.f32.gmra.mxu0 %v3313
    %v3341 = vpop.f32.mrf.mxu0
    %v3342 = vadd.f32 0.0, %v3341
    %3343 = vmatmul.f32.gmra.mxu0 %v3316
    %v3344 = vpop.f32.mrf.mxu0
    %v3345 = vadd.f32 0.0, %v3344
    %3346 = vmatmul.f32.gmra.mxu0 %v3319
    %v3347 = vpop.f32.mrf.mxu0
    %v3348 = vadd.f32 0.0, %v3347
    %3349 = vmatmul.f32.gmra.mxu0 %v3322
    %v3350 = vpop.f32.mrf.mxu0
    %v3351 = vadd.f32 0.0, %v3350
    %3352 = vdwg.mxu0
    %3353 = vmatpush.msra.mxu0 0.0
    %3354 = vmatpush.msra.mxu0 0.0
    %3355 = vmatpush.msra.mxu0 0.0
    %3356 = vmatpush.msra.mxu0 0.0
    %3357 = vmatpush.msra.mxu0 0.0
    %3358 = vmatpush.msra.mxu0 0.0
    %3359 = vmatpush.msra.mxu0 0.0
    %3360 = vmatpush.msra.mxu0 0.0
    %3361 = vmatpush.msra.mxu0 0.0
    %3362 = vmatpush.msra.mxu0 0.0
    %3363 = vmatpush.msra.mxu0 0.0
    %3364 = vmatpush.msra.mxu0 0.0
    %3365 = vmatpush.msra.mxu0 %v3078
    %3366 = vmatpush.msra.mxu0 %v3075
    %3367 = vmatpush.msra.mxu0 %v3049
    %3368 = vmatpush.msra.mxu0 %v3046
    %3369 = vmatmul.f32.gmra.mxu0 %v3313
    %v3370 = vpop.f32.mrf.mxu0
    %v3371 = vadd.f32 0.0, %v3370
    %3372 = vmatmul.f32.gmra.mxu0 %v3316
    %v3373 = vpop.f32.mrf.mxu0
    %v3374 = vadd.f32 0.0, %v3373
    %3375 = vmatmul.f32.gmra.mxu0 %v3319
    %v3376 = vpop.f32.mrf.mxu0
    %v3377 = vadd.f32 0.0, %v3376
    %3378 = vmatmul.f32.gmra.mxu0 %v3322
    %v3379 = vpop.f32.mrf.mxu0
    %v3380 = vadd.f32 0.0, %v3379
    %3381 = vdwg.mxu0
    %3382 = vmatpush.msra.mxu0 0.0
    %3383 = vmatpush.msra.mxu0 0.0
    %3384 = vmatpush.msra.mxu0 0.0
    %3385 = vmatpush.msra.mxu0 0.0
    %3386 = vmatpush.msra.mxu0 0.0
    %3387 = vmatpush.msra.mxu0 0.0
    %3388 = vmatpush.msra.mxu0 0.0
    %3389 = vmatpush.msra.mxu0 0.0
    %3390 = vmatpush.msra.mxu0 0.0
    %3391 = vmatpush.msra.mxu0 0.0
    %3392 = vmatpush.msra.mxu0 0.0
    %3393 = vmatpush.msra.mxu0 0.0
    %3394 = vmatpush.msra.mxu0 %v3136
    %3395 = vmatpush.msra.mxu0 %v3133
    %3396 = vmatpush.msra.mxu0 %v3107
    %3397 = vmatpush.msra.mxu0 %v3104
    %3398 = vmatmul.f32.gmra.mxu0 %v3313
    %v3399 = vpop.f32.mrf.mxu0
    %v3400 = vadd.f32 0.0, %v3399
    %3401 = vmatmul.f32.gmra.mxu0 %v3316
    %v3402 = vpop.f32.mrf.mxu0
    %v3403 = vadd.f32 0.0, %v3402
    %3404 = vmatmul.f32.gmra.mxu0 %v3319
    %v3405 = vpop.f32.mrf.mxu0
    %v3406 = vadd.f32 0.0, %v3405
    %3407 = vmatmul.f32.gmra.mxu0 %v3322
    %v3408 = vpop.f32.mrf.mxu0
    %v3409 = vadd.f32 0.0, %v3408
    %3410 = vdwg.mxu0
    %3411 = vmatpush.msra.mxu0 0.0
    %3412 = vmatpush.msra.mxu0 0.0
    %3413 = vmatpush.msra.mxu0 0.0
    %3414 = vmatpush.msra.mxu0 0.0
    %3415 = vmatpush.msra.mxu0 0.0
    %3416 = vmatpush.msra.mxu0 0.0
    %3417 = vmatpush.msra.mxu0 0.0
    %3418 = vmatpush.msra.mxu0 0.0
    %3419 = vmatpush.msra.mxu0 0.0
    %3420 = vmatpush.msra.mxu0 0.0
    %3421 = vmatpush.msra.mxu0 0.0
    %3422 = vmatpush.msra.mxu0 0.0
    %3423 = vmatpush.msra.mxu0 %v3194
    %3424 = vmatpush.msra.mxu0 %v3191
    %3425 = vmatpush.msra.mxu0 %v3165
    %3426 = vmatpush.msra.mxu0 %v3162
    %3427 = vmatmul.f32.gmra.mxu0 %v3313
    %v3428 = vpop.f32.mrf.mxu0
    %v3429 = vadd.f32 0.0, %v3428
    %3430 = vmatmul.f32.gmra.mxu0 %v3316
    %v3431 = vpop.f32.mrf.mxu0
    %v3432 = vadd.f32 0.0, %v3431
    %3433 = vmatmul.f32.gmra.mxu0 %v3319
    %v3434 = vpop.f32.mrf.mxu0
    %v3435 = vadd.f32 0.0, %v3434
    %3436 = vmatmul.f32.gmra.mxu0 %v3322
    %v3437 = vpop.f32.mrf.mxu0
    %v3438 = vadd.f32 0.0, %v3437
    %3439 = vdwg.mxu0
    %3440 = vmatpush.msra.mxu0 0.0
    %3441 = vmatpush.msra.mxu0 0.0
    %3442 = vmatpush.msra.mxu0 0.0
    %3443 = vmatpush.msra.mxu0 0.0
    %3444 = vmatpush.msra.mxu0 0.0
    %3445 = vmatpush.msra.mxu0 0.0
    %3446 = vmatpush.msra.mxu0 0.0
    %3447 = vmatpush.msra.mxu0 0.0
    %3448 = vmatpush.msra.mxu0 0.0
    %3449 = vmatpush.msra.mxu0 0.0
    %3450 = vmatpush.msra.mxu0 0.0
    %3451 = vmatpush.msra.mxu0 0.0
    %3452 = vmatpush.msra.mxu0 %v3252
    %3453 = vmatpush.msra.mxu0 %v3249
    %3454 = vmatpush.msra.mxu0 %v3223
    %3455 = vmatpush.msra.mxu0 %v3220
    %3456 = vmatmul.f32.gmra.mxu0 %v3313
    %v3457 = vpop.f32.mrf.mxu0
    %v3458 = vadd.f32 0.0, %v3457
    %3459 = vmatmul.f32.gmra.mxu0 %v3316
    %v3460 = vpop.f32.mrf.mxu0
    %v3461 = vadd.f32 0.0, %v3460
    %3462 = vmatmul.f32.gmra.mxu0 %v3319
    %v3463 = vpop.f32.mrf.mxu0
    %v3464 = vadd.f32 0.0, %v3463
    %3465 = vmatmul.f32.gmra.mxu0 %v3322
    %v3466 = vpop.f32.mrf.mxu0
    %v3467 = vadd.f32 0.0, %v3466
    %3468 = vdwg.mxu0
    %3469 = vmatpush.msra.mxu0 0.0
    %3470 = vmatpush.msra.mxu0 0.0
    %3471 = vmatpush.msra.mxu0 0.0
    %3472 = vmatpush.msra.mxu0 0.0
    %3473 = vmatpush.msra.mxu0 0.0
    %3474 = vmatpush.msra.mxu0 0.0
    %3475 = vmatpush.msra.mxu0 0.0
    %3476 = vmatpush.msra.mxu0 0.0
    %3477 = vmatpush.msra.mxu0 0.0
    %3478 = vmatpush.msra.mxu0 0.0
    %3479 = vmatpush.msra.mxu0 0.0
    %3480 = vmatpush.msra.mxu0 0.0
    %3481 = vmatpush.msra.mxu0 %v3310
    %3482 = vmatpush.msra.mxu0 %v3307
    %3483 = vmatpush.msra.mxu0 %v3281
    %3484 = vmatpush.msra.mxu0 %v3278
    %3485 = vmatmul.f32.gmra.mxu0 %v3313
    %v3486 = vpop.f32.mrf.mxu0
    %v3487 = vadd.f32 0.0, %v3486
    %3488 = vmatmul.f32.gmra.mxu0 %v3316
    %v3489 = vpop.f32.mrf.mxu0
    %v3490 = vadd.f32 0.0, %v3489
    %3491 = vmatmul.f32.gmra.mxu0 %v3319
    %v3492 = vpop.f32.mrf.mxu0
    %v3493 = vadd.f32 0.0, %v3492
    %3494 = vmatmul.f32.gmra.mxu0 %v3322
    %v3495 = vpop.f32.mrf.mxu0
    %v3496 = vadd.f32 0.0, %v3495
    %3497 = vdwg.mxu0
    %v3498 = vld [vmem:[%s31] sm:$0xff]
    %v3499 = vld [vmem:[%s31 + $0x8] sm:$0xff]
    %v3500 = vld [vmem:[%s31 + $0x10] sm:$0xff]
    %v3501 = vld [vmem:[%s31 + $0x18] sm:$0xff]
    %v3502 = vld [vmem:[%s33] sm:$0x1]
    %v3504 = vperm.slane %v3502, 0
    %v3507 = vsel %vm493, %v3342, 0
    %v3510 = vsel %vm493, %v3345, 0
    %v3513 = vsel %vm493, %v3348, 0
    %v3516 = vsel %vm493, %v3351, 0
    %v3519 = vsel %vm493, %v3371, 0
    %v3522 = vsel %vm493, %v3374, 0
    %v3525 = vsel %vm493, %v3377, 0
    %v3528 = vsel %vm493, %v3380, 0
    %v3531 = vsel %vm493, %v3400, 0
    %v3534 = vsel %vm493, %v3403, 0
    %v3537 = vsel %vm493, %v3406, 0
    %v3540 = vsel %vm493, %v3409, 0
    %v3543 = vsel %vm493, %v3429, 0
    %v3546 = vsel %vm493, %v3432, 0
    %v3549 = vsel %vm493, %v3435, 0
    %v3552 = vsel %vm493, %v3438, 0
    %v3555 = vsel %vm493, %v3458, 0
    %v3558 = vsel %vm493, %v3461, 0
    %v3561 = vsel %vm493, %v3464, 0
    %v3564 = vsel %vm493, %v3467, 0
    %v3567 = vsel %vm493, %v3487, 0
    %v3570 = vsel %vm493, %v3490, 0
    %v3573 = vsel %vm493, %v3493, 0
    %v3576 = vsel %vm493, %v3496, 0
    %3578 = vmatpush.msra.mxu0 0.0
    %3579 = vmatpush.msra.mxu0 0.0
    %3580 = vmatpush.msra.mxu0 0.0
    %3581 = vmatpush.msra.mxu0 0.0
    %3582 = vmatpush.msra.mxu0 0.0
    %3583 = vmatpush.msra.mxu0 0.0
    %3584 = vmatpush.msra.mxu0 0.0
    %3585 = vmatpush.msra.mxu0 0.0
    %3586 = vmatpush.msra.mxu0 0.0
    %3587 = vmatpush.msra.mxu0 0.0
    %3588 = vmatpush.msra.mxu0 0.0
    %3589 = vmatpush.msra.mxu0 0.0
    %3590 = vmatpush.msra.mxu0 %v3501
    %3591 = vmatpush.msra.mxu0 %v3500
    %3592 = vmatpush.msra.mxu0 %v3499
    %3593 = vmatpush.msra.mxu0 %v3498
    %3594 = vmatmul.f32.gmra.mxu0 %v3507
    %v3595 = vpop.f32.mrf.mxu0
    %v3596 = vadd.f32 %v3504, %v3595
    %3597 = vmatmul.f32.gmra.mxu0 %v3510
    %v3598 = vpop.f32.mrf.mxu0
    %v3599 = vadd.f32 %v3504, %v3598
    %3600 = vmatmul.f32.gmra.mxu0 %v3513
    %v3601 = vpop.f32.mrf.mxu0
    %v3602 = vadd.f32 %v3504, %v3601
    %3603 = vmatmul.f32.gmra.mxu0 %v3516
    %v3604 = vpop.f32.mrf.mxu0
    %v3605 = vadd.f32 %v3504, %v3604
    %3606 = vmatmul.f32.gmra.mxu0 %v3519
    %v3607 = vpop.f32.mrf.mxu0
    %v3608 = vadd.f32 %v3504, %v3607
    %3609 = vmatmul.f32.gmra.mxu0 %v3522
    %v3610 = vpop.f32.mrf.mxu0
    %v3611 = vadd.f32 %v3504, %v3610
    %3612 = vmatmul.f32.gmra.mxu0 %v3525
    %v3613 = vpop.f32.mrf.mxu0
    %v3614 = vadd.f32 %v3504, %v3613
    %3615 = vmatmul.f32.gmra.mxu0 %v3528
    %v3616 = vpop.f32.mrf.mxu0
    %v3617 = vadd.f32 %v3504, %v3616
    %3618 = vmatmul.f32.gmra.mxu0 %v3531
    %v3619 = vpop.f32.mrf.mxu0
    %v3620 = vadd.f32 %v3504, %v3619
    %3621 = vmatmul.f32.gmra.mxu0 %v3534
    %v3622 = vpop.f32.mrf.mxu0
    %v3623 = vadd.f32 %v3504, %v3622
    %3624 = vmatmul.f32.gmra.mxu0 %v3537
    %v3625 = vpop.f32.mrf.mxu0
    %v3626 = vadd.f32 %v3504, %v3625
    %3627 = vmatmul.f32.gmra.mxu0 %v3540
    %v3628 = vpop.f32.mrf.mxu0
    %v3629 = vadd.f32 %v3504, %v3628
    %3630 = vmatmul.f32.gmra.mxu0 %v3543
    %v3631 = vpop.f32.mrf.mxu0
    %v3632 = vadd.f32 %v3504, %v3631
    %3633 = vmatmul.f32.gmra.mxu0 %v3546
    %v3634 = vpop.f32.mrf.mxu0
    %v3635 = vadd.f32 %v3504, %v3634
    %3636 = vmatmul.f32.gmra.mxu0 %v3549
    %v3637 = vpop.f32.mrf.mxu0
    %v3638 = vadd.f32 %v3504, %v3637
    %3639 = vmatmul.f32.gmra.mxu0 %v3552
    %v3640 = vpop.f32.mrf.mxu0
    %v3641 = vadd.f32 %v3504, %v3640
    %3642 = vmatmul.f32.gmra.mxu0 %v3555
    %v3643 = vpop.f32.mrf.mxu0
    %v3644 = vadd.f32 %v3504, %v3643
    %3645 = vmatmul.f32.gmra.mxu0 %v3558
    %v3646 = vpop.f32.mrf.mxu0
    %v3647 = vadd.f32 %v3504, %v3646
    %3648 = vmatmul.f32.gmra.mxu0 %v3561
    %v3649 = vpop.f32.mrf.mxu0
    %v3650 = vadd.f32 %v3504, %v3649
    %3651 = vmatmul.f32.gmra.mxu0 %v3564
    %v3652 = vpop.f32.mrf.mxu0
    %v3653 = vadd.f32 %v3504, %v3652
    %3654 = vmatmul.f32.gmra.mxu0 %v3567
    %v3655 = vpop.f32.mrf.mxu0
    %v3656 = vadd.f32 %v3504, %v3655
    %3657 = vmatmul.f32.gmra.mxu0 %v3570
    %v3658 = vpop.f32.mrf.mxu0
    %v3659 = vadd.f32 %v3504, %v3658
    %3660 = vmatmul.f32.gmra.mxu0 %v3573
    %v3661 = vpop.f32.mrf.mxu0
    %v3662 = vadd.f32 %v3504, %v3661
    %3663 = vmatmul.f32.gmra.mxu0 %v3576
    %v3664 = vpop.f32.mrf.mxu0
    %v3665 = vadd.f32 %v3504, %v3664
    %3666 = vdwg.mxu0
    %v3667 = vadd.f32 %v456, %v3596
    %v3668 = vadd.f32 %v457, %v3599
    %v3669 = vadd.f32 %v458, %v3602
    %v3670 = vadd.f32 %v459, %v3605
    %v3671 = vadd.f32 %v460, %v3608
    %v3672 = vadd.f32 %v461, %v3611
    %v3673 = vadd.f32 %v462, %v3614
    %v3674 = vadd.f32 %v463, %v3617
    %v3675 = vadd.f32 %v464, %v3620
    %v3676 = vadd.f32 %v465, %v3623
    %v3677 = vadd.f32 %v466, %v3626
    %v3678 = vadd.f32 %v467, %v3629
    %v3679 = vadd.f32 %v468, %v3632
    %v3680 = vadd.f32 %v469, %v3635
    %v3681 = vadd.f32 %v470, %v3638
    %v3682 = vadd.f32 %v471, %v3641
    %v3683 = vadd.f32 %v472, %v3644
    %v3684 = vadd.f32 %v473, %v3647
    %v3685 = vadd.f32 %v474, %v3650
    %v3686 = vadd.f32 %v475, %v3653
    %v3687 = vadd.f32 %v476, %v3656
    %v3688 = vadd.f32 %v477, %v3659
    %v3689 = vadd.f32 %v478, %v3662
    %v3690 = vadd.f32 %v479, %v3665
    %v3691 = vld [vmem:[%s35] sm:$0x1]
    %v3692 = vld [vmem:[%s37] sm:$0x1]
    %v3693 = vsel %vm493, %v3667, 0.0
    %3694 = vadd.xlane.f32.xlu0 %v3693
    %v3695 = vpop.xlane.xlu0 %3694
    %v3696 = vsel %vm493, %v3668, 0.0
    %3697 = vadd.xlane.f32.xlu0 %v3696
    %v3698 = vpop.xlane.xlu0 %3697
    %v3699 = vsel %vm493, %v3669, 0.0
    %3700 = vadd.xlane.f32.xlu0 %v3699
    %v3701 = vpop.xlane.xlu0 %3700
    %v3702 = vsel %vm493, %v3670, 0.0
    %3703 = vadd.xlane.f32.xlu0 %v3702
    %v3704 = vpop.xlane.xlu0 %3703
    %v3705 = vsel %vm493, %v3671, 0.0
    %3706 = vadd.xlane.f32.xlu0 %v3705
    %v3707 = vpop.xlane.xlu0 %3706
    %v3708 = vsel %vm493, %v3672, 0.0
    %3709 = vadd.xlane.f32.xlu0 %v3708
    %v3710 = vpop.xlane.xlu0 %3709
    %v3711 = vsel %vm493, %v3673, 0.0
    %3712 = vadd.xlane.f32.xlu0 %v3711
    %v3713 = vpop.xlane.xlu0 %3712
    %v3714 = vsel %vm493, %v3674, 0.0
    %3715 = vadd.xlane.f32.xlu0 %v3714
    %v3716 = vpop.xlane.xlu0 %3715
    %v3717 = vsel %vm493, %v3675, 0.0
    %3718 = vadd.xlane.f32.xlu0 %v3717
    %v3719 = vpop.xlane.xlu0 %3718
    %v3720 = vsel %vm493, %v3676, 0.0
    %3721 = vadd.xlane.f32.xlu0 %v3720
    %v3722 = vpop.xlane.xlu0 %3721
    %v3723 = vsel %vm493, %v3677, 0.0
    %3724 = vadd.xlane.f32.xlu0 %v3723
    %v3725 = vpop.xlane.xlu0 %3724
    %v3726 = vsel %vm493, %v3678, 0.0
    %3727 = vadd.xlane.f32.xlu0 %v3726
    %v3728 = vpop.xlane.xlu0 %3727
    %v3729 = vsel %vm493, %v3679, 0.0
    %3730 = vadd.xlane.f32.xlu0 %v3729
    %v3731 = vpop.xlane.xlu0 %3730
    %v3732 = vsel %vm493, %v3680, 0.0
    %3733 = vadd.xlane.f32.xlu0 %v3732
    %v3734 = vpop.xlane.xlu0 %3733
    %v3735 = vsel %vm493, %v3681, 0.0
    %3736 = vadd.xlane.f32.xlu0 %v3735
    %v3737 = vpop.xlane.xlu0 %3736
    %v3738 = vsel %vm493, %v3682, 0.0
    %3739 = vadd.xlane.f32.xlu0 %v3738
    %v3740 = vpop.xlane.xlu0 %3739
    %v3741 = vsel %vm493, %v3683, 0.0
    %3742 = vadd.xlane.f32.xlu0 %v3741
    %v3743 = vpop.xlane.xlu0 %3742
    %v3744 = vsel %vm493, %v3684, 0.0
    %3745 = vadd.xlane.f32.xlu0 %v3744
    %v3746 = vpop.xlane.xlu0 %3745
    %v3747 = vsel %vm493, %v3685, 0.0
    %3748 = vadd.xlane.f32.xlu0 %v3747
    %v3749 = vpop.xlane.xlu0 %3748
    %v3750 = vsel %vm493, %v3686, 0.0
    %3751 = vadd.xlane.f32.xlu0 %v3750
    %v3752 = vpop.xlane.xlu0 %3751
    %v3753 = vsel %vm493, %v3687, 0.0
    %3754 = vadd.xlane.f32.xlu0 %v3753
    %v3755 = vpop.xlane.xlu0 %3754
    %v3756 = vsel %vm493, %v3688, 0.0
    %3757 = vadd.xlane.f32.xlu0 %v3756
    %v3758 = vpop.xlane.xlu0 %3757
    %v3759 = vsel %vm493, %v3689, 0.0
    %3760 = vadd.xlane.f32.xlu0 %v3759
    %v3761 = vpop.xlane.xlu0 %3760
    %v3762 = vsel %vm493, %v3690, 0.0
    %3763 = vadd.xlane.f32.xlu0 %v3762
    %v3764 = vpop.xlane.xlu0 %3763
    %v3765 = vrcp.pop 32.0
    %v3766 = vmul.f32 32.0, %v3765
    %v3767 = vsub.f32 1.0, %v3766
    %v3768 = vmul.f32 %v3765, %v3767
    %v3769 = vadd.f32 %v3765, %v3768
    %vm3770 = vweird.f32 %v3765
    %v3771 = vsel %vm3770, %v3765, %v3769
    %v3772 = vmul.f32 %v3695, %v3771
    %v3773 = vmul.f32 %v3698, %v3771
    %v3774 = vmul.f32 %v3701, %v3771
    %v3775 = vmul.f32 %v3704, %v3771
    %v3776 = vmul.f32 %v3707, %v3771
    %v3777 = vmul.f32 %v3710, %v3771
    %v3778 = vmul.f32 %v3713, %v3771
    %v3779 = vmul.f32 %v3716, %v3771
    %v3780 = vmul.f32 %v3719, %v3771
    %v3781 = vmul.f32 %v3722, %v3771
    %v3782 = vmul.f32 %v3725, %v3771
    %v3783 = vmul.f32 %v3728, %v3771
    %v3784 = vmul.f32 %v3731, %v3771
    %v3785 = vmul.f32 %v3734, %v3771
    %v3786 = vmul.f32 %v3737, %v3771
    %v3787 = vmul.f32 %v3740, %v3771
    %v3788 = vmul.f32 %v3743, %v3771
    %v3789 = vmul.f32 %v3746, %v3771
    %v3790 = vmul.f32 %v3749, %v3771
    %v3791 = vmul.f32 %v3752, %v3771
    %v3792 = vmul.f32 %v3755, %v3771
    %v3793 = vmul.f32 %v3758, %v3771
    %v3794 = vmul.f32 %v3761, %v3771
    %v3795 = vmul.f32 %v3764, %v3771
    %v3796 = vsub.f32 %v3667, %v3772
    %v3797 = vsub.f32 %v3668, %v3773
    %v3798 = vsub.f32 %v3669, %v3774
    %v3799 = vsub.f32 %v3670, %v3775
    %v3800 = vsub.f32 %v3671, %v3776
    %v3801 = vsub.f32 %v3672, %v3777
    %v3802 = vsub.f32 %v3673, %v3778
    %v3803 = vsub.f32 %v3674, %v3779
    %v3804 = vsub.f32 %v3675, %v3780
    %v3805 = vsub.f32 %v3676, %v3781
    %v3806 = vsub.f32 %v3677, %v3782
    %v3807 = vsub.f32 %v3678, %v3783
    %v3808 = vsub.f32 %v3679, %v3784
    %v3809 = vsub.f32 %v3680, %v3785
    %v3810 = vsub.f32 %v3681, %v3786
    %v3811 = vsub.f32 %v3682, %v3787
    %v3812 = vsub.f32 %v3683, %v3788
    %v3813 = vsub.f32 %v3684, %v3789
    %v3814 = vsub.f32 %v3685, %v3790
    %v3815 = vsub.f32 %v3686, %v3791
    %v3816 = vsub.f32 %v3687, %v3792
    %v3817 = vsub.f32 %v3688, %v3793
    %v3818 = vsub.f32 %v3689, %v3794
    %v3819 = vsub.f32 %v3690, %v3795
    %v3820 = vmul.f32 %v3796, %v3796
    %v3821 = vmul.f32 %v3797, %v3797
    %v3822 = vmul.f32 %v3798, %v3798
    %v3823 = vmul.f32 %v3799, %v3799
    %v3824 = vmul.f32 %v3800, %v3800
    %v3825 = vmul.f32 %v3801, %v3801
    %v3826 = vmul.f32 %v3802, %v3802
    %v3827 = vmul.f32 %v3803, %v3803
    %v3828 = vmul.f32 %v3804, %v3804
    %v3829 = vmul.f32 %v3805, %v3805
    %v3830 = vmul.f32 %v3806, %v3806
    %v3831 = vmul.f32 %v3807, %v3807
    %v3832 = vmul.f32 %v3808, %v3808
    %v3833 = vmul.f32 %v3809, %v3809
    %v3834 = vmul.f32 %v3810, %v3810
    %v3835 = vmul.f32 %v3811, %v3811
    %v3836 = vmul.f32 %v3812, %v3812
    %v3837 = vmul.f32 %v3813, %v3813
    %v3838 = vmul.f32 %v3814, %v3814
    %v3839 = vmul.f32 %v3815, %v3815
    %v3840 = vmul.f32 %v3816, %v3816
    %v3841 = vmul.f32 %v3817, %v3817
    %v3842 = vmul.f32 %v3818, %v3818
    %v3843 = vmul.f32 %v3819, %v3819
    %v3844 = vsel %vm493, %v3820, 0.0
    %3845 = vadd.xlane.f32.xlu0 %v3844
    %v3846 = vpop.xlane.xlu0 %3845
    %v3847 = vsel %vm493, %v3821, 0.0
    %3848 = vadd.xlane.f32.xlu0 %v3847
    %v3849 = vpop.xlane.xlu0 %3848
    %v3850 = vsel %vm493, %v3822, 0.0
    %3851 = vadd.xlane.f32.xlu0 %v3850
    %v3852 = vpop.xlane.xlu0 %3851
    %v3853 = vsel %vm493, %v3823, 0.0
    %3854 = vadd.xlane.f32.xlu0 %v3853
    %v3855 = vpop.xlane.xlu0 %3854
    %v3856 = vsel %vm493, %v3824, 0.0
    %3857 = vadd.xlane.f32.xlu0 %v3856
    %v3858 = vpop.xlane.xlu0 %3857
    %v3859 = vsel %vm493, %v3825, 0.0
    %3860 = vadd.xlane.f32.xlu0 %v3859
    %v3861 = vpop.xlane.xlu0 %3860
    %v3862 = vsel %vm493, %v3826, 0.0
    %3863 = vadd.xlane.f32.xlu0 %v3862
    %v3864 = vpop.xlane.xlu0 %3863
    %v3865 = vsel %vm493, %v3827, 0.0
    %3866 = vadd.xlane.f32.xlu0 %v3865
    %v3867 = vpop.xlane.xlu0 %3866
    %v3868 = vsel %vm493, %v3828, 0.0
    %3869 = vadd.xlane.f32.xlu0 %v3868
    %v3870 = vpop.xlane.xlu0 %3869
    %v3871 = vsel %vm493, %v3829, 0.0
    %3872 = vadd.xlane.f32.xlu0 %v3871
    %v3873 = vpop.xlane.xlu0 %3872
    %v3874 = vsel %vm493, %v3830, 0.0
    %3875 = vadd.xlane.f32.xlu0 %v3874
    %v3876 = vpop.xlane.xlu0 %3875
    %v3877 = vsel %vm493, %v3831, 0.0
    %3878 = vadd.xlane.f32.xlu0 %v3877
    %v3879 = vpop.xlane.xlu0 %3878
    %v3880 = vsel %vm493, %v3832, 0.0
    %3881 = vadd.xlane.f32.xlu0 %v3880
    %v3882 = vpop.xlane.xlu0 %3881
    %v3883 = vsel %vm493, %v3833, 0.0
    %3884 = vadd.xlane.f32.xlu0 %v3883
    %v3885 = vpop.xlane.xlu0 %3884
    %v3886 = vsel %vm493, %v3834, 0.0
    %3887 = vadd.xlane.f32.xlu0 %v3886
    %v3888 = vpop.xlane.xlu0 %3887
    %v3889 = vsel %vm493, %v3835, 0.0
    %3890 = vadd.xlane.f32.xlu0 %v3889
    %v3891 = vpop.xlane.xlu0 %3890
    %v3892 = vsel %vm493, %v3836, 0.0
    %3893 = vadd.xlane.f32.xlu0 %v3892
    %v3894 = vpop.xlane.xlu0 %3893
    %v3895 = vsel %vm493, %v3837, 0.0
    %3896 = vadd.xlane.f32.xlu0 %v3895
    %v3897 = vpop.xlane.xlu0 %3896
    %v3898 = vsel %vm493, %v3838, 0.0
    %3899 = vadd.xlane.f32.xlu0 %v3898
    %v3900 = vpop.xlane.xlu0 %3899
    %v3901 = vsel %vm493, %v3839, 0.0
    %3902 = vadd.xlane.f32.xlu0 %v3901
    %v3903 = vpop.xlane.xlu0 %3902
    %v3904 = vsel %vm493, %v3840, 0.0
    %3905 = vadd.xlane.f32.xlu0 %v3904
    %v3906 = vpop.xlane.xlu0 %3905
    %v3907 = vsel %vm493, %v3841, 0.0
    %3908 = vadd.xlane.f32.xlu0 %v3907
    %v3909 = vpop.xlane.xlu0 %3908
    %v3910 = vsel %vm493, %v3842, 0.0
    %3911 = vadd.xlane.f32.xlu0 %v3910
    %v3912 = vpop.xlane.xlu0 %3911
    %v3913 = vsel %vm493, %v3843, 0.0
    %3914 = vadd.xlane.f32.xlu0 %v3913
    %v3915 = vpop.xlane.xlu0 %3914
    %v3916 = vmul.f32 %v3846, %v3771
    %v3917 = vmul.f32 %v3849, %v3771
    %v3918 = vmul.f32 %v3852, %v3771
    %v3919 = vmul.f32 %v3855, %v3771
    %v3920 = vmul.f32 %v3858, %v3771
    %v3921 = vmul.f32 %v3861, %v3771
    %v3922 = vmul.f32 %v3864, %v3771
    %v3923 = vmul.f32 %v3867, %v3771
    %v3924 = vmul.f32 %v3870, %v3771
    %v3925 = vmul.f32 %v3873, %v3771
    %v3926 = vmul.f32 %v3876, %v3771
    %v3927 = vmul.f32 %v3879, %v3771
    %v3928 = vmul.f32 %v3882, %v3771
    %v3929 = vmul.f32 %v3885, %v3771
    %v3930 = vmul.f32 %v3888, %v3771
    %v3931 = vmul.f32 %v3891, %v3771
    %v3932 = vmul.f32 %v3894, %v3771
    %v3933 = vmul.f32 %v3897, %v3771
    %v3934 = vmul.f32 %v3900, %v3771
    %v3935 = vmul.f32 %v3903, %v3771
    %v3936 = vmul.f32 %v3906, %v3771
    %v3937 = vmul.f32 %v3909, %v3771
    %v3938 = vmul.f32 %v3912, %v3771
    %v3939 = vmul.f32 %v3915, %v3771
    %v3940 = vadd.f32 %v3916, 1e-05
    %v3941 = vadd.f32 %v3917, 1e-05
    %v3942 = vadd.f32 %v3918, 1e-05
    %v3943 = vadd.f32 %v3919, 1e-05
    %v3944 = vadd.f32 %v3920, 1e-05
    %v3945 = vadd.f32 %v3921, 1e-05
    %v3946 = vadd.f32 %v3922, 1e-05
    %v3947 = vadd.f32 %v3923, 1e-05
    %v3948 = vadd.f32 %v3924, 1e-05
    %v3949 = vadd.f32 %v3925, 1e-05
    %v3950 = vadd.f32 %v3926, 1e-05
    %v3951 = vadd.f32 %v3927, 1e-05
    %v3952 = vadd.f32 %v3928, 1e-05
    %v3953 = vadd.f32 %v3929, 1e-05
    %v3954 = vadd.f32 %v3930, 1e-05
    %v3955 = vadd.f32 %v3931, 1e-05
    %v3956 = vadd.f32 %v3932, 1e-05
    %v3957 = vadd.f32 %v3933, 1e-05
    %v3958 = vadd.f32 %v3934, 1e-05
    %v3959 = vadd.f32 %v3935, 1e-05
    %v3960 = vadd.f32 %v3936, 1e-05
    %v3961 = vadd.f32 %v3937, 1e-05
    %v3962 = vadd.f32 %v3938, 1e-05
    %v3963 = vadd.f32 %v3939, 1e-05
    %v3964 = vrsqrt.pop %v3940
    %v3965 = vmul.f32 %v3964, %v3940
    %v3966 = vmul.f32 %v3965, %v3964
    %v3967 = vmul.f32 0.5, %v3966
    %v3968 = vsub.f32 1.5, %v3967
    %v3969 = vmul.f32 %v3964, %v3968
    %vm3970 = vweird.f32 %v3940
    %vm3971 = vweird.f32 %v3964
    %vm3972 = vmor %vm3970, %vm3971
    %v3973 = vsel %vm3972, %v3964, %v3969
    %v3974 = vrsqrt.pop %v3941
    %v3975 = vmul.f32 %v3974, %v3941
    %v3976 = vmul.f32 %v3975, %v3974
    %v3977 = vmul.f32 0.5, %v3976
    %v3978 = vsub.f32 1.5, %v3977
    %v3979 = vmul.f32 %v3974, %v3978
    %vm3980 = vweird.f32 %v3941
    %vm3981 = vweird.f32 %v3974
    %vm3982 = vmor %vm3980, %vm3981
    %v3983 = vsel %vm3982, %v3974, %v3979
    %v3984 = vrsqrt.pop %v3942
    %v3985 = vmul.f32 %v3984, %v3942
    %v3986 = vmul.f32 %v3985, %v3984
    %v3987 = vmul.f32 0.5, %v3986
    %v3988 = vsub.f32 1.5, %v3987
    %v3989 = vmul.f32 %v3984, %v3988
    %vm3990 = vweird.f32 %v3942
    %vm3991 = vweird.f32 %v3984
    %vm3992 = vmor %vm3990, %vm3991
    %v3993 = vsel %vm3992, %v3984, %v3989
    %v3994 = vrsqrt.pop %v3943
    %v3995 = vmul.f32 %v3994, %v3943
    %v3996 = vmul.f32 %v3995, %v3994
    %v3997 = vmul.f32 0.5, %v3996
    %v3998 = vsub.f32 1.5, %v3997
    %v3999 = vmul.f32 %v3994, %v3998
    %vm4000 = vweird.f32 %v3943
    %vm4001 = vweird.f32 %v3994
    %vm4002 = vmor %vm4000, %vm4001
    %v4003 = vsel %vm4002, %v3994, %v3999
    %v4004 = vrsqrt.pop %v3944
    %v4005 = vmul.f32 %v4004, %v3944
    %v4006 = vmul.f32 %v4005, %v4004
    %v4007 = vmul.f32 0.5, %v4006
    %v4008 = vsub.f32 1.5, %v4007
    %v4009 = vmul.f32 %v4004, %v4008
    %vm4010 = vweird.f32 %v3944
    %vm4011 = vweird.f32 %v4004
    %vm4012 = vmor %vm4010, %vm4011
    %v4013 = vsel %vm4012, %v4004, %v4009
    %v4014 = vrsqrt.pop %v3945
    %v4015 = vmul.f32 %v4014, %v3945
    %v4016 = vmul.f32 %v4015, %v4014
    %v4017 = vmul.f32 0.5, %v4016
    %v4018 = vsub.f32 1.5, %v4017
    %v4019 = vmul.f32 %v4014, %v4018
    %vm4020 = vweird.f32 %v3945
    %vm4021 = vweird.f32 %v4014
    %vm4022 = vmor %vm4020, %vm4021
    %v4023 = vsel %vm4022, %v4014, %v4019
    %v4024 = vrsqrt.pop %v3946
    %v4025 = vmul.f32 %v4024, %v3946
    %v4026 = vmul.f32 %v4025, %v4024
    %v4027 = vmul.f32 0.5, %v4026
    %v4028 = vsub.f32 1.5, %v4027
    %v4029 = vmul.f32 %v4024, %v4028
    %vm4030 = vweird.f32 %v3946
    %vm4031 = vweird.f32 %v4024
    %vm4032 = vmor %vm4030, %vm4031
    %v4033 = vsel %vm4032, %v4024, %v4029
    %v4034 = vrsqrt.pop %v3947
    %v4035 = vmul.f32 %v4034, %v3947
    %v4036 = vmul.f32 %v4035, %v4034
    %v4037 = vmul.f32 0.5, %v4036
    %v4038 = vsub.f32 1.5, %v4037
    %v4039 = vmul.f32 %v4034, %v4038
    %vm4040 = vweird.f32 %v3947
    %vm4041 = vweird.f32 %v4034
    %vm4042 = vmor %vm4040, %vm4041
    %v4043 = vsel %vm4042, %v4034, %v4039
    %v4044 = vrsqrt.pop %v3948
    %v4045 = vmul.f32 %v4044, %v3948
    %v4046 = vmul.f32 %v4045, %v4044
    %v4047 = vmul.f32 0.5, %v4046
    %v4048 = vsub.f32 1.5, %v4047
    %v4049 = vmul.f32 %v4044, %v4048
    %vm4050 = vweird.f32 %v3948
    %vm4051 = vweird.f32 %v4044
    %vm4052 = vmor %vm4050, %vm4051
    %v4053 = vsel %vm4052, %v4044, %v4049
    %v4054 = vrsqrt.pop %v3949
    %v4055 = vmul.f32 %v4054, %v3949
    %v4056 = vmul.f32 %v4055, %v4054
    %v4057 = vmul.f32 0.5, %v4056
    %v4058 = vsub.f32 1.5, %v4057
    %v4059 = vmul.f32 %v4054, %v4058
    %vm4060 = vweird.f32 %v3949
    %vm4061 = vweird.f32 %v4054
    %vm4062 = vmor %vm4060, %vm4061
    %v4063 = vsel %vm4062, %v4054, %v4059
    %v4064 = vrsqrt.pop %v3950
    %v4065 = vmul.f32 %v4064, %v3950
    %v4066 = vmul.f32 %v4065, %v4064
    %v4067 = vmul.f32 0.5, %v4066
    %v4068 = vsub.f32 1.5, %v4067
    %v4069 = vmul.f32 %v4064, %v4068
    %vm4070 = vweird.f32 %v3950
    %vm4071 = vweird.f32 %v4064
    %vm4072 = vmor %vm4070, %vm4071
    %v4073 = vsel %vm4072, %v4064, %v4069
    %v4074 = vrsqrt.pop %v3951
    %v4075 = vmul.f32 %v4074, %v3951
    %v4076 = vmul.f32 %v4075, %v4074
    %v4077 = vmul.f32 0.5, %v4076
    %v4078 = vsub.f32 1.5, %v4077
    %v4079 = vmul.f32 %v4074, %v4078
    %vm4080 = vweird.f32 %v3951
    %vm4081 = vweird.f32 %v4074
    %vm4082 = vmor %vm4080, %vm4081
    %v4083 = vsel %vm4082, %v4074, %v4079
    %v4084 = vrsqrt.pop %v3952
    %v4085 = vmul.f32 %v4084, %v3952
    %v4086 = vmul.f32 %v4085, %v4084
    %v4087 = vmul.f32 0.5, %v4086
    %v4088 = vsub.f32 1.5, %v4087
    %v4089 = vmul.f32 %v4084, %v4088
    %vm4090 = vweird.f32 %v3952
    %vm4091 = vweird.f32 %v4084
    %vm4092 = vmor %vm4090, %vm4091
    %v4093 = vsel %vm4092, %v4084, %v4089
    %v4094 = vrsqrt.pop %v3953
    %v4095 = vmul.f32 %v4094, %v3953
    %v4096 = vmul.f32 %v4095, %v4094
    %v4097 = vmul.f32 0.5, %v4096
    %v4098 = vsub.f32 1.5, %v4097
    %v4099 = vmul.f32 %v4094, %v4098
    %vm4100 = vweird.f32 %v3953
    %vm4101 = vweird.f32 %v4094
    %vm4102 = vmor %vm4100, %vm4101
    %v4103 = vsel %vm4102, %v4094, %v4099
    %v4104 = vrsqrt.pop %v3954
    %v4105 = vmul.f32 %v4104, %v3954
    %v4106 = vmul.f32 %v4105, %v4104
    %v4107 = vmul.f32 0.5, %v4106
    %v4108 = vsub.f32 1.5, %v4107
    %v4109 = vmul.f32 %v4104, %v4108
    %vm4110 = vweird.f32 %v3954
    %vm4111 = vweird.f32 %v4104
    %vm4112 = vmor %vm4110, %vm4111
    %v4113 = vsel %vm4112, %v4104, %v4109
    %v4114 = vrsqrt.pop %v3955
    %v4115 = vmul.f32 %v4114, %v3955
    %v4116 = vmul.f32 %v4115, %v4114
    %v4117 = vmul.f32 0.5, %v4116
    %v4118 = vsub.f32 1.5, %v4117
    %v4119 = vmul.f32 %v4114, %v4118
    %vm4120 = vweird.f32 %v3955
    %vm4121 = vweird.f32 %v4114
    %vm4122 = vmor %vm4120, %vm4121
    %v4123 = vsel %vm4122, %v4114, %v4119
    %v4124 = vrsqrt.pop %v3956
    %v4125 = vmul.f32 %v4124, %v3956
    %v4126 = vmul.f32 %v4125, %v4124
    %v4127 = vmul.f32 0.5, %v4126
    %v4128 = vsub.f32 1.5, %v4127
    %v4129 = vmul.f32 %v4124, %v4128
    %vm4130 = vweird.f32 %v3956
    %vm4131 = vweird.f32 %v4124
    %vm4132 = vmor %vm4130, %vm4131
    %v4133 = vsel %vm4132, %v4124, %v4129
    %v4134 = vrsqrt.pop %v3957
    %v4135 = vmul.f32 %v4134, %v3957
    %v4136 = vmul.f32 %v4135, %v4134
    %v4137 = vmul.f32 0.5, %v4136
    %v4138 = vsub.f32 1.5, %v4137
    %v4139 = vmul.f32 %v4134, %v4138
    %vm4140 = vweird.f32 %v3957
    %vm4141 = vweird.f32 %v4134
    %vm4142 = vmor %vm4140, %vm4141
    %v4143 = vsel %vm4142, %v4134, %v4139
    %v4144 = vrsqrt.pop %v3958
    %v4145 = vmul.f32 %v4144, %v3958
    %v4146 = vmul.f32 %v4145, %v4144
    %v4147 = vmul.f32 0.5, %v4146
    %v4148 = vsub.f32 1.5, %v4147
    %v4149 = vmul.f32 %v4144, %v4148
    %vm4150 = vweird.f32 %v3958
    %vm4151 = vweird.f32 %v4144
    %vm4152 = vmor %vm4150, %vm4151
    %v4153 = vsel %vm4152, %v4144, %v4149
    %v4154 = vrsqrt.pop %v3959
    %v4155 = vmul.f32 %v4154, %v3959
    %v4156 = vmul.f32 %v4155, %v4154
    %v4157 = vmul.f32 0.5, %v4156
    %v4158 = vsub.f32 1.5, %v4157
    %v4159 = vmul.f32 %v4154, %v4158
    %vm4160 = vweird.f32 %v3959
    %vm4161 = vweird.f32 %v4154
    %vm4162 = vmor %vm4160, %vm4161
    %v4163 = vsel %vm4162, %v4154, %v4159
    %v4164 = vrsqrt.pop %v3960
    %v4165 = vmul.f32 %v4164, %v3960
    %v4166 = vmul.f32 %v4165, %v4164
    %v4167 = vmul.f32 0.5, %v4166
    %v4168 = vsub.f32 1.5, %v4167
    %v4169 = vmul.f32 %v4164, %v4168
    %vm4170 = vweird.f32 %v3960
    %vm4171 = vweird.f32 %v4164
    %vm4172 = vmor %vm4170, %vm4171
    %v4173 = vsel %vm4172, %v4164, %v4169
    %v4174 = vrsqrt.pop %v3961
    %v4175 = vmul.f32 %v4174, %v3961
    %v4176 = vmul.f32 %v4175, %v4174
    %v4177 = vmul.f32 0.5, %v4176
    %v4178 = vsub.f32 1.5, %v4177
    %v4179 = vmul.f32 %v4174, %v4178
    %vm4180 = vweird.f32 %v3961
    %vm4181 = vweird.f32 %v4174
    %vm4182 = vmor %vm4180, %vm4181
    %v4183 = vsel %vm4182, %v4174, %v4179
    %v4184 = vrsqrt.pop %v3962
    %v4185 = vmul.f32 %v4184, %v3962
    %v4186 = vmul.f32 %v4185, %v4184
    %v4187 = vmul.f32 0.5, %v4186
    %v4188 = vsub.f32 1.5, %v4187
    %v4189 = vmul.f32 %v4184, %v4188
    %vm4190 = vweird.f32 %v3962
    %vm4191 = vweird.f32 %v4184
    %vm4192 = vmor %vm4190, %vm4191
    %v4193 = vsel %vm4192, %v4184, %v4189
    %v4194 = vrsqrt.pop %v3963
    %v4195 = vmul.f32 %v4194, %v3963
    %v4196 = vmul.f32 %v4195, %v4194
    %v4197 = vmul.f32 0.5, %v4196
    %v4198 = vsub.f32 1.5, %v4197
    %v4199 = vmul.f32 %v4194, %v4198
    %vm4200 = vweird.f32 %v3963
    %vm4201 = vweird.f32 %v4194
    %vm4202 = vmor %vm4200, %vm4201
    %v4203 = vsel %vm4202, %v4194, %v4199
    %v4204 = vmul.f32 %v3796, %v3973
    %v4205 = vmul.f32 %v3797, %v3983
    %v4206 = vmul.f32 %v3798, %v3993
    %v4207 = vmul.f32 %v3799, %v4003
    %v4208 = vmul.f32 %v3800, %v4013
    %v4209 = vmul.f32 %v3801, %v4023
    %v4210 = vmul.f32 %v3802, %v4033
    %v4211 = vmul.f32 %v3803, %v4043
    %v4212 = vmul.f32 %v3804, %v4053
    %v4213 = vmul.f32 %v3805, %v4063
    %v4214 = vmul.f32 %v3806, %v4073
    %v4215 = vmul.f32 %v3807, %v4083
    %v4216 = vmul.f32 %v3808, %v4093
    %v4217 = vmul.f32 %v3809, %v4103
    %v4218 = vmul.f32 %v3810, %v4113
    %v4219 = vmul.f32 %v3811, %v4123
    %v4220 = vmul.f32 %v3812, %v4133
    %v4221 = vmul.f32 %v3813, %v4143
    %v4222 = vmul.f32 %v3814, %v4153
    %v4223 = vmul.f32 %v3815, %v4163
    %v4224 = vmul.f32 %v3816, %v4173
    %v4225 = vmul.f32 %v3817, %v4183
    %v4226 = vmul.f32 %v3818, %v4193
    %v4227 = vmul.f32 %v3819, %v4203
    %v4229 = vperm.slane %v3691, 0
    %v4231 = vmul.f32 %v4204, %v4229
    %v4232 = vmul.f32 %v4205, %v4229
    %v4233 = vmul.f32 %v4206, %v4229
    %v4234 = vmul.f32 %v4207, %v4229
    %v4235 = vmul.f32 %v4208, %v4229
    %v4236 = vmul.f32 %v4209, %v4229
    %v4237 = vmul.f32 %v4210, %v4229
    %v4238 = vmul.f32 %v4211, %v4229
    %v4239 = vmul.f32 %v4212, %v4229
    %v4240 = vmul.f32 %v4213, %v4229
    %v4241 = vmul.f32 %v4214, %v4229
    %v4242 = vmul.f32 %v4215, %v4229
    %v4243 = vmul.f32 %v4216, %v4229
    %v4244 = vmul.f32 %v4217, %v4229
    %v4245 = vmul.f32 %v4218, %v4229
    %v4246 = vmul.f32 %v4219, %v4229
    %v4247 = vmul.f32 %v4220, %v4229
    %v4248 = vmul.f32 %v4221, %v4229
    %v4249 = vmul.f32 %v4222, %v4229
    %v4250 = vmul.f32 %v4223, %v4229
    %v4251 = vmul.f32 %v4224, %v4229
    %v4252 = vmul.f32 %v4225, %v4229
    %v4253 = vmul.f32 %v4226, %v4229
    %v4254 = vmul.f32 %v4227, %v4229
    %v4256 = vperm.slane %v3692, 0
    %v4258 = vadd.f32 %v4231, %v4256
    %v4259 = vadd.f32 %v4232, %v4256
    %v4260 = vadd.f32 %v4233, %v4256
    %v4261 = vadd.f32 %v4234, %v4256
    %v4262 = vadd.f32 %v4235, %v4256
    %v4263 = vadd.f32 %v4236, %v4256
    %v4264 = vadd.f32 %v4237, %v4256
    %v4265 = vadd.f32 %v4238, %v4256
    %v4266 = vadd.f32 %v4239, %v4256
    %v4267 = vadd.f32 %v4240, %v4256
    %v4268 = vadd.f32 %v4241, %v4256
    %v4269 = vadd.f32 %v4242, %v4256
    %v4270 = vadd.f32 %v4243, %v4256
    %v4271 = vadd.f32 %v4244, %v4256
    %v4272 = vadd.f32 %v4245, %v4256
    %v4273 = vadd.f32 %v4246, %v4256
    %v4274 = vadd.f32 %v4247, %v4256
    %v4275 = vadd.f32 %v4248, %v4256
    %v4276 = vadd.f32 %v4249, %v4256
    %v4277 = vadd.f32 %v4250, %v4256
    %v4278 = vadd.f32 %v4251, %v4256
    %v4279 = vadd.f32 %v4252, %v4256
    %v4280 = vadd.f32 %v4253, %v4256
    %v4281 = vadd.f32 %v4254, %v4256
    %v4282 = vld [vmem:[%s39] sm:$0xff]
    %v4283 = vld [vmem:[%s39 + $0x8] sm:$0xff]
    %v4284 = vld [vmem:[%s39 + $0x10] sm:$0xff]
    %v4285 = vld [vmem:[%s39 + $0x18] sm:$0xff]
    %v4286 = vld [vmem:[%s41] sm:$0x1]
    %v4288 = vperm.slane %v4286, 0
    %v4291 = vsel %vm493, %v4258, 0
    %v4294 = vsel %vm493, %v4259, 0
    %v4297 = vsel %vm493, %v4260, 0
    %v4300 = vsel %vm493, %v4261, 0
    %v4303 = vsel %vm493, %v4262, 0
    %v4306 = vsel %vm493, %v4263, 0
    %v4309 = vsel %vm493, %v4264, 0
    %v4312 = vsel %vm493, %v4265, 0
    %v4315 = vsel %vm493, %v4266, 0
    %v4318 = vsel %vm493, %v4267, 0
    %v4321 = vsel %vm493, %v4268, 0
    %v4324 = vsel %vm493, %v4269, 0
    %v4327 = vsel %vm493, %v4270, 0
    %v4330 = vsel %vm493, %v4271, 0
    %v4333 = vsel %vm493, %v4272, 0
    %v4336 = vsel %vm493, %v4273, 0
    %v4339 = vsel %vm493, %v4274, 0
    %v4342 = vsel %vm493, %v4275, 0
    %v4345 = vsel %vm493, %v4276, 0
    %v4348 = vsel %vm493, %v4277, 0
    %v4351 = vsel %vm493, %v4278, 0
    %v4354 = vsel %vm493, %v4279, 0
    %v4357 = vsel %vm493, %v4280, 0
    %v4360 = vsel %vm493, %v4281, 0
    %4362 = vmatpush.msra.mxu0 0.0
    %4363 = vmatpush.msra.mxu0 0.0
    %4364 = vmatpush.msra.mxu0 0.0
    %4365 = vmatpush.msra.mxu0 0.0
    %4366 = vmatpush.msra.mxu0 0.0
    %4367 = vmatpush.msra.mxu0 0.0
    %4368 = vmatpush.msra.mxu0 0.0
    %4369 = vmatpush.msra.mxu0 0.0
    %4370 = vmatpush.msra.mxu0 0.0
    %4371 = vmatpush.msra.mxu0 0.0
    %4372 = vmatpush.msra.mxu0 0.0
    %4373 = vmatpush.msra.mxu0 0.0
    %4374 = vmatpush.msra.mxu0 %v4285
    %4375 = vmatpush.msra.mxu0 %v4284
    %4376 = vmatpush.msra.mxu0 %v4283
    %4377 = vmatpush.msra.mxu0 %v4282
    %4378 = vmatmul.f32.gmra.mxu0 %v4291
    %v4379 = vpop.f32.mrf.mxu0
    %v4380 = vadd.f32 %v4288, %v4379
    %4381 = vmatmul.f32.gmra.mxu0 %v4294
    %v4382 = vpop.f32.mrf.mxu0
    %v4383 = vadd.f32 %v4288, %v4382
    %4384 = vmatmul.f32.gmra.mxu0 %v4297
    %v4385 = vpop.f32.mrf.mxu0
    %v4386 = vadd.f32 %v4288, %v4385
    %4387 = vmatmul.f32.gmra.mxu0 %v4300
    %v4388 = vpop.f32.mrf.mxu0
    %v4389 = vadd.f32 %v4288, %v4388
    %4390 = vmatmul.f32.gmra.mxu0 %v4303
    %v4391 = vpop.f32.mrf.mxu0
    %v4392 = vadd.f32 %v4288, %v4391
    %4393 = vmatmul.f32.gmra.mxu0 %v4306
    %v4394 = vpop.f32.mrf.mxu0
    %v4395 = vadd.f32 %v4288, %v4394
    %4396 = vmatmul.f32.gmra.mxu0 %v4309
    %v4397 = vpop.f32.mrf.mxu0
    %v4398 = vadd.f32 %v4288, %v4397
    %4399 = vmatmul.f32.gmra.mxu0 %v4312
    %v4400 = vpop.f32.mrf.mxu0
    %v4401 = vadd.f32 %v4288, %v4400
    %4402 = vmatmul.f32.gmra.mxu0 %v4315
    %v4403 = vpop.f32.mrf.mxu0
    %v4404 = vadd.f32 %v4288, %v4403
    %4405 = vmatmul.f32.gmra.mxu0 %v4318
    %v4406 = vpop.f32.mrf.mxu0
    %v4407 = vadd.f32 %v4288, %v4406
    %4408 = vmatmul.f32.gmra.mxu0 %v4321
    %v4409 = vpop.f32.mrf.mxu0
    %v4410 = vadd.f32 %v4288, %v4409
    %4411 = vmatmul.f32.gmra.mxu0 %v4324
    %v4412 = vpop.f32.mrf.mxu0
    %v4413 = vadd.f32 %v4288, %v4412
    %4414 = vmatmul.f32.gmra.mxu0 %v4327
    %v4415 = vpop.f32.mrf.mxu0
    %v4416 = vadd.f32 %v4288, %v4415
    %4417 = vmatmul.f32.gmra.mxu0 %v4330
    %v4418 = vpop.f32.mrf.mxu0
    %v4419 = vadd.f32 %v4288, %v4418
    %4420 = vmatmul.f32.gmra.mxu0 %v4333
    %v4421 = vpop.f32.mrf.mxu0
    %v4422 = vadd.f32 %v4288, %v4421
    %4423 = vmatmul.f32.gmra.mxu0 %v4336
    %v4424 = vpop.f32.mrf.mxu0
    %v4425 = vadd.f32 %v4288, %v4424
    %4426 = vmatmul.f32.gmra.mxu0 %v4339
    %v4427 = vpop.f32.mrf.mxu0
    %v4428 = vadd.f32 %v4288, %v4427
    %4429 = vmatmul.f32.gmra.mxu0 %v4342
    %v4430 = vpop.f32.mrf.mxu0
    %v4431 = vadd.f32 %v4288, %v4430
    %4432 = vmatmul.f32.gmra.mxu0 %v4345
    %v4433 = vpop.f32.mrf.mxu0
    %v4434 = vadd.f32 %v4288, %v4433
    %4435 = vmatmul.f32.gmra.mxu0 %v4348
    %v4436 = vpop.f32.mrf.mxu0
    %v4437 = vadd.f32 %v4288, %v4436
    %4438 = vmatmul.f32.gmra.mxu0 %v4351
    %v4439 = vpop.f32.mrf.mxu0
    %v4440 = vadd.f32 %v4288, %v4439
    %4441 = vmatmul.f32.gmra.mxu0 %v4354
    %v4442 = vpop.f32.mrf.mxu0
    %v4443 = vadd.f32 %v4288, %v4442
    %4444 = vmatmul.f32.gmra.mxu0 %v4357
    %v4445 = vpop.f32.mrf.mxu0
    %v4446 = vadd.f32 %v4288, %v4445
    %4447 = vmatmul.f32.gmra.mxu0 %v4360
    %v4448 = vpop.f32.mrf.mxu0
    %v4449 = vadd.f32 %v4288, %v4448
    %4450 = vdwg.mxu0
    %v4451 = vmax.f32 %v4380, 0.0
    %v4452 = vmax.f32 %v4383, 0.0
    %v4453 = vmax.f32 %v4386, 0.0
    %v4454 = vmax.f32 %v4389, 0.0
    %v4455 = vmax.f32 %v4392, 0.0
    %v4456 = vmax.f32 %v4395, 0.0
    %v4457 = vmax.f32 %v4398, 0.0
    %v4458 = vmax.f32 %v4401, 0.0
    %v4459 = vmax.f32 %v4404, 0.0
    %v4460 = vmax.f32 %v4407, 0.0
    %v4461 = vmax.f32 %v4410, 0.0
    %v4462 = vmax.f32 %v4413, 0.0
    %v4463 = vmax.f32 %v4416, 0.0
    %v4464 = vmax.f32 %v4419, 0.0
    %v4465 = vmax.f32 %v4422, 0.0
    %v4466 = vmax.f32 %v4425, 0.0
    %v4467 = vmax.f32 %v4428, 0.0
    %v4468 = vmax.f32 %v4431, 0.0
    %v4469 = vmax.f32 %v4434, 0.0
    %v4470 = vmax.f32 %v4437, 0.0
    %v4471 = vmax.f32 %v4440, 0.0
    %v4472 = vmax.f32 %v4443, 0.0
    %v4473 = vmax.f32 %v4446, 0.0
    %v4474 = vmax.f32 %v4449, 0.0
    %v4475 = vld [vmem:[%s43] sm:$0xff]
    %v4476 = vld [vmem:[%s43 + $0x8] sm:$0xff]
    %v4477 = vld [vmem:[%s43 + $0x10] sm:$0xff]
    %v4478 = vld [vmem:[%s43 + $0x18] sm:$0xff]
    %v4479 = vld [vmem:[%s45] sm:$0x1]
    %v4481 = vperm.slane %v4479, 0
    %v4484 = vsel %vm493, %v4451, 0
    %v4487 = vsel %vm493, %v4452, 0
    %v4490 = vsel %vm493, %v4453, 0
    %v4493 = vsel %vm493, %v4454, 0
    %v4496 = vsel %vm493, %v4455, 0
    %v4499 = vsel %vm493, %v4456, 0
    %v4502 = vsel %vm493, %v4457, 0
    %v4505 = vsel %vm493, %v4458, 0
    %v4508 = vsel %vm493, %v4459, 0
    %v4511 = vsel %vm493, %v4460, 0
    %v4514 = vsel %vm493, %v4461, 0
    %v4517 = vsel %vm493, %v4462, 0
    %v4520 = vsel %vm493, %v4463, 0
    %v4523 = vsel %vm493, %v4464, 0
    %v4526 = vsel %vm493, %v4465, 0
    %v4529 = vsel %vm493, %v4466, 0
    %v4532 = vsel %vm493, %v4467, 0
    %v4535 = vsel %vm493, %v4468, 0
    %v4538 = vsel %vm493, %v4469, 0
    %v4541 = vsel %vm493, %v4470, 0
    %v4544 = vsel %vm493, %v4471, 0
    %v4547 = vsel %vm493, %v4472, 0
    %v4550 = vsel %vm493, %v4473, 0
    %v4553 = vsel %vm493, %v4474, 0
    %4555 = vmatpush.msra.mxu0 0.0
    %4556 = vmatpush.msra.mxu0 0.0
    %4557 = vmatpush.msra.mxu0 0.0
    %4558 = vmatpush.msra.mxu0 0.0
    %4559 = vmatpush.msra.mxu0 0.0
    %4560 = vmatpush.msra.mxu0 0.0
    %4561 = vmatpush.msra.mxu0 0.0
    %4562 = vmatpush.msra.mxu0 0.0
    %4563 = vmatpush.msra.mxu0 0.0
    %4564 = vmatpush.msra.mxu0 0.0
    %4565 = vmatpush.msra.mxu0 0.0
    %4566 = vmatpush.msra.mxu0 0.0
    %4567 = vmatpush.msra.mxu0 %v4478
    %4568 = vmatpush.msra.mxu0 %v4477
    %4569 = vmatpush.msra.mxu0 %v4476
    %4570 = vmatpush.msra.mxu0 %v4475
    %4571 = vmatmul.f32.gmra.mxu0 %v4484
    %v4572 = vpop.f32.mrf.mxu0
    %v4573 = vadd.f32 %v4481, %v4572
    %4574 = vmatmul.f32.gmra.mxu0 %v4487
    %v4575 = vpop.f32.mrf.mxu0
    %v4576 = vadd.f32 %v4481, %v4575
    %4577 = vmatmul.f32.gmra.mxu0 %v4490
    %v4578 = vpop.f32.mrf.mxu0
    %v4579 = vadd.f32 %v4481, %v4578
    %4580 = vmatmul.f32.gmra.mxu0 %v4493
    %v4581 = vpop.f32.mrf.mxu0
    %v4582 = vadd.f32 %v4481, %v4581
    %4583 = vmatmul.f32.gmra.mxu0 %v4496
    %v4584 = vpop.f32.mrf.mxu0
    %v4585 = vadd.f32 %v4481, %v4584
    %4586 = vmatmul.f32.gmra.mxu0 %v4499
    %v4587 = vpop.f32.mrf.mxu0
    %v4588 = vadd.f32 %v4481, %v4587
    %4589 = vmatmul.f32.gmra.mxu0 %v4502
    %v4590 = vpop.f32.mrf.mxu0
    %v4591 = vadd.f32 %v4481, %v4590
    %4592 = vmatmul.f32.gmra.mxu0 %v4505
    %v4593 = vpop.f32.mrf.mxu0
    %v4594 = vadd.f32 %v4481, %v4593
    %4595 = vmatmul.f32.gmra.mxu0 %v4508
    %v4596 = vpop.f32.mrf.mxu0
    %v4597 = vadd.f32 %v4481, %v4596
    %4598 = vmatmul.f32.gmra.mxu0 %v4511
    %v4599 = vpop.f32.mrf.mxu0
    %v4600 = vadd.f32 %v4481, %v4599
    %4601 = vmatmul.f32.gmra.mxu0 %v4514
    %v4602 = vpop.f32.mrf.mxu0
    %v4603 = vadd.f32 %v4481, %v4602
    %4604 = vmatmul.f32.gmra.mxu0 %v4517
    %v4605 = vpop.f32.mrf.mxu0
    %v4606 = vadd.f32 %v4481, %v4605
    %4607 = vmatmul.f32.gmra.mxu0 %v4520
    %v4608 = vpop.f32.mrf.mxu0
    %v4609 = vadd.f32 %v4481, %v4608
    %4610 = vmatmul.f32.gmra.mxu0 %v4523
    %v4611 = vpop.f32.mrf.mxu0
    %v4612 = vadd.f32 %v4481, %v4611
    %4613 = vmatmul.f32.gmra.mxu0 %v4526
    %v4614 = vpop.f32.mrf.mxu0
    %v4615 = vadd.f32 %v4481, %v4614
    %4616 = vmatmul.f32.gmra.mxu0 %v4529
    %v4617 = vpop.f32.mrf.mxu0
    %v4618 = vadd.f32 %v4481, %v4617
    %4619 = vmatmul.f32.gmra.mxu0 %v4532
    %v4620 = vpop.f32.mrf.mxu0
    %v4621 = vadd.f32 %v4481, %v4620
    %4622 = vmatmul.f32.gmra.mxu0 %v4535
    %v4623 = vpop.f32.mrf.mxu0
    %v4624 = vadd.f32 %v4481, %v4623
    %4625 = vmatmul.f32.gmra.mxu0 %v4538
    %v4626 = vpop.f32.mrf.mxu0
    %v4627 = vadd.f32 %v4481, %v4626
    %4628 = vmatmul.f32.gmra.mxu0 %v4541
    %v4629 = vpop.f32.mrf.mxu0
    %v4630 = vadd.f32 %v4481, %v4629
    %4631 = vmatmul.f32.gmra.mxu0 %v4544
    %v4632 = vpop.f32.mrf.mxu0
    %v4633 = vadd.f32 %v4481, %v4632
    %4634 = vmatmul.f32.gmra.mxu0 %v4547
    %v4635 = vpop.f32.mrf.mxu0
    %v4636 = vadd.f32 %v4481, %v4635
    %4637 = vmatmul.f32.gmra.mxu0 %v4550
    %v4638 = vpop.f32.mrf.mxu0
    %v4639 = vadd.f32 %v4481, %v4638
    %4640 = vmatmul.f32.gmra.mxu0 %v4553
    %v4641 = vpop.f32.mrf.mxu0
    %v4642 = vadd.f32 %v4481, %v4641
    %4643 = vdwg.mxu0
    %v4644 = vadd.f32 %v4258, %v4573
    %v4645 = vadd.f32 %v4259, %v4576
    %v4646 = vadd.f32 %v4260, %v4579
    %v4647 = vadd.f32 %v4261, %v4582
    %v4648 = vadd.f32 %v4262, %v4585
    %v4649 = vadd.f32 %v4263, %v4588
    %v4650 = vadd.f32 %v4264, %v4591
    %v4651 = vadd.f32 %v4265, %v4594
    %v4652 = vadd.f32 %v4266, %v4597
    %v4653 = vadd.f32 %v4267, %v4600
    %v4654 = vadd.f32 %v4268, %v4603
    %v4655 = vadd.f32 %v4269, %v4606
    %v4656 = vadd.f32 %v4270, %v4609
    %v4657 = vadd.f32 %v4271, %v4612
    %v4658 = vadd.f32 %v4272, %v4615
    %v4659 = vadd.f32 %v4273, %v4618
    %v4660 = vadd.f32 %v4274, %v4621
    %v4661 = vadd.f32 %v4275, %v4624
    %v4662 = vadd.f32 %v4276, %v4627
    %v4663 = vadd.f32 %v4277, %v4630
    %v4664 = vadd.f32 %v4278, %v4633
    %v4665 = vadd.f32 %v4279, %v4636
    %v4666 = vadd.f32 %v4280, %v4639
    %v4667 = vadd.f32 %v4281, %v4642
    %v4668 = vld [vmem:[%s47] sm:$0x1]
    %v4669 = vld [vmem:[%s49] sm:$0x1]
    %v4670 = vsel %vm493, %v4644, 0.0
    %4671 = vadd.xlane.f32.xlu0 %v4670
    %v4672 = vpop.xlane.xlu0 %4671
    %v4673 = vsel %vm493, %v4645, 0.0
    %4674 = vadd.xlane.f32.xlu0 %v4673
    %v4675 = vpop.xlane.xlu0 %4674
    %v4676 = vsel %vm493, %v4646, 0.0
    %4677 = vadd.xlane.f32.xlu0 %v4676
    %v4678 = vpop.xlane.xlu0 %4677
    %v4679 = vsel %vm493, %v4647, 0.0
    %4680 = vadd.xlane.f32.xlu0 %v4679
    %v4681 = vpop.xlane.xlu0 %4680
    %v4682 = vsel %vm493, %v4648, 0.0
    %4683 = vadd.xlane.f32.xlu0 %v4682
    %v4684 = vpop.xlane.xlu0 %4683
    %v4685 = vsel %vm493, %v4649, 0.0
    %4686 = vadd.xlane.f32.xlu0 %v4685
    %v4687 = vpop.xlane.xlu0 %4686
    %v4688 = vsel %vm493, %v4650, 0.0
    %4689 = vadd.xlane.f32.xlu0 %v4688
    %v4690 = vpop.xlane.xlu0 %4689
    %v4691 = vsel %vm493, %v4651, 0.0
    %4692 = vadd.xlane.f32.xlu0 %v4691
    %v4693 = vpop.xlane.xlu0 %4692
    %v4694 = vsel %vm493, %v4652, 0.0
    %4695 = vadd.xlane.f32.xlu0 %v4694
    %v4696 = vpop.xlane.xlu0 %4695
    %v4697 = vsel %vm493, %v4653, 0.0
    %4698 = vadd.xlane.f32.xlu0 %v4697
    %v4699 = vpop.xlane.xlu0 %4698
    %v4700 = vsel %vm493, %v4654, 0.0
    %4701 = vadd.xlane.f32.xlu0 %v4700
    %v4702 = vpop.xlane.xlu0 %4701
    %v4703 = vsel %vm493, %v4655, 0.0
    %4704 = vadd.xlane.f32.xlu0 %v4703
    %v4705 = vpop.xlane.xlu0 %4704
    %v4706 = vsel %vm493, %v4656, 0.0
    %4707 = vadd.xlane.f32.xlu0 %v4706
    %v4708 = vpop.xlane.xlu0 %4707
    %v4709 = vsel %vm493, %v4657, 0.0
    %4710 = vadd.xlane.f32.xlu0 %v4709
    %v4711 = vpop.xlane.xlu0 %4710
    %v4712 = vsel %vm493, %v4658, 0.0
    %4713 = vadd.xlane.f32.xlu0 %v4712
    %v4714 = vpop.xlane.xlu0 %4713
    %v4715 = vsel %vm493, %v4659, 0.0
    %4716 = vadd.xlane.f32.xlu0 %v4715
    %v4717 = vpop.xlane.xlu0 %4716
    %v4718 = vsel %vm493, %v4660, 0.0
    %4719 = vadd.xlane.f32.xlu0 %v4718
    %v4720 = vpop.xlane.xlu0 %4719
    %v4721 = vsel %vm493, %v4661, 0.0
    %4722 = vadd.xlane.f32.xlu0 %v4721
    %v4723 = vpop.xlane.xlu0 %4722
    %v4724 = vsel %vm493, %v4662, 0.0
    %4725 = vadd.xlane.f32.xlu0 %v4724
    %v4726 = vpop.xlane.xlu0 %4725
    %v4727 = vsel %vm493, %v4663, 0.0
    %4728 = vadd.xlane.f32.xlu0 %v4727
    %v4729 = vpop.xlane.xlu0 %4728
    %v4730 = vsel %vm493, %v4664, 0.0
    %4731 = vadd.xlane.f32.xlu0 %v4730
    %v4732 = vpop.xlane.xlu0 %4731
    %v4733 = vsel %vm493, %v4665, 0.0
    %4734 = vadd.xlane.f32.xlu0 %v4733
    %v4735 = vpop.xlane.xlu0 %4734
    %v4736 = vsel %vm493, %v4666, 0.0
    %4737 = vadd.xlane.f32.xlu0 %v4736
    %v4738 = vpop.xlane.xlu0 %4737
    %v4739 = vsel %vm493, %v4667, 0.0
    %4740 = vadd.xlane.f32.xlu0 %v4739
    %v4741 = vpop.xlane.xlu0 %4740
    %v4742 = vmul.f32 %v4672, %v3771
    %v4743 = vmul.f32 %v4675, %v3771
    %v4744 = vmul.f32 %v4678, %v3771
    %v4745 = vmul.f32 %v4681, %v3771
    %v4746 = vmul.f32 %v4684, %v3771
    %v4747 = vmul.f32 %v4687, %v3771
    %v4748 = vmul.f32 %v4690, %v3771
    %v4749 = vmul.f32 %v4693, %v3771
    %v4750 = vmul.f32 %v4696, %v3771
    %v4751 = vmul.f32 %v4699, %v3771
    %v4752 = vmul.f32 %v4702, %v3771
    %v4753 = vmul.f32 %v4705, %v3771
    %v4754 = vmul.f32 %v4708, %v3771
    %v4755 = vmul.f32 %v4711, %v3771
    %v4756 = vmul.f32 %v4714, %v3771
    %v4757 = vmul.f32 %v4717, %v3771
    %v4758 = vmul.f32 %v4720, %v3771
    %v4759 = vmul.f32 %v4723, %v3771
    %v4760 = vmul.f32 %v4726, %v3771
    %v4761 = vmul.f32 %v4729, %v3771
    %v4762 = vmul.f32 %v4732, %v3771
    %v4763 = vmul.f32 %v4735, %v3771
    %v4764 = vmul.f32 %v4738, %v3771
    %v4765 = vmul.f32 %v4741, %v3771
    %v4766 = vsub.f32 %v4644, %v4742
    %v4767 = vsub.f32 %v4645, %v4743
    %v4768 = vsub.f32 %v4646, %v4744
    %v4769 = vsub.f32 %v4647, %v4745
    %v4770 = vsub.f32 %v4648, %v4746
    %v4771 = vsub.f32 %v4649, %v4747
    %v4772 = vsub.f32 %v4650, %v4748
    %v4773 = vsub.f32 %v4651, %v4749
    %v4774 = vsub.f32 %v4652, %v4750
    %v4775 = vsub.f32 %v4653, %v4751
    %v4776 = vsub.f32 %v4654, %v4752
    %v4777 = vsub.f32 %v4655, %v4753
    %v4778 = vsub.f32 %v4656, %v4754
    %v4779 = vsub.f32 %v4657, %v4755
    %v4780 = vsub.f32 %v4658, %v4756
    %v4781 = vsub.f32 %v4659, %v4757
    %v4782 = vsub.f32 %v4660, %v4758
    %v4783 = vsub.f32 %v4661, %v4759
    %v4784 = vsub.f32 %v4662, %v4760
    %v4785 = vsub.f32 %v4663, %v4761
    %v4786 = vsub.f32 %v4664, %v4762
    %v4787 = vsub.f32 %v4665, %v4763
    %v4788 = vsub.f32 %v4666, %v4764
    %v4789 = vsub.f32 %v4667, %v4765
    %v4790 = vmul.f32 %v4766, %v4766
    %v4791 = vmul.f32 %v4767, %v4767
    %v4792 = vmul.f32 %v4768, %v4768
    %v4793 = vmul.f32 %v4769, %v4769
    %v4794 = vmul.f32 %v4770, %v4770
    %v4795 = vmul.f32 %v4771, %v4771
    %v4796 = vmul.f32 %v4772, %v4772
    %v4797 = vmul.f32 %v4773, %v4773
    %v4798 = vmul.f32 %v4774, %v4774
    %v4799 = vmul.f32 %v4775, %v4775
    %v4800 = vmul.f32 %v4776, %v4776
    %v4801 = vmul.f32 %v4777, %v4777
    %v4802 = vmul.f32 %v4778, %v4778
    %v4803 = vmul.f32 %v4779, %v4779
    %v4804 = vmul.f32 %v4780, %v4780
    %v4805 = vmul.f32 %v4781, %v4781
    %v4806 = vmul.f32 %v4782, %v4782
    %v4807 = vmul.f32 %v4783, %v4783
    %v4808 = vmul.f32 %v4784, %v4784
    %v4809 = vmul.f32 %v4785, %v4785
    %v4810 = vmul.f32 %v4786, %v4786
    %v4811 = vmul.f32 %v4787, %v4787
    %v4812 = vmul.f32 %v4788, %v4788
    %v4813 = vmul.f32 %v4789, %v4789
    %v4814 = vsel %vm493, %v4790, 0.0
    %4815 = vadd.xlane.f32.xlu0 %v4814
    %v4816 = vpop.xlane.xlu0 %4815
    %v4817 = vsel %vm493, %v4791, 0.0
    %4818 = vadd.xlane.f32.xlu0 %v4817
    %v4819 = vpop.xlane.xlu0 %4818
    %v4820 = vsel %vm493, %v4792, 0.0
    %4821 = vadd.xlane.f32.xlu0 %v4820
    %v4822 = vpop.xlane.xlu0 %4821
    %v4823 = vsel %vm493, %v4793, 0.0
    %4824 = vadd.xlane.f32.xlu0 %v4823
    %v4825 = vpop.xlane.xlu0 %4824
    %v4826 = vsel %vm493, %v4794, 0.0
    %4827 = vadd.xlane.f32.xlu0 %v4826
    %v4828 = vpop.xlane.xlu0 %4827
    %v4829 = vsel %vm493, %v4795, 0.0
    %4830 = vadd.xlane.f32.xlu0 %v4829
    %v4831 = vpop.xlane.xlu0 %4830
    %v4832 = vsel %vm493, %v4796, 0.0
    %4833 = vadd.xlane.f32.xlu0 %v4832
    %v4834 = vpop.xlane.xlu0 %4833
    %v4835 = vsel %vm493, %v4797, 0.0
    %4836 = vadd.xlane.f32.xlu0 %v4835
    %v4837 = vpop.xlane.xlu0 %4836
    %v4838 = vsel %vm493, %v4798, 0.0
    %4839 = vadd.xlane.f32.xlu0 %v4838
    %v4840 = vpop.xlane.xlu0 %4839
    %v4841 = vsel %vm493, %v4799, 0.0
    %4842 = vadd.xlane.f32.xlu0 %v4841
    %v4843 = vpop.xlane.xlu0 %4842
    %v4844 = vsel %vm493, %v4800, 0.0
    %4845 = vadd.xlane.f32.xlu0 %v4844
    %v4846 = vpop.xlane.xlu0 %4845
    %v4847 = vsel %vm493, %v4801, 0.0
    %4848 = vadd.xlane.f32.xlu0 %v4847
    %v4849 = vpop.xlane.xlu0 %4848
    %v4850 = vsel %vm493, %v4802, 0.0
    %4851 = vadd.xlane.f32.xlu0 %v4850
    %v4852 = vpop.xlane.xlu0 %4851
    %v4853 = vsel %vm493, %v4803, 0.0
    %4854 = vadd.xlane.f32.xlu0 %v4853
    %v4855 = vpop.xlane.xlu0 %4854
    %v4856 = vsel %vm493, %v4804, 0.0
    %4857 = vadd.xlane.f32.xlu0 %v4856
    %v4858 = vpop.xlane.xlu0 %4857
    %v4859 = vsel %vm493, %v4805, 0.0
    %4860 = vadd.xlane.f32.xlu0 %v4859
    %v4861 = vpop.xlane.xlu0 %4860
    %v4862 = vsel %vm493, %v4806, 0.0
    %4863 = vadd.xlane.f32.xlu0 %v4862
    %v4864 = vpop.xlane.xlu0 %4863
    %v4865 = vsel %vm493, %v4807, 0.0
    %4866 = vadd.xlane.f32.xlu0 %v4865
    %v4867 = vpop.xlane.xlu0 %4866
    %v4868 = vsel %vm493, %v4808, 0.0
    %4869 = vadd.xlane.f32.xlu0 %v4868
    %v4870 = vpop.xlane.xlu0 %4869
    %v4871 = vsel %vm493, %v4809, 0.0
    %4872 = vadd.xlane.f32.xlu0 %v4871
    %v4873 = vpop.xlane.xlu0 %4872
    %v4874 = vsel %vm493, %v4810, 0.0
    %4875 = vadd.xlane.f32.xlu0 %v4874
    %v4876 = vpop.xlane.xlu0 %4875
    %v4877 = vsel %vm493, %v4811, 0.0
    %4878 = vadd.xlane.f32.xlu0 %v4877
    %v4879 = vpop.xlane.xlu0 %4878
    %v4880 = vsel %vm493, %v4812, 0.0
    %4881 = vadd.xlane.f32.xlu0 %v4880
    %v4882 = vpop.xlane.xlu0 %4881
    %v4883 = vsel %vm493, %v4813, 0.0
    %4884 = vadd.xlane.f32.xlu0 %v4883
    %v4885 = vpop.xlane.xlu0 %4884
    %v4886 = vmul.f32 %v4816, %v3771
    %v4887 = vmul.f32 %v4819, %v3771
    %v4888 = vmul.f32 %v4822, %v3771
    %v4889 = vmul.f32 %v4825, %v3771
    %v4890 = vmul.f32 %v4828, %v3771
    %v4891 = vmul.f32 %v4831, %v3771
    %v4892 = vmul.f32 %v4834, %v3771
    %v4893 = vmul.f32 %v4837, %v3771
    %v4894 = vmul.f32 %v4840, %v3771
    %v4895 = vmul.f32 %v4843, %v3771
    %v4896 = vmul.f32 %v4846, %v3771
    %v4897 = vmul.f32 %v4849, %v3771
    %v4898 = vmul.f32 %v4852, %v3771
    %v4899 = vmul.f32 %v4855, %v3771
    %v4900 = vmul.f32 %v4858, %v3771
    %v4901 = vmul.f32 %v4861, %v3771
    %v4902 = vmul.f32 %v4864, %v3771
    %v4903 = vmul.f32 %v4867, %v3771
    %v4904 = vmul.f32 %v4870, %v3771
    %v4905 = vmul.f32 %v4873, %v3771
    %v4906 = vmul.f32 %v4876, %v3771
    %v4907 = vmul.f32 %v4879, %v3771
    %v4908 = vmul.f32 %v4882, %v3771
    %v4909 = vmul.f32 %v4885, %v3771
    %v4910 = vadd.f32 %v4886, 1e-05
    %v4911 = vadd.f32 %v4887, 1e-05
    %v4912 = vadd.f32 %v4888, 1e-05
    %v4913 = vadd.f32 %v4889, 1e-05
    %v4914 = vadd.f32 %v4890, 1e-05
    %v4915 = vadd.f32 %v4891, 1e-05
    %v4916 = vadd.f32 %v4892, 1e-05
    %v4917 = vadd.f32 %v4893, 1e-05
    %v4918 = vadd.f32 %v4894, 1e-05
    %v4919 = vadd.f32 %v4895, 1e-05
    %v4920 = vadd.f32 %v4896, 1e-05
    %v4921 = vadd.f32 %v4897, 1e-05
    %v4922 = vadd.f32 %v4898, 1e-05
    %v4923 = vadd.f32 %v4899, 1e-05
    %v4924 = vadd.f32 %v4900, 1e-05
    %v4925 = vadd.f32 %v4901, 1e-05
    %v4926 = vadd.f32 %v4902, 1e-05
    %v4927 = vadd.f32 %v4903, 1e-05
    %v4928 = vadd.f32 %v4904, 1e-05
    %v4929 = vadd.f32 %v4905, 1e-05
    %v4930 = vadd.f32 %v4906, 1e-05
    %v4931 = vadd.f32 %v4907, 1e-05
    %v4932 = vadd.f32 %v4908, 1e-05
    %v4933 = vadd.f32 %v4909, 1e-05
    %v4934 = vrsqrt.pop %v4910
    %v4935 = vmul.f32 %v4934, %v4910
    %v4936 = vmul.f32 %v4935, %v4934
    %v4937 = vmul.f32 0.5, %v4936
    %v4938 = vsub.f32 1.5, %v4937
    %v4939 = vmul.f32 %v4934, %v4938
    %vm4940 = vweird.f32 %v4910
    %vm4941 = vweird.f32 %v4934
    %vm4942 = vmor %vm4940, %vm4941
    %v4943 = vsel %vm4942, %v4934, %v4939
    %v4944 = vrsqrt.pop %v4911
    %v4945 = vmul.f32 %v4944, %v4911
    %v4946 = vmul.f32 %v4945, %v4944
    %v4947 = vmul.f32 0.5, %v4946
    %v4948 = vsub.f32 1.5, %v4947
    %v4949 = vmul.f32 %v4944, %v4948
    %vm4950 = vweird.f32 %v4911
    %vm4951 = vweird.f32 %v4944
    %vm4952 = vmor %vm4950, %vm4951
    %v4953 = vsel %vm4952, %v4944, %v4949
    %v4954 = vrsqrt.pop %v4912
    %v4955 = vmul.f32 %v4954, %v4912
    %v4956 = vmul.f32 %v4955, %v4954
    %v4957 = vmul.f32 0.5, %v4956
    %v4958 = vsub.f32 1.5, %v4957
    %v4959 = vmul.f32 %v4954, %v4958
    %vm4960 = vweird.f32 %v4912
    %vm4961 = vweird.f32 %v4954
    %vm4962 = vmor %vm4960, %vm4961
    %v4963 = vsel %vm4962, %v4954, %v4959
    %v4964 = vrsqrt.pop %v4913
    %v4965 = vmul.f32 %v4964, %v4913
    %v4966 = vmul.f32 %v4965, %v4964
    %v4967 = vmul.f32 0.5, %v4966
    %v4968 = vsub.f32 1.5, %v4967
    %v4969 = vmul.f32 %v4964, %v4968
    %vm4970 = vweird.f32 %v4913
    %vm4971 = vweird.f32 %v4964
    %vm4972 = vmor %vm4970, %vm4971
    %v4973 = vsel %vm4972, %v4964, %v4969
    %v4974 = vrsqrt.pop %v4914
    %v4975 = vmul.f32 %v4974, %v4914
    %v4976 = vmul.f32 %v4975, %v4974
    %v4977 = vmul.f32 0.5, %v4976
    %v4978 = vsub.f32 1.5, %v4977
    %v4979 = vmul.f32 %v4974, %v4978
    %vm4980 = vweird.f32 %v4914
    %vm4981 = vweird.f32 %v4974
    %vm4982 = vmor %vm4980, %vm4981
    %v4983 = vsel %vm4982, %v4974, %v4979
    %v4984 = vrsqrt.pop %v4915
    %v4985 = vmul.f32 %v4984, %v4915
    %v4986 = vmul.f32 %v4985, %v4984
    %v4987 = vmul.f32 0.5, %v4986
    %v4988 = vsub.f32 1.5, %v4987
    %v4989 = vmul.f32 %v4984, %v4988
    %vm4990 = vweird.f32 %v4915
    %vm4991 = vweird.f32 %v4984
    %vm4992 = vmor %vm4990, %vm4991
    %v4993 = vsel %vm4992, %v4984, %v4989
    %v4994 = vrsqrt.pop %v4916
    %v4995 = vmul.f32 %v4994, %v4916
    %v4996 = vmul.f32 %v4995, %v4994
    %v4997 = vmul.f32 0.5, %v4996
    %v4998 = vsub.f32 1.5, %v4997
    %v4999 = vmul.f32 %v4994, %v4998
    %vm5000 = vweird.f32 %v4916
    %vm5001 = vweird.f32 %v4994
    %vm5002 = vmor %vm5000, %vm5001
    %v5003 = vsel %vm5002, %v4994, %v4999
    %v5004 = vrsqrt.pop %v4917
    %v5005 = vmul.f32 %v5004, %v4917
    %v5006 = vmul.f32 %v5005, %v5004
    %v5007 = vmul.f32 0.5, %v5006
    %v5008 = vsub.f32 1.5, %v5007
    %v5009 = vmul.f32 %v5004, %v5008
    %vm5010 = vweird.f32 %v4917
    %vm5011 = vweird.f32 %v5004
    %vm5012 = vmor %vm5010, %vm5011
    %v5013 = vsel %vm5012, %v5004, %v5009
    %v5014 = vrsqrt.pop %v4918
    %v5015 = vmul.f32 %v5014, %v4918
    %v5016 = vmul.f32 %v5015, %v5014
    %v5017 = vmul.f32 0.5, %v5016
    %v5018 = vsub.f32 1.5, %v5017
    %v5019 = vmul.f32 %v5014, %v5018
    %vm5020 = vweird.f32 %v4918
    %vm5021 = vweird.f32 %v5014
    %vm5022 = vmor %vm5020, %vm5021
    %v5023 = vsel %vm5022, %v5014, %v5019
    %v5024 = vrsqrt.pop %v4919
    %v5025 = vmul.f32 %v5024, %v4919
    %v5026 = vmul.f32 %v5025, %v5024
    %v5027 = vmul.f32 0.5, %v5026
    %v5028 = vsub.f32 1.5, %v5027
    %v5029 = vmul.f32 %v5024, %v5028
    %vm5030 = vweird.f32 %v4919
    %vm5031 = vweird.f32 %v5024
    %vm5032 = vmor %vm5030, %vm5031
    %v5033 = vsel %vm5032, %v5024, %v5029
    %v5034 = vrsqrt.pop %v4920
    %v5035 = vmul.f32 %v5034, %v4920
    %v5036 = vmul.f32 %v5035, %v5034
    %v5037 = vmul.f32 0.5, %v5036
    %v5038 = vsub.f32 1.5, %v5037
    %v5039 = vmul.f32 %v5034, %v5038
    %vm5040 = vweird.f32 %v4920
    %vm5041 = vweird.f32 %v5034
    %vm5042 = vmor %vm5040, %vm5041
    %v5043 = vsel %vm5042, %v5034, %v5039
    %v5044 = vrsqrt.pop %v4921
    %v5045 = vmul.f32 %v5044, %v4921
    %v5046 = vmul.f32 %v5045, %v5044
    %v5047 = vmul.f32 0.5, %v5046
    %v5048 = vsub.f32 1.5, %v5047
    %v5049 = vmul.f32 %v5044, %v5048
    %vm5050 = vweird.f32 %v4921
    %vm5051 = vweird.f32 %v5044
    %vm5052 = vmor %vm5050, %vm5051
    %v5053 = vsel %vm5052, %v5044, %v5049
    %v5054 = vrsqrt.pop %v4922
    %v5055 = vmul.f32 %v5054, %v4922
    %v5056 = vmul.f32 %v5055, %v5054
    %v5057 = vmul.f32 0.5, %v5056
    %v5058 = vsub.f32 1.5, %v5057
    %v5059 = vmul.f32 %v5054, %v5058
    %vm5060 = vweird.f32 %v4922
    %vm5061 = vweird.f32 %v5054
    %vm5062 = vmor %vm5060, %vm5061
    %v5063 = vsel %vm5062, %v5054, %v5059
    %v5064 = vrsqrt.pop %v4923
    %v5065 = vmul.f32 %v5064, %v4923
    %v5066 = vmul.f32 %v5065, %v5064
    %v5067 = vmul.f32 0.5, %v5066
    %v5068 = vsub.f32 1.5, %v5067
    %v5069 = vmul.f32 %v5064, %v5068
    %vm5070 = vweird.f32 %v4923
    %vm5071 = vweird.f32 %v5064
    %vm5072 = vmor %vm5070, %vm5071
    %v5073 = vsel %vm5072, %v5064, %v5069
    %v5074 = vrsqrt.pop %v4924
    %v5075 = vmul.f32 %v5074, %v4924
    %v5076 = vmul.f32 %v5075, %v5074
    %v5077 = vmul.f32 0.5, %v5076
    %v5078 = vsub.f32 1.5, %v5077
    %v5079 = vmul.f32 %v5074, %v5078
    %vm5080 = vweird.f32 %v4924
    %vm5081 = vweird.f32 %v5074
    %vm5082 = vmor %vm5080, %vm5081
    %v5083 = vsel %vm5082, %v5074, %v5079
    %v5084 = vrsqrt.pop %v4925
    %v5085 = vmul.f32 %v5084, %v4925
    %v5086 = vmul.f32 %v5085, %v5084
    %v5087 = vmul.f32 0.5, %v5086
    %v5088 = vsub.f32 1.5, %v5087
    %v5089 = vmul.f32 %v5084, %v5088
    %vm5090 = vweird.f32 %v4925
    %vm5091 = vweird.f32 %v5084
    %vm5092 = vmor %vm5090, %vm5091
    %v5093 = vsel %vm5092, %v5084, %v5089
    %v5094 = vrsqrt.pop %v4926
    %v5095 = vmul.f32 %v5094, %v4926
    %v5096 = vmul.f32 %v5095, %v5094
    %v5097 = vmul.f32 0.5, %v5096
    %v5098 = vsub.f32 1.5, %v5097
    %v5099 = vmul.f32 %v5094, %v5098
    %vm5100 = vweird.f32 %v4926
    %vm5101 = vweird.f32 %v5094
    %vm5102 = vmor %vm5100, %vm5101
    %v5103 = vsel %vm5102, %v5094, %v5099
    %v5104 = vrsqrt.pop %v4927
    %v5105 = vmul.f32 %v5104, %v4927
    %v5106 = vmul.f32 %v5105, %v5104
    %v5107 = vmul.f32 0.5, %v5106
    %v5108 = vsub.f32 1.5, %v5107
    %v5109 = vmul.f32 %v5104, %v5108
    %vm5110 = vweird.f32 %v4927
    %vm5111 = vweird.f32 %v5104
    %vm5112 = vmor %vm5110, %vm5111
    %v5113 = vsel %vm5112, %v5104, %v5109
    %v5114 = vrsqrt.pop %v4928
    %v5115 = vmul.f32 %v5114, %v4928
    %v5116 = vmul.f32 %v5115, %v5114
    %v5117 = vmul.f32 0.5, %v5116
    %v5118 = vsub.f32 1.5, %v5117
    %v5119 = vmul.f32 %v5114, %v5118
    %vm5120 = vweird.f32 %v4928
    %vm5121 = vweird.f32 %v5114
    %vm5122 = vmor %vm5120, %vm5121
    %v5123 = vsel %vm5122, %v5114, %v5119
    %v5124 = vrsqrt.pop %v4929
    %v5125 = vmul.f32 %v5124, %v4929
    %v5126 = vmul.f32 %v5125, %v5124
    %v5127 = vmul.f32 0.5, %v5126
    %v5128 = vsub.f32 1.5, %v5127
    %v5129 = vmul.f32 %v5124, %v5128
    %vm5130 = vweird.f32 %v4929
    %vm5131 = vweird.f32 %v5124
    %vm5132 = vmor %vm5130, %vm5131
    %v5133 = vsel %vm5132, %v5124, %v5129
    %v5134 = vrsqrt.pop %v4930
    %v5135 = vmul.f32 %v5134, %v4930
    %v5136 = vmul.f32 %v5135, %v5134
    %v5137 = vmul.f32 0.5, %v5136
    %v5138 = vsub.f32 1.5, %v5137
    %v5139 = vmul.f32 %v5134, %v5138
    %vm5140 = vweird.f32 %v4930
    %vm5141 = vweird.f32 %v5134
    %vm5142 = vmor %vm5140, %vm5141
    %v5143 = vsel %vm5142, %v5134, %v5139
    %v5144 = vrsqrt.pop %v4931
    %v5145 = vmul.f32 %v5144, %v4931
    %v5146 = vmul.f32 %v5145, %v5144
    %v5147 = vmul.f32 0.5, %v5146
    %v5148 = vsub.f32 1.5, %v5147
    %v5149 = vmul.f32 %v5144, %v5148
    %vm5150 = vweird.f32 %v4931
    %vm5151 = vweird.f32 %v5144
    %vm5152 = vmor %vm5150, %vm5151
    %v5153 = vsel %vm5152, %v5144, %v5149
    %v5154 = vrsqrt.pop %v4932
    %v5155 = vmul.f32 %v5154, %v4932
    %v5156 = vmul.f32 %v5155, %v5154
    %v5157 = vmul.f32 0.5, %v5156
    %v5158 = vsub.f32 1.5, %v5157
    %v5159 = vmul.f32 %v5154, %v5158
    %vm5160 = vweird.f32 %v4932
    %vm5161 = vweird.f32 %v5154
    %vm5162 = vmor %vm5160, %vm5161
    %v5163 = vsel %vm5162, %v5154, %v5159
    %v5164 = vrsqrt.pop %v4933
    %v5165 = vmul.f32 %v5164, %v4933
    %v5166 = vmul.f32 %v5165, %v5164
    %v5167 = vmul.f32 0.5, %v5166
    %v5168 = vsub.f32 1.5, %v5167
    %v5169 = vmul.f32 %v5164, %v5168
    %vm5170 = vweird.f32 %v4933
    %vm5171 = vweird.f32 %v5164
    %vm5172 = vmor %vm5170, %vm5171
    %v5173 = vsel %vm5172, %v5164, %v5169
    %v5174 = vmul.f32 %v4766, %v4943
    %v5175 = vmul.f32 %v4767, %v4953
    %v5176 = vmul.f32 %v4768, %v4963
    %v5177 = vmul.f32 %v4769, %v4973
    %v5178 = vmul.f32 %v4770, %v4983
    %v5179 = vmul.f32 %v4771, %v4993
    %v5180 = vmul.f32 %v4772, %v5003
    %v5181 = vmul.f32 %v4773, %v5013
    %v5182 = vmul.f32 %v4774, %v5023
    %v5183 = vmul.f32 %v4775, %v5033
    %v5184 = vmul.f32 %v4776, %v5043
    %v5185 = vmul.f32 %v4777, %v5053
    %v5186 = vmul.f32 %v4778, %v5063
    %v5187 = vmul.f32 %v4779, %v5073
    %v5188 = vmul.f32 %v4780, %v5083
    %v5189 = vmul.f32 %v4781, %v5093
    %v5190 = vmul.f32 %v4782, %v5103
    %v5191 = vmul.f32 %v4783, %v5113
    %v5192 = vmul.f32 %v4784, %v5123
    %v5193 = vmul.f32 %v4785, %v5133
    %v5194 = vmul.f32 %v4786, %v5143
    %v5195 = vmul.f32 %v4787, %v5153
    %v5196 = vmul.f32 %v4788, %v5163
    %v5197 = vmul.f32 %v4789, %v5173
    %v5199 = vperm.slane %v4668, 0
    %v5201 = vmul.f32 %v5174, %v5199
    %v5202 = vmul.f32 %v5175, %v5199
    %v5203 = vmul.f32 %v5176, %v5199
    %v5204 = vmul.f32 %v5177, %v5199
    %v5205 = vmul.f32 %v5178, %v5199
    %v5206 = vmul.f32 %v5179, %v5199
    %v5207 = vmul.f32 %v5180, %v5199
    %v5208 = vmul.f32 %v5181, %v5199
    %v5209 = vmul.f32 %v5182, %v5199
    %v5210 = vmul.f32 %v5183, %v5199
    %v5211 = vmul.f32 %v5184, %v5199
    %v5212 = vmul.f32 %v5185, %v5199
    %v5213 = vmul.f32 %v5186, %v5199
    %v5214 = vmul.f32 %v5187, %v5199
    %v5215 = vmul.f32 %v5188, %v5199
    %v5216 = vmul.f32 %v5189, %v5199
    %v5217 = vmul.f32 %v5190, %v5199
    %v5218 = vmul.f32 %v5191, %v5199
    %v5219 = vmul.f32 %v5192, %v5199
    %v5220 = vmul.f32 %v5193, %v5199
    %v5221 = vmul.f32 %v5194, %v5199
    %v5222 = vmul.f32 %v5195, %v5199
    %v5223 = vmul.f32 %v5196, %v5199
    %v5224 = vmul.f32 %v5197, %v5199
    %v5226 = vperm.slane %v4669, 0
    %v5228 = vadd.f32 %v5201, %v5226
    %v5229 = vadd.f32 %v5202, %v5226
    %v5230 = vadd.f32 %v5203, %v5226
    %v5231 = vadd.f32 %v5204, %v5226
    %v5232 = vadd.f32 %v5205, %v5226
    %v5233 = vadd.f32 %v5206, %v5226
    %v5234 = vadd.f32 %v5207, %v5226
    %v5235 = vadd.f32 %v5208, %v5226
    %v5236 = vadd.f32 %v5209, %v5226
    %v5237 = vadd.f32 %v5210, %v5226
    %v5238 = vadd.f32 %v5211, %v5226
    %v5239 = vadd.f32 %v5212, %v5226
    %v5240 = vadd.f32 %v5213, %v5226
    %v5241 = vadd.f32 %v5214, %v5226
    %v5242 = vadd.f32 %v5215, %v5226
    %v5243 = vadd.f32 %v5216, %v5226
    %v5244 = vadd.f32 %v5217, %v5226
    %v5245 = vadd.f32 %v5218, %v5226
    %v5246 = vadd.f32 %v5219, %v5226
    %v5247 = vadd.f32 %v5220, %v5226
    %v5248 = vadd.f32 %v5221, %v5226
    %v5249 = vadd.f32 %v5222, %v5226
    %v5250 = vadd.f32 %v5223, %v5226
    %v5251 = vadd.f32 %v5224, %v5226
    %v5252 = vsel %vm493, %v5228, 0.0
    %v5253 = vsel %vm493, %v5229, 0.0
    %v5254 = vadd.f32 %v5252, %v5253
    %v5255 = vrot.slane %v5254, 4
    %v5256 = vadd.f32 %v5254, %v5255
    %v5257 = vrot.slane %v5256, 2
    %v5258 = vadd.f32 %v5256, %v5257
    %v5259 = vrot.slane %v5258, 1
    %v5260 = vadd.f32 %v5258, %v5259
    %v5261 = vsel %vm493, %v5230, 0.0
    %v5262 = vsel %vm493, %v5231, 0.0
    %v5263 = vadd.f32 %v5261, %v5262
    %v5264 = vrot.slane %v5263, 4
    %v5265 = vadd.f32 %v5263, %v5264
    %v5266 = vrot.slane %v5265, 2
    %v5267 = vadd.f32 %v5265, %v5266
    %v5268 = vrot.slane %v5267, 1
    %v5269 = vadd.f32 %v5267, %v5268
    %v5270 = vsel %vm493, %v5232, 0.0
    %v5271 = vsel %vm493, %v5233, 0.0
    %v5272 = vadd.f32 %v5270, %v5271
    %v5273 = vrot.slane %v5272, 4
    %v5274 = vadd.f32 %v5272, %v5273
    %v5275 = vrot.slane %v5274, 2
    %v5276 = vadd.f32 %v5274, %v5275
    %v5277 = vrot.slane %v5276, 1
    %v5278 = vadd.f32 %v5276, %v5277
    %v5279 = vsel %vm493, %v5234, 0.0
    %v5280 = vsel %vm493, %v5235, 0.0
    %v5281 = vadd.f32 %v5279, %v5280
    %v5282 = vrot.slane %v5281, 4
    %v5283 = vadd.f32 %v5281, %v5282
    %v5284 = vrot.slane %v5283, 2
    %v5285 = vadd.f32 %v5283, %v5284
    %v5286 = vrot.slane %v5285, 1
    %v5287 = vadd.f32 %v5285, %v5286
    %v5288 = vsel %vm493, %v5236, 0.0
    %v5289 = vsel %vm493, %v5237, 0.0
    %v5290 = vadd.f32 %v5288, %v5289
    %v5291 = vrot.slane %v5290, 4
    %v5292 = vadd.f32 %v5290, %v5291
    %v5293 = vrot.slane %v5292, 2
    %v5294 = vadd.f32 %v5292, %v5293
    %v5295 = vrot.slane %v5294, 1
    %v5296 = vadd.f32 %v5294, %v5295
    %v5297 = vsel %vm493, %v5238, 0.0
    %v5298 = vsel %vm493, %v5239, 0.0
    %v5299 = vadd.f32 %v5297, %v5298
    %v5300 = vrot.slane %v5299, 4
    %v5301 = vadd.f32 %v5299, %v5300
    %v5302 = vrot.slane %v5301, 2
    %v5303 = vadd.f32 %v5301, %v5302
    %v5304 = vrot.slane %v5303, 1
    %v5305 = vadd.f32 %v5303, %v5304
    %v5306 = vsel %vm493, %v5240, 0.0
    %v5307 = vsel %vm493, %v5241, 0.0
    %v5308 = vadd.f32 %v5306, %v5307
    %v5309 = vrot.slane %v5308, 4
    %v5310 = vadd.f32 %v5308, %v5309
    %v5311 = vrot.slane %v5310, 2
    %v5312 = vadd.f32 %v5310, %v5311
    %v5313 = vrot.slane %v5312, 1
    %v5314 = vadd.f32 %v5312, %v5313
    %v5315 = vsel %vm493, %v5242, 0.0
    %v5316 = vsel %vm493, %v5243, 0.0
    %v5317 = vadd.f32 %v5315, %v5316
    %v5318 = vrot.slane %v5317, 4
    %v5319 = vadd.f32 %v5317, %v5318
    %v5320 = vrot.slane %v5319, 2
    %v5321 = vadd.f32 %v5319, %v5320
    %v5322 = vrot.slane %v5321, 1
    %v5323 = vadd.f32 %v5321, %v5322
    %v5324 = vsel %vm493, %v5244, 0.0
    %v5325 = vsel %vm493, %v5245, 0.0
    %v5326 = vadd.f32 %v5324, %v5325
    %v5327 = vrot.slane %v5326, 4
    %v5328 = vadd.f32 %v5326, %v5327
    %v5329 = vrot.slane %v5328, 2
    %v5330 = vadd.f32 %v5328, %v5329
    %v5331 = vrot.slane %v5330, 1
    %v5332 = vadd.f32 %v5330, %v5331
    %v5333 = vsel %vm493, %v5246, 0.0
    %v5334 = vsel %vm493, %v5247, 0.0
    %v5335 = vadd.f32 %v5333, %v5334
    %v5336 = vrot.slane %v5335, 4
    %v5337 = vadd.f32 %v5335, %v5336
    %v5338 = vrot.slane %v5337, 2
    %v5339 = vadd.f32 %v5337, %v5338
    %v5340 = vrot.slane %v5339, 1
    %v5341 = vadd.f32 %v5339, %v5340
    %v5342 = vsel %vm493, %v5248, 0.0
    %v5343 = vsel %vm493, %v5249, 0.0
    %v5344 = vadd.f32 %v5342, %v5343
    %v5345 = vrot.slane %v5344, 4
    %v5346 = vadd.f32 %v5344, %v5345
    %v5347 = vrot.slane %v5346, 2
    %v5348 = vadd.f32 %v5346, %v5347
    %v5349 = vrot.slane %v5348, 1
    %v5350 = vadd.f32 %v5348, %v5349
    %v5351 = vsel %vm493, %v5250, 0.0
    %v5352 = vsel %vm493, %v5251, 0.0
    %v5353 = vadd.f32 %v5351, %v5352
    %v5354 = vrot.slane %v5353, 4
    %v5355 = vadd.f32 %v5353, %v5354
    %v5356 = vrot.slane %v5355, 2
    %v5357 = vadd.f32 %v5355, %v5356
    %v5358 = vrot.slane %v5357, 1
    %v5359 = vadd.f32 %v5357, %v5358
    %v5360 = vrcp.pop 16.0
    %v5361 = vmul.f32 16.0, %v5360
    %v5362 = vsub.f32 1.0, %v5361
    %v5363 = vmul.f32 %v5360, %v5362
    %v5364 = vadd.f32 %v5360, %v5363
    %vm5365 = vweird.f32 %v5360
    %v5366 = vsel %vm5365, %v5360, %v5364
    %v5367 = vmul.f32 %v5260, %v5366
    %v5368 = vmul.f32 %v5269, %v5366
    %v5369 = vmul.f32 %v5278, %v5366
    %v5370 = vmul.f32 %v5287, %v5366
    %v5371 = vmul.f32 %v5296, %v5366
    %v5372 = vmul.f32 %v5305, %v5366
    %v5373 = vmul.f32 %v5314, %v5366
    %v5374 = vmul.f32 %v5323, %v5366
    %v5375 = vmul.f32 %v5332, %v5366
    %v5376 = vmul.f32 %v5341, %v5366
    %v5377 = vmul.f32 %v5350, %v5366
    %v5378 = vmul.f32 %v5359, %v5366
    %5379 = vst.msk [vmem:[#allocation2] sm:$0xff] %vm493, 0.0
    %5380 = vst.msk [vmem:[#allocation2 + $0x8] sm:$0xff] %vm493, 0.0
    %v5381 = vld [vmem:[%s13] sm:$0xff]
    %v5382 = vperm.slane %v5381, 0
    %v5383 = vadd.f32 %v5367, %v5382
    %v5384 = vadd.f32 %v5368, %v5382
    %vm5385 = vcmask 253952
    %5386 = vst.msk [vmem:[#allocation2] sm:$0x1] %vm5385, %v5383
    %5387 = vst.msk [vmem:[#allocation2 + $0x8] sm:$0x1] %vm5385, %v5384
    %v5388 = vperm.slane %v5381, 1
    %v5389 = vadd.f32 %v5369, %v5388
    %v5390 = vadd.f32 %v5370, %v5388
    %5391 = vst.msk [vmem:[#allocation2 + $0x1] sm:$0x1] %vm5385, %v5389
    %5392 = vst.msk [vmem:[#allocation2 + $0x9] sm:$0x1] %vm5385, %v5390
    %v5393 = vperm.slane %v5381, 2
    %v5394 = vadd.f32 %v5371, %v5393
    %v5395 = vadd.f32 %v5372, %v5393
    %5396 = vst.msk [vmem:[#allocation2 + $0x2] sm:$0x1] %vm5385, %v5394
    %5397 = vst.msk [vmem:[#allocation2 + $0xa] sm:$0x1] %vm5385, %v5395
    %v5398 = vperm.slane %v5381, 3
    %v5399 = vadd.f32 %v5373, %v5398
    %v5400 = vadd.f32 %v5374, %v5398
    %5401 = vst.msk [vmem:[#allocation2 + $0x3] sm:$0x1] %vm5385, %v5399
    %5402 = vst.msk [vmem:[#allocation2 + $0xb] sm:$0x1] %vm5385, %v5400
    %v5403 = vperm.slane %v5381, 4
    %v5404 = vadd.f32 %v5375, %v5403
    %v5405 = vadd.f32 %v5376, %v5403
    %5406 = vst.msk [vmem:[#allocation2 + $0x4] sm:$0x1] %vm5385, %v5404
    %5407 = vst.msk [vmem:[#allocation2 + $0xc] sm:$0x1] %vm5385, %v5405
    %v5408 = vperm.slane %v5381, 5
    %v5409 = vadd.f32 %v5377, %v5408
    %v5410 = vadd.f32 %v5378, %v5408
    %5411 = vst.msk [vmem:[#allocation2 + $0x5] sm:$0x1] %vm5385, %v5409
    %5412 = vst.msk [vmem:[#allocation2 + $0xd] sm:$0x1] %vm5385, %v5410
    %v5413 = vld [vmem:[#allocation2] sm:$0xff]
    %v5414 = vld [vmem:[#allocation2 + $0x8] sm:$0xff]
    %s5415 = sld [smem:[#allocation11 + $0x1]]
    %v5416 = vld [vmem:[%s5] sm:$0xff]
    %v5417 = vld [vmem:[%s5 + $0x8] sm:$0xff]
    %v5418 = vld [vmem:[%s51] sm:$0xff]
    %v5419 = vld [vmem:[%s51 + $0x8] sm:$0xff]
    %v5420 = vld [vmem:[%s51 + $0x10] sm:$0xff]
    %v5421 = vld [vmem:[%s51 + $0x18] sm:$0xff]
    %v5422 = vld [vmem:[%s53] sm:$0x1]
    %v5424 = vperm.slane %v5422, 0
    %v5427 = vsel %vm493, %v5413, 0
    %v5430 = vsel %vm493, %v5414, 0
    %5432 = vmatpush.msra.mxu0 0.0
    %5433 = vmatpush.msra.mxu0 0.0
    %5434 = vmatpush.msra.mxu0 0.0
    %5435 = vmatpush.msra.mxu0 0.0
    %5436 = vmatpush.msra.mxu0 0.0
    %5437 = vmatpush.msra.mxu0 0.0
    %5438 = vmatpush.msra.mxu0 0.0
    %5439 = vmatpush.msra.mxu0 0.0
    %5440 = vmatpush.msra.mxu0 0.0
    %5441 = vmatpush.msra.mxu0 0.0
    %5442 = vmatpush.msra.mxu0 0.0
    %5443 = vmatpush.msra.mxu0 0.0
    %5444 = vmatpush.msra.mxu0 %v5421
    %5445 = vmatpush.msra.mxu0 %v5420
    %5446 = vmatpush.msra.mxu0 %v5419
    %5447 = vmatpush.msra.mxu0 %v5418
    %5448 = vmatmul.f32.gmra.mxu0 %v5427
    %v5449 = vpop.f32.mrf.mxu0
    %v5450 = vadd.f32 %v5424, %v5449
    %5451 = vmatmul.f32.gmra.mxu0 %v5430
    %v5452 = vpop.f32.mrf.mxu0
    %v5453 = vadd.f32 %v5424, %v5452
    %5454 = vdwg.mxu0
    %v5455 = vld [vmem:[%s55] sm:$0xff]
    %v5456 = vld [vmem:[%s55 + $0x8] sm:$0xff]
    %v5457 = vld [vmem:[%s55 + $0x10] sm:$0xff]
    %v5458 = vld [vmem:[%s55 + $0x18] sm:$0xff]
    %v5459 = vld [vmem:[%s57] sm:$0x1]
    %v5461 = vperm.slane %v5459, 0
    %5463 = vmatpush.msra.mxu0 0.0
    %5464 = vmatpush.msra.mxu0 0.0
    %5465 = vmatpush.msra.mxu0 0.0
    %5466 = vmatpush.msra.mxu0 0.0
    %5467 = vmatpush.msra.mxu0 0.0
    %5468 = vmatpush.msra.mxu0 0.0
    %5469 = vmatpush.msra.mxu0 0.0
    %5470 = vmatpush.msra.mxu0 0.0
    %5471 = vmatpush.msra.mxu0 0.0
    %5472 = vmatpush.msra.mxu0 0.0
    %5473 = vmatpush.msra.mxu0 0.0
    %5474 = vmatpush.msra.mxu0 0.0
    %5475 = vmatpush.msra.mxu0 %v5458
    %5476 = vmatpush.msra.mxu0 %v5457
    %5477 = vmatpush.msra.mxu0 %v5456
    %5478 = vmatpush.msra.mxu0 %v5455
    %5479 = vmatmul.f32.gmra.mxu0 %v5427
    %v5480 = vpop.f32.mrf.mxu0
    %v5481 = vadd.f32 %v5461, %v5480
    %5482 = vmatmul.f32.gmra.mxu0 %v5430
    %v5483 = vpop.f32.mrf.mxu0
    %v5484 = vadd.f32 %v5461, %v5483
    %5485 = vdwg.mxu0
    %v5486 = vld [vmem:[%s59] sm:$0xff]
    %v5487 = vld [vmem:[%s59 + $0x8] sm:$0xff]
    %v5488 = vld [vmem:[%s59 + $0x10] sm:$0xff]
    %v5489 = vld [vmem:[%s59 + $0x18] sm:$0xff]
    %v5490 = vld [vmem:[%s61] sm:$0x1]
    %v5492 = vperm.slane %v5490, 0
    %5494 = vmatpush.msra.mxu0 0.0
    %5495 = vmatpush.msra.mxu0 0.0
    %5496 = vmatpush.msra.mxu0 0.0
    %5497 = vmatpush.msra.mxu0 0.0
    %5498 = vmatpush.msra.mxu0 0.0
    %5499 = vmatpush.msra.mxu0 0.0
    %5500 = vmatpush.msra.mxu0 0.0
    %5501 = vmatpush.msra.mxu0 0.0
    %5502 = vmatpush.msra.mxu0 0.0
    %5503 = vmatpush.msra.mxu0 0.0
    %5504 = vmatpush.msra.mxu0 0.0
    %5505 = vmatpush.msra.mxu0 0.0
    %5506 = vmatpush.msra.mxu0 %v5489
    %5507 = vmatpush.msra.mxu0 %v5488
    %5508 = vmatpush.msra.mxu0 %v5487
    %5509 = vmatpush.msra.mxu0 %v5486
    %5510 = vmatmul.f32.gmra.mxu0 %v5427
    %v5511 = vpop.f32.mrf.mxu0
    %v5512 = vadd.f32 %v5492, %v5511
    %5513 = vmatmul.f32.gmra.mxu0 %v5430
    %v5514 = vpop.f32.mrf.mxu0
    %v5515 = vadd.f32 %v5492, %v5514
    %5516 = vdwg.mxu0
    %v5517 = vld [vmem:[%s63] sm:$0xff]
    %v5518 = vld [vmem:[%s63 + $0x8] sm:$0xff]
    %v5519 = vld [vmem:[%s63 + $0x10] sm:$0xff]
    %v5520 = vld [vmem:[%s63 + $0x18] sm:$0xff]
    %v5521 = vld [vmem:[%s65] sm:$0x1]
    %v5523 = vperm.slane %v5521, 0
    %5525 = vmatpush.msra.mxu0 0.0
    %5526 = vmatpush.msra.mxu0 0.0
    %5527 = vmatpush.msra.mxu0 0.0
    %5528 = vmatpush.msra.mxu0 0.0
    %5529 = vmatpush.msra.mxu0 0.0
    %5530 = vmatpush.msra.mxu0 0.0
    %5531 = vmatpush.msra.mxu0 0.0
    %5532 = vmatpush.msra.mxu0 0.0
    %5533 = vmatpush.msra.mxu0 0.0
    %5534 = vmatpush.msra.mxu0 0.0
    %5535 = vmatpush.msra.mxu0 0.0
    %5536 = vmatpush.msra.mxu0 0.0
    %5537 = vmatpush.msra.mxu0 %v5520
    %5538 = vmatpush.msra.mxu0 %v5519
    %5539 = vmatpush.msra.mxu0 %v5518
    %5540 = vmatpush.msra.mxu0 %v5517
    %5541 = vmatmul.f32.gmra.mxu0 %v5427
    %v5542 = vpop.f32.mrf.mxu0
    %v5543 = vadd.f32 %v5523, %v5542
    %5544 = vmatmul.f32.gmra.mxu0 %v5430
    %v5545 = vpop.f32.mrf.mxu0
    %v5546 = vadd.f32 %v5523, %v5545
    %5547 = vdwg.mxu0
    %v5549 = vsel %vm493, %v5450, 0
    %v5552 = vsel %vm493, %v5512, 0
    %5554 = vmatpush.xpose.msra.mxu0 0.0
    %5555 = vmatpush.xpose.msra.mxu0 0.0
    %5556 = vmatpush.xpose.msra.mxu0 0.0
    %5557 = vmatpush.xpose.msra.mxu0 0.0
    %5558 = vmatpush.xpose.msra.mxu0 0.0
    %5559 = vmatpush.xpose.msra.mxu0 0.0
    %5560 = vmatpush.xpose.msra.mxu0 0.0
    %5561 = vmatpush.xpose.msra.mxu0 0.0
    %5562 = vmatpush.xpose.msra.mxu0 0.0
    %5563 = vmatpush.xpose.msra.mxu0 0.0
    %5564 = vmatpush.xpose.msra.mxu0 0.0
    %5565 = vmatpush.xpose.msra.mxu0 0.0
    %5566 = vmatpush.xpose.msra.mxu0 0.0
    %5567 = vmatpush.xpose.msra.mxu0 0.0
    %5568 = vmatpush.xpose.msra.mxu0 0.0
    %5569 = vmatpush.xpose.msra.mxu0 %v5552
    %5570 = vmatmul.f32.gmra.mxu0 %v5549
    %v5571 = vpop.f32.mrf.mxu0
    %v5572 = vadd.f32 0.0, %v5571
    %5573 = vdwg.mxu0
    %v5575 = vsel %vm493, %v5453, 0
    %v5578 = vsel %vm493, %v5515, 0
    %5580 = vmatpush.xpose.msra.mxu0 0.0
    %5581 = vmatpush.xpose.msra.mxu0 0.0
    %5582 = vmatpush.xpose.msra.mxu0 0.0
    %5583 = vmatpush.xpose.msra.mxu0 0.0
    %5584 = vmatpush.xpose.msra.mxu0 0.0
    %5585 = vmatpush.xpose.msra.mxu0 0.0
    %5586 = vmatpush.xpose.msra.mxu0 0.0
    %5587 = vmatpush.xpose.msra.mxu0 0.0
    %5588 = vmatpush.xpose.msra.mxu0 0.0
    %5589 = vmatpush.xpose.msra.mxu0 0.0
    %5590 = vmatpush.xpose.msra.mxu0 0.0
    %5591 = vmatpush.xpose.msra.mxu0 0.0
    %5592 = vmatpush.xpose.msra.mxu0 0.0
    %5593 = vmatpush.xpose.msra.mxu0 0.0
    %5594 = vmatpush.xpose.msra.mxu0 0.0
    %5595 = vmatpush.xpose.msra.mxu0 %v5578
    %5596 = vmatmul.f32.gmra.mxu0 %v5575
    %v5597 = vpop.f32.mrf.mxu0
    %v5598 = vadd.f32 0.0, %v5597
    %5599 = vdwg.mxu0
    %v5601 = vsel %vm493, %v5481, 0
    %5603 = vmatpush.xpose.msra.mxu0 0.0
    %5604 = vmatpush.xpose.msra.mxu0 0.0
    %5605 = vmatpush.xpose.msra.mxu0 0.0
    %5606 = vmatpush.xpose.msra.mxu0 0.0
    %5607 = vmatpush.xpose.msra.mxu0 0.0
    %5608 = vmatpush.xpose.msra.mxu0 0.0
    %5609 = vmatpush.xpose.msra.mxu0 0.0
    %5610 = vmatpush.xpose.msra.mxu0 0.0
    %5611 = vmatpush.xpose.msra.mxu0 0.0
    %5612 = vmatpush.xpose.msra.mxu0 0.0
    %5613 = vmatpush.xpose.msra.mxu0 0.0
    %5614 = vmatpush.xpose.msra.mxu0 0.0
    %5615 = vmatpush.xpose.msra.mxu0 0.0
    %5616 = vmatpush.xpose.msra.mxu0 0.0
    %5617 = vmatpush.xpose.msra.mxu0 0.0
    %5618 = vmatpush.xpose.msra.mxu0 %v5552
    %5619 = vmatmul.f32.gmra.mxu0 %v5601
    %v5620 = vpop.f32.mrf.mxu0
    %v5621 = vadd.f32 0.0, %v5620
    %5622 = vdwg.mxu0
    %v5624 = vsel %vm493, %v5484, 0
    %5626 = vmatpush.xpose.msra.mxu0 0.0
    %5627 = vmatpush.xpose.msra.mxu0 0.0
    %5628 = vmatpush.xpose.msra.mxu0 0.0
    %5629 = vmatpush.xpose.msra.mxu0 0.0
    %5630 = vmatpush.xpose.msra.mxu0 0.0
    %5631 = vmatpush.xpose.msra.mxu0 0.0
    %5632 = vmatpush.xpose.msra.mxu0 0.0
    %5633 = vmatpush.xpose.msra.mxu0 0.0
    %5634 = vmatpush.xpose.msra.mxu0 0.0
    %5635 = vmatpush.xpose.msra.mxu0 0.0
    %5636 = vmatpush.xpose.msra.mxu0 0.0
    %5637 = vmatpush.xpose.msra.mxu0 0.0
    %5638 = vmatpush.xpose.msra.mxu0 0.0
    %5639 = vmatpush.xpose.msra.mxu0 0.0
    %5640 = vmatpush.xpose.msra.mxu0 0.0
    %5641 = vmatpush.xpose.msra.mxu0 %v5578
    %5642 = vmatmul.f32.gmra.mxu0 %v5624
    %v5643 = vpop.f32.mrf.mxu0
    %v5644 = vadd.f32 0.0, %v5643
    %5645 = vdwg.mxu0
    %v5646 = vmul.f32 %v5572, 0.5
    %v5647 = vmul.f32 %v5598, 0.5
    %v5648 = vmul.f32 %v5621, 0.5
    %v5649 = vmul.f32 %v5644, 0.5
    %vm5650 = vcmask 64512
    %v5651 = vsel %vm5650, %v5646, -inf
    %5652 = vmax.xlane.f32.xlu0 %v5651
    %v5653 = vpop.xlane.xlu0 %5652
    %v5654 = vsel %vm5650, %v5647, -inf
    %5655 = vmax.xlane.f32.xlu0 %v5654
    %v5656 = vpop.xlane.xlu0 %5655
    %v5657 = vsel %vm5650, %v5648, -inf
    %5658 = vmax.xlane.f32.xlu0 %v5657
    %v5659 = vpop.xlane.xlu0 %5658
    %v5660 = vsel %vm5650, %v5649, -inf
    %5661 = vmax.xlane.f32.xlu0 %v5660
    %v5662 = vpop.xlane.xlu0 %5661
    %v5663 = vsub.f32 %v5646, %v5653
    %v5664 = vsub.f32 %v5647, %v5656
    %v5665 = vsub.f32 %v5648, %v5659
    %v5666 = vsub.f32 %v5649, %v5662
    %v5667 = vmul.f32 %v5663, 1.442695
    %v5668 = vpow.pop %v5667
    %v5669 = vmul.f32 %v5664, 1.442695
    %v5670 = vpow.pop %v5669
    %v5671 = vmul.f32 %v5665, 1.442695
    %v5672 = vpow.pop %v5671
    %v5673 = vmul.f32 %v5666, 1.442695
    %v5674 = vpow.pop %v5673
    %v5675 = vsel %vm5650, %v5668, 0.0
    %5676 = vadd.xlane.f32.xlu0 %v5675
    %v5677 = vpop.xlane.xlu0 %5676
    %v5678 = vsel %vm5650, %v5670, 0.0
    %5679 = vadd.xlane.f32.xlu0 %v5678
    %v5680 = vpop.xlane.xlu0 %5679
    %v5681 = vsel %vm5650, %v5672, 0.0
    %5682 = vadd.xlane.f32.xlu0 %v5681
    %v5683 = vpop.xlane.xlu0 %5682
    %v5684 = vsel %vm5650, %v5674, 0.0
    %5685 = vadd.xlane.f32.xlu0 %v5684
    %v5686 = vpop.xlane.xlu0 %5685
    %v5687 = vrcp.pop %v5677
    %v5688 = vmul.f32 %v5677, %v5687
    %v5689 = vsub.f32 1.0, %v5688
    %v5690 = vmul.f32 %v5687, %v5689
    %v5691 = vadd.f32 %v5687, %v5690
    %vm5692 = vweird.f32 %v5677
    %vm5693 = vweird.f32 %v5687
    %vm5694 = vmor %vm5692, %vm5693
    %v5695 = vsel %vm5694, %v5687, %v5691
    %v5696 = vand.u32 2147483647, %v5677
    %vm5697 = vcmp.eq.f32.partialorder %v5696, 8.507059e+37
    %v5698 = vand.u32 %v5677, 2147483648
    %v5699 = vor.u32 1.1754944e-38, %v5698
    %v5700 = vsel %vm5697, %v5699, %v5695
    %v5701 = vmul.f32 %v5668, %v5700
    %v5702 = vrcp.pop %v5680
    %v5703 = vmul.f32 %v5680, %v5702
    %v5704 = vsub.f32 1.0, %v5703
    %v5705 = vmul.f32 %v5702, %v5704
    %v5706 = vadd.f32 %v5702, %v5705
    %vm5707 = vweird.f32 %v5680
    %vm5708 = vweird.f32 %v5702
    %vm5709 = vmor %vm5707, %vm5708
    %v5710 = vsel %vm5709, %v5702, %v5706
    %v5711 = vand.u32 2147483647, %v5680
    %vm5712 = vcmp.eq.f32.partialorder %v5711, 8.507059e+37
    %v5713 = vand.u32 %v5680, 2147483648
    %v5714 = vor.u32 1.1754944e-38, %v5713
    %v5715 = vsel %vm5712, %v5714, %v5710
    %v5716 = vmul.f32 %v5670, %v5715
    %v5717 = vrcp.pop %v5683
    %v5718 = vmul.f32 %v5683, %v5717
    %v5719 = vsub.f32 1.0, %v5718
    %v5720 = vmul.f32 %v5717, %v5719
    %v5721 = vadd.f32 %v5717, %v5720
    %vm5722 = vweird.f32 %v5683
    %vm5723 = vweird.f32 %v5717
    %vm5724 = vmor %vm5722, %vm5723
    %v5725 = vsel %vm5724, %v5717, %v5721
    %v5726 = vand.u32 2147483647, %v5683
    %vm5727 = vcmp.eq.f32.partialorder %v5726, 8.507059e+37
    %v5728 = vand.u32 %v5683, 2147483648
    %v5729 = vor.u32 1.1754944e-38, %v5728
    %v5730 = vsel %vm5727, %v5729, %v5725
    %v5731 = vmul.f32 %v5672, %v5730
    %v5732 = vrcp.pop %v5686
    %v5733 = vmul.f32 %v5686, %v5732
    %v5734 = vsub.f32 1.0, %v5733
    %v5735 = vmul.f32 %v5732, %v5734
    %v5736 = vadd.f32 %v5732, %v5735
    %vm5737 = vweird.f32 %v5686
    %vm5738 = vweird.f32 %v5732
    %vm5739 = vmor %vm5737, %vm5738
    %v5740 = vsel %vm5739, %v5732, %v5736
    %v5741 = vand.u32 2147483647, %v5686
    %vm5742 = vcmp.eq.f32.partialorder %v5741, 8.507059e+37
    %v5743 = vand.u32 %v5686, 2147483648
    %v5744 = vor.u32 1.1754944e-38, %v5743
    %v5745 = vsel %vm5742, %v5744, %v5740
    %v5746 = vmul.f32 %v5674, %v5745
    %v5747 = vstv %s5415
    %v5748 = vmul.f32 %v5747, %v5731
    %v5749 = vmul.f32 %v5747, %v5746
    %v5750 = vsub.f32 %v5701, %v5748
    %v5751 = vsub.f32 %v5716, %v5749
    %v5753 = vsel %vm5650, %v5750, 0
    %5755 = vmatpush.msra.mxu0 0.0
    %5756 = vmatpush.msra.mxu0 0.0
    %5757 = vmatpush.msra.mxu0 0.0
    %5758 = vmatpush.msra.mxu0 0.0
    %5759 = vmatpush.msra.mxu0 0.0
    %5760 = vmatpush.msra.mxu0 0.0
    %5761 = vmatpush.msra.mxu0 0.0
    %5762 = vmatpush.msra.mxu0 0.0
    %5763 = vmatpush.msra.mxu0 0.0
    %5764 = vmatpush.msra.mxu0 0.0
    %5765 = vmatpush.msra.mxu0 0.0
    %5766 = vmatpush.msra.mxu0 0.0
    %5767 = vmatpush.msra.mxu0 0.0
    %5768 = vmatpush.msra.mxu0 0.0
    %5769 = vmatpush.msra.mxu0 0.0
    %5770 = vmatpush.msra.mxu0 %v5543
    %5771 = vmatmul.f32.gmra.mxu0 %v5753
    %v5772 = vpop.f32.mrf.mxu0
    %v5773 = vadd.f32 0.0, %v5772
    %5774 = vdwg.mxu0
    %v5776 = vsel %vm5650, %v5751, 0
    %5778 = vmatpush.msra.mxu0 0.0
    %5779 = vmatpush.msra.mxu0 0.0
    %5780 = vmatpush.msra.mxu0 0.0
    %5781 = vmatpush.msra.mxu0 0.0
    %5782 = vmatpush.msra.mxu0 0.0
    %5783 = vmatpush.msra.mxu0 0.0
    %5784 = vmatpush.msra.mxu0 0.0
    %5785 = vmatpush.msra.mxu0 0.0
    %5786 = vmatpush.msra.mxu0 0.0
    %5787 = vmatpush.msra.mxu0 0.0
    %5788 = vmatpush.msra.mxu0 0.0
    %5789 = vmatpush.msra.mxu0 0.0
    %5790 = vmatpush.msra.mxu0 0.0
    %5791 = vmatpush.msra.mxu0 0.0
    %5792 = vmatpush.msra.mxu0 0.0
    %5793 = vmatpush.msra.mxu0 %v5546
    %5794 = vmatmul.f32.gmra.mxu0 %v5776
    %v5795 = vpop.f32.mrf.mxu0
    %v5796 = vadd.f32 0.0, %v5795
    %5797 = vdwg.mxu0
    %v5799 = vsel %vm1762, %v5416, 0
    %v5802 = vsel %vm1762, %v5417, 0
    %5804 = vmatpush.msra.mxu0 0.0
    %5805 = vmatpush.msra.mxu0 0.0
    %5806 = vmatpush.msra.mxu0 0.0
    %5807 = vmatpush.msra.mxu0 0.0
    %5808 = vmatpush.msra.mxu0 0.0
    %5809 = vmatpush.msra.mxu0 0.0
    %5810 = vmatpush.msra.mxu0 0.0
    %5811 = vmatpush.msra.mxu0 0.0
    %5812 = vmatpush.msra.mxu0 0.0
    %5813 = vmatpush.msra.mxu0 0.0
    %5814 = vmatpush.msra.mxu0 0.0
    %5815 = vmatpush.msra.mxu0 0.0
    %5816 = vmatpush.msra.mxu0 0.0
    %5817 = vmatpush.msra.mxu0 0.0
    %5818 = vmatpush.msra.mxu0 %v5796
    %5819 = vmatpush.msra.mxu0 %v5773
    %5820 = vmatmul.f32.gmra.mxu0 %v5799
    %v5821 = vpop.f32.mrf.mxu0
    %v5822 = vadd.f32 0.0, %v5821
    %5823 = vmatmul.f32.gmra.mxu0 %v5802
    %v5824 = vpop.f32.mrf.mxu0
    %v5825 = vadd.f32 0.0, %v5824
    %5826 = vdwg.mxu0
    %v5827 = vld [vmem:[%s67] sm:$0xff]
    %v5828 = vld [vmem:[%s67 + $0x8] sm:$0xff]
    %v5829 = vld [vmem:[%s67 + $0x10] sm:$0xff]
    %v5830 = vld [vmem:[%s67 + $0x18] sm:$0xff]
    %v5831 = vld [vmem:[%s69] sm:$0x1]
    %v5833 = vperm.slane %v5831, 0
    %v5836 = vsel %vm493, %v5822, 0
    %v5839 = vsel %vm493, %v5825, 0
    %5841 = vmatpush.msra.mxu0 0.0
    %5842 = vmatpush.msra.mxu0 0.0
    %5843 = vmatpush.msra.mxu0 0.0
    %5844 = vmatpush.msra.mxu0 0.0
    %5845 = vmatpush.msra.mxu0 0.0
    %5846 = vmatpush.msra.mxu0 0.0
    %5847 = vmatpush.msra.mxu0 0.0
    %5848 = vmatpush.msra.mxu0 0.0
    %5849 = vmatpush.msra.mxu0 0.0
    %5850 = vmatpush.msra.mxu0 0.0
    %5851 = vmatpush.msra.mxu0 0.0
    %5852 = vmatpush.msra.mxu0 0.0
    %5853 = vmatpush.msra.mxu0 %v5830
    %5854 = vmatpush.msra.mxu0 %v5829
    %5855 = vmatpush.msra.mxu0 %v5828
    %5856 = vmatpush.msra.mxu0 %v5827
    %5857 = vmatmul.f32.gmra.mxu0 %v5836
    %v5858 = vpop.f32.mrf.mxu0
    %v5859 = vadd.f32 %v5833, %v5858
    %5860 = vmatmul.f32.gmra.mxu0 %v5839
    %v5861 = vpop.f32.mrf.mxu0
    %v5862 = vadd.f32 %v5833, %v5861
    %5863 = vdwg.mxu0
    %v5864 = vadd.f32 %v5413, %v5859
    %v5865 = vadd.f32 %v5414, %v5862
    %v5866 = vld [vmem:[%s71] sm:$0x1]
    %v5867 = vld [vmem:[%s73] sm:$0x1]
    %v5868 = vsel %vm493, %v5864, 0.0
    %5869 = vadd.xlane.f32.xlu0 %v5868
    %v5870 = vpop.xlane.xlu0 %5869
    %v5871 = vsel %vm493, %v5865, 0.0
    %5872 = vadd.xlane.f32.xlu0 %v5871
    %v5873 = vpop.xlane.xlu0 %5872
    %v5874 = vmul.f32 %v5870, %v3771
    %v5875 = vmul.f32 %v5873, %v3771
    %v5876 = vsub.f32 %v5864, %v5874
    %v5877 = vsub.f32 %v5865, %v5875
    %v5878 = vmul.f32 %v5876, %v5876
    %v5879 = vmul.f32 %v5877, %v5877
    %v5880 = vsel %vm493, %v5878, 0.0
    %5881 = vadd.xlane.f32.xlu0 %v5880
    %v5882 = vpop.xlane.xlu0 %5881
    %v5883 = vsel %vm493, %v5879, 0.0
    %5884 = vadd.xlane.f32.xlu0 %v5883
    %v5885 = vpop.xlane.xlu0 %5884
    %v5886 = vmul.f32 %v5882, %v3771
    %v5887 = vmul.f32 %v5885, %v3771
    %v5888 = vadd.f32 %v5886, 1e-05
    %v5889 = vadd.f32 %v5887, 1e-05
    %v5890 = vrsqrt.pop %v5888
    %v5891 = vmul.f32 %v5890, %v5888
    %v5892 = vmul.f32 %v5891, %v5890
    %v5893 = vmul.f32 0.5, %v5892
    %v5894 = vsub.f32 1.5, %v5893
    %v5895 = vmul.f32 %v5890, %v5894
    %vm5896 = vweird.f32 %v5888
    %vm5897 = vweird.f32 %v5890
    %vm5898 = vmor %vm5896, %vm5897
    %v5899 = vsel %vm5898, %v5890, %v5895
    %v5900 = vrsqrt.pop %v5889
    %v5901 = vmul.f32 %v5900, %v5889
    %v5902 = vmul.f32 %v5901, %v5900
    %v5903 = vmul.f32 0.5, %v5902
    %v5904 = vsub.f32 1.5, %v5903
    %v5905 = vmul.f32 %v5900, %v5904
    %vm5906 = vweird.f32 %v5889
    %vm5907 = vweird.f32 %v5900
    %vm5908 = vmor %vm5906, %vm5907
    %v5909 = vsel %vm5908, %v5900, %v5905
    %v5910 = vmul.f32 %v5876, %v5899
    %v5911 = vmul.f32 %v5877, %v5909
    %v5913 = vperm.slane %v5866, 0
    %v5915 = vmul.f32 %v5910, %v5913
    %v5916 = vmul.f32 %v5911, %v5913
    %v5918 = vperm.slane %v5867, 0
    %v5920 = vadd.f32 %v5915, %v5918
    %v5921 = vadd.f32 %v5916, %v5918
    %v5922 = vld [vmem:[%s75] sm:$0xff]
    %v5923 = vld [vmem:[%s75 + $0x8] sm:$0xff]
    %v5924 = vld [vmem:[%s75 + $0x10] sm:$0xff]
    %v5925 = vld [vmem:[%s75 + $0x18] sm:$0xff]
    %v5926 = vld [vmem:[%s77] sm:$0x1]
    %v5928 = vperm.slane %v5926, 0
    %v5931 = vsel %vm493, %v5920, 0
    %v5934 = vsel %vm493, %v5921, 0
    %5936 = vmatpush.msra.mxu0 0.0
    %5937 = vmatpush.msra.mxu0 0.0
    %5938 = vmatpush.msra.mxu0 0.0
    %5939 = vmatpush.msra.mxu0 0.0
    %5940 = vmatpush.msra.mxu0 0.0
    %5941 = vmatpush.msra.mxu0 0.0
    %5942 = vmatpush.msra.mxu0 0.0
    %5943 = vmatpush.msra.mxu0 0.0
    %5944 = vmatpush.msra.mxu0 0.0
    %5945 = vmatpush.msra.mxu0 0.0
    %5946 = vmatpush.msra.mxu0 0.0
    %5947 = vmatpush.msra.mxu0 0.0
    %5948 = vmatpush.msra.mxu0 %v5925
    %5949 = vmatpush.msra.mxu0 %v5924
    %5950 = vmatpush.msra.mxu0 %v5923
    %5951 = vmatpush.msra.mxu0 %v5922
    %5952 = vmatmul.f32.gmra.mxu0 %v5931
    %v5953 = vpop.f32.mrf.mxu0
    %v5954 = vadd.f32 %v5928, %v5953
    %5955 = vmatmul.f32.gmra.mxu0 %v5934
    %v5956 = vpop.f32.mrf.mxu0
    %v5957 = vadd.f32 %v5928, %v5956
    %5958 = vdwg.mxu0
    %v5959 = vmax.f32 %v5954, 0.0
    %v5960 = vmax.f32 %v5957, 0.0
    %v5961 = vld [vmem:[%s79] sm:$0xff]
    %v5962 = vld [vmem:[%s79 + $0x8] sm:$0xff]
    %v5963 = vld [vmem:[%s79 + $0x10] sm:$0xff]
    %v5964 = vld [vmem:[%s79 + $0x18] sm:$0xff]
    %v5965 = vld [vmem:[#allocation3] sm:$0x1]
    %v5967 = vperm.slane %v5965, 0
    %v5970 = vsel %vm493, %v5959, 0
    %v5973 = vsel %vm493, %v5960, 0
    %5975 = vmatpush.msra.mxu0 0.0
    %5976 = vmatpush.msra.mxu0 0.0
    %5977 = vmatpush.msra.mxu0 0.0
    %5978 = vmatpush.msra.mxu0 0.0
    %5979 = vmatpush.msra.mxu0 0.0
    %5980 = vmatpush.msra.mxu0 0.0
    %5981 = vmatpush.msra.mxu0 0.0
    %5982 = vmatpush.msra.mxu0 0.0
    %5983 = vmatpush.msra.mxu0 0.0
    %5984 = vmatpush.msra.mxu0 0.0
    %5985 = vmatpush.msra.mxu0 0.0
    %5986 = vmatpush.msra.mxu0 0.0
    %5987 = vmatpush.msra.mxu0 %v5964
    %5988 = vmatpush.msra.mxu0 %v5963
    %5989 = vmatpush.msra.mxu0 %v5962
    %5990 = vmatpush.msra.mxu0 %v5961
    %5991 = vmatmul.f32.gmra.mxu0 %v5970
    %v5992 = vpop.f32.mrf.mxu0
    %v5993 = vadd.f32 %v5967, %v5992
    %5994 = vmatmul.f32.gmra.mxu0 %v5973
    %v5995 = vpop.f32.mrf.mxu0
    %v5996 = vadd.f32 %v5967, %v5995
    %5997 = vdwg.mxu0
    %v5998 = vadd.f32 %v5920, %v5993
    %v5999 = vadd.f32 %v5921, %v5996
    %v6000 = vld [vmem:[#allocation6] sm:$0x1]
    %v6001 = vld [vmem:[#allocation8] sm:$0x1]
    %v6002 = vsel %vm493, %v5998, 0.0
    %6003 = vadd.xlane.f32.xlu0 %v6002
    %v6004 = vpop.xlane.xlu0 %6003
    %v6005 = vsel %vm493, %v5999, 0.0
    %6006 = vadd.xlane.f32.xlu0 %v6005
    %v6007 = vpop.xlane.xlu0 %6006
    %v6008 = vmul.f32 %v6004, %v3771
    %v6009 = vmul.f32 %v6007, %v3771
    %v6010 = vsub.f32 %v5998, %v6008
    %v6011 = vsub.f32 %v5999, %v6009
    %v6012 = vmul.f32 %v6010, %v6010
    %v6013 = vmul.f32 %v6011, %v6011
    %v6014 = vsel %vm493, %v6012, 0.0
    %6015 = vadd.xlane.f32.xlu0 %v6014
    %v6016 = vpop.xlane.xlu0 %6015
    %v6017 = vsel %vm493, %v6013, 0.0
    %6018 = vadd.xlane.f32.xlu0 %v6017
    %v6019 = vpop.xlane.xlu0 %6018
    %v6020 = vmul.f32 %v6016, %v3771
    %v6021 = vmul.f32 %v6019, %v3771
    %v6022 = vadd.f32 %v6020, 1e-05
    %v6023 = vadd.f32 %v6021, 1e-05
    %v6024 = vrsqrt.pop %v6022
    %v6025 = vmul.f32 %v6024, %v6022
    %v6026 = vmul.f32 %v6025, %v6024
    %v6027 = vmul.f32 0.5, %v6026
    %v6028 = vsub.f32 1.5, %v6027
    %v6029 = vmul.f32 %v6024, %v6028
    %vm6030 = vweird.f32 %v6022
    %vm6031 = vweird.f32 %v6024
    %vm6032 = vmor %vm6030, %vm6031
    %v6033 = vsel %vm6032, %v6024, %v6029
    %v6034 = vrsqrt.pop %v6023
    %v6035 = vmul.f32 %v6034, %v6023
    %v6036 = vmul.f32 %v6035, %v6034
    %v6037 = vmul.f32 0.5, %v6036
    %v6038 = vsub.f32 1.5, %v6037
    %v6039 = vmul.f32 %v6034, %v6038
    %vm6040 = vweird.f32 %v6023
    %vm6041 = vweird.f32 %v6034
    %vm6042 = vmor %vm6040, %vm6041
    %v6043 = vsel %vm6042, %v6034, %v6039
    %v6044 = vmul.f32 %v6010, %v6033
    %v6045 = vmul.f32 %v6011, %v6043
    %v6047 = vperm.slane %v6000, 0
    %v6049 = vmul.f32 %v6044, %v6047
    %v6050 = vmul.f32 %v6045, %v6047
    %v6052 = vperm.slane %v6001, 0
    %v6054 = vadd.f32 %v6049, %v6052
    %v6055 = vadd.f32 %v6050, %v6052
    %v6056 = vld [vmem:[%s87] sm:$0xff]
    %v6057 = vld [vmem:[%s87 + $0x8] sm:$0xff]
    %v6058 = vld [vmem:[%s87 + $0x10] sm:$0xff]
    %v6059 = vld [vmem:[%s87 + $0x18] sm:$0xff]
    %v6060 = vld [vmem:[#allocation9] sm:$0x1]
    %v6062 = vperm.slane %v6060, 0
    %v6065 = vsel %vm493, %v6054, 0
    %v6068 = vsel %vm493, %v6055, 0
    %6070 = vmatpush.msra.mxu0 0.0
    %6071 = vmatpush.msra.mxu0 0.0
    %6072 = vmatpush.msra.mxu0 0.0
    %6073 = vmatpush.msra.mxu0 0.0
    %6074 = vmatpush.msra.mxu0 0.0
    %6075 = vmatpush.msra.mxu0 0.0
    %6076 = vmatpush.msra.mxu0 0.0
    %6077 = vmatpush.msra.mxu0 0.0
    %6078 = vmatpush.msra.mxu0 0.0
    %6079 = vmatpush.msra.mxu0 0.0
    %6080 = vmatpush.msra.mxu0 0.0
    %6081 = vmatpush.msra.mxu0 0.0
    %6082 = vmatpush.msra.mxu0 %v6059
    %6083 = vmatpush.msra.mxu0 %v6058
    %6084 = vmatpush.msra.mxu0 %v6057
    %6085 = vmatpush.msra.mxu0 %v6056
    %6086 = vmatmul.f32.gmra.mxu0 %v6065
    %v6087 = vpop.f32.mrf.mxu0
    %v6088 = vadd.f32 %v6062, %v6087
    %6089 = vmatmul.f32.gmra.mxu0 %v6068
    %v6090 = vpop.f32.mrf.mxu0
    %v6091 = vadd.f32 %v6062, %v6090
    %6092 = vdwg.mxu0
    %6093 = vst [vmem:[%s93] sm:$0xff] %v6088
    %6094 = vst [vmem:[%s93 + $0x8] sm:$0xff] %v6091
    // Predicated region
    $region206: #{vivitae_forward.1} parent=1 // pred_check
      _
    $region207: #{vivitae_forward.1} parent=1 // pred_check_branch
      %6096 = sbr.rel (0) target = $region209
    $region208: #{vivitae_forward.1} parent=1 // pred_region
      _
    $region209: #{vivitae_forward.1} parent=1 // pred_fallthru
      _
    // Predicated region
    $region210: #{vivitae_forward.1} parent=1 // pred_check
      _
    $region211: #{vivitae_forward.1} parent=1 // pred_check_branch
      %6098 = sbr.rel (0) target = $region213
    $region212: #{vivitae_forward.1} parent=1 // pred_region
      _
    $region213: #{vivitae_forward.1} parent=1 // pred_fallthru
      _
    %6099 = vsyncpa [#allocation4], 1
    %6100 = vsyncpa [#allocation7], 1
    %6101 = vsyncpa [#allocation10], 1
    %6102 = vsyncpa [#allocation5], 1

</llo_original>
